<compile_context>
chip_gen: v5e
topology: v5e:2x2
jax: 0.10.0
libtpu: 0.0.40
codegen_flags: <defaults>
</compile_context>

<pallas_src>
import functools

import jax
import jax.numpy as jnp
from jax.experimental import pallas as pl
from jax.experimental.pallas import tpu as pltpu


# ---------------- config (stands in for `cfg` in the reference code) --------
class cfg:
    RegularExpressions = ["re0", "re1", "re2", "re3", "re4"]   # n_re = 5
    max_chunk = 6
    MAX_STATE_LEN = 4


# ============================ in-kernel helpers ==============================

def _gru_update(gi, h, whh, bhh):
    """PyTorch GRU cell update given precomputed input gates gi = [r|z|n]."""
    H = h.shape[-1]
    gh = jnp.dot(h, whh, preferred_element_type=jnp.float32) + bhh
    r = jax.nn.sigmoid(gi[:, 0:H] + gh[:, 0:H])
    z = jax.nn.sigmoid(gi[:, H:2 * H] + gh[:, H:2 * H])
    n = jnp.tanh(gi[:, 2 * H:3 * H] + r * gh[:, 2 * H:3 * H])
    return (1.0 - z) * n + z * h


def _softmax(s):
    """Exact softmax over the last axis (matches torch.softmax for argmax ties)."""
    m = jnp.max(s, axis=-1, keepdims=True)
    e = jnp.exp(s - m)
    return e / jnp.sum(e, axis=-1, keepdims=True)


def _dot_concat(parts, w_ref, b_ref):
    """(concat(parts, -1) @ W) + b without materializing the concat in-kernel."""
    acc = b_ref[...]
    off = 0
    for p in parts:
        k = p.shape[-1]
        acc = acc + jnp.dot(p, w_ref[off:off + k, :],
                            preferred_element_type=jnp.float32)
        off += k
    return acc


# ============================ fused Pallas kernels ===========================

def _bigru_encoder_kernel(emb_ref, mask_ref,
                          wf_ih_ref, wf_hh_ref, bf_ih_ref, bf_hh_ref,
                          wb_ih_ref, wb_hh_ref, bb_ih_ref, bb_hh_ref,
                          out_ref, hid_ref, gif_ref, gib_ref, *, T, B, H):
    emb = emb_ref[...]                                     # [T*B, H]
    # hoisted input-side gate matmuls (one per direction), staged in VMEM scratch
    gif_ref[...] = jnp.dot(emb, wf_ih_ref[...],
                           preferred_element_type=jnp.float32) + bf_ih_ref[...]
    gib_ref[...] = jnp.dot(emb, wb_ih_ref[...],
                           preferred_element_type=jnp.float32) + bb_ih_ref[...]
    whh_f = wf_hh_ref[...]
    bhh_f = bf_hh_ref[...]
    whh_b = wb_hh_ref[...]
    bhh_b = bb_hh_ref[...]

    # forward direction: write each step through the output ref (no live lists)
    h_f = jnp.zeros((B, H), jnp.float32)
    for t in range(T):
        sl = pl.ds(t * B, B)
        h_new = _gru_update(gif_ref[sl, :], h_f, whh_f, bhh_f)
        m = mask_ref[sl, :]
        h_f = m * h_new + (1.0 - m) * h_f
        out_ref[:, t, :] = m * h_new

    # backward direction: accumulate into the already-written forward outputs
    h_b = jnp.zeros((B, H), jnp.float32)
    for t in range(T - 1, -1, -1):
        sl = pl.ds(t * B, B)
        h_new = _gru_update(gib_ref[sl, :], h_b, whh_b, bhh_b)
        m = mask_ref[sl, :]
        h_b = m * h_new + (1.0 - m) * h_b
        out_ref[:, t, :] = out_ref[:, t, :] + m * h_new

    hid_ref[...] = h_f + h_b                               # hidden[0] + hidden[1]


def _gru_seq_kernel(emb_ref, mask_ref, wih_ref, whh_ref, bih_ref, bhh_ref,
                    out_ref, hid_ref, gi_ref, *, T, B, H):
    gi_ref[...] = jnp.dot(emb_ref[...], wih_ref[...],
                          preferred_element_type=jnp.float32) + bih_ref[...]
    whh = whh_ref[...]
    bhh = bhh_ref[...]
    h = jnp.zeros((B, H), jnp.float32)
    for t in range(T):
        sl = pl.ds(t * B, B)
        h_new = _gru_update(gi_ref[sl, :], h, whh, bhh)
        m = mask_ref[sl, :]
        h = m * h_new + (1.0 - m) * h
        out_ref[:, t, :] = m * h_new                       # [B, T, H] layout
    hid_ref[...] = h


def _head_policy_kernel(uh_ref, sh_ref, act_ref, h0_ref, mem_ref, re_ref,
                        w_ht_ref, b_ht_ref, w_int_ref, b_int_ref,
                        s_wih_ref, s_whh_ref, s_bih_ref, s_bhh_ref,
                        w_s1_ref, b_s1_ref, w_12_ref, b_12_ref,
                        m_wih_ref, m_whh_ref, m_bih_ref, m_bhh_ref,
                        w_re_ref, b_re_ref, w_la_ref, b_la_ref,
                        w_cat_ref, b_cat_ref, w_hp_ref, b_hp_ref,
                        w_sp_ref, w_hv_ref, b_hv_ref, w_val_ref, b_val_ref,
                        enc_ref, intent_ref, hnew_ref,
                        policy_ref, slot1_ref, value_ref, gi_ref,
                        *, L, B, H2):
    # ---- head: hidden_transfer(cat(utt_h, st_h)) + hidden2intent + state_rnn step
    enc = _dot_concat([uh_ref[...], sh_ref[...]], w_ht_ref, b_ht_ref)
    intent_ref[...] = jnp.dot(enc, w_int_ref[...],
                              preferred_element_type=jnp.float32) + b_int_ref[...]
    gi = _dot_concat([enc, act_ref[...]], s_wih_ref, s_bih_ref)
    hnew = _gru_update(gi, h0_ref[...], s_whh_ref[...], s_bhh_ref[...])
    enc_ref[...] = enc
    hnew_ref[...] = hnew

    # ---- policy (state_out of the 1-step state_rnn == hnew) ----
    h1 = jax.nn.relu(jnp.dot(hnew, w_s1_ref[...],
                             preferred_element_type=jnp.float32) + b_s1_ref[...])
    h2 = jax.nn.relu(jnp.dot(h1, w_12_ref[...],
                             preferred_element_type=jnp.float32) + b_12_ref[...])

    # belief-state memory GRU (no packing), input matmul hoisted to one pass
    gi_ref[...] = jnp.dot(mem_ref[...], m_wih_ref[...],
                          preferred_element_type=jnp.float32) + m_bih_ref[...]
    m_whh = m_whh_ref[...]
    m_bhh = m_bhh_ref[...]
    h_mem = jnp.zeros((B, H2), jnp.float32)
    for t in range(L):
        h_mem = _gru_update(gi_ref[pl.ds(t * B, B), :], h_mem, m_whh, m_bhh)

    re_hidden = jnp.dot(re_ref[...], w_re_ref[...],
                        preferred_element_type=jnp.float32) + b_re_ref[...]
    last_a = jnp.dot(act_ref[...], w_la_ref[...],
                     preferred_element_type=jnp.float32) + b_la_ref[...]

    # one stacked matmul serves both hidden2hidden and the parts-part of hidden2slot
    parts = [last_a, h2, h_mem, re_hidden]                 # reference concat order
    both = _dot_concat(parts, w_cat_ref, b_cat_ref)        # [B, H2 + max_chunk]
    hidden2 = both[:, :H2]
    slot_part = both[:, H2:]
    policy = jnp.dot(hidden2, w_hp_ref[...],
                     preferred_element_type=jnp.float32) + b_hp_ref[...]
    slot_logit = slot_part + jnp.dot(_softmax(policy), w_sp_ref[...],
                                     preferred_element_type=jnp.float32)
    # softmax(cat([1-x, x], -1)) over the size-2 axis  ==  p1 = sigmoid(2x - 1)
    slot1_ref[...] = jax.nn.sigmoid(2.0 * slot_logit - 1.0)
    vhid = jnp.dot(hidden2, w_hv_ref[...],
                   preferred_element_type=jnp.float32) + b_hv_ref[...]
    value_ref[...] = jnp.dot(vhid, w_val_ref[...],
                             preferred_element_type=jnp.float32) + b_val_ref[...]
    policy_ref[...] = policy


def _decoder_kernel(dec_in_ref, h0_ref, utt_ref, utt_mask_ref, st_ref, st_mask_ref,
                    dlgoh_ref, stoh_ref, emb_ref, eTcat_ref, wihcat_ref,
                    whh_ref, bih_ref, bhh_ref, wrc_ref, wrs_ref, br_ref,
                    wg_ref, bg_ref, point_ref, gate_ref, *, L, H, V):
    dec_input = dec_in_ref[0]                          # [B, H]   per-slot embedding
    h = h0_ref[...]                                    # [B, H]   shared encoded hidden
    utt = utt_ref[...]                                 # [B, T, H]
    st = st_ref[...]                                   # [B, Ls, H]
    utt_mask = utt_mask_ref[...]                       # [B, T]
    st_mask = st_mask_ref[...]                         # [B, Ls]
    dlg_oh = dlgoh_ref[...]                            # [B, T, V]
    st_oh = stoh_ref[...]                              # [B, Ls, V]
    E = emb_ref[...]                                   # [V, H]
    eT_cat = eTcat_ref[...]                            # [H, V+3]  = [E^T | Wr_h]
    wih_cat = wihcat_ref[...]                          # [H, 3H+3] = [Wih | Wr_x]
    whh = whh_ref[...]
    bih = bih_ref[...]
    bhh = bhh_ref[...]
    wr_c = wrc_ref[...]
    wr_s = wrs_ref[...]
    br = br_ref[...]

    B = utt_mask.shape[0]
    NEG = jnp.float32(-1e30)
    vid = jax.lax.broadcasted_iota(jnp.int32, (B, V), 1)

    def attend(seq, mask, hq):
        # scores and context as batched MXU contractions (not VALU/XLU reductions)
        s = jnp.einsum('bqd,btd->bqt', hq[:, None, :], seq,
                       preferred_element_type=jnp.float32)[:, 0, :]
        s = jnp.where(mask > 0.0, s, NEG)
        p = _softmax(s)
        ctx = jnp.einsum('bqt,btd->bqd', p[:, None, :], seq,
                         preferred_element_type=jnp.float32)[:, 0, :]
        return ctx, p

    for wi in range(L):
        # GRU input gates and the dec-input part of W_ratio share one matmul
        gx = jnp.dot(dec_input, wih_cat, preferred_element_type=jnp.float32)
        gi = gx[:, :3 * H] + bih
        r_x = gx[:, 3 * H:]
        h = _gru_update(gi, h, whh, bhh)               # dec_state == new hidden
        ctx_vec, ctx_prob = attend(utt, utt_mask, h)
        st_vec, st_prob = attend(st, st_mask, h)
        if wi == 0:
            gate_ref[0] = jnp.dot(ctx_vec, wg_ref[...],
                                  preferred_element_type=jnp.float32) + bg_ref[...]
        # vocab logits and the hidden part of W_ratio share one matmul
        hv = jnp.dot(h, eT_cat, preferred_element_type=jnp.float32)   # [B, V+3]
        p_vocab = _softmax(hv[:, :V])
        ratio = _softmax(hv[:, V:] + r_x + br
                         + jnp.dot(ctx_vec, wr_c, preferred_element_type=jnp.float32)
                         + jnp.dot(st_vec, wr_s, preferred_element_type=jnp.float32))
        # scatter_add_(dim=1) as batched matmuls: [B,T] x [B,T,V] -> [B,V] (MXU)
        p_ctx = jnp.einsum('bqt,btv->bqv', ctx_prob[:, None, :], dlg_oh,
                           preferred_element_type=jnp.float32)[:, 0, :]
        p_st = jnp.einsum('bqt,btv->bqv', st_prob[:, None, :], st_oh,
                          preferred_element_type=jnp.float32)[:, 0, :]
        vps = ratio[:, 0:1]                            # vocab switch (col 0)
        sps = ratio[:, 1:2]                            # state switch (col 1)
        final_p = vps * p_vocab + sps * p_st + (1.0 - sps - vps) * p_ctx
        point_ref[0, :, wi, :] = final_p
        # greedy feedback: first-argmax one-hot -> embedding lookup via matmul
        mx = jnp.max(final_p, axis=1, keepdims=True)
        pred = jnp.min(jnp.where(final_p >= mx, vid, V), axis=1, keepdims=True)
        dec_input = jnp.dot((vid == pred).astype(jnp.float32), E,
                            preferred_element_type=jnp.float32)


# ============================ kernel wrappers ================================

def encoder_forward(params, dlg_his_TB, lengths, H):
    """EncoderRNN: bidirectional masked GRU over [T, B] token ids (dropout = id)."""
    T, B = dlg_his_TB.shape
    emb = params["embedding"][dlg_his_TB].reshape(T * B, H)
    mask = (jnp.arange(T)[:, None] < lengths[None, :]).astype(jnp.float32)
    mask = mask.reshape(T * B, 1)
    pf, pb = params["enc_gru_f"], params["enc_gru_b"]
    out, hid = pl.pallas_call(
        functools.partial(_bigru_encoder_kernel, T=T, B=B, H=H),
        out_shape=(jax.ShapeDtypeStruct((B, T, H), jnp.float32),
                   jax.ShapeDtypeStruct((B, H), jnp.float32)),
        scratch_shapes=[pltpu.VMEM((T * B, 3 * H), jnp.float32),
                        pltpu.VMEM((T * B, 3 * H), jnp.float32)],
    )(emb, mask,
      pf["wih"], pf["whh"], pf["bih"], pf["bhh"],
      pb["wih"], pb["whh"], pb["bih"], pb["bhh"])
    return out, hid                                        # [B,T,H], [B,H]


def state_encoder_forward(params, state, lengths, chunk_ids, H):
    B, Ls = state.shape
    emb = params["embedding"][state] + params["chunk_embedding"][chunk_ids]
    emb = jnp.transpose(emb, (1, 0, 2)).reshape(Ls * B, H)
    mask = (jnp.arange(Ls)[:, None] < lengths[None, :]).astype(jnp.float32)
    mask = mask.reshape(Ls * B, 1)
    p = params["state_gru"]
    out, hid = pl.pallas_call(
        functools.partial(_gru_seq_kernel, T=Ls, B=B, H=H),
        out_shape=(jax.ShapeDtypeStruct((B, Ls, H), jnp.float32),
                   jax.ShapeDtypeStruct((B, H), jnp.float32)),
        scratch_shapes=[pltpu.VMEM((Ls * B, 3 * H), jnp.float32)],
    )(emb, mask, p["wih"], p["whh"], p["bih"], p["bhh"])
    return out, hid                                        # [B,Ls,H], [B,H]


def head_policy_forward(params, utt_hidden, st_hidden, action2d, h0_state,
                        belief_state, re_tensor, dims):
    pol = params["policy"]
    B = utt_hidden.shape[0]
    L = belief_state.shape[1]
    H2 = dims["H2"]
    mem_emb = pol["state_embedding"][belief_state]                 # [B, L, EMB]
    mem_emb = jnp.transpose(mem_emb, (1, 0, 2)).reshape(L * B, dims["EMB"])
    outs = pl.pallas_call(
        functools.partial(_head_policy_kernel, L=L, B=B, H2=H2),
        out_shape=(jax.ShapeDtypeStruct((B, dims["H"]), jnp.float32),
                   jax.ShapeDtypeStruct((B, dims["n_usr_act"]), jnp.float32),
                   jax.ShapeDtypeStruct((B, dims["SH"]), jnp.float32),
                   jax.ShapeDtypeStruct((B, dims["n_act"]), jnp.float32),
                   jax.ShapeDtypeStruct((B, cfg.max_chunk), jnp.float32),
                   jax.ShapeDtypeStruct((B, 1), jnp.float32)),
        scratch_shapes=[pltpu.VMEM((L * B, 3 * H2), jnp.float32)],
    )(utt_hidden, st_hidden, action2d, h0_state, mem_emb,
      re_tensor.astype(jnp.float32),
      params["hidden_transfer"]["w"], params["hidden_transfer"]["b"],
      params["hidden2intent"]["w"], params["hidden2intent"]["b"],
      params["state_rnn"]["wih"], params["state_rnn"]["whh"],
      params["state_rnn"]["bih"], params["state_rnn"]["bhh"],
      pol["sta2hidden_one"]["w"], pol["sta2hidden_one"]["b"],
      pol["hidden_one2hidden_two"]["w"], pol["hidden_one2hidden_two"]["b"],
      pol["memory_rnn"]["wih"], pol["memory_rnn"]["whh"],
      pol["memory_rnn"]["bih"], pol["memory_rnn"]["bhh"],
      pol["re2hidden_two"]["w"], pol["re2hidden_two"]["b"],
      pol["last_act2hidden"]["w"], pol["last_act2hidden"]["b"],
      pol["w_cat"], pol["b_cat"],
      pol["hidden2policy"]["w"], pol["hidden2policy"]["b"],
      pol["w_sp"],
      pol["hidden2vhidden"]["w"], pol["hidden2vhidden"]["b"],
      pol["hidden2value"]["w"], pol["hidden2value"]["b"])
    enc, intent, hnew, policy, slot1, value = outs
    slot = jnp.stack([1.0 - slot1, slot1], axis=-1)                # [B, max_chunk, 2]
    return enc, intent, hnew, policy, slot, value


def generator_forward(params, batch_size, encoded_hidden_2d, utt_out, utt_lens,
                      st_out, st_lens, dlg, last_state, max_res_len,
                      slot_temp, slot_w2i, dims):
    H, V, G = dims["H"], dims["V"], dims["nb_gate"]
    B = batch_size
    S = len(slot_temp)
    T = utt_out.shape[1]
    Ls = st_out.shape[1]
    L = max_res_len

    # slot embeddings -> per-slot decoder input [S, B, H] (no S x tiling of the rest)
    dom_ids = jnp.array([slot_w2i[s.split("-")[0]] for s in slot_temp], jnp.int32)
    slt_ids = jnp.array([slot_w2i[s.split("-")[1]] for s in slot_temp], jnp.int32)
    combined = params["slot_emb"][dom_ids] + params["slot_emb"][slt_ids]   # [S, H]
    dec_input0 = jnp.broadcast_to(combined[:, None, :], (S, B, H))

    utt_mask = (jnp.arange(T)[None, :] < utt_lens[:, None]).astype(jnp.float32)
    st_mask = (jnp.arange(Ls)[None, :] < st_lens[:, None]).astype(jnp.float32)
    dlg_oh = jax.nn.one_hot(dlg, V, dtype=jnp.float32)                     # [B, T, V]
    st_oh = jax.nn.one_hot(last_state, V, dtype=jnp.float32)               # [B, Ls, V]

    def shared(shape):
        nd = len(shape)
        return pl.BlockSpec(shape, lambda s, _n=nd: (0,) * _n)

    point, gate = pl.pallas_call(
        functools.partial(_decoder_kernel, L=L, H=H, V=V),
        grid=(S,),
        in_specs=[
            pl.BlockSpec((1, B, H), lambda s: (s, 0, 0)),      # per-slot dec input
            shared((B, H)),                                    # encoded hidden
            shared((B, T, H)), shared((B, T)),                 # utt enc + mask
            shared((B, Ls, H)), shared((B, Ls)),               # state enc + mask
            shared((B, T, V)), shared((B, Ls, V)),             # pointer one-hots
            shared((V, H)), shared((H, V + 3)),                # E, [E^T | Wr_h]
            shared((H, 3 * H + 3)),                            # [Wih | Wr_x]
            shared((H, 3 * H)), shared((1, 3 * H)), shared((1, 3 * H)),
            shared((H, 3)), shared((H, 3)), shared((1, 3)),
            shared((H, G)), shared((1, G)),
        ],
        out_specs=(pl.BlockSpec((1, B, L, V), lambda s: (s, 0, 0, 0)),
                   pl.BlockSpec((1, B, G), lambda s: (s, 0, 0))),
        out_shape=(jax.ShapeDtypeStruct((S, B, L, V), jnp.float32),
                   jax.ShapeDtypeStruct((S, B, G), jnp.float32)),
        compiler_params=pltpu.CompilerParams(
            dimension_semantics=("parallel",)),
    )(dec_input0, encoded_hidden_2d, utt_out, utt_mask, st_out, st_mask,
      dlg_oh, st_oh,
      params["embedding"], params["dec_eT_cat"], params["dec_wih_cat"],
      params["dec_gru"]["whh"], params["dec_gru"]["bih"], params["dec_gru"]["bhh"],
      params["dec_wr_c"], params["dec_wr_s"], params["W_ratio"]["b"],
      params["W_gate"]["w"], params["W_gate"]["b"])

    # TODO(synk): idx2w string lookup has no array equivalent; returning token ids.
    words = jnp.transpose(jnp.argmax(point, axis=-1), (0, 2, 1))           # [S, L, B]
    return point, gate, words, []


# ============================ parameter init =================================

def _nrm(key, shape):
    return (0.1 * jax.random.normal(key, shape)).astype(jnp.float32)


def init_gru(key, in_dim, H):
    k = jax.random.split(key, 4)
    return {"wih": _nrm(k[0], (in_dim, 3 * H)),
            "whh": _nrm(k[1], (H, 3 * H)),
            "bih": _nrm(k[2], (1, 3 * H)),
            "bhh": _nrm(k[3], (1, 3 * H))}


def init_linear(key, in_dim, out_dim):
    k = jax.random.split(key, 2)
    return {"w": _nrm(k[0], (in_dim, out_dim)), "b": _nrm(k[1], (1, out_dim))}


def init_ross_params(key, dims, n_slot_words):
    keys = iter(jax.random.split(key, 64))
    H, V, H2 = dims["H"], dims["V"], dims["H2"]
    p = {}
    p["embedding"] = _nrm(next(keys), (V, H)).at[0].set(0.0)   # padding_idx=0
    p["enc_gru_f"] = init_gru(next(keys), H, H)                # encoder fwd direction
    p["enc_gru_b"] = init_gru(next(keys), H, H)                # encoder bwd direction
    p["chunk_embedding"] = _nrm(next(keys), (6, H))
    p["state_gru"] = init_gru(next(keys), H, H)
    p["hidden_transfer"] = init_linear(next(keys), 2 * H, H)
    p["dec_gru"] = init_gru(next(keys), H, H)
    p["W_ratio"] = init_linear(next(keys), 4 * H, 3)
    p["W_gate"] = init_linear(next(keys), H, dims["nb_gate"])
    p["slot_emb"] = _nrm(next(keys), (n_slot_words, H))
    p["hidden2intent"] = init_linear(next(keys), H, dims["n_usr_act"])
    p["state_rnn"] = init_gru(next(keys), H + dims["n_act"], dims["SH"])

    # derived / fused decoder weights (precomputed once -> fewer matmuls per step)
    wr = p["W_ratio"]["w"]                       # rows: [dec_state | ctx | state | x]
    p["dec_wih_cat"] = jnp.concatenate([p["dec_gru"]["wih"], wr[3 * H:4 * H]], axis=1)
    p["dec_eT_cat"] = jnp.concatenate([p["embedding"].T, wr[0:H]], axis=1)
    p["dec_wr_c"] = wr[H:2 * H]
    p["dec_wr_s"] = wr[2 * H:3 * H]

    pol = {}
    pol["sta2hidden_one"] = init_linear(next(keys), dims["SH"], dims["H1"])
    pol["hidden_one2hidden_two"] = init_linear(next(keys), dims["H1"], H2)
    pol["state_embedding"] = _nrm(next(keys), (V, dims["EMB"]))
    pol["memory_rnn"] = init_gru(next(keys), dims["EMB"], H2)
    pol["re2hidden_two"] = init_linear(next(keys), dims["n_re"], H2)
    pol["last_act2hidden"] = init_linear(next(keys), dims["n_act"], H2)
    pol["hidden2hidden"] = init_linear(next(keys), 4 * H2, H2)
    pol["hidden2policy"] = init_linear(next(keys), H2, dims["n_act"])
    pol["hidden2slot"] = init_linear(next(keys), 4 * H2 + dims["n_act"],
                                     cfg.max_chunk)
    pol["hidden2vhidden"] = init_linear(next(keys), H2, H2)
    pol["hidden2value"] = init_linear(next(keys), H2, 1)
    # fuse hidden2hidden with the parts-part of hidden2slot (one stacked matmul)
    pol["w_cat"] = jnp.concatenate([pol["hidden2hidden"]["w"],
                                    pol["hidden2slot"]["w"][:4 * H2]], axis=1)
    pol["b_cat"] = jnp.concatenate([pol["hidden2hidden"]["b"],
                                    pol["hidden2slot"]["b"]], axis=1)
    pol["w_sp"] = pol["hidden2slot"]["w"][4 * H2:]
    p["policy"] = pol
    return p


# ============================ full forward ===================================

def ross_forward(params, dims, slot_w2i, dlg_his, dlg_his_len, last_sys_state,
                 last_sys_state_len, last_state_chunk, sys_state, last_act,
                 slot_temps, last_state_hidden, reg_exp, use_teacher_forcing=False):
    # TODO(synk): teacher-forcing branch / random coin flip not implemented;
    #             greedy decoding (use_teacher_forcing=False) only.
    H = dims["H"]
    B = dlg_his.shape[0]

    utt_out, utt_hidden = encoder_forward(params, dlg_his.T, dlg_his_len, H)
    st_out, st_hidden = state_encoder_forward(params, last_sys_state,
                                              last_sys_state_len,
                                              last_state_chunk, H)

    action2d = jax.nn.one_hot(last_act.reshape(B), dims["n_act"], dtype=jnp.float32)

    # hidden_transfer + hidden2intent + state_rnn step + full policy head, fused
    (encoded_hidden, intent_tag, state_hidden_new,
     policy, slot, value) = head_policy_forward(params, utt_hidden, st_hidden,
                                                action2d, last_state_hidden[0],
                                                sys_state, reg_exp, dims)

    max_res_len = cfg.MAX_STATE_LEN
    all_point_outputs, _all_gate, words_point_out, words_class_out = generator_forward(
        params, B, encoded_hidden, utt_out, dlg_his_len, st_out,
        last_sys_state_len, dlg_his, last_sys_state, max_res_len,
        slot_temps, slot_w2i, dims)

    return (intent_tag, all_point_outputs, words_point_out, words_class_out,
            state_hidden_new[None], policy, slot, value)


# ================================== main =====================================

if __name__ == "__main__":
    slots = ["restaurant-food", "restaurant-area", "hotel-name"]
    gating_dict = {"ptr": 0, "dontcare": 1, "none": 2}
    voc = {f"w{i}": i for i in range(32)}

    slot_w2i = {}
    for slot in slots:
        d, s = slot.split("-")
        if d not in slot_w2i:
            slot_w2i[d] = len(slot_w2i)
        if s not in slot_w2i:
            slot_w2i[s] = len(slot_w2i)

    dims = dict(V=len(voc), H=32, EMB=16, SH=32, H1=32, H2=32,
                n_act=8, n_usr_act=6, n_re=len(cfg.RegularExpressions),
                nb_gate=len(gating_dict))

    key = jax.random.PRNGKey(0)
    kp, kd = jax.random.split(key)
    params = init_ross_params(kp, dims, len(slot_w2i))

    B, T, Ls, Lbs = 2, 8, 6, 5
    kk = jax.random.split(kd, 8)
    dlg_his = jax.random.randint(kk[0], (B, T), 1, dims["V"], dtype=jnp.int32)
    dlg_his_len = jnp.array([T, T - 2], dtype=jnp.int32)                 # max == T
    last_sys_state = jax.random.randint(kk[1], (B, Ls), 1, dims["V"], dtype=jnp.int32)
    last_sys_state_len = jnp.array([Ls, Ls - 1], dtype=jnp.int32)        # max == Ls
    last_state_chunk = jax.random.randint(kk[2], (B, Ls), 0, 6, dtype=jnp.int32)
    sys_state = jax.random.randint(kk[3], (B, Lbs), 1, dims["V"], dtype=jnp.int32)
    last_act = jax.random.randint(kk[4], (B, 1), 0, dims["n_act"], dtype=jnp.int32)
    last_state_hidden = (0.1 * jax.random.normal(kk[5], (1, B, dims["SH"]))).astype(jnp.float32)
    reg_exp = jax.random.uniform(kk[6], (B, dims["n_re"]), dtype=jnp.float32)

    @jax.jit
    def run(params, dlg_his, dlg_his_len, last_sys_state, last_sys_state_len,
            last_state_chunk, sys_state, last_act, last_state_hidden, reg_exp):
        return ross_forward(params, dims, slot_w2i, dlg_his, dlg_his_len,
                            last_sys_state, last_sys_state_len, last_state_chunk,
                            sys_state, last_act, slots, last_state_hidden,
                            reg_exp, use_teacher_forcing=False)

    outs = run(params, dlg_his, dlg_his_len, last_sys_state, last_sys_state_len,
               last_state_chunk, sys_state, last_act, last_state_hidden, reg_exp)
    jax.block_until_ready(outs)
    print("KERNEL_OK")
</pallas_src>

<mosaic_0001>
module attributes {stable_mosaic.version = 11 : i64} {
  func.func @_gru_seq_kernel(%arg0: memref<12x32xf32, #tpu.memory_space<vmem>>, %arg1: memref<12x1xf32, #tpu.memory_space<vmem>>, %arg2: memref<32x96xf32, #tpu.memory_space<vmem>>, %arg3: memref<32x96xf32, #tpu.memory_space<vmem>>, %arg4: memref<1x96xf32, #tpu.memory_space<vmem>>, %arg5: memref<1x96xf32, #tpu.memory_space<vmem>>, %arg6: memref<2x6x32xf32, #tpu.memory_space<vmem>>, %arg7: memref<2x32xf32, #tpu.memory_space<vmem>>, %arg8: memref<12x96xf32, #tpu.memory_space<vmem>>) attributes {dimension_semantics = [], scalar_prefetch = 0 : i64, scratch_operands = 1 : i64, tpu.core_type = #tpu.core_type<tc>} {
    %c0 = arith.constant 0 : index
    %c0_0 = arith.constant 0 : index
    %0 = vector.load %arg0[%c0, %c0_0] : memref<12x32xf32, #tpu.memory_space<vmem>>, vector<12x32xf32>
    %c0_1 = arith.constant 0 : index
    %c0_2 = arith.constant 0 : index
    %1 = vector.load %arg2[%c0_1, %c0_2] : memref<32x96xf32, #tpu.memory_space<vmem>>, vector<32x96xf32>
    %cst = arith.constant dense<0.000000e+00> : vector<12x96xf32>
    %2 = tpu.matmul %0, %1, %cst {dimension_numbers = #tpu.dot_dimension_numbers<[1], [0], [0], [1], [0, 0, 1, 1], [], []>} : vector<12x32xf32>, vector<32x96xf32>, vector<12x96xf32> -> vector<12x96xf32>
    %c0_3 = arith.constant 0 : index
    %c0_4 = arith.constant 0 : index
    %3 = vector.load %arg4[%c0_3, %c0_4] : memref<1x96xf32, #tpu.memory_space<vmem>>, vector<1x96xf32>
    %4 = vector.broadcast %3 : vector<1x96xf32> to vector<12x96xf32>
    %5 = arith.addf %2, %4 : vector<12x96xf32>
    %c0_5 = arith.constant 0 : index
    %c0_6 = arith.constant 0 : index
    %6 = vector.load %arg8[%c0_5, %c0_6] : memref<12x96xf32, #tpu.memory_space<vmem>>, vector<12x96xf32>
    tpu.vector_store %arg8[%c0_5, %c0_6], %5 {strides = array<i32>} : memref<12x96xf32, #tpu.memory_space<vmem>>, vector<12x96xf32>,
    %c0_7 = arith.constant 0 : index
    %c0_8 = arith.constant 0 : index
    %7 = vector.load %arg3[%c0_7, %c0_8] : memref<32x96xf32, #tpu.memory_space<vmem>>, vector<32x96xf32>
    %c0_9 = arith.constant 0 : index
    %c0_10 = arith.constant 0 : index
    %8 = vector.load %arg5[%c0_9, %c0_10] : memref<1x96xf32, #tpu.memory_space<vmem>>, vector<1x96xf32>
    %cst_11 = arith.constant 0.000000e+00 : f32
    %9 = vector.broadcast %cst_11 : f32 to vector<2x32xf32>
    %c0_12 = arith.constant 0 : index
    %c0_13 = arith.constant 0 : index
    %10 = vector.load %arg8[%c0_12, %c0_13] : memref<12x96xf32, #tpu.memory_space<vmem>>, vector<2x96xf32>
    %cst_14 = arith.constant dense<0.000000e+00> : vector<2x96xf32>
    %11 = tpu.matmul %9, %7, %cst_14 {dimension_numbers = #tpu.dot_dimension_numbers<[1], [0], [0], [1], [0, 0, 1, 1], [], []>} : vector<2x32xf32>, vector<32x96xf32>, vector<2x96xf32> -> vector<2x96xf32>
    %12 = vector.broadcast %8 : vector<1x96xf32> to vector<2x96xf32>
    %13 = arith.addf %11, %12 : vector<2x96xf32>
    %14 = vector.extract_strided_slice %10 {offsets = [0, 0], sizes = [2, 32], strides = [1, 1]} : vector<2x96xf32> to vector<2x32xf32>
    %15 = vector.extract_strided_slice %13 {offsets = [0, 0], sizes = [2, 32], strides = [1, 1]} : vector<2x96xf32> to vector<2x32xf32>
    %16 = arith.addf %14, %15 : vector<2x32xf32>
    %17 = arith.negf %16 : vector<2x32xf32>
    %18 = math.exp %17 : vector<2x32xf32>
    %cst_15 = arith.constant 1.000000e+00 : f32
    %19 = vector.broadcast %cst_15 : f32 to vector<2x32xf32>
    %20 = arith.addf %19, %18 : vector<2x32xf32>
    %21 = arith.divf %19, %20 : vector<2x32xf32>
    %22 = vector.extract_strided_slice %10 {offsets = [0, 32], sizes = [2, 32], strides = [1, 1]} : vector<2x96xf32> to vector<2x32xf32>
    %23 = vector.extract_strided_slice %13 {offsets = [0, 32], sizes = [2, 32], strides = [1, 1]} : vector<2x96xf32> to vector<2x32xf32>
    %24 = arith.addf %22, %23 : vector<2x32xf32>
    %25 = arith.negf %24 : vector<2x32xf32>
    %26 = math.exp %25 : vector<2x32xf32>
    %cst_16 = arith.constant 1.000000e+00 : f32
    %27 = vector.broadcast %cst_16 : f32 to vector<2x32xf32>
    %28 = arith.addf %27, %26 : vector<2x32xf32>
    %29 = arith.divf %27, %28 : vector<2x32xf32>
    %30 = vector.extract_strided_slice %10 {offsets = [0, 64], sizes = [2, 32], strides = [1, 1]} : vector<2x96xf32> to vector<2x32xf32>
    %31 = vector.extract_strided_slice %13 {offsets = [0, 64], sizes = [2, 32], strides = [1, 1]} : vector<2x96xf32> to vector<2x32xf32>
    %32 = arith.mulf %21, %31 : vector<2x32xf32>
    %33 = arith.addf %30, %32 : vector<2x32xf32>
    %34 = math.tanh %33 : vector<2x32xf32>
    %cst_17 = arith.constant 1.000000e+00 : f32
    %35 = vector.broadcast %cst_17 : f32 to vector<2x32xf32>
    %36 = arith.subf %35, %29 : vector<2x32xf32>
    %37 = arith.mulf %36, %34 : vector<2x32xf32>
    %38 = arith.mulf %29, %9 : vector<2x32xf32>
    %39 = arith.addf %37, %38 : vector<2x32xf32>
    %c0_18 = arith.constant 0 : index
    %c0_19 = arith.constant 0 : index
    %40 = vector.load %arg1[%c0_18, %c0_19] : memref<12x1xf32, #tpu.memory_space<vmem>>, vector<2x1xf32>
    %41 = vector.broadcast %40 : vector<2x1xf32> to vector<2x32xf32>
    %42 = arith.mulf %41, %39 : vector<2x32xf32>
    %cst_20 = arith.constant 1.000000e+00 : f32
    %43 = vector.broadcast %cst_20 : f32 to vector<2x1xf32>
    %44 = arith.subf %43, %40 : vector<2x1xf32>
    %45 = vector.broadcast %44 : vector<2x1xf32> to vector<2x32xf32>
    %46 = arith.mulf %45, %9 : vector<2x32xf32>
    %47 = arith.addf %42, %46 : vector<2x32xf32>
    %48 = vector.broadcast %40 : vector<2x1xf32> to vector<2x32xf32>
    %49 = arith.mulf %48, %39 : vector<2x32xf32>
    %c0_21 = arith.constant 0 : index
    %c0_22 = arith.constant 0 : index
    %c0_23 = arith.constant 0 : index
    %50 = vector.load %arg6[%c0_21, %c0_22, %c0_23] : memref<2x6x32xf32, #tpu.memory_space<vmem>>, vector<2x1x32xf32>
    %51 = vector.shape_cast %50 : vector<2x1x32xf32> to vector<2x32xf32>
    %52 = vector.shape_cast %49 : vector<2x32xf32> to vector<2x1x32xf32>
    tpu.vector_store %arg6[%c0_21, %c0_22, %c0_23], %52 {strides = array<i32>} : memref<2x6x32xf32, #tpu.memory_space<vmem>>, vector<2x1x32xf32>,
    %c2 = arith.constant 2 : index
    %c0_24 = arith.constant 0 : index
    %53 = vector.load %arg8[%c2, %c0_24] : memref<12x96xf32, #tpu.memory_space<vmem>>, vector<2x96xf32>
    %cst_25 = arith.constant dense<0.000000e+00> : vector<2x96xf32>
    %54 = tpu.matmul %47, %7, %cst_25 {dimension_numbers = #tpu.dot_dimension_numbers<[1], [0], [0], [1], [0, 0, 1, 1], [], []>} : vector<2x32xf32>, vector<32x96xf32>, vector<2x96xf32> -> vector<2x96xf32>
    %55 = vector.broadcast %8 : vector<1x96xf32> to vector<2x96xf32>
    %56 = arith.addf %54, %55 : vector<2x96xf32>
    %57 = vector.extract_strided_slice %53 {offsets = [0, 0], sizes = [2, 32], strides = [1, 1]} : vector<2x96xf32> to vector<2x32xf32>
    %58 = vector.extract_strided_slice %56 {offsets = [0, 0], sizes = [2, 32], strides = [1, 1]} : vector<2x96xf32> to vector<2x32xf32>
    %59 = arith.addf %57, %58 : vector<2x32xf32>
    %60 = arith.negf %59 : vector<2x32xf32>
    %61 = math.exp %60 : vector<2x32xf32>
    %cst_26 = arith.constant 1.000000e+00 : f32
    %62 = vector.broadcast %cst_26 : f32 to vector<2x32xf32>
    %63 = arith.addf %62, %61 : vector<2x32xf32>
    %64 = arith.divf %62, %63 : vector<2x32xf32>
    %65 = vector.extract_strided_slice %53 {offsets = [0, 32], sizes = [2, 32], strides = [1, 1]} : vector<2x96xf32> to vector<2x32xf32>
    %66 = vector.extract_strided_slice %56 {offsets = [0, 32], sizes = [2, 32], strides = [1, 1]} : vector<2x96xf32> to vector<2x32xf32>
    %67 = arith.addf %65, %66 : vector<2x32xf32>
    %68 = arith.negf %67 : vector<2x32xf32>
    %69 = math.exp %68 : vector<2x32xf32>
    %cst_27 = arith.constant 1.000000e+00 : f32
    %70 = vector.broadcast %cst_27 : f32 to vector<2x32xf32>
    %71 = arith.addf %70, %69 : vector<2x32xf32>
    %72 = arith.divf %70, %71 : vector<2x32xf32>
    %73 = vector.extract_strided_slice %53 {offsets = [0, 64], sizes = [2, 32], strides = [1, 1]} : vector<2x96xf32> to vector<2x32xf32>
    %74 = vector.extract_strided_slice %56 {offsets = [0, 64], sizes = [2, 32], strides = [1, 1]} : vector<2x96xf32> to vector<2x32xf32>
    %75 = arith.mulf %64, %74 : vector<2x32xf32>
    %76 = arith.addf %73, %75 : vector<2x32xf32>
    %77 = math.tanh %76 : vector<2x32xf32>
    %cst_28 = arith.constant 1.000000e+00 : f32
    %78 = vector.broadcast %cst_28 : f32 to vector<2x32xf32>
    %79 = arith.subf %78, %72 : vector<2x32xf32>
    %80 = arith.mulf %79, %77 : vector<2x32xf32>
    %81 = arith.mulf %72, %47 : vector<2x32xf32>
    %82 = arith.addf %80, %81 : vector<2x32xf32>
    %c2_29 = arith.constant 2 : index
    %c0_30 = arith.constant 0 : index
    %83 = vector.load %arg1[%c2_29, %c0_30] : memref<12x1xf32, #tpu.memory_space<vmem>>, vector<2x1xf32>
    %84 = vector.broadcast %83 : vector<2x1xf32> to vector<2x32xf32>
    %85 = arith.mulf %84, %82 : vector<2x32xf32>
    %cst_31 = arith.constant 1.000000e+00 : f32
    %86 = vector.broadcast %cst_31 : f32 to vector<2x1xf32>
    %87 = arith.subf %86, %83 : vector<2x1xf32>
    %88 = vector.broadcast %87 : vector<2x1xf32> to vector<2x32xf32>
    %89 = arith.mulf %88, %47 : vector<2x32xf32>
    %90 = arith.addf %85, %89 : vector<2x32xf32>
    %91 = vector.broadcast %83 : vector<2x1xf32> to vector<2x32xf32>
    %92 = arith.mulf %91, %82 : vector<2x32xf32>
    %c0_32 = arith.constant 0 : index
    %c1 = arith.constant 1 : index
    %c0_33 = arith.constant 0 : index
    %93 = vector.load %arg6[%c0_32, %c1, %c0_33] : memref<2x6x32xf32, #tpu.memory_space<vmem>>, vector<2x1x32xf32>
    %94 = vector.shape_cast %93 : vector<2x1x32xf32> to vector<2x32xf32>
    %95 = vector.shape_cast %92 : vector<2x32xf32> to vector<2x1x32xf32>
    tpu.vector_store %arg6[%c0_32, %c1, %c0_33], %95 {strides = array<i32>} : memref<2x6x32xf32, #tpu.memory_space<vmem>>, vector<2x1x32xf32>,
    %c4 = arith.constant 4 : index
    %c0_34 = arith.constant 0 : index
    %96 = vector.load %arg8[%c4, %c0_34] : memref<12x96xf32, #tpu.memory_space<vmem>>, vector<2x96xf32>
    %cst_35 = arith.constant dense<0.000000e+00> : vector<2x96xf32>
    %97 = tpu.matmul %90, %7, %cst_35 {dimension_numbers = #tpu.dot_dimension_numbers<[1], [0], [0], [1], [0, 0, 1, 1], [], []>} : vector<2x32xf32>, vector<32x96xf32>, vector<2x96xf32> -> vector<2x96xf32>
    %98 = vector.broadcast %8 : vector<1x96xf32> to vector<2x96xf32>
    %99 = arith.addf %97, %98 : vector<2x96xf32>
    %100 = vector.extract_strided_slice %96 {offsets = [0, 0], sizes = [2, 32], strides = [1, 1]} : vector<2x96xf32> to vector<2x32xf32>
    %101 = vector.extract_strided_slice %99 {offsets = [0, 0], sizes = [2, 32], strides = [1, 1]} : vector<2x96xf32> to vector<2x32xf32>
    %102 = arith.addf %100, %101 : vector<2x32xf32>
    %103 = arith.negf %102 : vector<2x32xf32>
    %104 = math.exp %103 : vector<2x32xf32>
    %cst_36 = arith.constant 1.000000e+00 : f32
    %105 = vector.broadcast %cst_36 : f32 to vector<2x32xf32>
    %106 = arith.addf %105, %104 : vector<2x32xf32>
    %107 = arith.divf %105, %106 : vector<2x32xf32>
    %108 = vector.extract_strided_slice %96 {offsets = [0, 32], sizes = [2, 32], strides = [1, 1]} : vector<2x96xf32> to vector<2x32xf32>
    %109 = vector.extract_strided_slice %99 {offsets = [0, 32], sizes = [2, 32], strides = [1, 1]} : vector<2x96xf32> to vector<2x32xf32>
    %110 = arith.addf %108, %109 : vector<2x32xf32>
    %111 = arith.negf %110 : vector<2x32xf32>
    %112 = math.exp %111 : vector<2x32xf32>
    %cst_37 = arith.constant 1.000000e+00 : f32
    %113 = vector.broadcast %cst_37 : f32 to vector<2x32xf32>
    %114 = arith.addf %113, %112 : vector<2x32xf32>
    %115 = arith.divf %113, %114 : vector<2x32xf32>
    %116 = vector.extract_strided_slice %96 {offsets = [0, 64], sizes = [2, 32], strides = [1, 1]} : vector<2x96xf32> to vector<2x32xf32>
    %117 = vector.extract_strided_slice %99 {offsets = [0, 64], sizes = [2, 32], strides = [1, 1]} : vector<2x96xf32> to vector<2x32xf32>
    %118 = arith.mulf %107, %117 : vector<2x32xf32>
    %119 = arith.addf %116, %118 : vector<2x32xf32>
    %120 = math.tanh %119 : vector<2x32xf32>
    %cst_38 = arith.constant 1.000000e+00 : f32
    %121 = vector.broadcast %cst_38 : f32 to vector<2x32xf32>
    %122 = arith.subf %121, %115 : vector<2x32xf32>
    %123 = arith.mulf %122, %120 : vector<2x32xf32>
    %124 = arith.mulf %115, %90 : vector<2x32xf32>
    %125 = arith.addf %123, %124 : vector<2x32xf32>
    %c4_39 = arith.constant 4 : index
    %c0_40 = arith.constant 0 : index
    %126 = vector.load %arg1[%c4_39, %c0_40] : memref<12x1xf32, #tpu.memory_space<vmem>>, vector<2x1xf32>
    %127 = vector.broadcast %126 : vector<2x1xf32> to vector<2x32xf32>
    %128 = arith.mulf %127, %125 : vector<2x32xf32>
    %cst_41 = arith.constant 1.000000e+00 : f32
    %129 = vector.broadcast %cst_41 : f32 to vector<2x1xf32>
    %130 = arith.subf %129, %126 : vector<2x1xf32>
    %131 = vector.broadcast %130 : vector<2x1xf32> to vector<2x32xf32>
    %132 = arith.mulf %131, %90 : vector<2x32xf32>
    %133 = arith.addf %128, %132 : vector<2x32xf32>
    %134 = vector.broadcast %126 : vector<2x1xf32> to vector<2x32xf32>
    %135 = arith.mulf %134, %125 : vector<2x32xf32>
    %c0_42 = arith.constant 0 : index
    %c2_43 = arith.constant 2 : index
    %c0_44 = arith.constant 0 : index
    %136 = vector.load %arg6[%c0_42, %c2_43, %c0_44] : memref<2x6x32xf32, #tpu.memory_space<vmem>>, vector<2x1x32xf32>
    %137 = vector.shape_cast %136 : vector<2x1x32xf32> to vector<2x32xf32>
    %138 = vector.shape_cast %135 : vector<2x32xf32> to vector<2x1x32xf32>
    tpu.vector_store %arg6[%c0_42, %c2_43, %c0_44], %138 {strides = array<i32>} : memref<2x6x32xf32, #tpu.memory_space<vmem>>, vector<2x1x32xf32>,
    %c6 = arith.constant 6 : index
    %c0_45 = arith.constant 0 : index
    %139 = vector.load %arg8[%c6, %c0_45] : memref<12x96xf32, #tpu.memory_space<vmem>>, vector<2x96xf32>
    %cst_46 = arith.constant dense<0.000000e+00> : vector<2x96xf32>
    %140 = tpu.matmul %133, %7, %cst_46 {dimension_numbers = #tpu.dot_dimension_numbers<[1], [0], [0], [1], [0, 0, 1, 1], [], []>} : vector<2x32xf32>, vector<32x96xf32>, vector<2x96xf32> -> vector<2x96xf32>
    %141 = vector.broadcast %8 : vector<1x96xf32> to vector<2x96xf32>
    %142 = arith.addf %140, %141 : vector<2x96xf32>
    %143 = vector.extract_strided_slice %139 {offsets = [0, 0], sizes = [2, 32], strides = [1, 1]} : vector<2x96xf32> to vector<2x32xf32>
    %144 = vector.extract_strided_slice %142 {offsets = [0, 0], sizes = [2, 32], strides = [1, 1]} : vector<2x96xf32> to vector<2x32xf32>
    %145 = arith.addf %143, %144 : vector<2x32xf32>
    %146 = arith.negf %145 : vector<2x32xf32>
    %147 = math.exp %146 : vector<2x32xf32>
    %cst_47 = arith.constant 1.000000e+00 : f32
    %148 = vector.broadcast %cst_47 : f32 to vector<2x32xf32>
    %149 = arith.addf %148, %147 : vector<2x32xf32>
    %150 = arith.divf %148, %149 : vector<2x32xf32>
    %151 = vector.extract_strided_slice %139 {offsets = [0, 32], sizes = [2, 32], strides = [1, 1]} : vector<2x96xf32> to vector<2x32xf32>
    %152 = vector.extract_strided_slice %142 {offsets = [0, 32], sizes = [2, 32], strides = [1, 1]} : vector<2x96xf32> to vector<2x32xf32>
    %153 = arith.addf %151, %152 : vector<2x32xf32>
    %154 = arith.negf %153 : vector<2x32xf32>
    %155 = math.exp %154 : vector<2x32xf32>
    %cst_48 = arith.constant 1.000000e+00 : f32
    %156 = vector.broadcast %cst_48 : f32 to vector<2x32xf32>
    %157 = arith.addf %156, %155 : vector<2x32xf32>
    %158 = arith.divf %156, %157 : vector<2x32xf32>
    %159 = vector.extract_strided_slice %139 {offsets = [0, 64], sizes = [2, 32], strides = [1, 1]} : vector<2x96xf32> to vector<2x32xf32>
    %160 = vector.extract_strided_slice %142 {offsets = [0, 64], sizes = [2, 32], strides = [1, 1]} : vector<2x96xf32> to vector<2x32xf32>
    %161 = arith.mulf %150, %160 : vector<2x32xf32>
    %162 = arith.addf %159, %161 : vector<2x32xf32>
    %163 = math.tanh %162 : vector<2x32xf32>
    %cst_49 = arith.constant 1.000000e+00 : f32
    %164 = vector.broadcast %cst_49 : f32 to vector<2x32xf32>
    %165 = arith.subf %164, %158 : vector<2x32xf32>
    %166 = arith.mulf %165, %163 : vector<2x32xf32>
    %167 = arith.mulf %158, %133 : vector<2x32xf32>
    %168 = arith.addf %166, %167 : vector<2x32xf32>
    %c6_50 = arith.constant 6 : index
    %c0_51 = arith.constant 0 : index
    %169 = vector.load %arg1[%c6_50, %c0_51] : memref<12x1xf32, #tpu.memory_space<vmem>>, vector<2x1xf32>
    %170 = vector.broadcast %169 : vector<2x1xf32> to vector<2x32xf32>
    %171 = arith.mulf %170, %168 : vector<2x32xf32>
    %cst_52 = arith.constant 1.000000e+00 : f32
    %172 = vector.broadcast %cst_52 : f32 to vector<2x1xf32>
    %173 = arith.subf %172, %169 : vector<2x1xf32>
    %174 = vector.broadcast %173 : vector<2x1xf32> to vector<2x32xf32>
    %175 = arith.mulf %174, %133 : vector<2x32xf32>
    %176 = arith.addf %171, %175 : vector<2x32xf32>
    %177 = vector.broadcast %169 : vector<2x1xf32> to vector<2x32xf32>
    %178 = arith.mulf %177, %168 : vector<2x32xf32>
    %c0_53 = arith.constant 0 : index
    %c3 = arith.constant 3 : index
    %c0_54 = arith.constant 0 : index
    %179 = vector.load %arg6[%c0_53, %c3, %c0_54] : memref<2x6x32xf32, #tpu.memory_space<vmem>>, vector<2x1x32xf32>
    %180 = vector.shape_cast %179 : vector<2x1x32xf32> to vector<2x32xf32>
    %181 = vector.shape_cast %178 : vector<2x32xf32> to vector<2x1x32xf32>
    tpu.vector_store %arg6[%c0_53, %c3, %c0_54], %181 {strides = array<i32>} : memref<2x6x32xf32, #tpu.memory_space<vmem>>, vector<2x1x32xf32>,
    %c8 = arith.constant 8 : index
    %c0_55 = arith.constant 0 : index
    %182 = vector.load %arg8[%c8, %c0_55] : memref<12x96xf32, #tpu.memory_space<vmem>>, vector<2x96xf32>
    %cst_56 = arith.constant dense<0.000000e+00> : vector<2x96xf32>
    %183 = tpu.matmul %176, %7, %cst_56 {dimension_numbers = #tpu.dot_dimension_numbers<[1], [0], [0], [1], [0, 0, 1, 1], [], []>} : vector<2x32xf32>, vector<32x96xf32>, vector<2x96xf32> -> vector<2x96xf32>
    %184 = vector.broadcast %8 : vector<1x96xf32> to vector<2x96xf32>
    %185 = arith.addf %183, %184 : vector<2x96xf32>
    %186 = vector.extract_strided_slice %182 {offsets = [0, 0], sizes = [2, 32], strides = [1, 1]} : vector<2x96xf32> to vector<2x32xf32>
    %187 = vector.extract_strided_slice %185 {offsets = [0, 0], sizes = [2, 32], strides = [1, 1]} : vector<2x96xf32> to vector<2x32xf32>
    %188 = arith.addf %186, %187 : vector<2x32xf32>
    %189 = arith.negf %188 : vector<2x32xf32>
    %190 = math.exp %189 : vector<2x32xf32>
    %cst_57 = arith.constant 1.000000e+00 : f32
    %191 = vector.broadcast %cst_57 : f32 to vector<2x32xf32>
    %192 = arith.addf %191, %190 : vector<2x32xf32>
    %193 = arith.divf %191, %192 : vector<2x32xf32>
    %194 = vector.extract_strided_slice %182 {offsets = [0, 32], sizes = [2, 32], strides = [1, 1]} : vector<2x96xf32> to vector<2x32xf32>
    %195 = vector.extract_strided_slice %185 {offsets = [0, 32], sizes = [2, 32], strides = [1, 1]} : vector<2x96xf32> to vector<2x32xf32>
    %196 = arith.addf %194, %195 : vector<2x32xf32>
    %197 = arith.negf %196 : vector<2x32xf32>
    %198 = math.exp %197 : vector<2x32xf32>
    %cst_58 = arith.constant 1.000000e+00 : f32
    %199 = vector.broadcast %cst_58 : f32 to vector<2x32xf32>
    %200 = arith.addf %199, %198 : vector<2x32xf32>
    %201 = arith.divf %199, %200 : vector<2x32xf32>
    %202 = vector.extract_strided_slice %182 {offsets = [0, 64], sizes = [2, 32], strides = [1, 1]} : vector<2x96xf32> to vector<2x32xf32>
    %203 = vector.extract_strided_slice %185 {offsets = [0, 64], sizes = [2, 32], strides = [1, 1]} : vector<2x96xf32> to vector<2x32xf32>
    %204 = arith.mulf %193, %203 : vector<2x32xf32>
    %205 = arith.addf %202, %204 : vector<2x32xf32>
    %206 = math.tanh %205 : vector<2x32xf32>
    %cst_59 = arith.constant 1.000000e+00 : f32
    %207 = vector.broadcast %cst_59 : f32 to vector<2x32xf32>
    %208 = arith.subf %207, %201 : vector<2x32xf32>
    %209 = arith.mulf %208, %206 : vector<2x32xf32>
    %210 = arith.mulf %201, %176 : vector<2x32xf32>
    %211 = arith.addf %209, %210 : vector<2x32xf32>
    %c8_60 = arith.constant 8 : index
    %c0_61 = arith.constant 0 : index
    %212 = vector.load %arg1[%c8_60, %c0_61] : memref<12x1xf32, #tpu.memory_space<vmem>>, vector<2x1xf32>
    %213 = vector.broadcast %212 : vector<2x1xf32> to vector<2x32xf32>
    %214 = arith.mulf %213, %211 : vector<2x32xf32>
    %cst_62 = arith.constant 1.000000e+00 : f32
    %215 = vector.broadcast %cst_62 : f32 to vector<2x1xf32>
    %216 = arith.subf %215, %212 : vector<2x1xf32>
    %217 = vector.broadcast %216 : vector<2x1xf32> to vector<2x32xf32>
    %218 = arith.mulf %217, %176 : vector<2x32xf32>
    %219 = arith.addf %214, %218 : vector<2x32xf32>
    %220 = vector.broadcast %212 : vector<2x1xf32> to vector<2x32xf32>
    %221 = arith.mulf %220, %211 : vector<2x32xf32>
    %c0_63 = arith.constant 0 : index
    %c4_64 = arith.constant 4 : index
    %c0_65 = arith.constant 0 : index
    %222 = vector.load %arg6[%c0_63, %c4_64, %c0_65] : memref<2x6x32xf32, #tpu.memory_space<vmem>>, vector<2x1x32xf32>
    %223 = vector.shape_cast %222 : vector<2x1x32xf32> to vector<2x32xf32>
    %224 = vector.shape_cast %221 : vector<2x32xf32> to vector<2x1x32xf32>
    tpu.vector_store %arg6[%c0_63, %c4_64, %c0_65], %224 {strides = array<i32>} : memref<2x6x32xf32, #tpu.memory_space<vmem>>, vector<2x1x32xf32>,
    %c10 = arith.constant 10 : index
    %c0_66 = arith.constant 0 : index
    %225 = vector.load %arg8[%c10, %c0_66] : memref<12x96xf32, #tpu.memory_space<vmem>>, vector<2x96xf32>
    %cst_67 = arith.constant dense<0.000000e+00> : vector<2x96xf32>
    %226 = tpu.matmul %219, %7, %cst_67 {dimension_numbers = #tpu.dot_dimension_numbers<[1], [0], [0], [1], [0, 0, 1, 1], [], []>} : vector<2x32xf32>, vector<32x96xf32>, vector<2x96xf32> -> vector<2x96xf32>
    %227 = vector.broadcast %8 : vector<1x96xf32> to vector<2x96xf32>
    %228 = arith.addf %226, %227 : vector<2x96xf32>
    %229 = vector.extract_strided_slice %225 {offsets = [0, 0], sizes = [2, 32], strides = [1, 1]} : vector<2x96xf32> to vector<2x32xf32>
    %230 = vector.extract_strided_slice %228 {offsets = [0, 0], sizes = [2, 32], strides = [1, 1]} : vector<2x96xf32> to vector<2x32xf32>
    %231 = arith.addf %229, %230 : vector<2x32xf32>
    %232 = arith.negf %231 : vector<2x32xf32>
    %233 = math.exp %232 : vector<2x32xf32>
    %cst_68 = arith.constant 1.000000e+00 : f32
    %234 = vector.broadcast %cst_68 : f32 to vector<2x32xf32>
    %235 = arith.addf %234, %233 : vector<2x32xf32>
    %236 = arith.divf %234, %235 : vector<2x32xf32>
    %237 = vector.extract_strided_slice %225 {offsets = [0, 32], sizes = [2, 32], strides = [1, 1]} : vector<2x96xf32> to vector<2x32xf32>
    %238 = vector.extract_strided_slice %228 {offsets = [0, 32], sizes = [2, 32], strides = [1, 1]} : vector<2x96xf32> to vector<2x32xf32>
    %239 = arith.addf %237, %238 : vector<2x32xf32>
    %240 = arith.negf %239 : vector<2x32xf32>
    %241 = math.exp %240 : vector<2x32xf32>
    %cst_69 = arith.constant 1.000000e+00 : f32
    %242 = vector.broadcast %cst_69 : f32 to vector<2x32xf32>
    %243 = arith.addf %242, %241 : vector<2x32xf32>
    %244 = arith.divf %242, %243 : vector<2x32xf32>
    %245 = vector.extract_strided_slice %225 {offsets = [0, 64], sizes = [2, 32], strides = [1, 1]} : vector<2x96xf32> to vector<2x32xf32>
    %246 = vector.extract_strided_slice %228 {offsets = [0, 64], sizes = [2, 32], strides = [1, 1]} : vector<2x96xf32> to vector<2x32xf32>
    %247 = arith.mulf %236, %246 : vector<2x32xf32>
    %248 = arith.addf %245, %247 : vector<2x32xf32>
    %249 = math.tanh %248 : vector<2x32xf32>
    %cst_70 = arith.constant 1.000000e+00 : f32
    %250 = vector.broadcast %cst_70 : f32 to vector<2x32xf32>
    %251 = arith.subf %250, %244 : vector<2x32xf32>
    %252 = arith.mulf %251, %249 : vector<2x32xf32>
    %253 = arith.mulf %244, %219 : vector<2x32xf32>
    %254 = arith.addf %252, %253 : vector<2x32xf32>
    %c10_71 = arith.constant 10 : index
    %c0_72 = arith.constant 0 : index
    %255 = vector.load %arg1[%c10_71, %c0_72] : memref<12x1xf32, #tpu.memory_space<vmem>>, vector<2x1xf32>
    %256 = vector.broadcast %255 : vector<2x1xf32> to vector<2x32xf32>
    %257 = arith.mulf %256, %254 : vector<2x32xf32>
    %cst_73 = arith.constant 1.000000e+00 : f32
    %258 = vector.broadcast %cst_73 : f32 to vector<2x1xf32>
    %259 = arith.subf %258, %255 : vector<2x1xf32>
    %260 = vector.broadcast %259 : vector<2x1xf32> to vector<2x32xf32>
    %261 = arith.mulf %260, %219 : vector<2x32xf32>
    %262 = arith.addf %257, %261 : vector<2x32xf32>
    %263 = vector.broadcast %255 : vector<2x1xf32> to vector<2x32xf32>
    %264 = arith.mulf %263, %254 : vector<2x32xf32>
    %c0_74 = arith.constant 0 : index
    %c5 = arith.constant 5 : index
    %c0_75 = arith.constant 0 : index
    %265 = vector.load %arg6[%c0_74, %c5, %c0_75] : memref<2x6x32xf32, #tpu.memory_space<vmem>>, vector<2x1x32xf32>
    %266 = vector.shape_cast %265 : vector<2x1x32xf32> to vector<2x32xf32>
    %267 = vector.shape_cast %264 : vector<2x32xf32> to vector<2x1x32xf32>
    tpu.vector_store %arg6[%c0_74, %c5, %c0_75], %267 {strides = array<i32>} : memref<2x6x32xf32, #tpu.memory_space<vmem>>, vector<2x1x32xf32>,
    %c0_76 = arith.constant 0 : index
    %c0_77 = arith.constant 0 : index
    %268 = vector.load %arg7[%c0_76, %c0_77] : memref<2x32xf32, #tpu.memory_space<vmem>>, vector<2x32xf32>
    tpu.vector_store %arg7[%c0_76, %c0_77], %262 {strides = array<i32>} : memref<2x32xf32, #tpu.memory_space<vmem>>, vector<2x32xf32>,
    return
  }
}

module attributes {stable_mosaic.version = 11 : i64} {
  func.func @_bigru_encoder_kernel(%arg0: memref<16x32xf32, #tpu.memory_space<vmem>>, %arg1: memref<16x1xf32, #tpu.memory_space<vmem>>, %arg2: memref<32x96xf32, #tpu.memory_space<vmem>>, %arg3: memref<32x96xf32, #tpu.memory_space<vmem>>, %arg4: memref<1x96xf32, #tpu.memory_space<vmem>>, %arg5: memref<1x96xf32, #tpu.memory_space<vmem>>, %arg6: memref<32x96xf32, #tpu.memory_space<vmem>>, %arg7: memref<32x96xf32, #tpu.memory_space<vmem>>, %arg8: memref<1x96xf32, #tpu.memory_space<vmem>>, %arg9: memref<1x96xf32, #tpu.memory_space<vmem>>, %arg10: memref<2x8x32xf32, #tpu.memory_space<vmem>>, %arg11: memref<2x32xf32, #tpu.memory_space<vmem>>, %arg12: memref<16x96xf32, #tpu.memory_space<vmem>>, %arg13: memref<16x96xf32, #tpu.memory_space<vmem>>) attributes {dimension_semantics = [], scalar_prefetch = 0 : i64, scratch_operands = 2 : i64, tpu.core_type = #tpu.core_type<tc>} {
    %c0 = arith.constant 0 : index
    %c0_0 = arith.constant 0 : index
    %0 = vector.load %arg0[%c0, %c0_0] : memref<16x32xf32, #tpu.memory_space<vmem>>, vector<16x32xf32>
    %c0_1 = arith.constant 0 : index
    %c0_2 = arith.constant 0 : index
    %1 = vector.load %arg2[%c0_1, %c0_2] : memref<32x96xf32, #tpu.memory_space<vmem>>, vector<32x96xf32>
    %cst = arith.constant dense<0.000000e+00> : vector<16x96xf32>
    %2 = tpu.matmul %0, %1, %cst {dimension_numbers = #tpu.dot_dimension_numbers<[1], [0], [0], [1], [0, 0, 1, 1], [], []>} : vector<16x32xf32>, vector<32x96xf32>, vector<16x96xf32> -> vector<16x96xf32>
    %c0_3 = arith.constant 0 : index
    %c0_4 = arith.constant 0 : index
    %3 = vector.load %arg4[%c0_3, %c0_4] : memref<1x96xf32, #tpu.memory_space<vmem>>, vector<1x96xf32>
    %4 = vector.broadcast %3 : vector<1x96xf32> to vector<16x96xf32>
    %5 = arith.addf %2, %4 : vector<16x96xf32>
    %c0_5 = arith.constant 0 : index
    %c0_6 = arith.constant 0 : index
    %6 = vector.load %arg12[%c0_5, %c0_6] : memref<16x96xf32, #tpu.memory_space<vmem>>, vector<16x96xf32>
    tpu.vector_store %arg12[%c0_5, %c0_6], %5 {strides = array<i32>} : memref<16x96xf32, #tpu.memory_space<vmem>>, vector<16x96xf32>,
    %c0_7 = arith.constant 0 : index
    %c0_8 = arith.constant 0 : index
    %7 = vector.load %arg6[%c0_7, %c0_8] : memref<32x96xf32, #tpu.memory_space<vmem>>, vector<32x96xf32>
    %cst_9 = arith.constant dense<0.000000e+00> : vector<16x96xf32>
    %8 = tpu.matmul %0, %7, %cst_9 {dimension_numbers = #tpu.dot_dimension_numbers<[1], [0], [0], [1], [0, 0, 1, 1], [], []>} : vector<16x32xf32>, vector<32x96xf32>, vector<16x96xf32> -> vector<16x96xf32>
    %c0_10 = arith.constant 0 : index
    %c0_11 = arith.constant 0 : index
    %9 = vector.load %arg8[%c0_10, %c0_11] : memref<1x96xf32, #tpu.memory_space<vmem>>, vector<1x96xf32>
    %10 = vector.broadcast %9 : vector<1x96xf32> to vector<16x96xf32>
    %11 = arith.addf %8, %10 : vector<16x96xf32>
    %c0_12 = arith.constant 0 : index
    %c0_13 = arith.constant 0 : index
    %12 = vector.load %arg13[%c0_12, %c0_13] : memref<16x96xf32, #tpu.memory_space<vmem>>, vector<16x96xf32>
    tpu.vector_store %arg13[%c0_12, %c0_13], %11 {strides = array<i32>} : memref<16x96xf32, #tpu.memory_space<vmem>>, vector<16x96xf32>,
    %c0_14 = arith.constant 0 : index
    %c0_15 = arith.constant 0 : index
    %13 = vector.load %arg3[%c0_14, %c0_15] : memref<32x96xf32, #tpu.memory_space<vmem>>, vector<32x96xf32>
    %c0_16 = arith.constant 0 : index
    %c0_17 = arith.constant 0 : index
    %14 = vector.load %arg5[%c0_16, %c0_17] : memref<1x96xf32, #tpu.memory_space<vmem>>, vector<1x96xf32>
    %c0_18 = arith.constant 0 : index
    %c0_19 = arith.constant 0 : index
    %15 = vector.load %arg7[%c0_18, %c0_19] : memref<32x96xf32, #tpu.memory_space<vmem>>, vector<32x96xf32>
    %c0_20 = arith.constant 0 : index
    %c0_21 = arith.constant 0 : index
    %16 = vector.load %arg9[%c0_20, %c0_21] : memref<1x96xf32, #tpu.memory_space<vmem>>, vector<1x96xf32>
    %cst_22 = arith.constant 0.000000e+00 : f32
    %17 = vector.broadcast %cst_22 : f32 to vector<2x32xf32>
    %c0_23 = arith.constant 0 : index
    %c0_24 = arith.constant 0 : index
    %18 = vector.load %arg12[%c0_23, %c0_24] : memref<16x96xf32, #tpu.memory_space<vmem>>, vector<2x96xf32>
    %cst_25 = arith.constant dense<0.000000e+00> : vector<2x96xf32>
    %19 = tpu.matmul %17, %13, %cst_25 {dimension_numbers = #tpu.dot_dimension_numbers<[1], [0], [0], [1], [0, 0, 1, 1], [], []>} : vector<2x32xf32>, vector<32x96xf32>, vector<2x96xf32> -> vector<2x96xf32>
    %20 = vector.broadcast %14 : vector<1x96xf32> to vector<2x96xf32>
    %21 = arith.addf %19, %20 : vector<2x96xf32>
    %22 = vector.extract_strided_slice %18 {offsets = [0, 0], sizes = [2, 32], strides = [1, 1]} : vector<2x96xf32> to vector<2x32xf32>
    %23 = vector.extract_strided_slice %21 {offsets = [0, 0], sizes = [2, 32], strides = [1, 1]} : vector<2x96xf32> to vector<2x32xf32>
    %24 = arith.addf %22, %23 : vector<2x32xf32>
    %25 = arith.negf %24 : vector<2x32xf32>
    %26 = math.exp %25 : vector<2x32xf32>
    %cst_26 = arith.constant 1.000000e+00 : f32
    %27 = vector.broadcast %cst_26 : f32 to vector<2x32xf32>
    %28 = arith.addf %27, %26 : vector<2x32xf32>
    %29 = arith.divf %27, %28 : vector<2x32xf32>
    %30 = vector.extract_strided_slice %18 {offsets = [0, 32], sizes = [2, 32], strides = [1, 1]} : vector<2x96xf32> to vector<2x32xf32>
    %31 = vector.extract_strided_slice %21 {offsets = [0, 32], sizes = [2, 32], strides = [1, 1]} : vector<2x96xf32> to vector<2x32xf32>
    %32 = arith.addf %30, %31 : vector<2x32xf32>
    %33 = arith.negf %32 : vector<2x32xf32>
    %34 = math.exp %33 : vector<2x32xf32>
    %cst_27 = arith.constant 1.000000e+00 : f32
    %35 = vector.broadcast %cst_27 : f32 to vector<2x32xf32>
    %36 = arith.addf %35, %34 : vector<2x32xf32>
    %37 = arith.divf %35, %36 : vector<2x32xf32>
    %38 = vector.extract_strided_slice %18 {offsets = [0, 64], sizes = [2, 32], strides = [1, 1]} : vector<2x96xf32> to vector<2x32xf32>
    %39 = vector.extract_strided_slice %21 {offsets = [0, 64], sizes = [2, 32], strides = [1, 1]} : vector<2x96xf32> to vector<2x32xf32>
    %40 = arith.mulf %29, %39 : vector<2x32xf32>
    %41 = arith.addf %38, %40 : vector<2x32xf32>
    %42 = math.tanh %41 : vector<2x32xf32>
    %cst_28 = arith.constant 1.000000e+00 : f32
    %43 = vector.broadcast %cst_28 : f32 to vector<2x32xf32>
    %44 = arith.subf %43, %37 : vector<2x32xf32>
    %45 = arith.mulf %44, %42 : vector<2x32xf32>
    %46 = arith.mulf %37, %17 : vector<2x32xf32>
    %47 = arith.addf %45, %46 : vector<2x32xf32>
    %c0_29 = arith.constant 0 : index
    %c0_30 = arith.constant 0 : index
    %48 = vector.load %arg1[%c0_29, %c0_30] : memref<16x1xf32, #tpu.memory_space<vmem>>, vector<2x1xf32>
    %49 = vector.broadcast %48 : vector<2x1xf32> to vector<2x32xf32>
    %50 = arith.mulf %49, %47 : vector<2x32xf32>
    %cst_31 = arith.constant 1.000000e+00 : f32
    %51 = vector.broadcast %cst_31 : f32 to vector<2x1xf32>
    %52 = arith.subf %51, %48 : vector<2x1xf32>
    %53 = vector.broadcast %52 : vector<2x1xf32> to vector<2x32xf32>
    %54 = arith.mulf %53, %17 : vector<2x32xf32>
    %55 = arith.addf %50, %54 : vector<2x32xf32>
    %56 = vector.broadcast %48 : vector<2x1xf32> to vector<2x32xf32>
    %57 = arith.mulf %56, %47 : vector<2x32xf32>
    %c0_32 = arith.constant 0 : index
    %c0_33 = arith.constant 0 : index
    %c0_34 = arith.constant 0 : index
    %58 = vector.load %arg10[%c0_32, %c0_33, %c0_34] : memref<2x8x32xf32, #tpu.memory_space<vmem>>, vector<2x1x32xf32>
    %59 = vector.shape_cast %58 : vector<2x1x32xf32> to vector<2x32xf32>
    %60 = vector.shape_cast %57 : vector<2x32xf32> to vector<2x1x32xf32>
    tpu.vector_store %arg10[%c0_32, %c0_33, %c0_34], %60 {strides = array<i32>} : memref<2x8x32xf32, #tpu.memory_space<vmem>>, vector<2x1x32xf32>,
    %c2 = arith.constant 2 : index
    %c0_35 = arith.constant 0 : index
    %61 = vector.load %arg12[%c2, %c0_35] : memref<16x96xf32, #tpu.memory_space<vmem>>, vector<2x96xf32>
    %cst_36 = arith.constant dense<0.000000e+00> : vector<2x96xf32>
    %62 = tpu.matmul %55, %13, %cst_36 {dimension_numbers = #tpu.dot_dimension_numbers<[1], [0], [0], [1], [0, 0, 1, 1], [], []>} : vector<2x32xf32>, vector<32x96xf32>, vector<2x96xf32> -> vector<2x96xf32>
    %63 = vector.broadcast %14 : vector<1x96xf32> to vector<2x96xf32>
    %64 = arith.addf %62, %63 : vector<2x96xf32>
    %65 = vector.extract_strided_slice %61 {offsets = [0, 0], sizes = [2, 32], strides = [1, 1]} : vector<2x96xf32> to vector<2x32xf32>
    %66 = vector.extract_strided_slice %64 {offsets = [0, 0], sizes = [2, 32], strides = [1, 1]} : vector<2x96xf32> to vector<2x32xf32>
    %67 = arith.addf %65, %66 : vector<2x32xf32>
    %68 = arith.negf %67 : vector<2x32xf32>
    %69 = math.exp %68 : vector<2x32xf32>
    %cst_37 = arith.constant 1.000000e+00 : f32
    %70 = vector.broadcast %cst_37 : f32 to vector<2x32xf32>
    %71 = arith.addf %70, %69 : vector<2x32xf32>
    %72 = arith.divf %70, %71 : vector<2x32xf32>
    %73 = vector.extract_strided_slice %61 {offsets = [0, 32], sizes = [2, 32], strides = [1, 1]} : vector<2x96xf32> to vector<2x32xf32>
    %74 = vector.extract_strided_slice %64 {offsets = [0, 32], sizes = [2, 32], strides = [1, 1]} : vector<2x96xf32> to vector<2x32xf32>
    %75 = arith.addf %73, %74 : vector<2x32xf32>
    %76 = arith.negf %75 : vector<2x32xf32>
    %77 = math.exp %76 : vector<2x32xf32>
    %cst_38 = arith.constant 1.000000e+00 : f32
    %78 = vector.broadcast %cst_38 : f32 to vector<2x32xf32>
    %79 = arith.addf %78, %77 : vector<2x32xf32>
    %80 = arith.divf %78, %79 : vector<2x32xf32>
    %81 = vector.extract_strided_slice %61 {offsets = [0, 64], sizes = [2, 32], strides = [1, 1]} : vector<2x96xf32> to vector<2x32xf32>
    %82 = vector.extract_strided_slice %64 {offsets = [0, 64], sizes = [2, 32], strides = [1, 1]} : vector<2x96xf32> to vector<2x32xf32>
    %83 = arith.mulf %72, %82 : vector<2x32xf32>
    %84 = arith.addf %81, %83 : vector<2x32xf32>
    %85 = math.tanh %84 : vector<2x32xf32>
    %cst_39 = arith.constant 1.000000e+00 : f32
    %86 = vector.broadcast %cst_39 : f32 to vector<2x32xf32>
    %87 = arith.subf %86, %80 : vector<2x32xf32>
    %88 = arith.mulf %87, %85 : vector<2x32xf32>
    %89 = arith.mulf %80, %55 : vector<2x32xf32>
    %90 = arith.addf %88, %89 : vector<2x32xf32>
    %c2_40 = arith.constant 2 : index
    %c0_41 = arith.constant 0 : index
    %91 = vector.load %arg1[%c2_40, %c0_41] : memref<16x1xf32, #tpu.memory_space<vmem>>, vector<2x1xf32>
    %92 = vector.broadcast %91 : vector<2x1xf32> to vector<2x32xf32>
    %93 = arith.mulf %92, %90 : vector<2x32xf32>
    %cst_42 = arith.constant 1.000000e+00 : f32
    %94 = vector.broadcast %cst_42 : f32 to vector<2x1xf32>
    %95 = arith.subf %94, %91 : vector<2x1xf32>
    %96 = vector.broadcast %95 : vector<2x1xf32> to vector<2x32xf32>
    %97 = arith.mulf %96, %55 : vector<2x32xf32>
    %98 = arith.addf %93, %97 : vector<2x32xf32>
    %99 = vector.broadcast %91 : vector<2x1xf32> to vector<2x32xf32>
    %100 = arith.mulf %99, %90 : vector<2x32xf32>
    %c0_43 = arith.constant 0 : index
    %c1 = arith.constant 1 : index
    %c0_44 = arith.constant 0 : index
    %101 = vector.load %arg10[%c0_43, %c1, %c0_44] : memref<2x8x32xf32, #tpu.memory_space<vmem>>, vector<2x1x32xf32>
    %102 = vector.shape_cast %101 : vector<2x1x32xf32> to vector<2x32xf32>
    %103 = vector.shape_cast %100 : vector<2x32xf32> to vector<2x1x32xf32>
    tpu.vector_store %arg10[%c0_43, %c1, %c0_44], %103 {strides = array<i32>} : memref<2x8x32xf32, #tpu.memory_space<vmem>>, vector<2x1x32xf32>,
    %c4 = arith.constant 4 : index
    %c0_45 = arith.constant 0 : index
    %104 = vector.load %arg12[%c4, %c0_45] : memref<16x96xf32, #tpu.memory_space<vmem>>, vector<2x96xf32>
    %cst_46 = arith.constant dense<0.000000e+00> : vector<2x96xf32>
    %105 = tpu.matmul %98, %13, %cst_46 {dimension_numbers = #tpu.dot_dimension_numbers<[1], [0], [0], [1], [0, 0, 1, 1], [], []>} : vector<2x32xf32>, vector<32x96xf32>, vector<2x96xf32> -> vector<2x96xf32>
    %106 = vector.broadcast %14 : vector<1x96xf32> to vector<2x96xf32>
    %107 = arith.addf %105, %106 : vector<2x96xf32>
    %108 = vector.extract_strided_slice %104 {offsets = [0, 0], sizes = [2, 32], strides = [1, 1]} : vector<2x96xf32> to vector<2x32xf32>
    %109 = vector.extract_strided_slice %107 {offsets = [0, 0], sizes = [2, 32], strides = [1, 1]} : vector<2x96xf32> to vector<2x32xf32>
    %110 = arith.addf %108, %109 : vector<2x32xf32>
    %111 = arith.negf %110 : vector<2x32xf32>
    %112 = math.exp %111 : vector<2x32xf32>
    %cst_47 = arith.constant 1.000000e+00 : f32
    %113 = vector.broadcast %cst_47 : f32 to vector<2x32xf32>
    %114 = arith.addf %113, %112 : vector<2x32xf32>
    %115 = arith.divf %113, %114 : vector<2x32xf32>
    %116 = vector.extract_strided_slice %104 {offsets = [0, 32], sizes = [2, 32], strides = [1, 1]} : vector<2x96xf32> to vector<2x32xf32>
    %117 = vector.extract_strided_slice %107 {offsets = [0, 32], sizes = [2, 32], strides = [1, 1]} : vector<2x96xf32> to vector<2x32xf32>
    %118 = arith.addf %116, %117 : vector<2x32xf32>
    %119 = arith.negf %118 : vector<2x32xf32>
    %120 = math.exp %119 : vector<2x32xf32>
    %cst_48 = arith.constant 1.000000e+00 : f32
    %121 = vector.broadcast %cst_48 : f32 to vector<2x32xf32>
    %122 = arith.addf %121, %120 : vector<2x32xf32>
    %123 = arith.divf %121, %122 : vector<2x32xf32>
    %124 = vector.extract_strided_slice %104 {offsets = [0, 64], sizes = [2, 32], strides = [1, 1]} : vector<2x96xf32> to vector<2x32xf32>
    %125 = vector.extract_strided_slice %107 {offsets = [0, 64], sizes = [2, 32], strides = [1, 1]} : vector<2x96xf32> to vector<2x32xf32>
    %126 = arith.mulf %115, %125 : vector<2x32xf32>
    %127 = arith.addf %124, %126 : vector<2x32xf32>
    %128 = math.tanh %127 : vector<2x32xf32>
    %cst_49 = arith.constant 1.000000e+00 : f32
    %129 = vector.broadcast %cst_49 : f32 to vector<2x32xf32>
    %130 = arith.subf %129, %123 : vector<2x32xf32>
    %131 = arith.mulf %130, %128 : vector<2x32xf32>
    %132 = arith.mulf %123, %98 : vector<2x32xf32>
    %133 = arith.addf %131, %132 : vector<2x32xf32>
    %c4_50 = arith.constant 4 : index
    %c0_51 = arith.constant 0 : index
    %134 = vector.load %arg1[%c4_50, %c0_51] : memref<16x1xf32, #tpu.memory_space<vmem>>, vector<2x1xf32>
    %135 = vector.broadcast %134 : vector<2x1xf32> to vector<2x32xf32>
    %136 = arith.mulf %135, %133 : vector<2x32xf32>
    %cst_52 = arith.constant 1.000000e+00 : f32
    %137 = vector.broadcast %cst_52 : f32 to vector<2x1xf32>
    %138 = arith.subf %137, %134 : vector<2x1xf32>
    %139 = vector.broadcast %138 : vector<2x1xf32> to vector<2x32xf32>
    %140 = arith.mulf %139, %98 : vector<2x32xf32>
    %141 = arith.addf %136, %140 : vector<2x32xf32>
    %142 = vector.broadcast %134 : vector<2x1xf32> to vector<2x32xf32>
    %143 = arith.mulf %142, %133 : vector<2x32xf32>
    %c0_53 = arith.constant 0 : index
    %c2_54 = arith.constant 2 : index
    %c0_55 = arith.constant 0 : index
    %144 = vector.load %arg10[%c0_53, %c2_54, %c0_55] : memref<2x8x32xf32, #tpu.memory_space<vmem>>, vector<2x1x32xf32>
    %145 = vector.shape_cast %144 : vector<2x1x32xf32> to vector<2x32xf32>
    %146 = vector.shape_cast %143 : vector<2x32xf32> to vector<2x1x32xf32>
    tpu.vector_store %arg10[%c0_53, %c2_54, %c0_55], %146 {strides = array<i32>} : memref<2x8x32xf32, #tpu.memory_space<vmem>>, vector<2x1x32xf32>,
    %c6 = arith.constant 6 : index
    %c0_56 = arith.constant 0 : index
    %147 = vector.load %arg12[%c6, %c0_56] : memref<16x96xf32, #tpu.memory_space<vmem>>, vector<2x96xf32>
    %cst_57 = arith.constant dense<0.000000e+00> : vector<2x96xf32>
    %148 = tpu.matmul %141, %13, %cst_57 {dimension_numbers = #tpu.dot_dimension_numbers<[1], [0], [0], [1], [0, 0, 1, 1], [], []>} : vector<2x32xf32>, vector<32x96xf32>, vector<2x96xf32> -> vector<2x96xf32>
    %149 = vector.broadcast %14 : vector<1x96xf32> to vector<2x96xf32>
    %150 = arith.addf %148, %149 : vector<2x96xf32>
    %151 = vector.extract_strided_slice %147 {offsets = [0, 0], sizes = [2, 32], strides = [1, 1]} : vector<2x96xf32> to vector<2x32xf32>
    %152 = vector.extract_strided_slice %150 {offsets = [0, 0], sizes = [2, 32], strides = [1, 1]} : vector<2x96xf32> to vector<2x32xf32>
    %153 = arith.addf %151, %152 : vector<2x32xf32>
    %154 = arith.negf %153 : vector<2x32xf32>
    %155 = math.exp %154 : vector<2x32xf32>
    %cst_58 = arith.constant 1.000000e+00 : f32
    %156 = vector.broadcast %cst_58 : f32 to vector<2x32xf32>
    %157 = arith.addf %156, %155 : vector<2x32xf32>
    %158 = arith.divf %156, %157 : vector<2x32xf32>
    %159 = vector.extract_strided_slice %147 {offsets = [0, 32], sizes = [2, 32], strides = [1, 1]} : vector<2x96xf32> to vector<2x32xf32>
    %160 = vector.extract_strided_slice %150 {offsets = [0, 32], sizes = [2, 32], strides = [1, 1]} : vector<2x96xf32> to vector<2x32xf32>
    %161 = arith.addf %159, %160 : vector<2x32xf32>
    %162 = arith.negf %161 : vector<2x32xf32>
    %163 = math.exp %162 : vector<2x32xf32>
    %cst_59 = arith.constant 1.000000e+00 : f32
    %164 = vector.broadcast %cst_59 : f32 to vector<2x32xf32>
    %165 = arith.addf %164, %163 : vector<2x32xf32>
    %166 = arith.divf %164, %165 : vector<2x32xf32>
    %167 = vector.extract_strided_slice %147 {offsets = [0, 64], sizes = [2, 32], strides = [1, 1]} : vector<2x96xf32> to vector<2x32xf32>
    %168 = vector.extract_strided_slice %150 {offsets = [0, 64], sizes = [2, 32], strides = [1, 1]} : vector<2x96xf32> to vector<2x32xf32>
    %169 = arith.mulf %158, %168 : vector<2x32xf32>
    %170 = arith.addf %167, %169 : vector<2x32xf32>
    %171 = math.tanh %170 : vector<2x32xf32>
    %cst_60 = arith.constant 1.000000e+00 : f32
    %172 = vector.broadcast %cst_60 : f32 to vector<2x32xf32>
    %173 = arith.subf %172, %166 : vector<2x32xf32>
    %174 = arith.mulf %173, %171 : vector<2x32xf32>
    %175 = arith.mulf %166, %141 : vector<2x32xf32>
    %176 = arith.addf %174, %175 : vector<2x32xf32>
    %c6_61 = arith.constant 6 : index
    %c0_62 = arith.constant 0 : index
    %177 = vector.load %arg1[%c6_61, %c0_62] : memref<16x1xf32, #tpu.memory_space<vmem>>, vector<2x1xf32>
    %178 = vector.broadcast %177 : vector<2x1xf32> to vector<2x32xf32>
    %179 = arith.mulf %178, %176 : vector<2x32xf32>
    %cst_63 = arith.constant 1.000000e+00 : f32
    %180 = vector.broadcast %cst_63 : f32 to vector<2x1xf32>
    %181 = arith.subf %180, %177 : vector<2x1xf32>
    %182 = vector.broadcast %181 : vector<2x1xf32> to vector<2x32xf32>
    %183 = arith.mulf %182, %141 : vector<2x32xf32>
    %184 = arith.addf %179, %183 : vector<2x32xf32>
    %185 = vector.broadcast %177 : vector<2x1xf32> to vector<2x32xf32>
    %186 = arith.mulf %185, %176 : vector<2x32xf32>
    %c0_64 = arith.constant 0 : index
    %c3 = arith.constant 3 : index
    %c0_65 = arith.constant 0 : index
    %187 = vector.load %arg10[%c0_64, %c3, %c0_65] : memref<2x8x32xf32, #tpu.memory_space<vmem>>, vector<2x1x32xf32>
    %188 = vector.shape_cast %187 : vector<2x1x32xf32> to vector<2x32xf32>
    %189 = vector.shape_cast %186 : vector<2x32xf32> to vector<2x1x32xf32>
    tpu.vector_store %arg10[%c0_64, %c3, %c0_65], %189 {strides = array<i32>} : memref<2x8x32xf32, #tpu.memory_space<vmem>>, vector<2x1x32xf32>,
    %c8 = arith.constant 8 : index
    %c0_66 = arith.constant 0 : index
    %190 = vector.load %arg12[%c8, %c0_66] : memref<16x96xf32, #tpu.memory_space<vmem>>, vector<2x96xf32>
    %cst_67 = arith.constant dense<0.000000e+00> : vector<2x96xf32>
    %191 = tpu.matmul %184, %13, %cst_67 {dimension_numbers = #tpu.dot_dimension_numbers<[1], [0], [0], [1], [0, 0, 1, 1], [], []>} : vector<2x32xf32>, vector<32x96xf32>, vector<2x96xf32> -> vector<2x96xf32>
    %192 = vector.broadcast %14 : vector<1x96xf32> to vector<2x96xf32>
    %193 = arith.addf %191, %192 : vector<2x96xf32>
    %194 = vector.extract_strided_slice %190 {offsets = [0, 0], sizes = [2, 32], strides = [1, 1]} : vector<2x96xf32> to vector<2x32xf32>
    %195 = vector.extract_strided_slice %193 {offsets = [0, 0], sizes = [2, 32], strides = [1, 1]} : vector<2x96xf32> to vector<2x32xf32>
    %196 = arith.addf %194, %195 : vector<2x32xf32>
    %197 = arith.negf %196 : vector<2x32xf32>
    %198 = math.exp %197 : vector<2x32xf32>
    %cst_68 = arith.constant 1.000000e+00 : f32
    %199 = vector.broadcast %cst_68 : f32 to vector<2x32xf32>
    %200 = arith.addf %199, %198 : vector<2x32xf32>
    %201 = arith.divf %199, %200 : vector<2x32xf32>
    %202 = vector.extract_strided_slice %190 {offsets = [0, 32], sizes = [2, 32], strides = [1, 1]} : vector<2x96xf32> to vector<2x32xf32>
    %203 = vector.extract_strided_slice %193 {offsets = [0, 32], sizes = [2, 32], strides = [1, 1]} : vector<2x96xf32> to vector<2x32xf32>
    %204 = arith.addf %202, %203 : vector<2x32xf32>
    %205 = arith.negf %204 : vector<2x32xf32>
    %206 = math.exp %205 : vector<2x32xf32>
    %cst_69 = arith.constant 1.000000e+00 : f32
    %207 = vector.broadcast %cst_69 : f32 to vector<2x32xf32>
    %208 = arith.addf %207, %206 : vector<2x32xf32>
    %209 = arith.divf %207, %208 : vector<2x32xf32>
    %210 = vector.extract_strided_slice %190 {offsets = [0, 64], sizes = [2, 32], strides = [1, 1]} : vector<2x96xf32> to vector<2x32xf32>
    %211 = vector.extract_strided_slice %193 {offsets = [0, 64], sizes = [2, 32], strides = [1, 1]} : vector<2x96xf32> to vector<2x32xf32>
    %212 = arith.mulf %201, %211 : vector<2x32xf32>
    %213 = arith.addf %210, %212 : vector<2x32xf32>
    %214 = math.tanh %213 : vector<2x32xf32>
    %cst_70 = arith.constant 1.000000e+00 : f32
    %215 = vector.broadcast %cst_70 : f32 to vector<2x32xf32>
    %216 = arith.subf %215, %209 : vector<2x32xf32>
    %217 = arith.mulf %216, %214 : vector<2x32xf32>
    %218 = arith.mulf %209, %184 : vector<2x32xf32>
    %219 = arith.addf %217, %218 : vector<2x32xf32>
    %c8_71 = arith.constant 8 : index
    %c0_72 = arith.constant 0 : index
    %220 = vector.load %arg1[%c8_71, %c0_72] : memref<16x1xf32, #tpu.memory_space<vmem>>, vector<2x1xf32>
    %221 = vector.broadcast %220 : vector<2x1xf32> to vector<2x32xf32>
    %222 = arith.mulf %221, %219 : vector<2x32xf32>
    %cst_73 = arith.constant 1.000000e+00 : f32
    %223 = vector.broadcast %cst_73 : f32 to vector<2x1xf32>
    %224 = arith.subf %223, %220 : vector<2x1xf32>
    %225 = vector.broadcast %224 : vector<2x1xf32> to vector<2x32xf32>
    %226 = arith.mulf %225, %184 : vector<2x32xf32>
    %227 = arith.addf %222, %226 : vector<2x32xf32>
    %228 = vector.broadcast %220 : vector<2x1xf32> to vector<2x32xf32>
    %229 = arith.mulf %228, %219 : vector<2x32xf32>
    %c0_74 = arith.constant 0 : index
    %c4_75 = arith.constant 4 : index
    %c0_76 = arith.constant 0 : index
    %230 = vector.load %arg10[%c0_74, %c4_75, %c0_76] : memref<2x8x32xf32, #tpu.memory_space<vmem>>, vector<2x1x32xf32>
    %231 = vector.shape_cast %230 : vector<2x1x32xf32> to vector<2x32xf32>
    %232 = vector.shape_cast %229 : vector<2x32xf32> to vector<2x1x32xf32>
    tpu.vector_store %arg10[%c0_74, %c4_75, %c0_76], %232 {strides = array<i32>} : memref<2x8x32xf32, #tpu.memory_space<vmem>>, vector<2x1x32xf32>,
    %c10 = arith.constant 10 : index
    %c0_77 = arith.constant 0 : index
    %233 = vector.load %arg12[%c10, %c0_77] : memref<16x96xf32, #tpu.memory_space<vmem>>, vector<2x96xf32>
    %cst_78 = arith.constant dense<0.000000e+00> : vector<2x96xf32>
    %234 = tpu.matmul %227, %13, %cst_78 {dimension_numbers = #tpu.dot_dimension_numbers<[1], [0], [0], [1], [0, 0, 1, 1], [], []>} : vector<2x32xf32>, vector<32x96xf32>, vector<2x96xf32> -> vector<2x96xf32>
    %235 = vector.broadcast %14 : vector<1x96xf32> to vector<2x96xf32>
    %236 = arith.addf %234, %235 : vector<2x96xf32>
    %237 = vector.extract_strided_slice %233 {offsets = [0, 0], sizes = [2, 32], strides = [1, 1]} : vector<2x96xf32> to vector<2x32xf32>
    %238 = vector.extract_strided_slice %236 {offsets = [0, 0], sizes = [2, 32], strides = [1, 1]} : vector<2x96xf32> to vector<2x32xf32>
    %239 = arith.addf %237, %238 : vector<2x32xf32>
    %240 = arith.negf %239 : vector<2x32xf32>
    %241 = math.exp %240 : vector<2x32xf32>
    %cst_79 = arith.constant 1.000000e+00 : f32
    %242 = vector.broadcast %cst_79 : f32 to vector<2x32xf32>
    %243 = arith.addf %242, %241 : vector<2x32xf32>
    %244 = arith.divf %242, %243 : vector<2x32xf32>
    %245 = vector.extract_strided_slice %233 {offsets = [0, 32], sizes = [2, 32], strides = [1, 1]} : vector<2x96xf32> to vector<2x32xf32>
    %246 = vector.extract_strided_slice %236 {offsets = [0, 32], sizes = [2, 32], strides = [1, 1]} : vector<2x96xf32> to vector<2x32xf32>
    %247 = arith.addf %245, %246 : vector<2x32xf32>
    %248 = arith.negf %247 : vector<2x32xf32>
    %249 = math.exp %248 : vector<2x32xf32>
    %cst_80 = arith.constant 1.000000e+00 : f32
    %250 = vector.broadcast %cst_80 : f32 to vector<2x32xf32>
    %251 = arith.addf %250, %249 : vector<2x32xf32>
    %252 = arith.divf %250, %251 : vector<2x32xf32>
    %253 = vector.extract_strided_slice %233 {offsets = [0, 64], sizes = [2, 32], strides = [1, 1]} : vector<2x96xf32> to vector<2x32xf32>
    %254 = vector.extract_strided_slice %236 {offsets = [0, 64], sizes = [2, 32], strides = [1, 1]} : vector<2x96xf32> to vector<2x32xf32>
    %255 = arith.mulf %244, %254 : vector<2x32xf32>
    %256 = arith.addf %253, %255 : vector<2x32xf32>
    %257 = math.tanh %256 : vector<2x32xf32>
    %cst_81 = arith.constant 1.000000e+00 : f32
    %258 = vector.broadcast %cst_81 : f32 to vector<2x32xf32>
    %259 = arith.subf %258, %252 : vector<2x32xf32>
    %260 = arith.mulf %259, %257 : vector<2x32xf32>
    %261 = arith.mulf %252, %227 : vector<2x32xf32>
    %262 = arith.addf %260, %261 : vector<2x32xf32>
    %c10_82 = arith.constant 10 : index
    %c0_83 = arith.constant 0 : index
    %263 = vector.load %arg1[%c10_82, %c0_83] : memref<16x1xf32, #tpu.memory_space<vmem>>, vector<2x1xf32>
    %264 = vector.broadcast %263 : vector<2x1xf32> to vector<2x32xf32>
    %265 = arith.mulf %264, %262 : vector<2x32xf32>
    %cst_84 = arith.constant 1.000000e+00 : f32
    %266 = vector.broadcast %cst_84 : f32 to vector<2x1xf32>
    %267 = arith.subf %266, %263 : vector<2x1xf32>
    %268 = vector.broadcast %267 : vector<2x1xf32> to vector<2x32xf32>
    %269 = arith.mulf %268, %227 : vector<2x32xf32>
    %270 = arith.addf %265, %269 : vector<2x32xf32>
    %271 = vector.broadcast %263 : vector<2x1xf32> to vector<2x32xf32>
    %272 = arith.mulf %271, %262 : vector<2x32xf32>
    %c0_85 = arith.constant 0 : index
    %c5 = arith.constant 5 : index
    %c0_86 = arith.constant 0 : index
    %273 = vector.load %arg10[%c0_85, %c5, %c0_86] : memref<2x8x32xf32, #tpu.memory_space<vmem>>, vector<2x1x32xf32>
    %274 = vector.shape_cast %273 : vector<2x1x32xf32> to vector<2x32xf32>
    %275 = vector.shape_cast %272 : vector<2x32xf32> to vector<2x1x32xf32>
    tpu.vector_store %arg10[%c0_85, %c5, %c0_86], %275 {strides = array<i32>} : memref<2x8x32xf32, #tpu.memory_space<vmem>>, vector<2x1x32xf32>,
    %c12 = arith.constant 12 : index
    %c0_87 = arith.constant 0 : index
    %276 = vector.load %arg12[%c12, %c0_87] : memref<16x96xf32, #tpu.memory_space<vmem>>, vector<2x96xf32>
    %cst_88 = arith.constant dense<0.000000e+00> : vector<2x96xf32>
    %277 = tpu.matmul %270, %13, %cst_88 {dimension_numbers = #tpu.dot_dimension_numbers<[1], [0], [0], [1], [0, 0, 1, 1], [], []>} : vector<2x32xf32>, vector<32x96xf32>, vector<2x96xf32> -> vector<2x96xf32>
    %278 = vector.broadcast %14 : vector<1x96xf32> to vector<2x96xf32>
    %279 = arith.addf %277, %278 : vector<2x96xf32>
    %280 = vector.extract_strided_slice %276 {offsets = [0, 0], sizes = [2, 32], strides = [1, 1]} : vector<2x96xf32> to vector<2x32xf32>
    %281 = vector.extract_strided_slice %279 {offsets = [0, 0], sizes = [2, 32], strides = [1, 1]} : vector<2x96xf32> to vector<2x32xf32>
    %282 = arith.addf %280, %281 : vector<2x32xf32>
    %283 = arith.negf %282 : vector<2x32xf32>
    %284 = math.exp %283 : vector<2x32xf32>
    %cst_89 = arith.constant 1.000000e+00 : f32
    %285 = vector.broadcast %cst_89 : f32 to vector<2x32xf32>
    %286 = arith.addf %285, %284 : vector<2x32xf32>
    %287 = arith.divf %285, %286 : vector<2x32xf32>
    %288 = vector.extract_strided_slice %276 {offsets = [0, 32], sizes = [2, 32], strides = [1, 1]} : vector<2x96xf32> to vector<2x32xf32>
    %289 = vector.extract_strided_slice %279 {offsets = [0, 32], sizes = [2, 32], strides = [1, 1]} : vector<2x96xf32> to vector<2x32xf32>
    %290 = arith.addf %288, %289 : vector<2x32xf32>
    %291 = arith.negf %290 : vector<2x32xf32>
    %292 = math.exp %291 : vector<2x32xf32>
    %cst_90 = arith.constant 1.000000e+00 : f32
    %293 = vector.broadcast %cst_90 : f32 to vector<2x32xf32>
    %294 = arith.addf %293, %292 : vector<2x32xf32>
    %295 = arith.divf %293, %294 : vector<2x32xf32>
    %296 = vector.extract_strided_slice %276 {offsets = [0, 64], sizes = [2, 32], strides = [1, 1]} : vector<2x96xf32> to vector<2x32xf32>
    %297 = vector.extract_strided_slice %279 {offsets = [0, 64], sizes = [2, 32], strides = [1, 1]} : vector<2x96xf32> to vector<2x32xf32>
    %298 = arith.mulf %287, %297 : vector<2x32xf32>
    %299 = arith.addf %296, %298 : vector<2x32xf32>
    %300 = math.tanh %299 : vector<2x32xf32>
    %cst_91 = arith.constant 1.000000e+00 : f32
    %301 = vector.broadcast %cst_91 : f32 to vector<2x32xf32>
    %302 = arith.subf %301, %295 : vector<2x32xf32>
    %303 = arith.mulf %302, %300 : vector<2x32xf32>
    %304 = arith.mulf %295, %270 : vector<2x32xf32>
    %305 = arith.addf %303, %304 : vector<2x32xf32>
    %c12_92 = arith.constant 12 : index
    %c0_93 = arith.constant 0 : index
    %306 = vector.load %arg1[%c12_92, %c0_93] : memref<16x1xf32, #tpu.memory_space<vmem>>, vector<2x1xf32>
    %307 = vector.broadcast %306 : vector<2x1xf32> to vector<2x32xf32>
    %308 = arith.mulf %307, %305 : vector<2x32xf32>
    %cst_94 = arith.constant 1.000000e+00 : f32
    %309 = vector.broadcast %cst_94 : f32 to vector<2x1xf32>
    %310 = arith.subf %309, %306 : vector<2x1xf32>
    %311 = vector.broadcast %310 : vector<2x1xf32> to vector<2x32xf32>
    %312 = arith.mulf %311, %270 : vector<2x32xf32>
    %313 = arith.addf %308, %312 : vector<2x32xf32>
    %314 = vector.broadcast %306 : vector<2x1xf32> to vector<2x32xf32>
    %315 = arith.mulf %314, %305 : vector<2x32xf32>
    %c0_95 = arith.constant 0 : index
    %c6_96 = arith.constant 6 : index
    %c0_97 = arith.constant 0 : index
    %316 = vector.load %arg10[%c0_95, %c6_96, %c0_97] : memref<2x8x32xf32, #tpu.memory_space<vmem>>, vector<2x1x32xf32>
    %317 = vector.shape_cast %316 : vector<2x1x32xf32> to vector<2x32xf32>
    %318 = vector.shape_cast %315 : vector<2x32xf32> to vector<2x1x32xf32>
    tpu.vector_store %arg10[%c0_95, %c6_96, %c0_97], %318 {strides = array<i32>} : memref<2x8x32xf32, #tpu.memory_space<vmem>>, vector<2x1x32xf32>,
    %c14 = arith.constant 14 : index
    %c0_98 = arith.constant 0 : index
    %319 = vector.load %arg12[%c14, %c0_98] : memref<16x96xf32, #tpu.memory_space<vmem>>, vector<2x96xf32>
    %cst_99 = arith.constant dense<0.000000e+00> : vector<2x96xf32>
    %320 = tpu.matmul %313, %13, %cst_99 {dimension_numbers = #tpu.dot_dimension_numbers<[1], [0], [0], [1], [0, 0, 1, 1], [], []>} : vector<2x32xf32>, vector<32x96xf32>, vector<2x96xf32> -> vector<2x96xf32>
    %321 = vector.broadcast %14 : vector<1x96xf32> to vector<2x96xf32>
    %322 = arith.addf %320, %321 : vector<2x96xf32>
    %323 = vector.extract_strided_slice %319 {offsets = [0, 0], sizes = [2, 32], strides = [1, 1]} : vector<2x96xf32> to vector<2x32xf32>
    %324 = vector.extract_strided_slice %322 {offsets = [0, 0], sizes = [2, 32], strides = [1, 1]} : vector<2x96xf32> to vector<2x32xf32>
    %325 = arith.addf %323, %324 : vector<2x32xf32>
    %326 = arith.negf %325 : vector<2x32xf32>
    %327 = math.exp %326 : vector<2x32xf32>
    %cst_100 = arith.constant 1.000000e+00 : f32
    %328 = vector.broadcast %cst_100 : f32 to vector<2x32xf32>
    %329 = arith.addf %328, %327 : vector<2x32xf32>
    %330 = arith.divf %328, %329 : vector<2x32xf32>
    %331 = vector.extract_strided_slice %319 {offsets = [0, 32], sizes = [2, 32], strides = [1, 1]} : vector<2x96xf32> to vector<2x32xf32>
    %332 = vector.extract_strided_slice %322 {offsets = [0, 32], sizes = [2, 32], strides = [1, 1]} : vector<2x96xf32> to vector<2x32xf32>
    %333 = arith.addf %331, %332 : vector<2x32xf32>
    %334 = arith.negf %333 : vector<2x32xf32>
    %335 = math.exp %334 : vector<2x32xf32>
    %cst_101 = arith.constant 1.000000e+00 : f32
    %336 = vector.broadcast %cst_101 : f32 to vector<2x32xf32>
    %337 = arith.addf %336, %335 : vector<2x32xf32>
    %338 = arith.divf %336, %337 : vector<2x32xf32>
    %339 = vector.extract_strided_slice %319 {offsets = [0, 64], sizes = [2, 32], strides = [1, 1]} : vector<2x96xf32> to vector<2x32xf32>
    %340 = vector.extract_strided_slice %322 {offsets = [0, 64], sizes = [2, 32], strides = [1, 1]} : vector<2x96xf32> to vector<2x32xf32>
    %341 = arith.mulf %330, %340 : vector<2x32xf32>
    %342 = arith.addf %339, %341 : vector<2x32xf32>
    %343 = math.tanh %342 : vector<2x32xf32>
    %cst_102 = arith.constant 1.000000e+00 : f32
    %344 = vector.broadcast %cst_102 : f32 to vector<2x32xf32>
    %345 = arith.subf %344, %338 : vector<2x32xf32>
    %346 = arith.mulf %345, %343 : vector<2x32xf32>
    %347 = arith.mulf %338, %313 : vector<2x32xf32>
    %348 = arith.addf %346, %347 : vector<2x32xf32>
    %c14_103 = arith.constant 14 : index
    %c0_104 = arith.constant 0 : index
    %349 = vector.load %arg1[%c14_103, %c0_104] : memref<16x1xf32, #tpu.memory_space<vmem>>, vector<2x1xf32>
    %350 = vector.broadcast %349 : vector<2x1xf32> to vector<2x32xf32>
    %351 = arith.mulf %350, %348 : vector<2x32xf32>
    %cst_105 = arith.constant 1.000000e+00 : f32
    %352 = vector.broadcast %cst_105 : f32 to vector<2x1xf32>
    %353 = arith.subf %352, %349 : vector<2x1xf32>
    %354 = vector.broadcast %353 : vector<2x1xf32> to vector<2x32xf32>
    %355 = arith.mulf %354, %313 : vector<2x32xf32>
    %356 = arith.addf %351, %355 : vector<2x32xf32>
    %357 = vector.broadcast %349 : vector<2x1xf32> to vector<2x32xf32>
    %358 = arith.mulf %357, %348 : vector<2x32xf32>
    %c0_106 = arith.constant 0 : index
    %c7 = arith.constant 7 : index
    %c0_107 = arith.constant 0 : index
    %359 = vector.load %arg10[%c0_106, %c7, %c0_107] : memref<2x8x32xf32, #tpu.memory_space<vmem>>, vector<2x1x32xf32>
    %360 = vector.shape_cast %359 : vector<2x1x32xf32> to vector<2x32xf32>
    %361 = vector.shape_cast %358 : vector<2x32xf32> to vector<2x1x32xf32>
    tpu.vector_store %arg10[%c0_106, %c7, %c0_107], %361 {strides = array<i32>} : memref<2x8x32xf32, #tpu.memory_space<vmem>>, vector<2x1x32xf32>,
    %cst_108 = arith.constant 0.000000e+00 : f32
    %362 = vector.broadcast %cst_108 : f32 to vector<2x32xf32>
    %c14_109 = arith.constant 14 : index
    %c0_110 = arith.constant 0 : index
    %363 = vector.load %arg13[%c14_109, %c0_110] : memref<16x96xf32, #tpu.memory_space<vmem>>, vector<2x96xf32>
    %cst_111 = arith.constant dense<0.000000e+00> : vector<2x96xf32>
    %364 = tpu.matmul %362, %15, %cst_111 {dimension_numbers = #tpu.dot_dimension_numbers<[1], [0], [0], [1], [0, 0, 1, 1], [], []>} : vector<2x32xf32>, vector<32x96xf32>, vector<2x96xf32> -> vector<2x96xf32>
    %365 = vector.broadcast %16 : vector<1x96xf32> to vector<2x96xf32>
    %366 = arith.addf %364, %365 : vector<2x96xf32>
    %367 = vector.extract_strided_slice %363 {offsets = [0, 0], sizes = [2, 32], strides = [1, 1]} : vector<2x96xf32> to vector<2x32xf32>
    %368 = vector.extract_strided_slice %366 {offsets = [0, 0], sizes = [2, 32], strides = [1, 1]} : vector<2x96xf32> to vector<2x32xf32>
    %369 = arith.addf %367, %368 : vector<2x32xf32>
    %370 = arith.negf %369 : vector<2x32xf32>
    %371 = math.exp %370 : vector<2x32xf32>
    %cst_112 = arith.constant 1.000000e+00 : f32
    %372 = vector.broadcast %cst_112 : f32 to vector<2x32xf32>
    %373 = arith.addf %372, %371 : vector<2x32xf32>
    %374 = arith.divf %372, %373 : vector<2x32xf32>
    %375 = vector.extract_strided_slice %363 {offsets = [0, 32], sizes = [2, 32], strides = [1, 1]} : vector<2x96xf32> to vector<2x32xf32>
    %376 = vector.extract_strided_slice %366 {offsets = [0, 32], sizes = [2, 32], strides = [1, 1]} : vector<2x96xf32> to vector<2x32xf32>
    %377 = arith.addf %375, %376 : vector<2x32xf32>
    %378 = arith.negf %377 : vector<2x32xf32>
    %379 = math.exp %378 : vector<2x32xf32>
    %cst_113 = arith.constant 1.000000e+00 : f32
    %380 = vector.broadcast %cst_113 : f32 to vector<2x32xf32>
    %381 = arith.addf %380, %379 : vector<2x32xf32>
    %382 = arith.divf %380, %381 : vector<2x32xf32>
    %383 = vector.extract_strided_slice %363 {offsets = [0, 64], sizes = [2, 32], strides = [1, 1]} : vector<2x96xf32> to vector<2x32xf32>
    %384 = vector.extract_strided_slice %366 {offsets = [0, 64], sizes = [2, 32], strides = [1, 1]} : vector<2x96xf32> to vector<2x32xf32>
    %385 = arith.mulf %374, %384 : vector<2x32xf32>
    %386 = arith.addf %383, %385 : vector<2x32xf32>
    %387 = math.tanh %386 : vector<2x32xf32>
    %cst_114 = arith.constant 1.000000e+00 : f32
    %388 = vector.broadcast %cst_114 : f32 to vector<2x32xf32>
    %389 = arith.subf %388, %382 : vector<2x32xf32>
    %390 = arith.mulf %389, %387 : vector<2x32xf32>
    %391 = arith.mulf %382, %362 : vector<2x32xf32>
    %392 = arith.addf %390, %391 : vector<2x32xf32>
    %c14_115 = arith.constant 14 : index
    %c0_116 = arith.constant 0 : index
    %393 = vector.load %arg1[%c14_115, %c0_116] : memref<16x1xf32, #tpu.memory_space<vmem>>, vector<2x1xf32>
    %394 = vector.broadcast %393 : vector<2x1xf32> to vector<2x32xf32>
    %395 = arith.mulf %394, %392 : vector<2x32xf32>
    %cst_117 = arith.constant 1.000000e+00 : f32
    %396 = vector.broadcast %cst_117 : f32 to vector<2x1xf32>
    %397 = arith.subf %396, %393 : vector<2x1xf32>
    %398 = vector.broadcast %397 : vector<2x1xf32> to vector<2x32xf32>
    %399 = arith.mulf %398, %362 : vector<2x32xf32>
    %400 = arith.addf %395, %399 : vector<2x32xf32>
    %c0_118 = arith.constant 0 : index
    %c7_119 = arith.constant 7 : index
    %c0_120 = arith.constant 0 : index
    %401 = vector.load %arg10[%c0_118, %c7_119, %c0_120] : memref<2x8x32xf32, #tpu.memory_space<vmem>>, vector<2x1x32xf32>
    %402 = vector.shape_cast %401 : vector<2x1x32xf32> to vector<2x32xf32>
    %403 = vector.broadcast %393 : vector<2x1xf32> to vector<2x32xf32>
    %404 = arith.mulf %403, %392 : vector<2x32xf32>
    %405 = arith.addf %402, %404 : vector<2x32xf32>
    %c0_121 = arith.constant 0 : index
    %c7_122 = arith.constant 7 : index
    %c0_123 = arith.constant 0 : index
    %406 = vector.load %arg10[%c0_121, %c7_122, %c0_123] : memref<2x8x32xf32, #tpu.memory_space<vmem>>, vector<2x1x32xf32>
    %407 = vector.shape_cast %406 : vector<2x1x32xf32> to vector<2x32xf32>
    %408 = vector.shape_cast %405 : vector<2x32xf32> to vector<2x1x32xf32>
    tpu.vector_store %arg10[%c0_121, %c7_122, %c0_123], %408 {strides = array<i32>} : memref<2x8x32xf32, #tpu.memory_space<vmem>>, vector<2x1x32xf32>,
    %c12_124 = arith.constant 12 : index
    %c0_125 = arith.constant 0 : index
    %409 = vector.load %arg13[%c12_124, %c0_125] : memref<16x96xf32, #tpu.memory_space<vmem>>, vector<2x96xf32>
    %cst_126 = arith.constant dense<0.000000e+00> : vector<2x96xf32>
    %410 = tpu.matmul %400, %15, %cst_126 {dimension_numbers = #tpu.dot_dimension_numbers<[1], [0], [0], [1], [0, 0, 1, 1], [], []>} : vector<2x32xf32>, vector<32x96xf32>, vector<2x96xf32> -> vector<2x96xf32>
    %411 = vector.broadcast %16 : vector<1x96xf32> to vector<2x96xf32>
    %412 = arith.addf %410, %411 : vector<2x96xf32>
    %413 = vector.extract_strided_slice %409 {offsets = [0, 0], sizes = [2, 32], strides = [1, 1]} : vector<2x96xf32> to vector<2x32xf32>
    %414 = vector.extract_strided_slice %412 {offsets = [0, 0], sizes = [2, 32], strides = [1, 1]} : vector<2x96xf32> to vector<2x32xf32>
    %415 = arith.addf %413, %414 : vector<2x32xf32>
    %416 = arith.negf %415 : vector<2x32xf32>
    %417 = math.exp %416 : vector<2x32xf32>
    %cst_127 = arith.constant 1.000000e+00 : f32
    %418 = vector.broadcast %cst_127 : f32 to vector<2x32xf32>
    %419 = arith.addf %418, %417 : vector<2x32xf32>
    %420 = arith.divf %418, %419 : vector<2x32xf32>
    %421 = vector.extract_strided_slice %409 {offsets = [0, 32], sizes = [2, 32], strides = [1, 1]} : vector<2x96xf32> to vector<2x32xf32>
    %422 = vector.extract_strided_slice %412 {offsets = [0, 32], sizes = [2, 32], strides = [1, 1]} : vector<2x96xf32> to vector<2x32xf32>
    %423 = arith.addf %421, %422 : vector<2x32xf32>
    %424 = arith.negf %423 : vector<2x32xf32>
    %425 = math.exp %424 : vector<2x32xf32>
    %cst_128 = arith.constant 1.000000e+00 : f32
    %426 = vector.broadcast %cst_128 : f32 to vector<2x32xf32>
    %427 = arith.addf %426, %425 : vector<2x32xf32>
    %428 = arith.divf %426, %427 : vector<2x32xf32>
    %429 = vector.extract_strided_slice %409 {offsets = [0, 64], sizes = [2, 32], strides = [1, 1]} : vector<2x96xf32> to vector<2x32xf32>
    %430 = vector.extract_strided_slice %412 {offsets = [0, 64], sizes = [2, 32], strides = [1, 1]} : vector<2x96xf32> to vector<2x32xf32>
    %431 = arith.mulf %420, %430 : vector<2x32xf32>
    %432 = arith.addf %429, %431 : vector<2x32xf32>
    %433 = math.tanh %432 : vector<2x32xf32>
    %cst_129 = arith.constant 1.000000e+00 : f32
    %434 = vector.broadcast %cst_129 : f32 to vector<2x32xf32>
    %435 = arith.subf %434, %428 : vector<2x32xf32>
    %436 = arith.mulf %435, %433 : vector<2x32xf32>
    %437 = arith.mulf %428, %400 : vector<2x32xf32>
    %438 = arith.addf %436, %437 : vector<2x32xf32>
    %c12_130 = arith.constant 12 : index
    %c0_131 = arith.constant 0 : index
    %439 = vector.load %arg1[%c12_130, %c0_131] : memref<16x1xf32, #tpu.memory_space<vmem>>, vector<2x1xf32>
    %440 = vector.broadcast %439 : vector<2x1xf32> to vector<2x32xf32>
    %441 = arith.mulf %440, %438 : vector<2x32xf32>
    %cst_132 = arith.constant 1.000000e+00 : f32
    %442 = vector.broadcast %cst_132 : f32 to vector<2x1xf32>
    %443 = arith.subf %442, %439 : vector<2x1xf32>
    %444 = vector.broadcast %443 : vector<2x1xf32> to vector<2x32xf32>
    %445 = arith.mulf %444, %400 : vector<2x32xf32>
    %446 = arith.addf %441, %445 : vector<2x32xf32>
    %c0_133 = arith.constant 0 : index
    %c6_134 = arith.constant 6 : index
    %c0_135 = arith.constant 0 : index
    %447 = vector.load %arg10[%c0_133, %c6_134, %c0_135] : memref<2x8x32xf32, #tpu.memory_space<vmem>>, vector<2x1x32xf32>
    %448 = vector.shape_cast %447 : vector<2x1x32xf32> to vector<2x32xf32>
    %449 = vector.broadcast %439 : vector<2x1xf32> to vector<2x32xf32>
    %450 = arith.mulf %449, %438 : vector<2x32xf32>
    %451 = arith.addf %448, %450 : vector<2x32xf32>
    %c0_136 = arith.constant 0 : index
    %c6_137 = arith.constant 6 : index
    %c0_138 = arith.constant 0 : index
    %452 = vector.load %arg10[%c0_136, %c6_137, %c0_138] : memref<2x8x32xf32, #tpu.memory_space<vmem>>, vector<2x1x32xf32>
    %453 = vector.shape_cast %452 : vector<2x1x32xf32> to vector<2x32xf32>
    %454 = vector.shape_cast %451 : vector<2x32xf32> to vector<2x1x32xf32>
    tpu.vector_store %arg10[%c0_136, %c6_137, %c0_138], %454 {strides = array<i32>} : memref<2x8x32xf32, #tpu.memory_space<vmem>>, vector<2x1x32xf32>,
    %c10_139 = arith.constant 10 : index
    %c0_140 = arith.constant 0 : index
    %455 = vector.load %arg13[%c10_139, %c0_140] : memref<16x96xf32, #tpu.memory_space<vmem>>, vector<2x96xf32>
    %cst_141 = arith.constant dense<0.000000e+00> : vector<2x96xf32>
    %456 = tpu.matmul %446, %15, %cst_141 {dimension_numbers = #tpu.dot_dimension_numbers<[1], [0], [0], [1], [0, 0, 1, 1], [], []>} : vector<2x32xf32>, vector<32x96xf32>, vector<2x96xf32> -> vector<2x96xf32>
    %457 = vector.broadcast %16 : vector<1x96xf32> to vector<2x96xf32>
    %458 = arith.addf %456, %457 : vector<2x96xf32>
    %459 = vector.extract_strided_slice %455 {offsets = [0, 0], sizes = [2, 32], strides = [1, 1]} : vector<2x96xf32> to vector<2x32xf32>
    %460 = vector.extract_strided_slice %458 {offsets = [0, 0], sizes = [2, 32], strides = [1, 1]} : vector<2x96xf32> to vector<2x32xf32>
    %461 = arith.addf %459, %460 : vector<2x32xf32>
    %462 = arith.negf %461 : vector<2x32xf32>
    %463 = math.exp %462 : vector<2x32xf32>
    %cst_142 = arith.constant 1.000000e+00 : f32
    %464 = vector.broadcast %cst_142 : f32 to vector<2x32xf32>
    %465 = arith.addf %464, %463 : vector<2x32xf32>
    %466 = arith.divf %464, %465 : vector<2x32xf32>
    %467 = vector.extract_strided_slice %455 {offsets = [0, 32], sizes = [2, 32], strides = [1, 1]} : vector<2x96xf32> to vector<2x32xf32>
    %468 = vector.extract_strided_slice %458 {offsets = [0, 32], sizes = [2, 32], strides = [1, 1]} : vector<2x96xf32> to vector<2x32xf32>
    %469 = arith.addf %467, %468 : vector<2x32xf32>
    %470 = arith.negf %469 : vector<2x32xf32>
    %471 = math.exp %470 : vector<2x32xf32>
    %cst_143 = arith.constant 1.000000e+00 : f32
    %472 = vector.broadcast %cst_143 : f32 to vector<2x32xf32>
    %473 = arith.addf %472, %471 : vector<2x32xf32>
    %474 = arith.divf %472, %473 : vector<2x32xf32>
    %475 = vector.extract_strided_slice %455 {offsets = [0, 64], sizes = [2, 32], strides = [1, 1]} : vector<2x96xf32> to vector<2x32xf32>
    %476 = vector.extract_strided_slice %458 {offsets = [0, 64], sizes = [2, 32], strides = [1, 1]} : vector<2x96xf32> to vector<2x32xf32>
    %477 = arith.mulf %466, %476 : vector<2x32xf32>
    %478 = arith.addf %475, %477 : vector<2x32xf32>
    %479 = math.tanh %478 : vector<2x32xf32>
    %cst_144 = arith.constant 1.000000e+00 : f32
    %480 = vector.broadcast %cst_144 : f32 to vector<2x32xf32>
    %481 = arith.subf %480, %474 : vector<2x32xf32>
    %482 = arith.mulf %481, %479 : vector<2x32xf32>
    %483 = arith.mulf %474, %446 : vector<2x32xf32>
    %484 = arith.addf %482, %483 : vector<2x32xf32>
    %c10_145 = arith.constant 10 : index
    %c0_146 = arith.constant 0 : index
    %485 = vector.load %arg1[%c10_145, %c0_146] : memref<16x1xf32, #tpu.memory_space<vmem>>, vector<2x1xf32>
    %486 = vector.broadcast %485 : vector<2x1xf32> to vector<2x32xf32>
    %487 = arith.mulf %486, %484 : vector<2x32xf32>
    %cst_147 = arith.constant 1.000000e+00 : f32
    %488 = vector.broadcast %cst_147 : f32 to vector<2x1xf32>
    %489 = arith.subf %488, %485 : vector<2x1xf32>
    %490 = vector.broadcast %489 : vector<2x1xf32> to vector<2x32xf32>
    %491 = arith.mulf %490, %446 : vector<2x32xf32>
    %492 = arith.addf %487, %491 : vector<2x32xf32>
    %c0_148 = arith.constant 0 : index
    %c5_149 = arith.constant 5 : index
    %c0_150 = arith.constant 0 : index
    %493 = vector.load %arg10[%c0_148, %c5_149, %c0_150] : memref<2x8x32xf32, #tpu.memory_space<vmem>>, vector<2x1x32xf32>
    %494 = vector.shape_cast %493 : vector<2x1x32xf32> to vector<2x32xf32>
    %495 = vector.broadcast %485 : vector<2x1xf32> to vector<2x32xf32>
    %496 = arith.mulf %495, %484 : vector<2x32xf32>
    %497 = arith.addf %494, %496 : vector<2x32xf32>
    %c0_151 = arith.constant 0 : index
    %c5_152 = arith.constant 5 : index
    %c0_153 = arith.constant 0 : index
    %498 = vector.load %arg10[%c0_151, %c5_152, %c0_153] : memref<2x8x32xf32, #tpu.memory_space<vmem>>, vector<2x1x32xf32>
    %499 = vector.shape_cast %498 : vector<2x1x32xf32> to vector<2x32xf32>
    %500 = vector.shape_cast %497 : vector<2x32xf32> to vector<2x1x32xf32>
    tpu.vector_store %arg10[%c0_151, %c5_152, %c0_153], %500 {strides = array<i32>} : memref<2x8x32xf32, #tpu.memory_space<vmem>>, vector<2x1x32xf32>,
    %c8_154 = arith.constant 8 : index
    %c0_155 = arith.constant 0 : index
    %501 = vector.load %arg13[%c8_154, %c0_155] : memref<16x96xf32, #tpu.memory_space<vmem>>, vector<2x96xf32>
    %cst_156 = arith.constant dense<0.000000e+00> : vector<2x96xf32>
    %502 = tpu.matmul %492, %15, %cst_156 {dimension_numbers = #tpu.dot_dimension_numbers<[1], [0], [0], [1], [0, 0, 1, 1], [], []>} : vector<2x32xf32>, vector<32x96xf32>, vector<2x96xf32> -> vector<2x96xf32>
    %503 = vector.broadcast %16 : vector<1x96xf32> to vector<2x96xf32>
    %504 = arith.addf %502, %503 : vector<2x96xf32>
    %505 = vector.extract_strided_slice %501 {offsets = [0, 0], sizes = [2, 32], strides = [1, 1]} : vector<2x96xf32> to vector<2x32xf32>
    %506 = vector.extract_strided_slice %504 {offsets = [0, 0], sizes = [2, 32], strides = [1, 1]} : vector<2x96xf32> to vector<2x32xf32>
    %507 = arith.addf %505, %506 : vector<2x32xf32>
    %508 = arith.negf %507 : vector<2x32xf32>
    %509 = math.exp %508 : vector<2x32xf32>
    %cst_157 = arith.constant 1.000000e+00 : f32
    %510 = vector.broadcast %cst_157 : f32 to vector<2x32xf32>
    %511 = arith.addf %510, %509 : vector<2x32xf32>
    %512 = arith.divf %510, %511 : vector<2x32xf32>
    %513 = vector.extract_strided_slice %501 {offsets = [0, 32], sizes = [2, 32], strides = [1, 1]} : vector<2x96xf32> to vector<2x32xf32>
    %514 = vector.extract_strided_slice %504 {offsets = [0, 32], sizes = [2, 32], strides = [1, 1]} : vector<2x96xf32> to vector<2x32xf32>
    %515 = arith.addf %513, %514 : vector<2x32xf32>
    %516 = arith.negf %515 : vector<2x32xf32>
    %517 = math.exp %516 : vector<2x32xf32>
    %cst_158 = arith.constant 1.000000e+00 : f32
    %518 = vector.broadcast %cst_158 : f32 to vector<2x32xf32>
    %519 = arith.addf %518, %517 : vector<2x32xf32>
    %520 = arith.divf %518, %519 : vector<2x32xf32>
    %521 = vector.extract_strided_slice %501 {offsets = [0, 64], sizes = [2, 32], strides = [1, 1]} : vector<2x96xf32> to vector<2x32xf32>
    %522 = vector.extract_strided_slice %504 {offsets = [0, 64], sizes = [2, 32], strides = [1, 1]} : vector<2x96xf32> to vector<2x32xf32>
    %523 = arith.mulf %512, %522 : vector<2x32xf32>
    %524 = arith.addf %521, %523 : vector<2x32xf32>
    %525 = math.tanh %524 : vector<2x32xf32>
    %cst_159 = arith.constant 1.000000e+00 : f32
    %526 = vector.broadcast %cst_159 : f32 to vector<2x32xf32>
    %527 = arith.subf %526, %520 : vector<2x32xf32>
    %528 = arith.mulf %527, %525 : vector<2x32xf32>
    %529 = arith.mulf %520, %492 : vector<2x32xf32>
    %530 = arith.addf %528, %529 : vector<2x32xf32>
    %c8_160 = arith.constant 8 : index
    %c0_161 = arith.constant 0 : index
    %531 = vector.load %arg1[%c8_160, %c0_161] : memref<16x1xf32, #tpu.memory_space<vmem>>, vector<2x1xf32>
    %532 = vector.broadcast %531 : vector<2x1xf32> to vector<2x32xf32>
    %533 = arith.mulf %532, %530 : vector<2x32xf32>
    %cst_162 = arith.constant 1.000000e+00 : f32
    %534 = vector.broadcast %cst_162 : f32 to vector<2x1xf32>
    %535 = arith.subf %534, %531 : vector<2x1xf32>
    %536 = vector.broadcast %535 : vector<2x1xf32> to vector<2x32xf32>
    %537 = arith.mulf %536, %492 : vector<2x32xf32>
    %538 = arith.addf %533, %537 : vector<2x32xf32>
    %c0_163 = arith.constant 0 : index
    %c4_164 = arith.constant 4 : index
    %c0_165 = arith.constant 0 : index
    %539 = vector.load %arg10[%c0_163, %c4_164, %c0_165] : memref<2x8x32xf32, #tpu.memory_space<vmem>>, vector<2x1x32xf32>
    %540 = vector.shape_cast %539 : vector<2x1x32xf32> to vector<2x32xf32>
    %541 = vector.broadcast %531 : vector<2x1xf32> to vector<2x32xf32>
    %542 = arith.mulf %541, %530 : vector<2x32xf32>
    %543 = arith.addf %540, %542 : vector<2x32xf32>
    %c0_166 = arith.constant 0 : index
    %c4_167 = arith.constant 4 : index
    %c0_168 = arith.constant 0 : index
    %544 = vector.load %arg10[%c0_166, %c4_167, %c0_168] : memref<2x8x32xf32, #tpu.memory_space<vmem>>, vector<2x1x32xf32>
    %545 = vector.shape_cast %544 : vector<2x1x32xf32> to vector<2x32xf32>
    %546 = vector.shape_cast %543 : vector<2x32xf32> to vector<2x1x32xf32>
    tpu.vector_store %arg10[%c0_166, %c4_167, %c0_168], %546 {strides = array<i32>} : memref<2x8x32xf32, #tpu.memory_space<vmem>>, vector<2x1x32xf32>,
    %c6_169 = arith.constant 6 : index
    %c0_170 = arith.constant 0 : index
    %547 = vector.load %arg13[%c6_169, %c0_170] : memref<16x96xf32, #tpu.memory_space<vmem>>, vector<2x96xf32>
    %cst_171 = arith.constant dense<0.000000e+00> : vector<2x96xf32>
    %548 = tpu.matmul %538, %15, %cst_171 {dimension_numbers = #tpu.dot_dimension_numbers<[1], [0], [0], [1], [0, 0, 1, 1], [], []>} : vector<2x32xf32>, vector<32x96xf32>, vector<2x96xf32> -> vector<2x96xf32>
    %549 = vector.broadcast %16 : vector<1x96xf32> to vector<2x96xf32>
    %550 = arith.addf %548, %549 : vector<2x96xf32>
    %551 = vector.extract_strided_slice %547 {offsets = [0, 0], sizes = [2, 32], strides = [1, 1]} : vector<2x96xf32> to vector<2x32xf32>
    %552 = vector.extract_strided_slice %550 {offsets = [0, 0], sizes = [2, 32], strides = [1, 1]} : vector<2x96xf32> to vector<2x32xf32>
    %553 = arith.addf %551, %552 : vector<2x32xf32>
    %554 = arith.negf %553 : vector<2x32xf32>
    %555 = math.exp %554 : vector<2x32xf32>
    %cst_172 = arith.constant 1.000000e+00 : f32
    %556 = vector.broadcast %cst_172 : f32 to vector<2x32xf32>
    %557 = arith.addf %556, %555 : vector<2x32xf32>
    %558 = arith.divf %556, %557 : vector<2x32xf32>
    %559 = vector.extract_strided_slice %547 {offsets = [0, 32], sizes = [2, 32], strides = [1, 1]} : vector<2x96xf32> to vector<2x32xf32>
    %560 = vector.extract_strided_slice %550 {offsets = [0, 32], sizes = [2, 32], strides = [1, 1]} : vector<2x96xf32> to vector<2x32xf32>
    %561 = arith.addf %559, %560 : vector<2x32xf32>
    %562 = arith.negf %561 : vector<2x32xf32>
    %563 = math.exp %562 : vector<2x32xf32>
    %cst_173 = arith.constant 1.000000e+00 : f32
    %564 = vector.broadcast %cst_173 : f32 to vector<2x32xf32>
    %565 = arith.addf %564, %563 : vector<2x32xf32>
    %566 = arith.divf %564, %565 : vector<2x32xf32>
    %567 = vector.extract_strided_slice %547 {offsets = [0, 64], sizes = [2, 32], strides = [1, 1]} : vector<2x96xf32> to vector<2x32xf32>
    %568 = vector.extract_strided_slice %550 {offsets = [0, 64], sizes = [2, 32], strides = [1, 1]} : vector<2x96xf32> to vector<2x32xf32>
    %569 = arith.mulf %558, %568 : vector<2x32xf32>
    %570 = arith.addf %567, %569 : vector<2x32xf32>
    %571 = math.tanh %570 : vector<2x32xf32>
    %cst_174 = arith.constant 1.000000e+00 : f32
    %572 = vector.broadcast %cst_174 : f32 to vector<2x32xf32>
    %573 = arith.subf %572, %566 : vector<2x32xf32>
    %574 = arith.mulf %573, %571 : vector<2x32xf32>
    %575 = arith.mulf %566, %538 : vector<2x32xf32>
    %576 = arith.addf %574, %575 : vector<2x32xf32>
    %c6_175 = arith.constant 6 : index
    %c0_176 = arith.constant 0 : index
    %577 = vector.load %arg1[%c6_175, %c0_176] : memref<16x1xf32, #tpu.memory_space<vmem>>, vector<2x1xf32>
    %578 = vector.broadcast %577 : vector<2x1xf32> to vector<2x32xf32>
    %579 = arith.mulf %578, %576 : vector<2x32xf32>
    %cst_177 = arith.constant 1.000000e+00 : f32
    %580 = vector.broadcast %cst_177 : f32 to vector<2x1xf32>
    %581 = arith.subf %580, %577 : vector<2x1xf32>
    %582 = vector.broadcast %581 : vector<2x1xf32> to vector<2x32xf32>
    %583 = arith.mulf %582, %538 : vector<2x32xf32>
    %584 = arith.addf %579, %583 : vector<2x32xf32>
    %c0_178 = arith.constant 0 : index
    %c3_179 = arith.constant 3 : index
    %c0_180 = arith.constant 0 : index
    %585 = vector.load %arg10[%c0_178, %c3_179, %c0_180] : memref<2x8x32xf32, #tpu.memory_space<vmem>>, vector<2x1x32xf32>
    %586 = vector.shape_cast %585 : vector<2x1x32xf32> to vector<2x32xf32>
    %587 = vector.broadcast %577 : vector<2x1xf32> to vector<2x32xf32>
    %588 = arith.mulf %587, %576 : vector<2x32xf32>
    %589 = arith.addf %586, %588 : vector<2x32xf32>
    %c0_181 = arith.constant 0 : index
    %c3_182 = arith.constant 3 : index
    %c0_183 = arith.constant 0 : index
    %590 = vector.load %arg10[%c0_181, %c3_182, %c0_183] : memref<2x8x32xf32, #tpu.memory_space<vmem>>, vector<2x1x32xf32>
    %591 = vector.shape_cast %590 : vector<2x1x32xf32> to vector<2x32xf32>
    %592 = vector.shape_cast %589 : vector<2x32xf32> to vector<2x1x32xf32>
    tpu.vector_store %arg10[%c0_181, %c3_182, %c0_183], %592 {strides = array<i32>} : memref<2x8x32xf32, #tpu.memory_space<vmem>>, vector<2x1x32xf32>,
    %c4_184 = arith.constant 4 : index
    %c0_185 = arith.constant 0 : index
    %593 = vector.load %arg13[%c4_184, %c0_185] : memref<16x96xf32, #tpu.memory_space<vmem>>, vector<2x96xf32>
    %cst_186 = arith.constant dense<0.000000e+00> : vector<2x96xf32>
    %594 = tpu.matmul %584, %15, %cst_186 {dimension_numbers = #tpu.dot_dimension_numbers<[1], [0], [0], [1], [0, 0, 1, 1], [], []>} : vector<2x32xf32>, vector<32x96xf32>, vector<2x96xf32> -> vector<2x96xf32>
    %595 = vector.broadcast %16 : vector<1x96xf32> to vector<2x96xf32>
    %596 = arith.addf %594, %595 : vector<2x96xf32>
    %597 = vector.extract_strided_slice %593 {offsets = [0, 0], sizes = [2, 32], strides = [1, 1]} : vector<2x96xf32> to vector<2x32xf32>
    %598 = vector.extract_strided_slice %596 {offsets = [0, 0], sizes = [2, 32], strides = [1, 1]} : vector<2x96xf32> to vector<2x32xf32>
    %599 = arith.addf %597, %598 : vector<2x32xf32>
    %600 = arith.negf %599 : vector<2x32xf32>
    %601 = math.exp %600 : vector<2x32xf32>
    %cst_187 = arith.constant 1.000000e+00 : f32
    %602 = vector.broadcast %cst_187 : f32 to vector<2x32xf32>
    %603 = arith.addf %602, %601 : vector<2x32xf32>
    %604 = arith.divf %602, %603 : vector<2x32xf32>
    %605 = vector.extract_strided_slice %593 {offsets = [0, 32], sizes = [2, 32], strides = [1, 1]} : vector<2x96xf32> to vector<2x32xf32>
    %606 = vector.extract_strided_slice %596 {offsets = [0, 32], sizes = [2, 32], strides = [1, 1]} : vector<2x96xf32> to vector<2x32xf32>
    %607 = arith.addf %605, %606 : vector<2x32xf32>
    %608 = arith.negf %607 : vector<2x32xf32>
    %609 = math.exp %608 : vector<2x32xf32>
    %cst_188 = arith.constant 1.000000e+00 : f32
    %610 = vector.broadcast %cst_188 : f32 to vector<2x32xf32>
    %611 = arith.addf %610, %609 : vector<2x32xf32>
    %612 = arith.divf %610, %611 : vector<2x32xf32>
    %613 = vector.extract_strided_slice %593 {offsets = [0, 64], sizes = [2, 32], strides = [1, 1]} : vector<2x96xf32> to vector<2x32xf32>
    %614 = vector.extract_strided_slice %596 {offsets = [0, 64], sizes = [2, 32], strides = [1, 1]} : vector<2x96xf32> to vector<2x32xf32>
    %615 = arith.mulf %604, %614 : vector<2x32xf32>
    %616 = arith.addf %613, %615 : vector<2x32xf32>
    %617 = math.tanh %616 : vector<2x32xf32>
    %cst_189 = arith.constant 1.000000e+00 : f32
    %618 = vector.broadcast %cst_189 : f32 to vector<2x32xf32>
    %619 = arith.subf %618, %612 : vector<2x32xf32>
    %620 = arith.mulf %619, %617 : vector<2x32xf32>
    %621 = arith.mulf %612, %584 : vector<2x32xf32>
    %622 = arith.addf %620, %621 : vector<2x32xf32>
    %c4_190 = arith.constant 4 : index
    %c0_191 = arith.constant 0 : index
    %623 = vector.load %arg1[%c4_190, %c0_191] : memref<16x1xf32, #tpu.memory_space<vmem>>, vector<2x1xf32>
    %624 = vector.broadcast %623 : vector<2x1xf32> to vector<2x32xf32>
    %625 = arith.mulf %624, %622 : vector<2x32xf32>
    %cst_192 = arith.constant 1.000000e+00 : f32
    %626 = vector.broadcast %cst_192 : f32 to vector<2x1xf32>
    %627 = arith.subf %626, %623 : vector<2x1xf32>
    %628 = vector.broadcast %627 : vector<2x1xf32> to vector<2x32xf32>
    %629 = arith.mulf %628, %584 : vector<2x32xf32>
    %630 = arith.addf %625, %629 : vector<2x32xf32>
    %c0_193 = arith.constant 0 : index
    %c2_194 = arith.constant 2 : index
    %c0_195 = arith.constant 0 : index
    %631 = vector.load %arg10[%c0_193, %c2_194, %c0_195] : memref<2x8x32xf32, #tpu.memory_space<vmem>>, vector<2x1x32xf32>
    %632 = vector.shape_cast %631 : vector<2x1x32xf32> to vector<2x32xf32>
    %633 = vector.broadcast %623 : vector<2x1xf32> to vector<2x32xf32>
    %634 = arith.mulf %633, %622 : vector<2x32xf32>
    %635 = arith.addf %632, %634 : vector<2x32xf32>
    %c0_196 = arith.constant 0 : index
    %c2_197 = arith.constant 2 : index
    %c0_198 = arith.constant 0 : index
    %636 = vector.load %arg10[%c0_196, %c2_197, %c0_198] : memref<2x8x32xf32, #tpu.memory_space<vmem>>, vector<2x1x32xf32>
    %637 = vector.shape_cast %636 : vector<2x1x32xf32> to vector<2x32xf32>
    %638 = vector.shape_cast %635 : vector<2x32xf32> to vector<2x1x32xf32>
    tpu.vector_store %arg10[%c0_196, %c2_197, %c0_198], %638 {strides = array<i32>} : memref<2x8x32xf32, #tpu.memory_space<vmem>>, vector<2x1x32xf32>,
    %c2_199 = arith.constant 2 : index
    %c0_200 = arith.constant 0 : index
    %639 = vector.load %arg13[%c2_199, %c0_200] : memref<16x96xf32, #tpu.memory_space<vmem>>, vector<2x96xf32>
    %cst_201 = arith.constant dense<0.000000e+00> : vector<2x96xf32>
    %640 = tpu.matmul %630, %15, %cst_201 {dimension_numbers = #tpu.dot_dimension_numbers<[1], [0], [0], [1], [0, 0, 1, 1], [], []>} : vector<2x32xf32>, vector<32x96xf32>, vector<2x96xf32> -> vector<2x96xf32>
    %641 = vector.broadcast %16 : vector<1x96xf32> to vector<2x96xf32>
    %642 = arith.addf %640, %641 : vector<2x96xf32>
    %643 = vector.extract_strided_slice %639 {offsets = [0, 0], sizes = [2, 32], strides = [1, 1]} : vector<2x96xf32> to vector<2x32xf32>
    %644 = vector.extract_strided_slice %642 {offsets = [0, 0], sizes = [2, 32], strides = [1, 1]} : vector<2x96xf32> to vector<2x32xf32>
    %645 = arith.addf %643, %644 : vector<2x32xf32>
    %646 = arith.negf %645 : vector<2x32xf32>
    %647 = math.exp %646 : vector<2x32xf32>
    %cst_202 = arith.constant 1.000000e+00 : f32
    %648 = vector.broadcast %cst_202 : f32 to vector<2x32xf32>
    %649 = arith.addf %648, %647 : vector<2x32xf32>
    %650 = arith.divf %648, %649 : vector<2x32xf32>
    %651 = vector.extract_strided_slice %639 {offsets = [0, 32], sizes = [2, 32], strides = [1, 1]} : vector<2x96xf32> to vector<2x32xf32>
    %652 = vector.extract_strided_slice %642 {offsets = [0, 32], sizes = [2, 32], strides = [1, 1]} : vector<2x96xf32> to vector<2x32xf32>
    %653 = arith.addf %651, %652 : vector<2x32xf32>
    %654 = arith.negf %653 : vector<2x32xf32>
    %655 = math.exp %654 : vector<2x32xf32>
    %cst_203 = arith.constant 1.000000e+00 : f32
    %656 = vector.broadcast %cst_203 : f32 to vector<2x32xf32>
    %657 = arith.addf %656, %655 : vector<2x32xf32>
    %658 = arith.divf %656, %657 : vector<2x32xf32>
    %659 = vector.extract_strided_slice %639 {offsets = [0, 64], sizes = [2, 32], strides = [1, 1]} : vector<2x96xf32> to vector<2x32xf32>
    %660 = vector.extract_strided_slice %642 {offsets = [0, 64], sizes = [2, 32], strides = [1, 1]} : vector<2x96xf32> to vector<2x32xf32>
    %661 = arith.mulf %650, %660 : vector<2x32xf32>
    %662 = arith.addf %659, %661 : vector<2x32xf32>
    %663 = math.tanh %662 : vector<2x32xf32>
    %cst_204 = arith.constant 1.000000e+00 : f32
    %664 = vector.broadcast %cst_204 : f32 to vector<2x32xf32>
    %665 = arith.subf %664, %658 : vector<2x32xf32>
    %666 = arith.mulf %665, %663 : vector<2x32xf32>
    %667 = arith.mulf %658, %630 : vector<2x32xf32>
    %668 = arith.addf %666, %667 : vector<2x32xf32>
    %c2_205 = arith.constant 2 : index
    %c0_206 = arith.constant 0 : index
    %669 = vector.load %arg1[%c2_205, %c0_206] : memref<16x1xf32, #tpu.memory_space<vmem>>, vector<2x1xf32>
    %670 = vector.broadcast %669 : vector<2x1xf32> to vector<2x32xf32>
    %671 = arith.mulf %670, %668 : vector<2x32xf32>
    %cst_207 = arith.constant 1.000000e+00 : f32
    %672 = vector.broadcast %cst_207 : f32 to vector<2x1xf32>
    %673 = arith.subf %672, %669 : vector<2x1xf32>
    %674 = vector.broadcast %673 : vector<2x1xf32> to vector<2x32xf32>
    %675 = arith.mulf %674, %630 : vector<2x32xf32>
    %676 = arith.addf %671, %675 : vector<2x32xf32>
    %c0_208 = arith.constant 0 : index
    %c1_209 = arith.constant 1 : index
    %c0_210 = arith.constant 0 : index
    %677 = vector.load %arg10[%c0_208, %c1_209, %c0_210] : memref<2x8x32xf32, #tpu.memory_space<vmem>>, vector<2x1x32xf32>
    %678 = vector.shape_cast %677 : vector<2x1x32xf32> to vector<2x32xf32>
    %679 = vector.broadcast %669 : vector<2x1xf32> to vector<2x32xf32>
    %680 = arith.mulf %679, %668 : vector<2x32xf32>
    %681 = arith.addf %678, %680 : vector<2x32xf32>
    %c0_211 = arith.constant 0 : index
    %c1_212 = arith.constant 1 : index
    %c0_213 = arith.constant 0 : index
    %682 = vector.load %arg10[%c0_211, %c1_212, %c0_213] : memref<2x8x32xf32, #tpu.memory_space<vmem>>, vector<2x1x32xf32>
    %683 = vector.shape_cast %682 : vector<2x1x32xf32> to vector<2x32xf32>
    %684 = vector.shape_cast %681 : vector<2x32xf32> to vector<2x1x32xf32>
    tpu.vector_store %arg10[%c0_211, %c1_212, %c0_213], %684 {strides = array<i32>} : memref<2x8x32xf32, #tpu.memory_space<vmem>>, vector<2x1x32xf32>,
    %c0_214 = arith.constant 0 : index
    %c0_215 = arith.constant 0 : index
    %685 = vector.load %arg13[%c0_214, %c0_215] : memref<16x96xf32, #tpu.memory_space<vmem>>, vector<2x96xf32>
    %cst_216 = arith.constant dense<0.000000e+00> : vector<2x96xf32>
    %686 = tpu.matmul %676, %15, %cst_216 {dimension_numbers = #tpu.dot_dimension_numbers<[1], [0], [0], [1], [0, 0, 1, 1], [], []>} : vector<2x32xf32>, vector<32x96xf32>, vector<2x96xf32> -> vector<2x96xf32>
    %687 = vector.broadcast %16 : vector<1x96xf32> to vector<2x96xf32>
    %688 = arith.addf %686, %687 : vector<2x96xf32>
    %689 = vector.extract_strided_slice %685 {offsets = [0, 0], sizes = [2, 32], strides = [1, 1]} : vector<2x96xf32> to vector<2x32xf32>
    %690 = vector.extract_strided_slice %688 {offsets = [0, 0], sizes = [2, 32], strides = [1, 1]} : vector<2x96xf32> to vector<2x32xf32>
    %691 = arith.addf %689, %690 : vector<2x32xf32>
    %692 = arith.negf %691 : vector<2x32xf32>
    %693 = math.exp %692 : vector<2x32xf32>
    %cst_217 = arith.constant 1.000000e+00 : f32
    %694 = vector.broadcast %cst_217 : f32 to vector<2x32xf32>
    %695 = arith.addf %694, %693 : vector<2x32xf32>
    %696 = arith.divf %694, %695 : vector<2x32xf32>
    %697 = vector.extract_strided_slice %685 {offsets = [0, 32], sizes = [2, 32], strides = [1, 1]} : vector<2x96xf32> to vector<2x32xf32>
    %698 = vector.extract_strided_slice %688 {offsets = [0, 32], sizes = [2, 32], strides = [1, 1]} : vector<2x96xf32> to vector<2x32xf32>
    %699 = arith.addf %697, %698 : vector<2x32xf32>
    %700 = arith.negf %699 : vector<2x32xf32>
    %701 = math.exp %700 : vector<2x32xf32>
    %cst_218 = arith.constant 1.000000e+00 : f32
    %702 = vector.broadcast %cst_218 : f32 to vector<2x32xf32>
    %703 = arith.addf %702, %701 : vector<2x32xf32>
    %704 = arith.divf %702, %703 : vector<2x32xf32>
    %705 = vector.extract_strided_slice %685 {offsets = [0, 64], sizes = [2, 32], strides = [1, 1]} : vector<2x96xf32> to vector<2x32xf32>
    %706 = vector.extract_strided_slice %688 {offsets = [0, 64], sizes = [2, 32], strides = [1, 1]} : vector<2x96xf32> to vector<2x32xf32>
    %707 = arith.mulf %696, %706 : vector<2x32xf32>
    %708 = arith.addf %705, %707 : vector<2x32xf32>
    %709 = math.tanh %708 : vector<2x32xf32>
    %cst_219 = arith.constant 1.000000e+00 : f32
    %710 = vector.broadcast %cst_219 : f32 to vector<2x32xf32>
    %711 = arith.subf %710, %704 : vector<2x32xf32>
    %712 = arith.mulf %711, %709 : vector<2x32xf32>
    %713 = arith.mulf %704, %676 : vector<2x32xf32>
    %714 = arith.addf %712, %713 : vector<2x32xf32>
    %c0_220 = arith.constant 0 : index
    %c0_221 = arith.constant 0 : index
    %715 = vector.load %arg1[%c0_220, %c0_221] : memref<16x1xf32, #tpu.memory_space<vmem>>, vector<2x1xf32>
    %716 = vector.broadcast %715 : vector<2x1xf32> to vector<2x32xf32>
    %717 = arith.mulf %716, %714 : vector<2x32xf32>
    %cst_222 = arith.constant 1.000000e+00 : f32
    %718 = vector.broadcast %cst_222 : f32 to vector<2x1xf32>
    %719 = arith.subf %718, %715 : vector<2x1xf32>
    %720 = vector.broadcast %719 : vector<2x1xf32> to vector<2x32xf32>
    %721 = arith.mulf %720, %676 : vector<2x32xf32>
    %722 = arith.addf %717, %721 : vector<2x32xf32>
    %c0_223 = arith.constant 0 : index
    %c0_224 = arith.constant 0 : index
    %c0_225 = arith.constant 0 : index
    %723 = vector.load %arg10[%c0_223, %c0_224, %c0_225] : memref<2x8x32xf32, #tpu.memory_space<vmem>>, vector<2x1x32xf32>
    %724 = vector.shape_cast %723 : vector<2x1x32xf32> to vector<2x32xf32>
    %725 = vector.broadcast %715 : vector<2x1xf32> to vector<2x32xf32>
    %726 = arith.mulf %725, %714 : vector<2x32xf32>
    %727 = arith.addf %724, %726 : vector<2x32xf32>
    %c0_226 = arith.constant 0 : index
    %c0_227 = arith.constant 0 : index
    %c0_228 = arith.constant 0 : index
    %728 = vector.load %arg10[%c0_226, %c0_227, %c0_228] : memref<2x8x32xf32, #tpu.memory_space<vmem>>, vector<2x1x32xf32>
    %729 = vector.shape_cast %728 : vector<2x1x32xf32> to vector<2x32xf32>
    %730 = vector.shape_cast %727 : vector<2x32xf32> to vector<2x1x32xf32>
    tpu.vector_store %arg10[%c0_226, %c0_227, %c0_228], %730 {strides = array<i32>} : memref<2x8x32xf32, #tpu.memory_space<vmem>>, vector<2x1x32xf32>,
    %731 = arith.addf %356, %722 : vector<2x32xf32>
    %c0_229 = arith.constant 0 : index
    %c0_230 = arith.constant 0 : index
    %732 = vector.load %arg11[%c0_229, %c0_230] : memref<2x32xf32, #tpu.memory_space<vmem>>, vector<2x32xf32>
    tpu.vector_store %arg11[%c0_229, %c0_230], %731 {strides = array<i32>} : memref<2x32xf32, #tpu.memory_space<vmem>>, vector<2x32xf32>,
    return
  }
}

module attributes {stable_mosaic.version = 11 : i64} {
  func.func @_head_policy_kernel(%arg0: memref<2x32xf32, #tpu.memory_space<vmem>>, %arg1: memref<2x32xf32, #tpu.memory_space<vmem>>, %arg2: memref<2x8xf32, #tpu.memory_space<vmem>>, %arg3: memref<2x32xf32, #tpu.memory_space<vmem>>, %arg4: memref<10x16xf32, #tpu.memory_space<vmem>>, %arg5: memref<2x5xf32, #tpu.memory_space<vmem>>, %arg6: memref<64x32xf32, #tpu.memory_space<vmem>>, %arg7: memref<1x32xf32, #tpu.memory_space<vmem>>, %arg8: memref<32x6xf32, #tpu.memory_space<vmem>>, %arg9: memref<1x6xf32, #tpu.memory_space<vmem>>, %arg10: memref<40x96xf32, #tpu.memory_space<vmem>>, %arg11: memref<32x96xf32, #tpu.memory_space<vmem>>, %arg12: memref<1x96xf32, #tpu.memory_space<vmem>>, %arg13: memref<1x96xf32, #tpu.memory_space<vmem>>, %arg14: memref<32x32xf32, #tpu.memory_space<vmem>>, %arg15: memref<1x32xf32, #tpu.memory_space<vmem>>, %arg16: memref<32x32xf32, #tpu.memory_space<vmem>>, %arg17: memref<1x32xf32, #tpu.memory_space<vmem>>, %arg18: memref<16x96xf32, #tpu.memory_space<vmem>>, %arg19: memref<32x96xf32, #tpu.memory_space<vmem>>, %arg20: memref<1x96xf32, #tpu.memory_space<vmem>>, %arg21: memref<1x96xf32, #tpu.memory_space<vmem>>, %arg22: memref<5x32xf32, #tpu.memory_space<vmem>>, %arg23: memref<1x32xf32, #tpu.memory_space<vmem>>, %arg24: memref<8x32xf32, #tpu.memory_space<vmem>>, %arg25: memref<1x32xf32, #tpu.memory_space<vmem>>, %arg26: memref<128x38xf32, #tpu.memory_space<vmem>>, %arg27: memref<1x38xf32, #tpu.memory_space<vmem>>, %arg28: memref<32x8xf32, #tpu.memory_space<vmem>>, %arg29: memref<1x8xf32, #tpu.memory_space<vmem>>, %arg30: memref<8x6xf32, #tpu.memory_space<vmem>>, %arg31: memref<32x32xf32, #tpu.memory_space<vmem>>, %arg32: memref<1x32xf32, #tpu.memory_space<vmem>>, %arg33: memref<32x1xf32, #tpu.memory_space<vmem>>, %arg34: memref<1x1xf32, #tpu.memory_space<vmem>>, %arg35: memref<2x32xf32, #tpu.memory_space<vmem>>, %arg36: memref<2x6xf32, #tpu.memory_space<vmem>>, %arg37: memref<2x32xf32, #tpu.memory_space<vmem>>, %arg38: memref<2x8xf32, #tpu.memory_space<vmem>>, %arg39: memref<2x6xf32, #tpu.memory_space<vmem>>, %arg40: memref<2x1xf32, #tpu.memory_space<vmem>>, %arg41: memref<10x96xf32, #tpu.memory_space<vmem>>) attributes {dimension_semantics = [], scalar_prefetch = 0 : i64, scratch_operands = 1 : i64, tpu.core_type = #tpu.core_type<tc>} {
    %c0 = arith.constant 0 : index
    %c0_0 = arith.constant 0 : index
    %0 = vector.load %arg0[%c0, %c0_0] : memref<2x32xf32, #tpu.memory_space<vmem>>, vector<2x32xf32>
    %c0_1 = arith.constant 0 : index
    %c0_2 = arith.constant 0 : index
    %1 = vector.load %arg1[%c0_1, %c0_2] : memref<2x32xf32, #tpu.memory_space<vmem>>, vector<2x32xf32>
    %c0_3 = arith.constant 0 : index
    %c0_4 = arith.constant 0 : index
    %2 = vector.load %arg7[%c0_3, %c0_4] : memref<1x32xf32, #tpu.memory_space<vmem>>, vector<1x32xf32>
    %c0_5 = arith.constant 0 : index
    %c0_6 = arith.constant 0 : index
    %3 = vector.load %arg6[%c0_5, %c0_6] : memref<64x32xf32, #tpu.memory_space<vmem>>, vector<32x32xf32>
    %cst = arith.constant dense<0.000000e+00> : vector<2x32xf32>
    %4 = tpu.matmul %0, %3, %cst {dimension_numbers = #tpu.dot_dimension_numbers<[1], [0], [0], [1], [0, 0, 1, 1], [], []>} : vector<2x32xf32>, vector<32x32xf32>, vector<2x32xf32> -> vector<2x32xf32>
    %5 = vector.broadcast %2 : vector<1x32xf32> to vector<2x32xf32>
    %6 = arith.addf %5, %4 : vector<2x32xf32>
    %c32 = arith.constant 32 : index
    %c0_7 = arith.constant 0 : index
    %7 = vector.load %arg6[%c32, %c0_7] : memref<64x32xf32, #tpu.memory_space<vmem>>, vector<32x32xf32>
    %cst_8 = arith.constant dense<0.000000e+00> : vector<2x32xf32>
    %8 = tpu.matmul %1, %7, %cst_8 {dimension_numbers = #tpu.dot_dimension_numbers<[1], [0], [0], [1], [0, 0, 1, 1], [], []>} : vector<2x32xf32>, vector<32x32xf32>, vector<2x32xf32> -> vector<2x32xf32>
    %9 = arith.addf %6, %8 : vector<2x32xf32>
    %c0_9 = arith.constant 0 : index
    %c0_10 = arith.constant 0 : index
    %10 = vector.load %arg8[%c0_9, %c0_10] : memref<32x6xf32, #tpu.memory_space<vmem>>, vector<32x6xf32>
    %cst_11 = arith.constant dense<0.000000e+00> : vector<2x6xf32>
    %11 = tpu.matmul %9, %10, %cst_11 {dimension_numbers = #tpu.dot_dimension_numbers<[1], [0], [0], [1], [0, 0, 1, 1], [], []>} : vector<2x32xf32>, vector<32x6xf32>, vector<2x6xf32> -> vector<2x6xf32>
    %c0_12 = arith.constant 0 : index
    %c0_13 = arith.constant 0 : index
    %12 = vector.load %arg9[%c0_12, %c0_13] : memref<1x6xf32, #tpu.memory_space<vmem>>, vector<1x6xf32>
    %13 = vector.broadcast %12 : vector<1x6xf32> to vector<2x6xf32>
    %14 = arith.addf %11, %13 : vector<2x6xf32>
    %c0_14 = arith.constant 0 : index
    %c0_15 = arith.constant 0 : index
    %15 = vector.load %arg36[%c0_14, %c0_15] : memref<2x6xf32, #tpu.memory_space<vmem>>, vector<2x6xf32>
    tpu.vector_store %arg36[%c0_14, %c0_15], %14 {strides = array<i32>} : memref<2x6xf32, #tpu.memory_space<vmem>>, vector<2x6xf32>,
    %c0_16 = arith.constant 0 : index
    %c0_17 = arith.constant 0 : index
    %16 = vector.load %arg2[%c0_16, %c0_17] : memref<2x8xf32, #tpu.memory_space<vmem>>, vector<2x8xf32>
    %c0_18 = arith.constant 0 : index
    %c0_19 = arith.constant 0 : index
    %17 = vector.load %arg12[%c0_18, %c0_19] : memref<1x96xf32, #tpu.memory_space<vmem>>, vector<1x96xf32>
    %c0_20 = arith.constant 0 : index
    %c0_21 = arith.constant 0 : index
    %18 = vector.load %arg10[%c0_20, %c0_21] : memref<40x96xf32, #tpu.memory_space<vmem>>, vector<32x96xf32>
    %cst_22 = arith.constant dense<0.000000e+00> : vector<2x96xf32>
    %19 = tpu.matmul %9, %18, %cst_22 {dimension_numbers = #tpu.dot_dimension_numbers<[1], [0], [0], [1], [0, 0, 1, 1], [], []>} : vector<2x32xf32>, vector<32x96xf32>, vector<2x96xf32> -> vector<2x96xf32>
    %20 = vector.broadcast %17 : vector<1x96xf32> to vector<2x96xf32>
    %21 = arith.addf %20, %19 : vector<2x96xf32>
    %c32_23 = arith.constant 32 : index
    %c0_24 = arith.constant 0 : index
    %22 = vector.load %arg10[%c32_23, %c0_24] : memref<40x96xf32, #tpu.memory_space<vmem>>, vector<8x96xf32>
    %cst_25 = arith.constant dense<0.000000e+00> : vector<2x96xf32>
    %23 = tpu.matmul %16, %22, %cst_25 {dimension_numbers = #tpu.dot_dimension_numbers<[1], [0], [0], [1], [0, 0, 1, 1], [], []>} : vector<2x8xf32>, vector<8x96xf32>, vector<2x96xf32> -> vector<2x96xf32>
    %24 = arith.addf %21, %23 : vector<2x96xf32>
    %c0_26 = arith.constant 0 : index
    %c0_27 = arith.constant 0 : index
    %25 = vector.load %arg3[%c0_26, %c0_27] : memref<2x32xf32, #tpu.memory_space<vmem>>, vector<2x32xf32>
    %c0_28 = arith.constant 0 : index
    %c0_29 = arith.constant 0 : index
    %26 = vector.load %arg11[%c0_28, %c0_29] : memref<32x96xf32, #tpu.memory_space<vmem>>, vector<32x96xf32>
    %c0_30 = arith.constant 0 : index
    %c0_31 = arith.constant 0 : index
    %27 = vector.load %arg13[%c0_30, %c0_31] : memref<1x96xf32, #tpu.memory_space<vmem>>, vector<1x96xf32>
    %cst_32 = arith.constant dense<0.000000e+00> : vector<2x96xf32>
    %28 = tpu.matmul %25, %26, %cst_32 {dimension_numbers = #tpu.dot_dimension_numbers<[1], [0], [0], [1], [0, 0, 1, 1], [], []>} : vector<2x32xf32>, vector<32x96xf32>, vector<2x96xf32> -> vector<2x96xf32>
    %29 = vector.broadcast %27 : vector<1x96xf32> to vector<2x96xf32>
    %30 = arith.addf %28, %29 : vector<2x96xf32>
    %31 = vector.extract_strided_slice %24 {offsets = [0, 0], sizes = [2, 32], strides = [1, 1]} : vector<2x96xf32> to vector<2x32xf32>
    %32 = vector.extract_strided_slice %30 {offsets = [0, 0], sizes = [2, 32], strides = [1, 1]} : vector<2x96xf32> to vector<2x32xf32>
    %33 = arith.addf %31, %32 : vector<2x32xf32>
    %34 = arith.negf %33 : vector<2x32xf32>
    %35 = math.exp %34 : vector<2x32xf32>
    %cst_33 = arith.constant 1.000000e+00 : f32
    %36 = vector.broadcast %cst_33 : f32 to vector<2x32xf32>
    %37 = arith.addf %36, %35 : vector<2x32xf32>
    %38 = arith.divf %36, %37 : vector<2x32xf32>
    %39 = vector.extract_strided_slice %24 {offsets = [0, 32], sizes = [2, 32], strides = [1, 1]} : vector<2x96xf32> to vector<2x32xf32>
    %40 = vector.extract_strided_slice %30 {offsets = [0, 32], sizes = [2, 32], strides = [1, 1]} : vector<2x96xf32> to vector<2x32xf32>
    %41 = arith.addf %39, %40 : vector<2x32xf32>
    %42 = arith.negf %41 : vector<2x32xf32>
    %43 = math.exp %42 : vector<2x32xf32>
    %cst_34 = arith.constant 1.000000e+00 : f32
    %44 = vector.broadcast %cst_34 : f32 to vector<2x32xf32>
    %45 = arith.addf %44, %43 : vector<2x32xf32>
    %46 = arith.divf %44, %45 : vector<2x32xf32>
    %47 = vector.extract_strided_slice %24 {offsets = [0, 64], sizes = [2, 32], strides = [1, 1]} : vector<2x96xf32> to vector<2x32xf32>
    %48 = vector.extract_strided_slice %30 {offsets = [0, 64], sizes = [2, 32], strides = [1, 1]} : vector<2x96xf32> to vector<2x32xf32>
    %49 = arith.mulf %38, %48 : vector<2x32xf32>
    %50 = arith.addf %47, %49 : vector<2x32xf32>
    %51 = math.tanh %50 : vector<2x32xf32>
    %cst_35 = arith.constant 1.000000e+00 : f32
    %52 = vector.broadcast %cst_35 : f32 to vector<2x32xf32>
    %53 = arith.subf %52, %46 : vector<2x32xf32>
    %54 = arith.mulf %53, %51 : vector<2x32xf32>
    %55 = arith.mulf %46, %25 : vector<2x32xf32>
    %56 = arith.addf %54, %55 : vector<2x32xf32>
    %c0_36 = arith.constant 0 : index
    %c0_37 = arith.constant 0 : index
    %57 = vector.load %arg35[%c0_36, %c0_37] : memref<2x32xf32, #tpu.memory_space<vmem>>, vector<2x32xf32>
    tpu.vector_store %arg35[%c0_36, %c0_37], %9 {strides = array<i32>} : memref<2x32xf32, #tpu.memory_space<vmem>>, vector<2x32xf32>,
    %c0_38 = arith.constant 0 : index
    %c0_39 = arith.constant 0 : index
    %58 = vector.load %arg37[%c0_38, %c0_39] : memref<2x32xf32, #tpu.memory_space<vmem>>, vector<2x32xf32>
    tpu.vector_store %arg37[%c0_38, %c0_39], %56 {strides = array<i32>} : memref<2x32xf32, #tpu.memory_space<vmem>>, vector<2x32xf32>,
    %c0_40 = arith.constant 0 : index
    %c0_41 = arith.constant 0 : index
    %59 = vector.load %arg14[%c0_40, %c0_41] : memref<32x32xf32, #tpu.memory_space<vmem>>, vector<32x32xf32>
    %cst_42 = arith.constant dense<0.000000e+00> : vector<2x32xf32>
    %60 = tpu.matmul %56, %59, %cst_42 {dimension_numbers = #tpu.dot_dimension_numbers<[1], [0], [0], [1], [0, 0, 1, 1], [], []>} : vector<2x32xf32>, vector<32x32xf32>, vector<2x32xf32> -> vector<2x32xf32>
    %c0_43 = arith.constant 0 : index
    %c0_44 = arith.constant 0 : index
    %61 = vector.load %arg15[%c0_43, %c0_44] : memref<1x32xf32, #tpu.memory_space<vmem>>, vector<1x32xf32>
    %62 = vector.broadcast %61 : vector<1x32xf32> to vector<2x32xf32>
    %63 = arith.addf %60, %62 : vector<2x32xf32>
    %cst_45 = arith.constant 0.000000e+00 : f32
    %64 = vector.broadcast %cst_45 : f32 to vector<2x32xf32>
    %65 = arith.maximumf %63, %64 : vector<2x32xf32>
    %c0_46 = arith.constant 0 : index
    %c0_47 = arith.constant 0 : index
    %66 = vector.load %arg16[%c0_46, %c0_47] : memref<32x32xf32, #tpu.memory_space<vmem>>, vector<32x32xf32>
    %cst_48 = arith.constant dense<0.000000e+00> : vector<2x32xf32>
    %67 = tpu.matmul %65, %66, %cst_48 {dimension_numbers = #tpu.dot_dimension_numbers<[1], [0], [0], [1], [0, 0, 1, 1], [], []>} : vector<2x32xf32>, vector<32x32xf32>, vector<2x32xf32> -> vector<2x32xf32>
    %c0_49 = arith.constant 0 : index
    %c0_50 = arith.constant 0 : index
    %68 = vector.load %arg17[%c0_49, %c0_50] : memref<1x32xf32, #tpu.memory_space<vmem>>, vector<1x32xf32>
    %69 = vector.broadcast %68 : vector<1x32xf32> to vector<2x32xf32>
    %70 = arith.addf %67, %69 : vector<2x32xf32>
    %cst_51 = arith.constant 0.000000e+00 : f32
    %71 = vector.broadcast %cst_51 : f32 to vector<2x32xf32>
    %72 = arith.maximumf %70, %71 : vector<2x32xf32>
    %c0_52 = arith.constant 0 : index
    %c0_53 = arith.constant 0 : index
    %73 = vector.load %arg4[%c0_52, %c0_53] : memref<10x16xf32, #tpu.memory_space<vmem>>, vector<10x16xf32>
    %c0_54 = arith.constant 0 : index
    %c0_55 = arith.constant 0 : index
    %74 = vector.load %arg18[%c0_54, %c0_55] : memref<16x96xf32, #tpu.memory_space<vmem>>, vector<16x96xf32>
    %cst_56 = arith.constant dense<0.000000e+00> : vector<10x96xf32>
    %75 = tpu.matmul %73, %74, %cst_56 {dimension_numbers = #tpu.dot_dimension_numbers<[1], [0], [0], [1], [0, 0, 1, 1], [], []>} : vector<10x16xf32>, vector<16x96xf32>, vector<10x96xf32> -> vector<10x96xf32>
    %c0_57 = arith.constant 0 : index
    %c0_58 = arith.constant 0 : index
    %76 = vector.load %arg20[%c0_57, %c0_58] : memref<1x96xf32, #tpu.memory_space<vmem>>, vector<1x96xf32>
    %77 = vector.broadcast %76 : vector<1x96xf32> to vector<10x96xf32>
    %78 = arith.addf %75, %77 : vector<10x96xf32>
    %c0_59 = arith.constant 0 : index
    %c0_60 = arith.constant 0 : index
    %79 = vector.load %arg41[%c0_59, %c0_60] : memref<10x96xf32, #tpu.memory_space<vmem>>, vector<10x96xf32>
    tpu.vector_store %arg41[%c0_59, %c0_60], %78 {strides = array<i32>} : memref<10x96xf32, #tpu.memory_space<vmem>>, vector<10x96xf32>,
    %c0_61 = arith.constant 0 : index
    %c0_62 = arith.constant 0 : index
    %80 = vector.load %arg19[%c0_61, %c0_62] : memref<32x96xf32, #tpu.memory_space<vmem>>, vector<32x96xf32>
    %c0_63 = arith.constant 0 : index
    %c0_64 = arith.constant 0 : index
    %81 = vector.load %arg21[%c0_63, %c0_64] : memref<1x96xf32, #tpu.memory_space<vmem>>, vector<1x96xf32>
    %cst_65 = arith.constant 0.000000e+00 : f32
    %82 = vector.broadcast %cst_65 : f32 to vector<2x32xf32>
    %c0_66 = arith.constant 0 : index
    %c0_67 = arith.constant 0 : index
    %83 = vector.load %arg41[%c0_66, %c0_67] : memref<10x96xf32, #tpu.memory_space<vmem>>, vector<2x96xf32>
    %cst_68 = arith.constant dense<0.000000e+00> : vector<2x96xf32>
    %84 = tpu.matmul %82, %80, %cst_68 {dimension_numbers = #tpu.dot_dimension_numbers<[1], [0], [0], [1], [0, 0, 1, 1], [], []>} : vector<2x32xf32>, vector<32x96xf32>, vector<2x96xf32> -> vector<2x96xf32>
    %85 = vector.broadcast %81 : vector<1x96xf32> to vector<2x96xf32>
    %86 = arith.addf %84, %85 : vector<2x96xf32>
    %87 = vector.extract_strided_slice %83 {offsets = [0, 0], sizes = [2, 32], strides = [1, 1]} : vector<2x96xf32> to vector<2x32xf32>
    %88 = vector.extract_strided_slice %86 {offsets = [0, 0], sizes = [2, 32], strides = [1, 1]} : vector<2x96xf32> to vector<2x32xf32>
    %89 = arith.addf %87, %88 : vector<2x32xf32>
    %90 = arith.negf %89 : vector<2x32xf32>
    %91 = math.exp %90 : vector<2x32xf32>
    %cst_69 = arith.constant 1.000000e+00 : f32
    %92 = vector.broadcast %cst_69 : f32 to vector<2x32xf32>
    %93 = arith.addf %92, %91 : vector<2x32xf32>
    %94 = arith.divf %92, %93 : vector<2x32xf32>
    %95 = vector.extract_strided_slice %83 {offsets = [0, 32], sizes = [2, 32], strides = [1, 1]} : vector<2x96xf32> to vector<2x32xf32>
    %96 = vector.extract_strided_slice %86 {offsets = [0, 32], sizes = [2, 32], strides = [1, 1]} : vector<2x96xf32> to vector<2x32xf32>
    %97 = arith.addf %95, %96 : vector<2x32xf32>
    %98 = arith.negf %97 : vector<2x32xf32>
    %99 = math.exp %98 : vector<2x32xf32>
    %cst_70 = arith.constant 1.000000e+00 : f32
    %100 = vector.broadcast %cst_70 : f32 to vector<2x32xf32>
    %101 = arith.addf %100, %99 : vector<2x32xf32>
    %102 = arith.divf %100, %101 : vector<2x32xf32>
    %103 = vector.extract_strided_slice %83 {offsets = [0, 64], sizes = [2, 32], strides = [1, 1]} : vector<2x96xf32> to vector<2x32xf32>
    %104 = vector.extract_strided_slice %86 {offsets = [0, 64], sizes = [2, 32], strides = [1, 1]} : vector<2x96xf32> to vector<2x32xf32>
    %105 = arith.mulf %94, %104 : vector<2x32xf32>
    %106 = arith.addf %103, %105 : vector<2x32xf32>
    %107 = math.tanh %106 : vector<2x32xf32>
    %cst_71 = arith.constant 1.000000e+00 : f32
    %108 = vector.broadcast %cst_71 : f32 to vector<2x32xf32>
    %109 = arith.subf %108, %102 : vector<2x32xf32>
    %110 = arith.mulf %109, %107 : vector<2x32xf32>
    %111 = arith.mulf %102, %82 : vector<2x32xf32>
    %112 = arith.addf %110, %111 : vector<2x32xf32>
    %c2 = arith.constant 2 : index
    %c0_72 = arith.constant 0 : index
    %113 = vector.load %arg41[%c2, %c0_72] : memref<10x96xf32, #tpu.memory_space<vmem>>, vector<2x96xf32>
    %cst_73 = arith.constant dense<0.000000e+00> : vector<2x96xf32>
    %114 = tpu.matmul %112, %80, %cst_73 {dimension_numbers = #tpu.dot_dimension_numbers<[1], [0], [0], [1], [0, 0, 1, 1], [], []>} : vector<2x32xf32>, vector<32x96xf32>, vector<2x96xf32> -> vector<2x96xf32>
    %115 = vector.broadcast %81 : vector<1x96xf32> to vector<2x96xf32>
    %116 = arith.addf %114, %115 : vector<2x96xf32>
    %117 = vector.extract_strided_slice %113 {offsets = [0, 0], sizes = [2, 32], strides = [1, 1]} : vector<2x96xf32> to vector<2x32xf32>
    %118 = vector.extract_strided_slice %116 {offsets = [0, 0], sizes = [2, 32], strides = [1, 1]} : vector<2x96xf32> to vector<2x32xf32>
    %119 = arith.addf %117, %118 : vector<2x32xf32>
    %120 = arith.negf %119 : vector<2x32xf32>
    %121 = math.exp %120 : vector<2x32xf32>
    %cst_74 = arith.constant 1.000000e+00 : f32
    %122 = vector.broadcast %cst_74 : f32 to vector<2x32xf32>
    %123 = arith.addf %122, %121 : vector<2x32xf32>
    %124 = arith.divf %122, %123 : vector<2x32xf32>
    %125 = vector.extract_strided_slice %113 {offsets = [0, 32], sizes = [2, 32], strides = [1, 1]} : vector<2x96xf32> to vector<2x32xf32>
    %126 = vector.extract_strided_slice %116 {offsets = [0, 32], sizes = [2, 32], strides = [1, 1]} : vector<2x96xf32> to vector<2x32xf32>
    %127 = arith.addf %125, %126 : vector<2x32xf32>
    %128 = arith.negf %127 : vector<2x32xf32>
    %129 = math.exp %128 : vector<2x32xf32>
    %cst_75 = arith.constant 1.000000e+00 : f32
    %130 = vector.broadcast %cst_75 : f32 to vector<2x32xf32>
    %131 = arith.addf %130, %129 : vector<2x32xf32>
    %132 = arith.divf %130, %131 : vector<2x32xf32>
    %133 = vector.extract_strided_slice %113 {offsets = [0, 64], sizes = [2, 32], strides = [1, 1]} : vector<2x96xf32> to vector<2x32xf32>
    %134 = vector.extract_strided_slice %116 {offsets = [0, 64], sizes = [2, 32], strides = [1, 1]} : vector<2x96xf32> to vector<2x32xf32>
    %135 = arith.mulf %124, %134 : vector<2x32xf32>
    %136 = arith.addf %133, %135 : vector<2x32xf32>
    %137 = math.tanh %136 : vector<2x32xf32>
    %cst_76 = arith.constant 1.000000e+00 : f32
    %138 = vector.broadcast %cst_76 : f32 to vector<2x32xf32>
    %139 = arith.subf %138, %132 : vector<2x32xf32>
    %140 = arith.mulf %139, %137 : vector<2x32xf32>
    %141 = arith.mulf %132, %112 : vector<2x32xf32>
    %142 = arith.addf %140, %141 : vector<2x32xf32>
    %c4 = arith.constant 4 : index
    %c0_77 = arith.constant 0 : index
    %143 = vector.load %arg41[%c4, %c0_77] : memref<10x96xf32, #tpu.memory_space<vmem>>, vector<2x96xf32>
    %cst_78 = arith.constant dense<0.000000e+00> : vector<2x96xf32>
    %144 = tpu.matmul %142, %80, %cst_78 {dimension_numbers = #tpu.dot_dimension_numbers<[1], [0], [0], [1], [0, 0, 1, 1], [], []>} : vector<2x32xf32>, vector<32x96xf32>, vector<2x96xf32> -> vector<2x96xf32>
    %145 = vector.broadcast %81 : vector<1x96xf32> to vector<2x96xf32>
    %146 = arith.addf %144, %145 : vector<2x96xf32>
    %147 = vector.extract_strided_slice %143 {offsets = [0, 0], sizes = [2, 32], strides = [1, 1]} : vector<2x96xf32> to vector<2x32xf32>
    %148 = vector.extract_strided_slice %146 {offsets = [0, 0], sizes = [2, 32], strides = [1, 1]} : vector<2x96xf32> to vector<2x32xf32>
    %149 = arith.addf %147, %148 : vector<2x32xf32>
    %150 = arith.negf %149 : vector<2x32xf32>
    %151 = math.exp %150 : vector<2x32xf32>
    %cst_79 = arith.constant 1.000000e+00 : f32
    %152 = vector.broadcast %cst_79 : f32 to vector<2x32xf32>
    %153 = arith.addf %152, %151 : vector<2x32xf32>
    %154 = arith.divf %152, %153 : vector<2x32xf32>
    %155 = vector.extract_strided_slice %143 {offsets = [0, 32], sizes = [2, 32], strides = [1, 1]} : vector<2x96xf32> to vector<2x32xf32>
    %156 = vector.extract_strided_slice %146 {offsets = [0, 32], sizes = [2, 32], strides = [1, 1]} : vector<2x96xf32> to vector<2x32xf32>
    %157 = arith.addf %155, %156 : vector<2x32xf32>
    %158 = arith.negf %157 : vector<2x32xf32>
    %159 = math.exp %158 : vector<2x32xf32>
    %cst_80 = arith.constant 1.000000e+00 : f32
    %160 = vector.broadcast %cst_80 : f32 to vector<2x32xf32>
    %161 = arith.addf %160, %159 : vector<2x32xf32>
    %162 = arith.divf %160, %161 : vector<2x32xf32>
    %163 = vector.extract_strided_slice %143 {offsets = [0, 64], sizes = [2, 32], strides = [1, 1]} : vector<2x96xf32> to vector<2x32xf32>
    %164 = vector.extract_strided_slice %146 {offsets = [0, 64], sizes = [2, 32], strides = [1, 1]} : vector<2x96xf32> to vector<2x32xf32>
    %165 = arith.mulf %154, %164 : vector<2x32xf32>
    %166 = arith.addf %163, %165 : vector<2x32xf32>
    %167 = math.tanh %166 : vector<2x32xf32>
    %cst_81 = arith.constant 1.000000e+00 : f32
    %168 = vector.broadcast %cst_81 : f32 to vector<2x32xf32>
    %169 = arith.subf %168, %162 : vector<2x32xf32>
    %170 = arith.mulf %169, %167 : vector<2x32xf32>
    %171 = arith.mulf %162, %142 : vector<2x32xf32>
    %172 = arith.addf %170, %171 : vector<2x32xf32>
    %c6 = arith.constant 6 : index
    %c0_82 = arith.constant 0 : index
    %173 = vector.load %arg41[%c6, %c0_82] : memref<10x96xf32, #tpu.memory_space<vmem>>, vector<2x96xf32>
    %cst_83 = arith.constant dense<0.000000e+00> : vector<2x96xf32>
    %174 = tpu.matmul %172, %80, %cst_83 {dimension_numbers = #tpu.dot_dimension_numbers<[1], [0], [0], [1], [0, 0, 1, 1], [], []>} : vector<2x32xf32>, vector<32x96xf32>, vector<2x96xf32> -> vector<2x96xf32>
    %175 = vector.broadcast %81 : vector<1x96xf32> to vector<2x96xf32>
    %176 = arith.addf %174, %175 : vector<2x96xf32>
    %177 = vector.extract_strided_slice %173 {offsets = [0, 0], sizes = [2, 32], strides = [1, 1]} : vector<2x96xf32> to vector<2x32xf32>
    %178 = vector.extract_strided_slice %176 {offsets = [0, 0], sizes = [2, 32], strides = [1, 1]} : vector<2x96xf32> to vector<2x32xf32>
    %179 = arith.addf %177, %178 : vector<2x32xf32>
    %180 = arith.negf %179 : vector<2x32xf32>
    %181 = math.exp %180 : vector<2x32xf32>
    %cst_84 = arith.constant 1.000000e+00 : f32
    %182 = vector.broadcast %cst_84 : f32 to vector<2x32xf32>
    %183 = arith.addf %182, %181 : vector<2x32xf32>
    %184 = arith.divf %182, %183 : vector<2x32xf32>
    %185 = vector.extract_strided_slice %173 {offsets = [0, 32], sizes = [2, 32], strides = [1, 1]} : vector<2x96xf32> to vector<2x32xf32>
    %186 = vector.extract_strided_slice %176 {offsets = [0, 32], sizes = [2, 32], strides = [1, 1]} : vector<2x96xf32> to vector<2x32xf32>
    %187 = arith.addf %185, %186 : vector<2x32xf32>
    %188 = arith.negf %187 : vector<2x32xf32>
    %189 = math.exp %188 : vector<2x32xf32>
    %cst_85 = arith.constant 1.000000e+00 : f32
    %190 = vector.broadcast %cst_85 : f32 to vector<2x32xf32>
    %191 = arith.addf %190, %189 : vector<2x32xf32>
    %192 = arith.divf %190, %191 : vector<2x32xf32>
    %193 = vector.extract_strided_slice %173 {offsets = [0, 64], sizes = [2, 32], strides = [1, 1]} : vector<2x96xf32> to vector<2x32xf32>
    %194 = vector.extract_strided_slice %176 {offsets = [0, 64], sizes = [2, 32], strides = [1, 1]} : vector<2x96xf32> to vector<2x32xf32>
    %195 = arith.mulf %184, %194 : vector<2x32xf32>
    %196 = arith.addf %193, %195 : vector<2x32xf32>
    %197 = math.tanh %196 : vector<2x32xf32>
    %cst_86 = arith.constant 1.000000e+00 : f32
    %198 = vector.broadcast %cst_86 : f32 to vector<2x32xf32>
    %199 = arith.subf %198, %192 : vector<2x32xf32>
    %200 = arith.mulf %199, %197 : vector<2x32xf32>
    %201 = arith.mulf %192, %172 : vector<2x32xf32>
    %202 = arith.addf %200, %201 : vector<2x32xf32>
    %c8 = arith.constant 8 : index
    %c0_87 = arith.constant 0 : index
    %203 = vector.load %arg41[%c8, %c0_87] : memref<10x96xf32, #tpu.memory_space<vmem>>, vector<2x96xf32>
    %cst_88 = arith.constant dense<0.000000e+00> : vector<2x96xf32>
    %204 = tpu.matmul %202, %80, %cst_88 {dimension_numbers = #tpu.dot_dimension_numbers<[1], [0], [0], [1], [0, 0, 1, 1], [], []>} : vector<2x32xf32>, vector<32x96xf32>, vector<2x96xf32> -> vector<2x96xf32>
    %205 = vector.broadcast %81 : vector<1x96xf32> to vector<2x96xf32>
    %206 = arith.addf %204, %205 : vector<2x96xf32>
    %207 = vector.extract_strided_slice %203 {offsets = [0, 0], sizes = [2, 32], strides = [1, 1]} : vector<2x96xf32> to vector<2x32xf32>
    %208 = vector.extract_strided_slice %206 {offsets = [0, 0], sizes = [2, 32], strides = [1, 1]} : vector<2x96xf32> to vector<2x32xf32>
    %209 = arith.addf %207, %208 : vector<2x32xf32>
    %210 = arith.negf %209 : vector<2x32xf32>
    %211 = math.exp %210 : vector<2x32xf32>
    %cst_89 = arith.constant 1.000000e+00 : f32
    %212 = vector.broadcast %cst_89 : f32 to vector<2x32xf32>
    %213 = arith.addf %212, %211 : vector<2x32xf32>
    %214 = arith.divf %212, %213 : vector<2x32xf32>
    %215 = vector.extract_strided_slice %203 {offsets = [0, 32], sizes = [2, 32], strides = [1, 1]} : vector<2x96xf32> to vector<2x32xf32>
    %216 = vector.extract_strided_slice %206 {offsets = [0, 32], sizes = [2, 32], strides = [1, 1]} : vector<2x96xf32> to vector<2x32xf32>
    %217 = arith.addf %215, %216 : vector<2x32xf32>
    %218 = arith.negf %217 : vector<2x32xf32>
    %219 = math.exp %218 : vector<2x32xf32>
    %cst_90 = arith.constant 1.000000e+00 : f32
    %220 = vector.broadcast %cst_90 : f32 to vector<2x32xf32>
    %221 = arith.addf %220, %219 : vector<2x32xf32>
    %222 = arith.divf %220, %221 : vector<2x32xf32>
    %223 = vector.extract_strided_slice %203 {offsets = [0, 64], sizes = [2, 32], strides = [1, 1]} : vector<2x96xf32> to vector<2x32xf32>
    %224 = vector.extract_strided_slice %206 {offsets = [0, 64], sizes = [2, 32], strides = [1, 1]} : vector<2x96xf32> to vector<2x32xf32>
    %225 = arith.mulf %214, %224 : vector<2x32xf32>
    %226 = arith.addf %223, %225 : vector<2x32xf32>
    %227 = math.tanh %226 : vector<2x32xf32>
    %cst_91 = arith.constant 1.000000e+00 : f32
    %228 = vector.broadcast %cst_91 : f32 to vector<2x32xf32>
    %229 = arith.subf %228, %222 : vector<2x32xf32>
    %230 = arith.mulf %229, %227 : vector<2x32xf32>
    %231 = arith.mulf %222, %202 : vector<2x32xf32>
    %232 = arith.addf %230, %231 : vector<2x32xf32>
    %c0_92 = arith.constant 0 : index
    %c0_93 = arith.constant 0 : index
    %233 = vector.load %arg5[%c0_92, %c0_93] : memref<2x5xf32, #tpu.memory_space<vmem>>, vector<2x5xf32>
    %c0_94 = arith.constant 0 : index
    %c0_95 = arith.constant 0 : index
    %234 = vector.load %arg22[%c0_94, %c0_95] : memref<5x32xf32, #tpu.memory_space<vmem>>, vector<5x32xf32>
    %cst_96 = arith.constant dense<0.000000e+00> : vector<2x32xf32>
    %235 = tpu.matmul %233, %234, %cst_96 {dimension_numbers = #tpu.dot_dimension_numbers<[1], [0], [0], [1], [0, 0, 1, 1], [], []>} : vector<2x5xf32>, vector<5x32xf32>, vector<2x32xf32> -> vector<2x32xf32>
    %c0_97 = arith.constant 0 : index
    %c0_98 = arith.constant 0 : index
    %236 = vector.load %arg23[%c0_97, %c0_98] : memref<1x32xf32, #tpu.memory_space<vmem>>, vector<1x32xf32>
    %237 = vector.broadcast %236 : vector<1x32xf32> to vector<2x32xf32>
    %238 = arith.addf %235, %237 : vector<2x32xf32>
    %c0_99 = arith.constant 0 : index
    %c0_100 = arith.constant 0 : index
    %239 = vector.load %arg2[%c0_99, %c0_100] : memref<2x8xf32, #tpu.memory_space<vmem>>, vector<2x8xf32>
    %c0_101 = arith.constant 0 : index
    %c0_102 = arith.constant 0 : index
    %240 = vector.load %arg24[%c0_101, %c0_102] : memref<8x32xf32, #tpu.memory_space<vmem>>, vector<8x32xf32>
    %cst_103 = arith.constant dense<0.000000e+00> : vector<2x32xf32>
    %241 = tpu.matmul %239, %240, %cst_103 {dimension_numbers = #tpu.dot_dimension_numbers<[1], [0], [0], [1], [0, 0, 1, 1], [], []>} : vector<2x8xf32>, vector<8x32xf32>, vector<2x32xf32> -> vector<2x32xf32>
    %c0_104 = arith.constant 0 : index
    %c0_105 = arith.constant 0 : index
    %242 = vector.load %arg25[%c0_104, %c0_105] : memref<1x32xf32, #tpu.memory_space<vmem>>, vector<1x32xf32>
    %243 = vector.broadcast %242 : vector<1x32xf32> to vector<2x32xf32>
    %244 = arith.addf %241, %243 : vector<2x32xf32>
    %c0_106 = arith.constant 0 : index
    %c0_107 = arith.constant 0 : index
    %245 = vector.load %arg27[%c0_106, %c0_107] : memref<1x38xf32, #tpu.memory_space<vmem>>, vector<1x38xf32>
    %c0_108 = arith.constant 0 : index
    %c0_109 = arith.constant 0 : index
    %246 = vector.load %arg26[%c0_108, %c0_109] : memref<128x38xf32, #tpu.memory_space<vmem>>, vector<32x38xf32>
    %cst_110 = arith.constant dense<0.000000e+00> : vector<2x38xf32>
    %247 = tpu.matmul %244, %246, %cst_110 {dimension_numbers = #tpu.dot_dimension_numbers<[1], [0], [0], [1], [0, 0, 1, 1], [], []>} : vector<2x32xf32>, vector<32x38xf32>, vector<2x38xf32> -> vector<2x38xf32>
    %248 = vector.broadcast %245 : vector<1x38xf32> to vector<2x38xf32>
    %249 = arith.addf %248, %247 : vector<2x38xf32>
    %c32_111 = arith.constant 32 : index
    %c0_112 = arith.constant 0 : index
    %250 = vector.load %arg26[%c32_111, %c0_112] : memref<128x38xf32, #tpu.memory_space<vmem>>, vector<32x38xf32>
    %cst_113 = arith.constant dense<0.000000e+00> : vector<2x38xf32>
    %251 = tpu.matmul %72, %250, %cst_113 {dimension_numbers = #tpu.dot_dimension_numbers<[1], [0], [0], [1], [0, 0, 1, 1], [], []>} : vector<2x32xf32>, vector<32x38xf32>, vector<2x38xf32> -> vector<2x38xf32>
    %252 = arith.addf %249, %251 : vector<2x38xf32>
    %c64 = arith.constant 64 : index
    %c0_114 = arith.constant 0 : index
    %253 = vector.load %arg26[%c64, %c0_114] : memref<128x38xf32, #tpu.memory_space<vmem>>, vector<32x38xf32>
    %cst_115 = arith.constant dense<0.000000e+00> : vector<2x38xf32>
    %254 = tpu.matmul %232, %253, %cst_115 {dimension_numbers = #tpu.dot_dimension_numbers<[1], [0], [0], [1], [0, 0, 1, 1], [], []>} : vector<2x32xf32>, vector<32x38xf32>, vector<2x38xf32> -> vector<2x38xf32>
    %255 = arith.addf %252, %254 : vector<2x38xf32>
    %c96 = arith.constant 96 : index
    %c0_116 = arith.constant 0 : index
    %256 = vector.load %arg26[%c96, %c0_116] : memref<128x38xf32, #tpu.memory_space<vmem>>, vector<32x38xf32>
    %cst_117 = arith.constant dense<0.000000e+00> : vector<2x38xf32>
    %257 = tpu.matmul %238, %256, %cst_117 {dimension_numbers = #tpu.dot_dimension_numbers<[1], [0], [0], [1], [0, 0, 1, 1], [], []>} : vector<2x32xf32>, vector<32x38xf32>, vector<2x38xf32> -> vector<2x38xf32>
    %258 = arith.addf %255, %257 : vector<2x38xf32>
    %259 = vector.extract_strided_slice %258 {offsets = [0, 0], sizes = [2, 32], strides = [1, 1]} : vector<2x38xf32> to vector<2x32xf32>
    %260 = vector.extract_strided_slice %258 {offsets = [0, 32], sizes = [2, 6], strides = [1, 1]} : vector<2x38xf32> to vector<2x6xf32>
    %c0_118 = arith.constant 0 : index
    %c0_119 = arith.constant 0 : index
    %261 = vector.load %arg28[%c0_118, %c0_119] : memref<32x8xf32, #tpu.memory_space<vmem>>, vector<32x8xf32>
    %cst_120 = arith.constant dense<0.000000e+00> : vector<2x8xf32>
    %262 = tpu.matmul %259, %261, %cst_120 {dimension_numbers = #tpu.dot_dimension_numbers<[1], [0], [0], [1], [0, 0, 1, 1], [], []>} : vector<2x32xf32>, vector<32x8xf32>, vector<2x8xf32> -> vector<2x8xf32>
    %c0_121 = arith.constant 0 : index
    %c0_122 = arith.constant 0 : index
    %263 = vector.load %arg29[%c0_121, %c0_122] : memref<1x8xf32, #tpu.memory_space<vmem>>, vector<1x8xf32>
    %264 = vector.broadcast %263 : vector<1x8xf32> to vector<2x8xf32>
    %265 = arith.addf %262, %264 : vector<2x8xf32>
    %cst_123 = arith.constant dense<0xFF800000> : vector<2xf32>
    %266 = vector.multi_reduction <maximumf>, %265, %cst_123 [1] : vector<2x8xf32> to vector<2xf32>
    %267 = vector.shape_cast %266 : vector<2xf32> to vector<2x1xf32>
    %268 = vector.broadcast %267 : vector<2x1xf32> to vector<2x8xf32>
    %269 = arith.subf %265, %268 : vector<2x8xf32>
    %270 = math.exp %269 : vector<2x8xf32>
    %cst_124 = arith.constant dense<0.000000e+00> : vector<2xf32>
    %271 = vector.multi_reduction <add>, %270, %cst_124 [1] : vector<2x8xf32> to vector<2xf32>
    %272 = vector.shape_cast %271 : vector<2xf32> to vector<2x1xf32>
    %273 = vector.broadcast %272 : vector<2x1xf32> to vector<2x8xf32>
    %274 = arith.divf %270, %273 : vector<2x8xf32>
    %c0_125 = arith.constant 0 : index
    %c0_126 = arith.constant 0 : index
    %275 = vector.load %arg30[%c0_125, %c0_126] : memref<8x6xf32, #tpu.memory_space<vmem>>, vector<8x6xf32>
    %cst_127 = arith.constant dense<0.000000e+00> : vector<2x6xf32>
    %276 = tpu.matmul %274, %275, %cst_127 {dimension_numbers = #tpu.dot_dimension_numbers<[1], [0], [0], [1], [0, 0, 1, 1], [], []>} : vector<2x8xf32>, vector<8x6xf32>, vector<2x6xf32> -> vector<2x6xf32>
    %277 = arith.addf %260, %276 : vector<2x6xf32>
    %cst_128 = arith.constant 2.000000e+00 : f32
    %278 = vector.broadcast %cst_128 : f32 to vector<2x6xf32>
    %279 = arith.mulf %278, %277 : vector<2x6xf32>
    %cst_129 = arith.constant 1.000000e+00 : f32
    %280 = vector.broadcast %cst_129 : f32 to vector<2x6xf32>
    %281 = arith.subf %279, %280 : vector<2x6xf32>
    %282 = arith.negf %281 : vector<2x6xf32>
    %283 = math.exp %282 : vector<2x6xf32>
    %cst_130 = arith.constant 1.000000e+00 : f32
    %284 = vector.broadcast %cst_130 : f32 to vector<2x6xf32>
    %285 = arith.addf %284, %283 : vector<2x6xf32>
    %286 = arith.divf %284, %285 : vector<2x6xf32>
    %c0_131 = arith.constant 0 : index
    %c0_132 = arith.constant 0 : index
    %287 = vector.load %arg39[%c0_131, %c0_132] : memref<2x6xf32, #tpu.memory_space<vmem>>, vector<2x6xf32>
    tpu.vector_store %arg39[%c0_131, %c0_132], %286 {strides = array<i32>} : memref<2x6xf32, #tpu.memory_space<vmem>>, vector<2x6xf32>,
    %c0_133 = arith.constant 0 : index
    %c0_134 = arith.constant 0 : index
    %288 = vector.load %arg31[%c0_133, %c0_134] : memref<32x32xf32, #tpu.memory_space<vmem>>, vector<32x32xf32>
    %cst_135 = arith.constant dense<0.000000e+00> : vector<2x32xf32>
    %289 = tpu.matmul %259, %288, %cst_135 {dimension_numbers = #tpu.dot_dimension_numbers<[1], [0], [0], [1], [0, 0, 1, 1], [], []>} : vector<2x32xf32>, vector<32x32xf32>, vector<2x32xf32> -> vector<2x32xf32>
    %c0_136 = arith.constant 0 : index
    %c0_137 = arith.constant 0 : index
    %290 = vector.load %arg32[%c0_136, %c0_137] : memref<1x32xf32, #tpu.memory_space<vmem>>, vector<1x32xf32>
    %291 = vector.broadcast %290 : vector<1x32xf32> to vector<2x32xf32>
    %292 = arith.addf %289, %291 : vector<2x32xf32>
    %c0_138 = arith.constant 0 : index
    %c0_139 = arith.constant 0 : index
    %293 = vector.load %arg33[%c0_138, %c0_139] : memref<32x1xf32, #tpu.memory_space<vmem>>, vector<32x1xf32>
    %cst_140 = arith.constant dense<0.000000e+00> : vector<2x1xf32>
    %294 = tpu.matmul %292, %293, %cst_140 {dimension_numbers = #tpu.dot_dimension_numbers<[1], [0], [0], [1], [0, 0, 1, 1], [], []>} : vector<2x32xf32>, vector<32x1xf32>, vector<2x1xf32> -> vector<2x1xf32>
    %c0_141 = arith.constant 0 : index
    %c0_142 = arith.constant 0 : index
    %295 = vector.load %arg34[%c0_141, %c0_142] : memref<1x1xf32, #tpu.memory_space<vmem>>, vector<1x1xf32>
    %296 = vector.broadcast %295 : vector<1x1xf32> to vector<2x1xf32>
    %297 = arith.addf %294, %296 : vector<2x1xf32>
    %c0_143 = arith.constant 0 : index
    %c0_144 = arith.constant 0 : index
    %298 = vector.load %arg40[%c0_143, %c0_144] : memref<2x1xf32, #tpu.memory_space<vmem>>, vector<2x1xf32>
    tpu.vector_store %arg40[%c0_143, %c0_144], %297 {strides = array<i32>} : memref<2x1xf32, #tpu.memory_space<vmem>>, vector<2x1xf32>,
    %c0_145 = arith.constant 0 : index
    %c0_146 = arith.constant 0 : index
    %299 = vector.load %arg38[%c0_145, %c0_146] : memref<2x8xf32, #tpu.memory_space<vmem>>, vector<2x8xf32>
    tpu.vector_store %arg38[%c0_145, %c0_146], %265 {strides = array<i32>} : memref<2x8xf32, #tpu.memory_space<vmem>>, vector<2x8xf32>,
    return
  }
}

module attributes {stable_mosaic.version = 11 : i64} {
  func.func @_decoder_kernel(%arg0: i32, %arg1: memref<1x2x32xf32, #tpu.memory_space<vmem>>, %arg2: memref<2x32xf32, #tpu.memory_space<vmem>>, %arg3: memref<2x8x32xf32, #tpu.memory_space<vmem>>, %arg4: memref<2x8xf32, #tpu.memory_space<vmem>>, %arg5: memref<2x6x32xf32, #tpu.memory_space<vmem>>, %arg6: memref<2x6xf32, #tpu.memory_space<vmem>>, %arg7: memref<2x8x32xf32, #tpu.memory_space<vmem>>, %arg8: memref<2x6x32xf32, #tpu.memory_space<vmem>>, %arg9: memref<32x32xf32, #tpu.memory_space<vmem>>, %arg10: memref<32x35xf32, #tpu.memory_space<vmem>>, %arg11: memref<32x99xf32, #tpu.memory_space<vmem>>, %arg12: memref<32x96xf32, #tpu.memory_space<vmem>>, %arg13: memref<1x96xf32, #tpu.memory_space<vmem>>, %arg14: memref<1x96xf32, #tpu.memory_space<vmem>>, %arg15: memref<32x3xf32, #tpu.memory_space<vmem>>, %arg16: memref<32x3xf32, #tpu.memory_space<vmem>>, %arg17: memref<1x3xf32, #tpu.memory_space<vmem>>, %arg18: memref<32x3xf32, #tpu.memory_space<vmem>>, %arg19: memref<1x3xf32, #tpu.memory_space<vmem>>, %arg20: memref<1x2x4x32xf32, #tpu.memory_space<vmem>>, %arg21: memref<1x2x3xf32, #tpu.memory_space<vmem>>) attributes {dimension_semantics = [#tpu.dimension_semantics<parallel>], iteration_bounds = array<i64: 3>, scalar_prefetch = 0 : i64, scratch_operands = 0 : i64, tpu.core_type = #tpu.core_type<tc>, window_params = [{transform_indices = @transform_0, window_bounds = array<i64: 1, 2, 32>}, {pipeline_mode = #tpu.pipeline_mode<synchronous>, transform_indices = @transform_1, window_bounds = array<i64: 2, 32>}, {pipeline_mode = #tpu.pipeline_mode<synchronous>, transform_indices = @transform_2, window_bounds = array<i64: 2, 8, 32>}, {pipeline_mode = #tpu.pipeline_mode<synchronous>, transform_indices = @transform_3, window_bounds = array<i64: 2, 8>}, {pipeline_mode = #tpu.pipeline_mode<synchronous>, transform_indices = @transform_4, window_bounds = array<i64: 2, 6, 32>}, {pipeline_mode = #tpu.pipeline_mode<synchronous>, transform_indices = @transform_5, window_bounds = array<i64: 2, 6>}, {pipeline_mode = #tpu.pipeline_mode<synchronous>, transform_indices = @transform_6, window_bounds = array<i64: 2, 8, 32>}, {pipeline_mode = #tpu.pipeline_mode<synchronous>, transform_indices = @transform_7, window_bounds = array<i64: 2, 6, 32>}, {pipeline_mode = #tpu.pipeline_mode<synchronous>, transform_indices = @transform_8, window_bounds = array<i64: 32, 32>}, {pipeline_mode = #tpu.pipeline_mode<synchronous>, transform_indices = @transform_9, window_bounds = array<i64: 32, 35>}, {pipeline_mode = #tpu.pipeline_mode<synchronous>, transform_indices = @transform_10, window_bounds = array<i64: 32, 99>}, {pipeline_mode = #tpu.pipeline_mode<synchronous>, transform_indices = @transform_11, window_bounds = array<i64: 32, 96>}, {pipeline_mode = #tpu.pipeline_mode<synchronous>, transform_indices = @transform_12, window_bounds = array<i64: 1, 96>}, {pipeline_mode = #tpu.pipeline_mode<synchronous>, transform_indices = @transform_13, window_bounds = array<i64: 1, 96>}, {pipeline_mode = #tpu.pipeline_mode<synchronous>, transform_indices = @transform_14, window_bounds = array<i64: 32, 3>}, {pipeline_mode = #tpu.pipeline_mode<synchronous>, transform_indices = @transform_15, window_bounds = array<i64: 32, 3>}, {pipeline_mode = #tpu.pipeline_mode<synchronous>, transform_indices = @transform_16, window_bounds = array<i64: 1, 3>}, {pipeline_mode = #tpu.pipeline_mode<synchronous>, transform_indices = @transform_17, window_bounds = array<i64: 32, 3>}, {pipeline_mode = #tpu.pipeline_mode<synchronous>, transform_indices = @transform_18, window_bounds = array<i64: 1, 3>}, {transform_indices = @transform_19, window_bounds = array<i64: 1, 2, 4, 32>}, {transform_indices = @transform_20, window_bounds = array<i64: 1, 2, 3>}]} {
    %c0 = arith.constant 0 : index
    %c0_0 = arith.constant 0 : index
    %c0_1 = arith.constant 0 : index
    %0 = vector.load %arg1[%c0, %c0_0, %c0_1] : memref<1x2x32xf32, #tpu.memory_space<vmem>>, vector<1x2x32xf32>
    %1 = vector.shape_cast %0 : vector<1x2x32xf32> to vector<2x32xf32>
    %c0_2 = arith.constant 0 : index
    %c0_3 = arith.constant 0 : index
    %2 = vector.load %arg2[%c0_2, %c0_3] : memref<2x32xf32, #tpu.memory_space<vmem>>, vector<2x32xf32>
    %c0_4 = arith.constant 0 : index
    %c0_5 = arith.constant 0 : index
    %c0_6 = arith.constant 0 : index
    %3 = vector.load %arg3[%c0_4, %c0_5, %c0_6] : memref<2x8x32xf32, #tpu.memory_space<vmem>>, vector<2x8x32xf32>
    %c0_7 = arith.constant 0 : index
    %c0_8 = arith.constant 0 : index
    %c0_9 = arith.constant 0 : index
    %4 = vector.load %arg5[%c0_7, %c0_8, %c0_9] : memref<2x6x32xf32, #tpu.memory_space<vmem>>, vector<2x6x32xf32>
    %c0_10 = arith.constant 0 : index
    %c0_11 = arith.constant 0 : index
    %5 = vector.load %arg4[%c0_10, %c0_11] : memref<2x8xf32, #tpu.memory_space<vmem>>, vector<2x8xf32>
    %c0_12 = arith.constant 0 : index
    %c0_13 = arith.constant 0 : index
    %6 = vector.load %arg6[%c0_12, %c0_13] : memref<2x6xf32, #tpu.memory_space<vmem>>, vector<2x6xf32>
    %c0_14 = arith.constant 0 : index
    %c0_15 = arith.constant 0 : index
    %c0_16 = arith.constant 0 : index
    %7 = vector.load %arg7[%c0_14, %c0_15, %c0_16] : memref<2x8x32xf32, #tpu.memory_space<vmem>>, vector<2x8x32xf32>
    %c0_17 = arith.constant 0 : index
    %c0_18 = arith.constant 0 : index
    %c0_19 = arith.constant 0 : index
    %8 = vector.load %arg8[%c0_17, %c0_18, %c0_19] : memref<2x6x32xf32, #tpu.memory_space<vmem>>, vector<2x6x32xf32>
    %c0_20 = arith.constant 0 : index
    %c0_21 = arith.constant 0 : index
    %9 = vector.load %arg9[%c0_20, %c0_21] : memref<32x32xf32, #tpu.memory_space<vmem>>, vector<32x32xf32>
    %c0_22 = arith.constant 0 : index
    %c0_23 = arith.constant 0 : index
    %10 = vector.load %arg10[%c0_22, %c0_23] : memref<32x35xf32, #tpu.memory_space<vmem>>, vector<32x35xf32>
    %c0_24 = arith.constant 0 : index
    %c0_25 = arith.constant 0 : index
    %11 = vector.load %arg11[%c0_24, %c0_25] : memref<32x99xf32, #tpu.memory_space<vmem>>, vector<32x99xf32>
    %c0_26 = arith.constant 0 : index
    %c0_27 = arith.constant 0 : index
    %12 = vector.load %arg12[%c0_26, %c0_27] : memref<32x96xf32, #tpu.memory_space<vmem>>, vector<32x96xf32>
    %c0_28 = arith.constant 0 : index
    %c0_29 = arith.constant 0 : index
    %13 = vector.load %arg13[%c0_28, %c0_29] : memref<1x96xf32, #tpu.memory_space<vmem>>, vector<1x96xf32>
    %c0_30 = arith.constant 0 : index
    %c0_31 = arith.constant 0 : index
    %14 = vector.load %arg14[%c0_30, %c0_31] : memref<1x96xf32, #tpu.memory_space<vmem>>, vector<1x96xf32>
    %c0_32 = arith.constant 0 : index
    %c0_33 = arith.constant 0 : index
    %15 = vector.load %arg15[%c0_32, %c0_33] : memref<32x3xf32, #tpu.memory_space<vmem>>, vector<32x3xf32>
    %c0_34 = arith.constant 0 : index
    %c0_35 = arith.constant 0 : index
    %16 = vector.load %arg16[%c0_34, %c0_35] : memref<32x3xf32, #tpu.memory_space<vmem>>, vector<32x3xf32>
    %c0_36 = arith.constant 0 : index
    %c0_37 = arith.constant 0 : index
    %17 = vector.load %arg17[%c0_36, %c0_37] : memref<1x3xf32, #tpu.memory_space<vmem>>, vector<1x3xf32>
    %18 = tpu.iota {dimensions = array<i32: 1>} : vector<2x32xi32>
    %cst = arith.constant dense<0.000000e+00> : vector<2x99xf32>
    %19 = tpu.matmul %1, %11, %cst {dimension_numbers = #tpu.dot_dimension_numbers<[1], [0], [0], [1], [0, 0, 1, 1], [], []>} : vector<2x32xf32>, vector<32x99xf32>, vector<2x99xf32> -> vector<2x99xf32>
    %20 = vector.extract_strided_slice %19 {offsets = [0, 0], sizes = [2, 96], strides = [1, 1]} : vector<2x99xf32> to vector<2x96xf32>
    %21 = vector.broadcast %13 : vector<1x96xf32> to vector<2x96xf32>
    %22 = arith.addf %20, %21 : vector<2x96xf32>
    %23 = vector.extract_strided_slice %19 {offsets = [0, 96], sizes = [2, 3], strides = [1, 1]} : vector<2x99xf32> to vector<2x3xf32>
    %cst_38 = arith.constant dense<0.000000e+00> : vector<2x96xf32>
    %24 = tpu.matmul %2, %12, %cst_38 {dimension_numbers = #tpu.dot_dimension_numbers<[1], [0], [0], [1], [0, 0, 1, 1], [], []>} : vector<2x32xf32>, vector<32x96xf32>, vector<2x96xf32> -> vector<2x96xf32>
    %25 = vector.broadcast %14 : vector<1x96xf32> to vector<2x96xf32>
    %26 = arith.addf %24, %25 : vector<2x96xf32>
    %27 = vector.extract_strided_slice %22 {offsets = [0, 0], sizes = [2, 32], strides = [1, 1]} : vector<2x96xf32> to vector<2x32xf32>
    %28 = vector.extract_strided_slice %26 {offsets = [0, 0], sizes = [2, 32], strides = [1, 1]} : vector<2x96xf32> to vector<2x32xf32>
    %29 = arith.addf %27, %28 : vector<2x32xf32>
    %30 = arith.negf %29 : vector<2x32xf32>
    %31 = math.exp %30 : vector<2x32xf32>
    %cst_39 = arith.constant 1.000000e+00 : f32
    %32 = vector.broadcast %cst_39 : f32 to vector<2x32xf32>
    %33 = arith.addf %32, %31 : vector<2x32xf32>
    %34 = arith.divf %32, %33 : vector<2x32xf32>
    %35 = vector.extract_strided_slice %22 {offsets = [0, 32], sizes = [2, 32], strides = [1, 1]} : vector<2x96xf32> to vector<2x32xf32>
    %36 = vector.extract_strided_slice %26 {offsets = [0, 32], sizes = [2, 32], strides = [1, 1]} : vector<2x96xf32> to vector<2x32xf32>
    %37 = arith.addf %35, %36 : vector<2x32xf32>
    %38 = arith.negf %37 : vector<2x32xf32>
    %39 = math.exp %38 : vector<2x32xf32>
    %cst_40 = arith.constant 1.000000e+00 : f32
    %40 = vector.broadcast %cst_40 : f32 to vector<2x32xf32>
    %41 = arith.addf %40, %39 : vector<2x32xf32>
    %42 = arith.divf %40, %41 : vector<2x32xf32>
    %43 = vector.extract_strided_slice %22 {offsets = [0, 64], sizes = [2, 32], strides = [1, 1]} : vector<2x96xf32> to vector<2x32xf32>
    %44 = vector.extract_strided_slice %26 {offsets = [0, 64], sizes = [2, 32], strides = [1, 1]} : vector<2x96xf32> to vector<2x32xf32>
    %45 = arith.mulf %34, %44 : vector<2x32xf32>
    %46 = arith.addf %43, %45 : vector<2x32xf32>
    %47 = math.tanh %46 : vector<2x32xf32>
    %cst_41 = arith.constant 1.000000e+00 : f32
    %48 = vector.broadcast %cst_41 : f32 to vector<2x32xf32>
    %49 = arith.subf %48, %42 : vector<2x32xf32>
    %50 = arith.mulf %49, %47 : vector<2x32xf32>
    %51 = arith.mulf %42, %2 : vector<2x32xf32>
    %52 = arith.addf %50, %51 : vector<2x32xf32>
    %53 = vector.shape_cast %52 : vector<2x32xf32> to vector<2x1x32xf32>
    "tpu.trace_start"() <{level = 10 : i32, message = "bqd,btd->bqt"}> : () -> ()
    %cst_42 = arith.constant dense<0.000000e+00> : vector<2x1x8xf32>
    %54 = tpu.matmul %53, %3, %cst_42 {dimension_numbers = #tpu.dot_dimension_numbers<[2], [2], [1], [1], [0, 0, 0, 1, 1, 1], [0], [0]>} : vector<2x1x32xf32>, vector<2x8x32xf32>, vector<2x1x8xf32> -> vector<2x1x8xf32>
    "tpu.trace_stop"() : () -> ()
    %55 = vector.shape_cast %54 : vector<2x1x8xf32> to vector<2x8xf32>
    %cst_43 = arith.constant 0.000000e+00 : f32
    %56 = vector.broadcast %cst_43 : f32 to vector<2x8xf32>
    %57 = arith.cmpf ogt, %5, %56 : vector<2x8xf32>
    %cst_44 = arith.constant -1.000000e+30 : f32
    %58 = vector.broadcast %cst_44 : f32 to vector<2x8xf32>
    %59 = arith.select %57, %55, %58 : vector<2x8xi1>, vector<2x8xf32>
    %cst_45 = arith.constant dense<0xFF800000> : vector<2xf32>
    %60 = vector.multi_reduction <maximumf>, %59, %cst_45 [1] : vector<2x8xf32> to vector<2xf32>
    %61 = vector.shape_cast %60 : vector<2xf32> to vector<2x1xf32>
    %62 = vector.broadcast %61 : vector<2x1xf32> to vector<2x8xf32>
    %63 = arith.subf %59, %62 : vector<2x8xf32>
    %64 = math.exp %63 : vector<2x8xf32>
    %cst_46 = arith.constant dense<0.000000e+00> : vector<2xf32>
    %65 = vector.multi_reduction <add>, %64, %cst_46 [1] : vector<2x8xf32> to vector<2xf32>
    %66 = vector.shape_cast %65 : vector<2xf32> to vector<2x1xf32>
    %67 = vector.broadcast %66 : vector<2x1xf32> to vector<2x8xf32>
    %68 = arith.divf %64, %67 : vector<2x8xf32>
    %69 = vector.shape_cast %68 : vector<2x8xf32> to vector<2x1x8xf32>
    "tpu.trace_start"() <{level = 10 : i32, message = "bqt,btd->bqd"}> : () -> ()
    %cst_47 = arith.constant dense<0.000000e+00> : vector<2x1x32xf32>
    %70 = tpu.matmul %69, %3, %cst_47 {dimension_numbers = #tpu.dot_dimension_numbers<[2], [1], [1], [2], [0, 0, 0, 1, 1, 2], [0], [0]>} : vector<2x1x8xf32>, vector<2x8x32xf32>, vector<2x1x32xf32> -> vector<2x1x32xf32>
    "tpu.trace_stop"() : () -> ()
    %71 = vector.shape_cast %70 : vector<2x1x32xf32> to vector<2x32xf32>
    %72 = vector.shape_cast %52 : vector<2x32xf32> to vector<2x1x32xf32>
    "tpu.trace_start"() <{level = 10 : i32, message = "bqd,btd->bqt"}> : () -> ()
    %cst_48 = arith.constant dense<0.000000e+00> : vector<2x1x6xf32>
    %73 = tpu.matmul %72, %4, %cst_48 {dimension_numbers = #tpu.dot_dimension_numbers<[2], [2], [1], [1], [0, 0, 0, 1, 1, 1], [0], [0]>} : vector<2x1x32xf32>, vector<2x6x32xf32>, vector<2x1x6xf32> -> vector<2x1x6xf32>
    "tpu.trace_stop"() : () -> ()
    %74 = vector.shape_cast %73 : vector<2x1x6xf32> to vector<2x6xf32>
    %cst_49 = arith.constant 0.000000e+00 : f32
    %75 = vector.broadcast %cst_49 : f32 to vector<2x6xf32>
    %76 = arith.cmpf ogt, %6, %75 : vector<2x6xf32>
    %cst_50 = arith.constant -1.000000e+30 : f32
    %77 = vector.broadcast %cst_50 : f32 to vector<2x6xf32>
    %78 = arith.select %76, %74, %77 : vector<2x6xi1>, vector<2x6xf32>
    %cst_51 = arith.constant dense<0xFF800000> : vector<2xf32>
    %79 = vector.multi_reduction <maximumf>, %78, %cst_51 [1] : vector<2x6xf32> to vector<2xf32>
    %80 = vector.shape_cast %79 : vector<2xf32> to vector<2x1xf32>
    %81 = vector.broadcast %80 : vector<2x1xf32> to vector<2x6xf32>
    %82 = arith.subf %78, %81 : vector<2x6xf32>
    %83 = math.exp %82 : vector<2x6xf32>
    %cst_52 = arith.constant dense<0.000000e+00> : vector<2xf32>
    %84 = vector.multi_reduction <add>, %83, %cst_52 [1] : vector<2x6xf32> to vector<2xf32>
    %85 = vector.shape_cast %84 : vector<2xf32> to vector<2x1xf32>
    %86 = vector.broadcast %85 : vector<2x1xf32> to vector<2x6xf32>
    %87 = arith.divf %83, %86 : vector<2x6xf32>
    %88 = vector.shape_cast %87 : vector<2x6xf32> to vector<2x1x6xf32>
    "tpu.trace_start"() <{level = 10 : i32, message = "bqt,btd->bqd"}> : () -> ()
    %cst_53 = arith.constant dense<0.000000e+00> : vector<2x1x32xf32>
    %89 = tpu.matmul %88, %4, %cst_53 {dimension_numbers = #tpu.dot_dimension_numbers<[2], [1], [1], [2], [0, 0, 0, 1, 1, 2], [0], [0]>} : vector<2x1x6xf32>, vector<2x6x32xf32>, vector<2x1x32xf32> -> vector<2x1x32xf32>
    "tpu.trace_stop"() : () -> ()
    %90 = vector.shape_cast %89 : vector<2x1x32xf32> to vector<2x32xf32>
    %c0_54 = arith.constant 0 : index
    %c0_55 = arith.constant 0 : index
    %91 = vector.load %arg18[%c0_54, %c0_55] : memref<32x3xf32, #tpu.memory_space<vmem>>, vector<32x3xf32>
    %cst_56 = arith.constant dense<0.000000e+00> : vector<2x3xf32>
    %92 = tpu.matmul %71, %91, %cst_56 {dimension_numbers = #tpu.dot_dimension_numbers<[1], [0], [0], [1], [0, 0, 1, 1], [], []>} : vector<2x32xf32>, vector<32x3xf32>, vector<2x3xf32> -> vector<2x3xf32>
    %c0_57 = arith.constant 0 : index
    %c0_58 = arith.constant 0 : index
    %93 = vector.load %arg19[%c0_57, %c0_58] : memref<1x3xf32, #tpu.memory_space<vmem>>, vector<1x3xf32>
    %94 = vector.broadcast %93 : vector<1x3xf32> to vector<2x3xf32>
    %95 = arith.addf %92, %94 : vector<2x3xf32>
    %c0_59 = arith.constant 0 : index
    %c0_60 = arith.constant 0 : index
    %c0_61 = arith.constant 0 : index
    %96 = vector.load %arg21[%c0_59, %c0_60, %c0_61] : memref<1x2x3xf32, #tpu.memory_space<vmem>>, vector<1x2x3xf32>
    %97 = vector.shape_cast %96 : vector<1x2x3xf32> to vector<2x3xf32>
    %98 = vector.shape_cast %95 : vector<2x3xf32> to vector<1x2x3xf32>
    tpu.vector_store %arg21[%c0_59, %c0_60, %c0_61], %98 {strides = array<i32>} : memref<1x2x3xf32, #tpu.memory_space<vmem>>, vector<1x2x3xf32>,
    %cst_62 = arith.constant dense<0.000000e+00> : vector<2x35xf32>
    %99 = tpu.matmul %52, %10, %cst_62 {dimension_numbers = #tpu.dot_dimension_numbers<[1], [0], [0], [1], [0, 0, 1, 1], [], []>} : vector<2x32xf32>, vector<32x35xf32>, vector<2x35xf32> -> vector<2x35xf32>
    %100 = vector.extract_strided_slice %99 {offsets = [0, 0], sizes = [2, 32], strides = [1, 1]} : vector<2x35xf32> to vector<2x32xf32>
    %cst_63 = arith.constant dense<0xFF800000> : vector<2xf32>
    %101 = vector.multi_reduction <maximumf>, %100, %cst_63 [1] : vector<2x32xf32> to vector<2xf32>
    %102 = vector.shape_cast %101 : vector<2xf32> to vector<2x1xf32>
    %103 = vector.broadcast %102 : vector<2x1xf32> to vector<2x32xf32>
    %104 = arith.subf %100, %103 : vector<2x32xf32>
    %105 = math.exp %104 : vector<2x32xf32>
    %cst_64 = arith.constant dense<0.000000e+00> : vector<2xf32>
    %106 = vector.multi_reduction <add>, %105, %cst_64 [1] : vector<2x32xf32> to vector<2xf32>
    %107 = vector.shape_cast %106 : vector<2xf32> to vector<2x1xf32>
    %108 = vector.broadcast %107 : vector<2x1xf32> to vector<2x32xf32>
    %109 = arith.divf %105, %108 : vector<2x32xf32>
    %110 = vector.extract_strided_slice %99 {offsets = [0, 32], sizes = [2, 3], strides = [1, 1]} : vector<2x35xf32> to vector<2x3xf32>
    %111 = arith.addf %110, %23 : vector<2x3xf32>
    %112 = vector.broadcast %17 : vector<1x3xf32> to vector<2x3xf32>
    %113 = arith.addf %111, %112 : vector<2x3xf32>
    %cst_65 = arith.constant dense<0.000000e+00> : vector<2x3xf32>
    %114 = tpu.matmul %71, %15, %cst_65 {dimension_numbers = #tpu.dot_dimension_numbers<[1], [0], [0], [1], [0, 0, 1, 1], [], []>} : vector<2x32xf32>, vector<32x3xf32>, vector<2x3xf32> -> vector<2x3xf32>
    %115 = arith.addf %113, %114 : vector<2x3xf32>
    %cst_66 = arith.constant dense<0.000000e+00> : vector<2x3xf32>
    %116 = tpu.matmul %90, %16, %cst_66 {dimension_numbers = #tpu.dot_dimension_numbers<[1], [0], [0], [1], [0, 0, 1, 1], [], []>} : vector<2x32xf32>, vector<32x3xf32>, vector<2x3xf32> -> vector<2x3xf32>
    %117 = arith.addf %115, %116 : vector<2x3xf32>
    %cst_67 = arith.constant dense<0xFF800000> : vector<2xf32>
    %118 = vector.multi_reduction <maximumf>, %117, %cst_67 [1] : vector<2x3xf32> to vector<2xf32>
    %119 = vector.shape_cast %118 : vector<2xf32> to vector<2x1xf32>
    %120 = vector.broadcast %119 : vector<2x1xf32> to vector<2x3xf32>
    %121 = arith.subf %117, %120 : vector<2x3xf32>
    %122 = math.exp %121 : vector<2x3xf32>
    %cst_68 = arith.constant dense<0.000000e+00> : vector<2xf32>
    %123 = vector.multi_reduction <add>, %122, %cst_68 [1] : vector<2x3xf32> to vector<2xf32>
    %124 = vector.shape_cast %123 : vector<2xf32> to vector<2x1xf32>
    %125 = vector.broadcast %124 : vector<2x1xf32> to vector<2x3xf32>
    %126 = arith.divf %122, %125 : vector<2x3xf32>
    %127 = vector.shape_cast %68 : vector<2x8xf32> to vector<2x1x8xf32>
    "tpu.trace_start"() <{level = 10 : i32, message = "bqt,btv->bqv"}> : () -> ()
    %cst_69 = arith.constant dense<0.000000e+00> : vector<2x1x32xf32>
    %128 = tpu.matmul %127, %7, %cst_69 {dimension_numbers = #tpu.dot_dimension_numbers<[2], [1], [1], [2], [0, 0, 0, 1, 1, 2], [0], [0]>} : vector<2x1x8xf32>, vector<2x8x32xf32>, vector<2x1x32xf32> -> vector<2x1x32xf32>
    "tpu.trace_stop"() : () -> ()
    %129 = vector.shape_cast %128 : vector<2x1x32xf32> to vector<2x32xf32>
    %130 = vector.shape_cast %87 : vector<2x6xf32> to vector<2x1x6xf32>
    "tpu.trace_start"() <{level = 10 : i32, message = "bqt,btv->bqv"}> : () -> ()
    %cst_70 = arith.constant dense<0.000000e+00> : vector<2x1x32xf32>
    %131 = tpu.matmul %130, %8, %cst_70 {dimension_numbers = #tpu.dot_dimension_numbers<[2], [1], [1], [2], [0, 0, 0, 1, 1, 2], [0], [0]>} : vector<2x1x6xf32>, vector<2x6x32xf32>, vector<2x1x32xf32> -> vector<2x1x32xf32>
    "tpu.trace_stop"() : () -> ()
    %132 = vector.shape_cast %131 : vector<2x1x32xf32> to vector<2x32xf32>
    %133 = vector.extract_strided_slice %126 {offsets = [0, 0], sizes = [2, 1], strides = [1, 1]} : vector<2x3xf32> to vector<2x1xf32>
    %134 = vector.extract_strided_slice %126 {offsets = [0, 1], sizes = [2, 1], strides = [1, 1]} : vector<2x3xf32> to vector<2x1xf32>
    %135 = vector.broadcast %133 : vector<2x1xf32> to vector<2x32xf32>
    %136 = arith.mulf %135, %109 : vector<2x32xf32>
    %137 = vector.broadcast %134 : vector<2x1xf32> to vector<2x32xf32>
    %138 = arith.mulf %137, %132 : vector<2x32xf32>
    %139 = arith.addf %136, %138 : vector<2x32xf32>
    %cst_71 = arith.constant 1.000000e+00 : f32
    %140 = vector.broadcast %cst_71 : f32 to vector<2x1xf32>
    %141 = arith.subf %140, %134 : vector<2x1xf32>
    %142 = arith.subf %141, %133 : vector<2x1xf32>
    %143 = vector.broadcast %142 : vector<2x1xf32> to vector<2x32xf32>
    %144 = arith.mulf %143, %129 : vector<2x32xf32>
    %145 = arith.addf %139, %144 : vector<2x32xf32>
    %c0_72 = arith.constant 0 : index
    %c0_73 = arith.constant 0 : index
    %c0_74 = arith.constant 0 : index
    %c0_75 = arith.constant 0 : index
    %146 = vector.load %arg20[%c0_72, %c0_73, %c0_74, %c0_75] : memref<1x2x4x32xf32, #tpu.memory_space<vmem>>, vector<1x2x1x32xf32>
    %147 = vector.shape_cast %146 : vector<1x2x1x32xf32> to vector<2x32xf32>
    %148 = vector.shape_cast %145 : vector<2x32xf32> to vector<1x2x1x32xf32>
    tpu.vector_store %arg20[%c0_72, %c0_73, %c0_74, %c0_75], %148 {strides = array<i32>} : memref<1x2x4x32xf32, #tpu.memory_space<vmem>>, vector<1x2x1x32xf32>,
    %cst_76 = arith.constant dense<0xFF800000> : vector<2xf32>
    %149 = vector.multi_reduction <maximumf>, %145, %cst_76 [1] : vector<2x32xf32> to vector<2xf32>
    %150 = vector.shape_cast %149 : vector<2xf32> to vector<2x1xf32>
    %151 = vector.broadcast %150 : vector<2x1xf32> to vector<2x32xf32>
    %152 = arith.cmpf oge, %145, %151 : vector<2x32xf32>
    %c32_i32 = arith.constant 32 : i32
    %153 = vector.broadcast %c32_i32 : i32 to vector<2x32xi32>
    %154 = arith.select %152, %18, %153 : vector<2x32xi1>, vector<2x32xi32>
    %cst_77 = arith.constant dense<2147483647> : vector<2xi32>
    %155 = vector.multi_reduction <minsi>, %154, %cst_77 [1] : vector<2x32xi32> to vector<2xi32>
    %156 = vector.shape_cast %155 : vector<2xi32> to vector<2x1xi32>
    %157 = vector.broadcast %156 : vector<2x1xi32> to vector<2x32xi32>
    %158 = arith.cmpi eq, %18, %157 : vector<2x32xi32>
    %159 = arith.extui %158 : vector<2x32xi1> to vector<2x32xi32>
    %160 = arith.sitofp %159 : vector<2x32xi32> to vector<2x32xf32>
    %cst_78 = arith.constant dense<0.000000e+00> : vector<2x32xf32>
    %161 = tpu.matmul %160, %9, %cst_78 {dimension_numbers = #tpu.dot_dimension_numbers<[1], [0], [0], [1], [0, 0, 1, 1], [], []>} : vector<2x32xf32>, vector<32x32xf32>, vector<2x32xf32> -> vector<2x32xf32>
    %cst_79 = arith.constant dense<0.000000e+00> : vector<2x99xf32>
    %162 = tpu.matmul %161, %11, %cst_79 {dimension_numbers = #tpu.dot_dimension_numbers<[1], [0], [0], [1], [0, 0, 1, 1], [], []>} : vector<2x32xf32>, vector<32x99xf32>, vector<2x99xf32> -> vector<2x99xf32>
    %163 = vector.extract_strided_slice %162 {offsets = [0, 0], sizes = [2, 96], strides = [1, 1]} : vector<2x99xf32> to vector<2x96xf32>
    %164 = vector.broadcast %13 : vector<1x96xf32> to vector<2x96xf32>
    %165 = arith.addf %163, %164 : vector<2x96xf32>
    %166 = vector.extract_strided_slice %162 {offsets = [0, 96], sizes = [2, 3], strides = [1, 1]} : vector<2x99xf32> to vector<2x3xf32>
    %cst_80 = arith.constant dense<0.000000e+00> : vector<2x96xf32>
    %167 = tpu.matmul %52, %12, %cst_80 {dimension_numbers = #tpu.dot_dimension_numbers<[1], [0], [0], [1], [0, 0, 1, 1], [], []>} : vector<2x32xf32>, vector<32x96xf32>, vector<2x96xf32> -> vector<2x96xf32>
    %168 = vector.broadcast %14 : vector<1x96xf32> to vector<2x96xf32>
    %169 = arith.addf %167, %168 : vector<2x96xf32>
    %170 = vector.extract_strided_slice %165 {offsets = [0, 0], sizes = [2, 32], strides = [1, 1]} : vector<2x96xf32> to vector<2x32xf32>
    %171 = vector.extract_strided_slice %169 {offsets = [0, 0], sizes = [2, 32], strides = [1, 1]} : vector<2x96xf32> to vector<2x32xf32>
    %172 = arith.addf %170, %171 : vector<2x32xf32>
    %173 = arith.negf %172 : vector<2x32xf32>
    %174 = math.exp %173 : vector<2x32xf32>
    %cst_81 = arith.constant 1.000000e+00 : f32
    %175 = vector.broadcast %cst_81 : f32 to vector<2x32xf32>
    %176 = arith.addf %175, %174 : vector<2x32xf32>
    %177 = arith.divf %175, %176 : vector<2x32xf32>
    %178 = vector.extract_strided_slice %165 {offsets = [0, 32], sizes = [2, 32], strides = [1, 1]} : vector<2x96xf32> to vector<2x32xf32>
    %179 = vector.extract_strided_slice %169 {offsets = [0, 32], sizes = [2, 32], strides = [1, 1]} : vector<2x96xf32> to vector<2x32xf32>
    %180 = arith.addf %178, %179 : vector<2x32xf32>
    %181 = arith.negf %180 : vector<2x32xf32>
    %182 = math.exp %181 : vector<2x32xf32>
    %cst_82 = arith.constant 1.000000e+00 : f32
    %183 = vector.broadcast %cst_82 : f32 to vector<2x32xf32>
    %184 = arith.addf %183, %182 : vector<2x32xf32>
    %185 = arith.divf %183, %184 : vector<2x32xf32>
    %186 = vector.extract_strided_slice %165 {offsets = [0, 64], sizes = [2, 32], strides = [1, 1]} : vector<2x96xf32> to vector<2x32xf32>
    %187 = vector.extract_strided_slice %169 {offsets = [0, 64], sizes = [2, 32], strides = [1, 1]} : vector<2x96xf32> to vector<2x32xf32>
    %188 = arith.mulf %177, %187 : vector<2x32xf32>
    %189 = arith.addf %186, %188 : vector<2x32xf32>
    %190 = math.tanh %189 : vector<2x32xf32>
    %cst_83 = arith.constant 1.000000e+00 : f32
    %191 = vector.broadcast %cst_83 : f32 to vector<2x32xf32>
    %192 = arith.subf %191, %185 : vector<2x32xf32>
    %193 = arith.mulf %192, %190 : vector<2x32xf32>
    %194 = arith.mulf %185, %52 : vector<2x32xf32>
    %195 = arith.addf %193, %194 : vector<2x32xf32>
    %196 = vector.shape_cast %195 : vector<2x32xf32> to vector<2x1x32xf32>
    "tpu.trace_start"() <{level = 10 : i32, message = "bqd,btd->bqt"}> : () -> ()
    %cst_84 = arith.constant dense<0.000000e+00> : vector<2x1x8xf32>
    %197 = tpu.matmul %196, %3, %cst_84 {dimension_numbers = #tpu.dot_dimension_numbers<[2], [2], [1], [1], [0, 0, 0, 1, 1, 1], [0], [0]>} : vector<2x1x32xf32>, vector<2x8x32xf32>, vector<2x1x8xf32> -> vector<2x1x8xf32>
    "tpu.trace_stop"() : () -> ()
    %198 = vector.shape_cast %197 : vector<2x1x8xf32> to vector<2x8xf32>
    %cst_85 = arith.constant 0.000000e+00 : f32
    %199 = vector.broadcast %cst_85 : f32 to vector<2x8xf32>
    %200 = arith.cmpf ogt, %5, %199 : vector<2x8xf32>
    %cst_86 = arith.constant -1.000000e+30 : f32
    %201 = vector.broadcast %cst_86 : f32 to vector<2x8xf32>
    %202 = arith.select %200, %198, %201 : vector<2x8xi1>, vector<2x8xf32>
    %cst_87 = arith.constant dense<0xFF800000> : vector<2xf32>
    %203 = vector.multi_reduction <maximumf>, %202, %cst_87 [1] : vector<2x8xf32> to vector<2xf32>
    %204 = vector.shape_cast %203 : vector<2xf32> to vector<2x1xf32>
    %205 = vector.broadcast %204 : vector<2x1xf32> to vector<2x8xf32>
    %206 = arith.subf %202, %205 : vector<2x8xf32>
    %207 = math.exp %206 : vector<2x8xf32>
    %cst_88 = arith.constant dense<0.000000e+00> : vector<2xf32>
    %208 = vector.multi_reduction <add>, %207, %cst_88 [1] : vector<2x8xf32> to vector<2xf32>
    %209 = vector.shape_cast %208 : vector<2xf32> to vector<2x1xf32>
    %210 = vector.broadcast %209 : vector<2x1xf32> to vector<2x8xf32>
    %211 = arith.divf %207, %210 : vector<2x8xf32>
    %212 = vector.shape_cast %211 : vector<2x8xf32> to vector<2x1x8xf32>
    "tpu.trace_start"() <{level = 10 : i32, message = "bqt,btd->bqd"}> : () -> ()
    %cst_89 = arith.constant dense<0.000000e+00> : vector<2x1x32xf32>
    %213 = tpu.matmul %212, %3, %cst_89 {dimension_numbers = #tpu.dot_dimension_numbers<[2], [1], [1], [2], [0, 0, 0, 1, 1, 2], [0], [0]>} : vector<2x1x8xf32>, vector<2x8x32xf32>, vector<2x1x32xf32> -> vector<2x1x32xf32>
    "tpu.trace_stop"() : () -> ()
    %214 = vector.shape_cast %213 : vector<2x1x32xf32> to vector<2x32xf32>
    %215 = vector.shape_cast %195 : vector<2x32xf32> to vector<2x1x32xf32>
    "tpu.trace_start"() <{level = 10 : i32, message = "bqd,btd->bqt"}> : () -> ()
    %cst_90 = arith.constant dense<0.000000e+00> : vector<2x1x6xf32>
    %216 = tpu.matmul %215, %4, %cst_90 {dimension_numbers = #tpu.dot_dimension_numbers<[2], [2], [1], [1], [0, 0, 0, 1, 1, 1], [0], [0]>} : vector<2x1x32xf32>, vector<2x6x32xf32>, vector<2x1x6xf32> -> vector<2x1x6xf32>
    "tpu.trace_stop"() : () -> ()
    %217 = vector.shape_cast %216 : vector<2x1x6xf32> to vector<2x6xf32>
    %cst_91 = arith.constant 0.000000e+00 : f32
    %218 = vector.broadcast %cst_91 : f32 to vector<2x6xf32>
    %219 = arith.cmpf ogt, %6, %218 : vector<2x6xf32>
    %cst_92 = arith.constant -1.000000e+30 : f32
    %220 = vector.broadcast %cst_92 : f32 to vector<2x6xf32>
    %221 = arith.select %219, %217, %220 : vector<2x6xi1>, vector<2x6xf32>
    %cst_93 = arith.constant dense<0xFF800000> : vector<2xf32>
    %222 = vector.multi_reduction <maximumf>, %221, %cst_93 [1] : vector<2x6xf32> to vector<2xf32>
    %223 = vector.shape_cast %222 : vector<2xf32> to vector<2x1xf32>
    %224 = vector.broadcast %223 : vector<2x1xf32> to vector<2x6xf32>
    %225 = arith.subf %221, %224 : vector<2x6xf32>
    %226 = math.exp %225 : vector<2x6xf32>
    %cst_94 = arith.constant dense<0.000000e+00> : vector<2xf32>
    %227 = vector.multi_reduction <add>, %226, %cst_94 [1] : vector<2x6xf32> to vector<2xf32>
    %228 = vector.shape_cast %227 : vector<2xf32> to vector<2x1xf32>
    %229 = vector.broadcast %228 : vector<2x1xf32> to vector<2x6xf32>
    %230 = arith.divf %226, %229 : vector<2x6xf32>
    %231 = vector.shape_cast %230 : vector<2x6xf32> to vector<2x1x6xf32>
    "tpu.trace_start"() <{level = 10 : i32, message = "bqt,btd->bqd"}> : () -> ()
    %cst_95 = arith.constant dense<0.000000e+00> : vector<2x1x32xf32>
    %232 = tpu.matmul %231, %4, %cst_95 {dimension_numbers = #tpu.dot_dimension_numbers<[2], [1], [1], [2], [0, 0, 0, 1, 1, 2], [0], [0]>} : vector<2x1x6xf32>, vector<2x6x32xf32>, vector<2x1x32xf32> -> vector<2x1x32xf32>
    "tpu.trace_stop"() : () -> ()
    %233 = vector.shape_cast %232 : vector<2x1x32xf32> to vector<2x32xf32>
    %cst_96 = arith.constant dense<0.000000e+00> : vector<2x35xf32>
    %234 = tpu.matmul %195, %10, %cst_96 {dimension_numbers = #tpu.dot_dimension_numbers<[1], [0], [0], [1], [0, 0, 1, 1], [], []>} : vector<2x32xf32>, vector<32x35xf32>, vector<2x35xf32> -> vector<2x35xf32>
    %235 = vector.extract_strided_slice %234 {offsets = [0, 0], sizes = [2, 32], strides = [1, 1]} : vector<2x35xf32> to vector<2x32xf32>
    %cst_97 = arith.constant dense<0xFF800000> : vector<2xf32>
    %236 = vector.multi_reduction <maximumf>, %235, %cst_97 [1] : vector<2x32xf32> to vector<2xf32>
    %237 = vector.shape_cast %236 : vector<2xf32> to vector<2x1xf32>
    %238 = vector.broadcast %237 : vector<2x1xf32> to vector<2x32xf32>
    %239 = arith.subf %235, %238 : vector<2x32xf32>
    %240 = math.exp %239 : vector<2x32xf32>
    %cst_98 = arith.constant dense<0.000000e+00> : vector<2xf32>
    %241 = vector.multi_reduction <add>, %240, %cst_98 [1] : vector<2x32xf32> to vector<2xf32>
    %242 = vector.shape_cast %241 : vector<2xf32> to vector<2x1xf32>
    %243 = vector.broadcast %242 : vector<2x1xf32> to vector<2x32xf32>
    %244 = arith.divf %240, %243 : vector<2x32xf32>
    %245 = vector.extract_strided_slice %234 {offsets = [0, 32], sizes = [2, 3], strides = [1, 1]} : vector<2x35xf32> to vector<2x3xf32>
    %246 = arith.addf %245, %166 : vector<2x3xf32>
    %247 = vector.broadcast %17 : vector<1x3xf32> to vector<2x3xf32>
    %248 = arith.addf %246, %247 : vector<2x3xf32>
    %cst_99 = arith.constant dense<0.000000e+00> : vector<2x3xf32>
    %249 = tpu.matmul %214, %15, %cst_99 {dimension_numbers = #tpu.dot_dimension_numbers<[1], [0], [0], [1], [0, 0, 1, 1], [], []>} : vector<2x32xf32>, vector<32x3xf32>, vector<2x3xf32> -> vector<2x3xf32>
    %250 = arith.addf %248, %249 : vector<2x3xf32>
    %cst_100 = arith.constant dense<0.000000e+00> : vector<2x3xf32>
    %251 = tpu.matmul %233, %16, %cst_100 {dimension_numbers = #tpu.dot_dimension_numbers<[1], [0], [0], [1], [0, 0, 1, 1], [], []>} : vector<2x32xf32>, vector<32x3xf32>, vector<2x3xf32> -> vector<2x3xf32>
    %252 = arith.addf %250, %251 : vector<2x3xf32>
    %cst_101 = arith.constant dense<0xFF800000> : vector<2xf32>
    %253 = vector.multi_reduction <maximumf>, %252, %cst_101 [1] : vector<2x3xf32> to vector<2xf32>
    %254 = vector.shape_cast %253 : vector<2xf32> to vector<2x1xf32>
    %255 = vector.broadcast %254 : vector<2x1xf32> to vector<2x3xf32>
    %256 = arith.subf %252, %255 : vector<2x3xf32>
    %257 = math.exp %256 : vector<2x3xf32>
    %cst_102 = arith.constant dense<0.000000e+00> : vector<2xf32>
    %258 = vector.multi_reduction <add>, %257, %cst_102 [1] : vector<2x3xf32> to vector<2xf32>
    %259 = vector.shape_cast %258 : vector<2xf32> to vector<2x1xf32>
    %260 = vector.broadcast %259 : vector<2x1xf32> to vector<2x3xf32>
    %261 = arith.divf %257, %260 : vector<2x3xf32>
    %262 = vector.shape_cast %211 : vector<2x8xf32> to vector<2x1x8xf32>
    "tpu.trace_start"() <{level = 10 : i32, message = "bqt,btv->bqv"}> : () -> ()
    %cst_103 = arith.constant dense<0.000000e+00> : vector<2x1x32xf32>
    %263 = tpu.matmul %262, %7, %cst_103 {dimension_numbers = #tpu.dot_dimension_numbers<[2], [1], [1], [2], [0, 0, 0, 1, 1, 2], [0], [0]>} : vector<2x1x8xf32>, vector<2x8x32xf32>, vector<2x1x32xf32> -> vector<2x1x32xf32>
    "tpu.trace_stop"() : () -> ()
    %264 = vector.shape_cast %263 : vector<2x1x32xf32> to vector<2x32xf32>
    %265 = vector.shape_cast %230 : vector<2x6xf32> to vector<2x1x6xf32>
    "tpu.trace_start"() <{level = 10 : i32, message = "bqt,btv->bqv"}> : () -> ()
    %cst_104 = arith.constant dense<0.000000e+00> : vector<2x1x32xf32>
    %266 = tpu.matmul %265, %8, %cst_104 {dimension_numbers = #tpu.dot_dimension_numbers<[2], [1], [1], [2], [0, 0, 0, 1, 1, 2], [0], [0]>} : vector<2x1x6xf32>, vector<2x6x32xf32>, vector<2x1x32xf32> -> vector<2x1x32xf32>
    "tpu.trace_stop"() : () -> ()
    %267 = vector.shape_cast %266 : vector<2x1x32xf32> to vector<2x32xf32>
    %268 = vector.extract_strided_slice %261 {offsets = [0, 0], sizes = [2, 1], strides = [1, 1]} : vector<2x3xf32> to vector<2x1xf32>
    %269 = vector.extract_strided_slice %261 {offsets = [0, 1], sizes = [2, 1], strides = [1, 1]} : vector<2x3xf32> to vector<2x1xf32>
    %270 = vector.broadcast %268 : vector<2x1xf32> to vector<2x32xf32>
    %271 = arith.mulf %270, %244 : vector<2x32xf32>
    %272 = vector.broadcast %269 : vector<2x1xf32> to vector<2x32xf32>
    %273 = arith.mulf %272, %267 : vector<2x32xf32>
    %274 = arith.addf %271, %273 : vector<2x32xf32>
    %cst_105 = arith.constant 1.000000e+00 : f32
    %275 = vector.broadcast %cst_105 : f32 to vector<2x1xf32>
    %276 = arith.subf %275, %269 : vector<2x1xf32>
    %277 = arith.subf %276, %268 : vector<2x1xf32>
    %278 = vector.broadcast %277 : vector<2x1xf32> to vector<2x32xf32>
    %279 = arith.mulf %278, %264 : vector<2x32xf32>
    %280 = arith.addf %274, %279 : vector<2x32xf32>
    %c0_106 = arith.constant 0 : index
    %c0_107 = arith.constant 0 : index
    %c1 = arith.constant 1 : index
    %c0_108 = arith.constant 0 : index
    %281 = vector.load %arg20[%c0_106, %c0_107, %c1, %c0_108] : memref<1x2x4x32xf32, #tpu.memory_space<vmem>>, vector<1x2x1x32xf32>
    %282 = vector.shape_cast %281 : vector<1x2x1x32xf32> to vector<2x32xf32>
    %283 = vector.shape_cast %280 : vector<2x32xf32> to vector<1x2x1x32xf32>
    tpu.vector_store %arg20[%c0_106, %c0_107, %c1, %c0_108], %283 {strides = array<i32>} : memref<1x2x4x32xf32, #tpu.memory_space<vmem>>, vector<1x2x1x32xf32>,
    %cst_109 = arith.constant dense<0xFF800000> : vector<2xf32>
    %284 = vector.multi_reduction <maximumf>, %280, %cst_109 [1] : vector<2x32xf32> to vector<2xf32>
    %285 = vector.shape_cast %284 : vector<2xf32> to vector<2x1xf32>
    %286 = vector.broadcast %285 : vector<2x1xf32> to vector<2x32xf32>
    %287 = arith.cmpf oge, %280, %286 : vector<2x32xf32>
    %c32_i32_110 = arith.constant 32 : i32
    %288 = vector.broadcast %c32_i32_110 : i32 to vector<2x32xi32>
    %289 = arith.select %287, %18, %288 : vector<2x32xi1>, vector<2x32xi32>
    %cst_111 = arith.constant dense<2147483647> : vector<2xi32>
    %290 = vector.multi_reduction <minsi>, %289, %cst_111 [1] : vector<2x32xi32> to vector<2xi32>
    %291 = vector.shape_cast %290 : vector<2xi32> to vector<2x1xi32>
    %292 = vector.broadcast %291 : vector<2x1xi32> to vector<2x32xi32>
    %293 = arith.cmpi eq, %18, %292 : vector<2x32xi32>
    %294 = arith.extui %293 : vector<2x32xi1> to vector<2x32xi32>
    %295 = arith.sitofp %294 : vector<2x32xi32> to vector<2x32xf32>
    %cst_112 = arith.constant dense<0.000000e+00> : vector<2x32xf32>
    %296 = tpu.matmul %295, %9, %cst_112 {dimension_numbers = #tpu.dot_dimension_numbers<[1], [0], [0], [1], [0, 0, 1, 1], [], []>} : vector<2x32xf32>, vector<32x32xf32>, vector<2x32xf32> -> vector<2x32xf32>
    %cst_113 = arith.constant dense<0.000000e+00> : vector<2x99xf32>
    %297 = tpu.matmul %296, %11, %cst_113 {dimension_numbers = #tpu.dot_dimension_numbers<[1], [0], [0], [1], [0, 0, 1, 1], [], []>} : vector<2x32xf32>, vector<32x99xf32>, vector<2x99xf32> -> vector<2x99xf32>
    %298 = vector.extract_strided_slice %297 {offsets = [0, 0], sizes = [2, 96], strides = [1, 1]} : vector<2x99xf32> to vector<2x96xf32>
    %299 = vector.broadcast %13 : vector<1x96xf32> to vector<2x96xf32>
    %300 = arith.addf %298, %299 : vector<2x96xf32>
    %301 = vector.extract_strided_slice %297 {offsets = [0, 96], sizes = [2, 3], strides = [1, 1]} : vector<2x99xf32> to vector<2x3xf32>
    %cst_114 = arith.constant dense<0.000000e+00> : vector<2x96xf32>
    %302 = tpu.matmul %195, %12, %cst_114 {dimension_numbers = #tpu.dot_dimension_numbers<[1], [0], [0], [1], [0, 0, 1, 1], [], []>} : vector<2x32xf32>, vector<32x96xf32>, vector<2x96xf32> -> vector<2x96xf32>
    %303 = vector.broadcast %14 : vector<1x96xf32> to vector<2x96xf32>
    %304 = arith.addf %302, %303 : vector<2x96xf32>
    %305 = vector.extract_strided_slice %300 {offsets = [0, 0], sizes = [2, 32], strides = [1, 1]} : vector<2x96xf32> to vector<2x32xf32>
    %306 = vector.extract_strided_slice %304 {offsets = [0, 0], sizes = [2, 32], strides = [1, 1]} : vector<2x96xf32> to vector<2x32xf32>
    %307 = arith.addf %305, %306 : vector<2x32xf32>
    %308 = arith.negf %307 : vector<2x32xf32>
    %309 = math.exp %308 : vector<2x32xf32>
    %cst_115 = arith.constant 1.000000e+00 : f32
    %310 = vector.broadcast %cst_115 : f32 to vector<2x32xf32>
    %311 = arith.addf %310, %309 : vector<2x32xf32>
    %312 = arith.divf %310, %311 : vector<2x32xf32>
    %313 = vector.extract_strided_slice %300 {offsets = [0, 32], sizes = [2, 32], strides = [1, 1]} : vector<2x96xf32> to vector<2x32xf32>
    %314 = vector.extract_strided_slice %304 {offsets = [0, 32], sizes = [2, 32], strides = [1, 1]} : vector<2x96xf32> to vector<2x32xf32>
    %315 = arith.addf %313, %314 : vector<2x32xf32>
    %316 = arith.negf %315 : vector<2x32xf32>
    %317 = math.exp %316 : vector<2x32xf32>
    %cst_116 = arith.constant 1.000000e+00 : f32
    %318 = vector.broadcast %cst_116 : f32 to vector<2x32xf32>
    %319 = arith.addf %318, %317 : vector<2x32xf32>
    %320 = arith.divf %318, %319 : vector<2x32xf32>
    %321 = vector.extract_strided_slice %300 {offsets = [0, 64], sizes = [2, 32], strides = [1, 1]} : vector<2x96xf32> to vector<2x32xf32>
    %322 = vector.extract_strided_slice %304 {offsets = [0, 64], sizes = [2, 32], strides = [1, 1]} : vector<2x96xf32> to vector<2x32xf32>
    %323 = arith.mulf %312, %322 : vector<2x32xf32>
    %324 = arith.addf %321, %323 : vector<2x32xf32>
    %325 = math.tanh %324 : vector<2x32xf32>
    %cst_117 = arith.constant 1.000000e+00 : f32
    %326 = vector.broadcast %cst_117 : f32 to vector<2x32xf32>
    %327 = arith.subf %326, %320 : vector<2x32xf32>
    %328 = arith.mulf %327, %325 : vector<2x32xf32>
    %329 = arith.mulf %320, %195 : vector<2x32xf32>
    %330 = arith.addf %328, %329 : vector<2x32xf32>
    %331 = vector.shape_cast %330 : vector<2x32xf32> to vector<2x1x32xf32>
    "tpu.trace_start"() <{level = 10 : i32, message = "bqd,btd->bqt"}> : () -> ()
    %cst_118 = arith.constant dense<0.000000e+00> : vector<2x1x8xf32>
    %332 = tpu.matmul %331, %3, %cst_118 {dimension_numbers = #tpu.dot_dimension_numbers<[2], [2], [1], [1], [0, 0, 0, 1, 1, 1], [0], [0]>} : vector<2x1x32xf32>, vector<2x8x32xf32>, vector<2x1x8xf32> -> vector<2x1x8xf32>
    "tpu.trace_stop"() : () -> ()
    %333 = vector.shape_cast %332 : vector<2x1x8xf32> to vector<2x8xf32>
    %cst_119 = arith.constant 0.000000e+00 : f32
    %334 = vector.broadcast %cst_119 : f32 to vector<2x8xf32>
    %335 = arith.cmpf ogt, %5, %334 : vector<2x8xf32>
    %cst_120 = arith.constant -1.000000e+30 : f32
    %336 = vector.broadcast %cst_120 : f32 to vector<2x8xf32>
    %337 = arith.select %335, %333, %336 : vector<2x8xi1>, vector<2x8xf32>
    %cst_121 = arith.constant dense<0xFF800000> : vector<2xf32>
    %338 = vector.multi_reduction <maximumf>, %337, %cst_121 [1] : vector<2x8xf32> to vector<2xf32>
    %339 = vector.shape_cast %338 : vector<2xf32> to vector<2x1xf32>
    %340 = vector.broadcast %339 : vector<2x1xf32> to vector<2x8xf32>
    %341 = arith.subf %337, %340 : vector<2x8xf32>
    %342 = math.exp %341 : vector<2x8xf32>
    %cst_122 = arith.constant dense<0.000000e+00> : vector<2xf32>
    %343 = vector.multi_reduction <add>, %342, %cst_122 [1] : vector<2x8xf32> to vector<2xf32>
    %344 = vector.shape_cast %343 : vector<2xf32> to vector<2x1xf32>
    %345 = vector.broadcast %344 : vector<2x1xf32> to vector<2x8xf32>
    %346 = arith.divf %342, %345 : vector<2x8xf32>
    %347 = vector.shape_cast %346 : vector<2x8xf32> to vector<2x1x8xf32>
    "tpu.trace_start"() <{level = 10 : i32, message = "bqt,btd->bqd"}> : () -> ()
    %cst_123 = arith.constant dense<0.000000e+00> : vector<2x1x32xf32>
    %348 = tpu.matmul %347, %3, %cst_123 {dimension_numbers = #tpu.dot_dimension_numbers<[2], [1], [1], [2], [0, 0, 0, 1, 1, 2], [0], [0]>} : vector<2x1x8xf32>, vector<2x8x32xf32>, vector<2x1x32xf32> -> vector<2x1x32xf32>
    "tpu.trace_stop"() : () -> ()
    %349 = vector.shape_cast %348 : vector<2x1x32xf32> to vector<2x32xf32>
    %350 = vector.shape_cast %330 : vector<2x32xf32> to vector<2x1x32xf32>
    "tpu.trace_start"() <{level = 10 : i32, message = "bqd,btd->bqt"}> : () -> ()
    %cst_124 = arith.constant dense<0.000000e+00> : vector<2x1x6xf32>
    %351 = tpu.matmul %350, %4, %cst_124 {dimension_numbers = #tpu.dot_dimension_numbers<[2], [2], [1], [1], [0, 0, 0, 1, 1, 1], [0], [0]>} : vector<2x1x32xf32>, vector<2x6x32xf32>, vector<2x1x6xf32> -> vector<2x1x6xf32>
    "tpu.trace_stop"() : () -> ()
    %352 = vector.shape_cast %351 : vector<2x1x6xf32> to vector<2x6xf32>
    %cst_125 = arith.constant 0.000000e+00 : f32
    %353 = vector.broadcast %cst_125 : f32 to vector<2x6xf32>
    %354 = arith.cmpf ogt, %6, %353 : vector<2x6xf32>
    %cst_126 = arith.constant -1.000000e+30 : f32
    %355 = vector.broadcast %cst_126 : f32 to vector<2x6xf32>
    %356 = arith.select %354, %352, %355 : vector<2x6xi1>, vector<2x6xf32>
    %cst_127 = arith.constant dense<0xFF800000> : vector<2xf32>
    %357 = vector.multi_reduction <maximumf>, %356, %cst_127 [1] : vector<2x6xf32> to vector<2xf32>
    %358 = vector.shape_cast %357 : vector<2xf32> to vector<2x1xf32>
    %359 = vector.broadcast %358 : vector<2x1xf32> to vector<2x6xf32>
    %360 = arith.subf %356, %359 : vector<2x6xf32>
    %361 = math.exp %360 : vector<2x6xf32>
    %cst_128 = arith.constant dense<0.000000e+00> : vector<2xf32>
    %362 = vector.multi_reduction <add>, %361, %cst_128 [1] : vector<2x6xf32> to vector<2xf32>
    %363 = vector.shape_cast %362 : vector<2xf32> to vector<2x1xf32>
    %364 = vector.broadcast %363 : vector<2x1xf32> to vector<2x6xf32>
    %365 = arith.divf %361, %364 : vector<2x6xf32>
    %366 = vector.shape_cast %365 : vector<2x6xf32> to vector<2x1x6xf32>
    "tpu.trace_start"() <{level = 10 : i32, message = "bqt,btd->bqd"}> : () -> ()
    %cst_129 = arith.constant dense<0.000000e+00> : vector<2x1x32xf32>
    %367 = tpu.matmul %366, %4, %cst_129 {dimension_numbers = #tpu.dot_dimension_numbers<[2], [1], [1], [2], [0, 0, 0, 1, 1, 2], [0], [0]>} : vector<2x1x6xf32>, vector<2x6x32xf32>, vector<2x1x32xf32> -> vector<2x1x32xf32>
    "tpu.trace_stop"() : () -> ()
    %368 = vector.shape_cast %367 : vector<2x1x32xf32> to vector<2x32xf32>
    %cst_130 = arith.constant dense<0.000000e+00> : vector<2x35xf32>
    %369 = tpu.matmul %330, %10, %cst_130 {dimension_numbers = #tpu.dot_dimension_numbers<[1], [0], [0], [1], [0, 0, 1, 1], [], []>} : vector<2x32xf32>, vector<32x35xf32>, vector<2x35xf32> -> vector<2x35xf32>
    %370 = vector.extract_strided_slice %369 {offsets = [0, 0], sizes = [2, 32], strides = [1, 1]} : vector<2x35xf32> to vector<2x32xf32>
    %cst_131 = arith.constant dense<0xFF800000> : vector<2xf32>
    %371 = vector.multi_reduction <maximumf>, %370, %cst_131 [1] : vector<2x32xf32> to vector<2xf32>
    %372 = vector.shape_cast %371 : vector<2xf32> to vector<2x1xf32>
    %373 = vector.broadcast %372 : vector<2x1xf32> to vector<2x32xf32>
    %374 = arith.subf %370, %373 : vector<2x32xf32>
    %375 = math.exp %374 : vector<2x32xf32>
    %cst_132 = arith.constant dense<0.000000e+00> : vector<2xf32>
    %376 = vector.multi_reduction <add>, %375, %cst_132 [1] : vector<2x32xf32> to vector<2xf32>
    %377 = vector.shape_cast %376 : vector<2xf32> to vector<2x1xf32>
    %378 = vector.broadcast %377 : vector<2x1xf32> to vector<2x32xf32>
    %379 = arith.divf %375, %378 : vector<2x32xf32>
    %380 = vector.extract_strided_slice %369 {offsets = [0, 32], sizes = [2, 3], strides = [1, 1]} : vector<2x35xf32> to vector<2x3xf32>
    %381 = arith.addf %380, %301 : vector<2x3xf32>
    %382 = vector.broadcast %17 : vector<1x3xf32> to vector<2x3xf32>
    %383 = arith.addf %381, %382 : vector<2x3xf32>
    %cst_133 = arith.constant dense<0.000000e+00> : vector<2x3xf32>
    %384 = tpu.matmul %349, %15, %cst_133 {dimension_numbers = #tpu.dot_dimension_numbers<[1], [0], [0], [1], [0, 0, 1, 1], [], []>} : vector<2x32xf32>, vector<32x3xf32>, vector<2x3xf32> -> vector<2x3xf32>
    %385 = arith.addf %383, %384 : vector<2x3xf32>
    %cst_134 = arith.constant dense<0.000000e+00> : vector<2x3xf32>
    %386 = tpu.matmul %368, %16, %cst_134 {dimension_numbers = #tpu.dot_dimension_numbers<[1], [0], [0], [1], [0, 0, 1, 1], [], []>} : vector<2x32xf32>, vector<32x3xf32>, vector<2x3xf32> -> vector<2x3xf32>
    %387 = arith.addf %385, %386 : vector<2x3xf32>
    %cst_135 = arith.constant dense<0xFF800000> : vector<2xf32>
    %388 = vector.multi_reduction <maximumf>, %387, %cst_135 [1] : vector<2x3xf32> to vector<2xf32>
    %389 = vector.shape_cast %388 : vector<2xf32> to vector<2x1xf32>
    %390 = vector.broadcast %389 : vector<2x1xf32> to vector<2x3xf32>
    %391 = arith.subf %387, %390 : vector<2x3xf32>
    %392 = math.exp %391 : vector<2x3xf32>
    %cst_136 = arith.constant dense<0.000000e+00> : vector<2xf32>
    %393 = vector.multi_reduction <add>, %392, %cst_136 [1] : vector<2x3xf32> to vector<2xf32>
    %394 = vector.shape_cast %393 : vector<2xf32> to vector<2x1xf32>
    %395 = vector.broadcast %394 : vector<2x1xf32> to vector<2x3xf32>
    %396 = arith.divf %392, %395 : vector<2x3xf32>
    %397 = vector.shape_cast %346 : vector<2x8xf32> to vector<2x1x8xf32>
    "tpu.trace_start"() <{level = 10 : i32, message = "bqt,btv->bqv"}> : () -> ()
    %cst_137 = arith.constant dense<0.000000e+00> : vector<2x1x32xf32>
    %398 = tpu.matmul %397, %7, %cst_137 {dimension_numbers = #tpu.dot_dimension_numbers<[2], [1], [1], [2], [0, 0, 0, 1, 1, 2], [0], [0]>} : vector<2x1x8xf32>, vector<2x8x32xf32>, vector<2x1x32xf32> -> vector<2x1x32xf32>
    "tpu.trace_stop"() : () -> ()
    %399 = vector.shape_cast %398 : vector<2x1x32xf32> to vector<2x32xf32>
    %400 = vector.shape_cast %365 : vector<2x6xf32> to vector<2x1x6xf32>
    "tpu.trace_start"() <{level = 10 : i32, message = "bqt,btv->bqv"}> : () -> ()
    %cst_138 = arith.constant dense<0.000000e+00> : vector<2x1x32xf32>
    %401 = tpu.matmul %400, %8, %cst_138 {dimension_numbers = #tpu.dot_dimension_numbers<[2], [1], [1], [2], [0, 0, 0, 1, 1, 2], [0], [0]>} : vector<2x1x6xf32>, vector<2x6x32xf32>, vector<2x1x32xf32> -> vector<2x1x32xf32>
    "tpu.trace_stop"() : () -> ()
    %402 = vector.shape_cast %401 : vector<2x1x32xf32> to vector<2x32xf32>
    %403 = vector.extract_strided_slice %396 {offsets = [0, 0], sizes = [2, 1], strides = [1, 1]} : vector<2x3xf32> to vector<2x1xf32>
    %404 = vector.extract_strided_slice %396 {offsets = [0, 1], sizes = [2, 1], strides = [1, 1]} : vector<2x3xf32> to vector<2x1xf32>
    %405 = vector.broadcast %403 : vector<2x1xf32> to vector<2x32xf32>
    %406 = arith.mulf %405, %379 : vector<2x32xf32>
    %407 = vector.broadcast %404 : vector<2x1xf32> to vector<2x32xf32>
    %408 = arith.mulf %407, %402 : vector<2x32xf32>
    %409 = arith.addf %406, %408 : vector<2x32xf32>
    %cst_139 = arith.constant 1.000000e+00 : f32
    %410 = vector.broadcast %cst_139 : f32 to vector<2x1xf32>
    %411 = arith.subf %410, %404 : vector<2x1xf32>
    %412 = arith.subf %411, %403 : vector<2x1xf32>
    %413 = vector.broadcast %412 : vector<2x1xf32> to vector<2x32xf32>
    %414 = arith.mulf %413, %399 : vector<2x32xf32>
    %415 = arith.addf %409, %414 : vector<2x32xf32>
    %c0_140 = arith.constant 0 : index
    %c0_141 = arith.constant 0 : index
    %c2 = arith.constant 2 : index
    %c0_142 = arith.constant 0 : index
    %416 = vector.load %arg20[%c0_140, %c0_141, %c2, %c0_142] : memref<1x2x4x32xf32, #tpu.memory_space<vmem>>, vector<1x2x1x32xf32>
    %417 = vector.shape_cast %416 : vector<1x2x1x32xf32> to vector<2x32xf32>
    %418 = vector.shape_cast %415 : vector<2x32xf32> to vector<1x2x1x32xf32>
    tpu.vector_store %arg20[%c0_140, %c0_141, %c2, %c0_142], %418 {strides = array<i32>} : memref<1x2x4x32xf32, #tpu.memory_space<vmem>>, vector<1x2x1x32xf32>,
    %cst_143 = arith.constant dense<0xFF800000> : vector<2xf32>
    %419 = vector.multi_reduction <maximumf>, %415, %cst_143 [1] : vector<2x32xf32> to vector<2xf32>
    %420 = vector.shape_cast %419 : vector<2xf32> to vector<2x1xf32>
    %421 = vector.broadcast %420 : vector<2x1xf32> to vector<2x32xf32>
    %422 = arith.cmpf oge, %415, %421 : vector<2x32xf32>
    %c32_i32_144 = arith.constant 32 : i32
    %423 = vector.broadcast %c32_i32_144 : i32 to vector<2x32xi32>
    %424 = arith.select %422, %18, %423 : vector<2x32xi1>, vector<2x32xi32>
    %cst_145 = arith.constant dense<2147483647> : vector<2xi32>
    %425 = vector.multi_reduction <minsi>, %424, %cst_145 [1] : vector<2x32xi32> to vector<2xi32>
    %426 = vector.shape_cast %425 : vector<2xi32> to vector<2x1xi32>
    %427 = vector.broadcast %426 : vector<2x1xi32> to vector<2x32xi32>
    %428 = arith.cmpi eq, %18, %427 : vector<2x32xi32>
    %429 = arith.extui %428 : vector<2x32xi1> to vector<2x32xi32>
    %430 = arith.sitofp %429 : vector<2x32xi32> to vector<2x32xf32>
    %cst_146 = arith.constant dense<0.000000e+00> : vector<2x32xf32>
    %431 = tpu.matmul %430, %9, %cst_146 {dimension_numbers = #tpu.dot_dimension_numbers<[1], [0], [0], [1], [0, 0, 1, 1], [], []>} : vector<2x32xf32>, vector<32x32xf32>, vector<2x32xf32> -> vector<2x32xf32>
    %cst_147 = arith.constant dense<0.000000e+00> : vector<2x99xf32>
    %432 = tpu.matmul %431, %11, %cst_147 {dimension_numbers = #tpu.dot_dimension_numbers<[1], [0], [0], [1], [0, 0, 1, 1], [], []>} : vector<2x32xf32>, vector<32x99xf32>, vector<2x99xf32> -> vector<2x99xf32>
    %433 = vector.extract_strided_slice %432 {offsets = [0, 0], sizes = [2, 96], strides = [1, 1]} : vector<2x99xf32> to vector<2x96xf32>
    %434 = vector.broadcast %13 : vector<1x96xf32> to vector<2x96xf32>
    %435 = arith.addf %433, %434 : vector<2x96xf32>
    %436 = vector.extract_strided_slice %432 {offsets = [0, 96], sizes = [2, 3], strides = [1, 1]} : vector<2x99xf32> to vector<2x3xf32>
    %cst_148 = arith.constant dense<0.000000e+00> : vector<2x96xf32>
    %437 = tpu.matmul %330, %12, %cst_148 {dimension_numbers = #tpu.dot_dimension_numbers<[1], [0], [0], [1], [0, 0, 1, 1], [], []>} : vector<2x32xf32>, vector<32x96xf32>, vector<2x96xf32> -> vector<2x96xf32>
    %438 = vector.broadcast %14 : vector<1x96xf32> to vector<2x96xf32>
    %439 = arith.addf %437, %438 : vector<2x96xf32>
    %440 = vector.extract_strided_slice %435 {offsets = [0, 0], sizes = [2, 32], strides = [1, 1]} : vector<2x96xf32> to vector<2x32xf32>
    %441 = vector.extract_strided_slice %439 {offsets = [0, 0], sizes = [2, 32], strides = [1, 1]} : vector<2x96xf32> to vector<2x32xf32>
    %442 = arith.addf %440, %441 : vector<2x32xf32>
    %443 = arith.negf %442 : vector<2x32xf32>
    %444 = math.exp %443 : vector<2x32xf32>
    %cst_149 = arith.constant 1.000000e+00 : f32
    %445 = vector.broadcast %cst_149 : f32 to vector<2x32xf32>
    %446 = arith.addf %445, %444 : vector<2x32xf32>
    %447 = arith.divf %445, %446 : vector<2x32xf32>
    %448 = vector.extract_strided_slice %435 {offsets = [0, 32], sizes = [2, 32], strides = [1, 1]} : vector<2x96xf32> to vector<2x32xf32>
    %449 = vector.extract_strided_slice %439 {offsets = [0, 32], sizes = [2, 32], strides = [1, 1]} : vector<2x96xf32> to vector<2x32xf32>
    %450 = arith.addf %448, %449 : vector<2x32xf32>
    %451 = arith.negf %450 : vector<2x32xf32>
    %452 = math.exp %451 : vector<2x32xf32>
    %cst_150 = arith.constant 1.000000e+00 : f32
    %453 = vector.broadcast %cst_150 : f32 to vector<2x32xf32>
    %454 = arith.addf %453, %452 : vector<2x32xf32>
    %455 = arith.divf %453, %454 : vector<2x32xf32>
    %456 = vector.extract_strided_slice %435 {offsets = [0, 64], sizes = [2, 32], strides = [1, 1]} : vector<2x96xf32> to vector<2x32xf32>
    %457 = vector.extract_strided_slice %439 {offsets = [0, 64], sizes = [2, 32], strides = [1, 1]} : vector<2x96xf32> to vector<2x32xf32>
    %458 = arith.mulf %447, %457 : vector<2x32xf32>
    %459 = arith.addf %456, %458 : vector<2x32xf32>
    %460 = math.tanh %459 : vector<2x32xf32>
    %cst_151 = arith.constant 1.000000e+00 : f32
    %461 = vector.broadcast %cst_151 : f32 to vector<2x32xf32>
    %462 = arith.subf %461, %455 : vector<2x32xf32>
    %463 = arith.mulf %462, %460 : vector<2x32xf32>
    %464 = arith.mulf %455, %330 : vector<2x32xf32>
    %465 = arith.addf %463, %464 : vector<2x32xf32>
    %466 = vector.shape_cast %465 : vector<2x32xf32> to vector<2x1x32xf32>
    "tpu.trace_start"() <{level = 10 : i32, message = "bqd,btd->bqt"}> : () -> ()
    %cst_152 = arith.constant dense<0.000000e+00> : vector<2x1x8xf32>
    %467 = tpu.matmul %466, %3, %cst_152 {dimension_numbers = #tpu.dot_dimension_numbers<[2], [2], [1], [1], [0, 0, 0, 1, 1, 1], [0], [0]>} : vector<2x1x32xf32>, vector<2x8x32xf32>, vector<2x1x8xf32> -> vector<2x1x8xf32>
    "tpu.trace_stop"() : () -> ()
    %468 = vector.shape_cast %467 : vector<2x1x8xf32> to vector<2x8xf32>
    %cst_153 = arith.constant 0.000000e+00 : f32
    %469 = vector.broadcast %cst_153 : f32 to vector<2x8xf32>
    %470 = arith.cmpf ogt, %5, %469 : vector<2x8xf32>
    %cst_154 = arith.constant -1.000000e+30 : f32
    %471 = vector.broadcast %cst_154 : f32 to vector<2x8xf32>
    %472 = arith.select %470, %468, %471 : vector<2x8xi1>, vector<2x8xf32>
    %cst_155 = arith.constant dense<0xFF800000> : vector<2xf32>
    %473 = vector.multi_reduction <maximumf>, %472, %cst_155 [1] : vector<2x8xf32> to vector<2xf32>
    %474 = vector.shape_cast %473 : vector<2xf32> to vector<2x1xf32>
    %475 = vector.broadcast %474 : vector<2x1xf32> to vector<2x8xf32>
    %476 = arith.subf %472, %475 : vector<2x8xf32>
    %477 = math.exp %476 : vector<2x8xf32>
    %cst_156 = arith.constant dense<0.000000e+00> : vector<2xf32>
    %478 = vector.multi_reduction <add>, %477, %cst_156 [1] : vector<2x8xf32> to vector<2xf32>
    %479 = vector.shape_cast %478 : vector<2xf32> to vector<2x1xf32>
    %480 = vector.broadcast %479 : vector<2x1xf32> to vector<2x8xf32>
    %481 = arith.divf %477, %480 : vector<2x8xf32>
    %482 = vector.shape_cast %481 : vector<2x8xf32> to vector<2x1x8xf32>
    "tpu.trace_start"() <{level = 10 : i32, message = "bqt,btd->bqd"}> : () -> ()
    %cst_157 = arith.constant dense<0.000000e+00> : vector<2x1x32xf32>
    %483 = tpu.matmul %482, %3, %cst_157 {dimension_numbers = #tpu.dot_dimension_numbers<[2], [1], [1], [2], [0, 0, 0, 1, 1, 2], [0], [0]>} : vector<2x1x8xf32>, vector<2x8x32xf32>, vector<2x1x32xf32> -> vector<2x1x32xf32>
    "tpu.trace_stop"() : () -> ()
    %484 = vector.shape_cast %483 : vector<2x1x32xf32> to vector<2x32xf32>
    %485 = vector.shape_cast %465 : vector<2x32xf32> to vector<2x1x32xf32>
    "tpu.trace_start"() <{level = 10 : i32, message = "bqd,btd->bqt"}> : () -> ()
    %cst_158 = arith.constant dense<0.000000e+00> : vector<2x1x6xf32>
    %486 = tpu.matmul %485, %4, %cst_158 {dimension_numbers = #tpu.dot_dimension_numbers<[2], [2], [1], [1], [0, 0, 0, 1, 1, 1], [0], [0]>} : vector<2x1x32xf32>, vector<2x6x32xf32>, vector<2x1x6xf32> -> vector<2x1x6xf32>
    "tpu.trace_stop"() : () -> ()
    %487 = vector.shape_cast %486 : vector<2x1x6xf32> to vector<2x6xf32>
    %cst_159 = arith.constant 0.000000e+00 : f32
    %488 = vector.broadcast %cst_159 : f32 to vector<2x6xf32>
    %489 = arith.cmpf ogt, %6, %488 : vector<2x6xf32>
    %cst_160 = arith.constant -1.000000e+30 : f32
    %490 = vector.broadcast %cst_160 : f32 to vector<2x6xf32>
    %491 = arith.select %489, %487, %490 : vector<2x6xi1>, vector<2x6xf32>
    %cst_161 = arith.constant dense<0xFF800000> : vector<2xf32>
    %492 = vector.multi_reduction <maximumf>, %491, %cst_161 [1] : vector<2x6xf32> to vector<2xf32>
    %493 = vector.shape_cast %492 : vector<2xf32> to vector<2x1xf32>
    %494 = vector.broadcast %493 : vector<2x1xf32> to vector<2x6xf32>
    %495 = arith.subf %491, %494 : vector<2x6xf32>
    %496 = math.exp %495 : vector<2x6xf32>
    %cst_162 = arith.constant dense<0.000000e+00> : vector<2xf32>
    %497 = vector.multi_reduction <add>, %496, %cst_162 [1] : vector<2x6xf32> to vector<2xf32>
    %498 = vector.shape_cast %497 : vector<2xf32> to vector<2x1xf32>
    %499 = vector.broadcast %498 : vector<2x1xf32> to vector<2x6xf32>
    %500 = arith.divf %496, %499 : vector<2x6xf32>
    %501 = vector.shape_cast %500 : vector<2x6xf32> to vector<2x1x6xf32>
    "tpu.trace_start"() <{level = 10 : i32, message = "bqt,btd->bqd"}> : () -> ()
    %cst_163 = arith.constant dense<0.000000e+00> : vector<2x1x32xf32>
    %502 = tpu.matmul %501, %4, %cst_163 {dimension_numbers = #tpu.dot_dimension_numbers<[2], [1], [1], [2], [0, 0, 0, 1, 1, 2], [0], [0]>} : vector<2x1x6xf32>, vector<2x6x32xf32>, vector<2x1x32xf32> -> vector<2x1x32xf32>
    "tpu.trace_stop"() : () -> ()
    %503 = vector.shape_cast %502 : vector<2x1x32xf32> to vector<2x32xf32>
    %cst_164 = arith.constant dense<0.000000e+00> : vector<2x35xf32>
    %504 = tpu.matmul %465, %10, %cst_164 {dimension_numbers = #tpu.dot_dimension_numbers<[1], [0], [0], [1], [0, 0, 1, 1], [], []>} : vector<2x32xf32>, vector<32x35xf32>, vector<2x35xf32> -> vector<2x35xf32>
    %505 = vector.extract_strided_slice %504 {offsets = [0, 0], sizes = [2, 32], strides = [1, 1]} : vector<2x35xf32> to vector<2x32xf32>
    %cst_165 = arith.constant dense<0xFF800000> : vector<2xf32>
    %506 = vector.multi_reduction <maximumf>, %505, %cst_165 [1] : vector<2x32xf32> to vector<2xf32>
    %507 = vector.shape_cast %506 : vector<2xf32> to vector<2x1xf32>
    %508 = vector.broadcast %507 : vector<2x1xf32> to vector<2x32xf32>
    %509 = arith.subf %505, %508 : vector<2x32xf32>
    %510 = math.exp %509 : vector<2x32xf32>
    %cst_166 = arith.constant dense<0.000000e+00> : vector<2xf32>
    %511 = vector.multi_reduction <add>, %510, %cst_166 [1] : vector<2x32xf32> to vector<2xf32>
    %512 = vector.shape_cast %511 : vector<2xf32> to vector<2x1xf32>
    %513 = vector.broadcast %512 : vector<2x1xf32> to vector<2x32xf32>
    %514 = arith.divf %510, %513 : vector<2x32xf32>
    %515 = vector.extract_strided_slice %504 {offsets = [0, 32], sizes = [2, 3], strides = [1, 1]} : vector<2x35xf32> to vector<2x3xf32>
    %516 = arith.addf %515, %436 : vector<2x3xf32>
    %517 = vector.broadcast %17 : vector<1x3xf32> to vector<2x3xf32>
    %518 = arith.addf %516, %517 : vector<2x3xf32>
    %cst_167 = arith.constant dense<0.000000e+00> : vector<2x3xf32>
    %519 = tpu.matmul %484, %15, %cst_167 {dimension_numbers = #tpu.dot_dimension_numbers<[1], [0], [0], [1], [0, 0, 1, 1], [], []>} : vector<2x32xf32>, vector<32x3xf32>, vector<2x3xf32> -> vector<2x3xf32>
    %520 = arith.addf %518, %519 : vector<2x3xf32>
    %cst_168 = arith.constant dense<0.000000e+00> : vector<2x3xf32>
    %521 = tpu.matmul %503, %16, %cst_168 {dimension_numbers = #tpu.dot_dimension_numbers<[1], [0], [0], [1], [0, 0, 1, 1], [], []>} : vector<2x32xf32>, vector<32x3xf32>, vector<2x3xf32> -> vector<2x3xf32>
    %522 = arith.addf %520, %521 : vector<2x3xf32>
    %cst_169 = arith.constant dense<0xFF800000> : vector<2xf32>
    %523 = vector.multi_reduction <maximumf>, %522, %cst_169 [1] : vector<2x3xf32> to vector<2xf32>
    %524 = vector.shape_cast %523 : vector<2xf32> to vector<2x1xf32>
    %525 = vector.broadcast %524 : vector<2x1xf32> to vector<2x3xf32>
    %526 = arith.subf %522, %525 : vector<2x3xf32>
    %527 = math.exp %526 : vector<2x3xf32>
    %cst_170 = arith.constant dense<0.000000e+00> : vector<2xf32>
    %528 = vector.multi_reduction <add>, %527, %cst_170 [1] : vector<2x3xf32> to vector<2xf32>
    %529 = vector.shape_cast %528 : vector<2xf32> to vector<2x1xf32>
    %530 = vector.broadcast %529 : vector<2x1xf32> to vector<2x3xf32>
    %531 = arith.divf %527, %530 : vector<2x3xf32>
    %532 = vector.shape_cast %481 : vector<2x8xf32> to vector<2x1x8xf32>
    "tpu.trace_start"() <{level = 10 : i32, message = "bqt,btv->bqv"}> : () -> ()
    %cst_171 = arith.constant dense<0.000000e+00> : vector<2x1x32xf32>
    %533 = tpu.matmul %532, %7, %cst_171 {dimension_numbers = #tpu.dot_dimension_numbers<[2], [1], [1], [2], [0, 0, 0, 1, 1, 2], [0], [0]>} : vector<2x1x8xf32>, vector<2x8x32xf32>, vector<2x1x32xf32> -> vector<2x1x32xf32>
    "tpu.trace_stop"() : () -> ()
    %534 = vector.shape_cast %533 : vector<2x1x32xf32> to vector<2x32xf32>
    %535 = vector.shape_cast %500 : vector<2x6xf32> to vector<2x1x6xf32>
    "tpu.trace_start"() <{level = 10 : i32, message = "bqt,btv->bqv"}> : () -> ()
    %cst_172 = arith.constant dense<0.000000e+00> : vector<2x1x32xf32>
    %536 = tpu.matmul %535, %8, %cst_172 {dimension_numbers = #tpu.dot_dimension_numbers<[2], [1], [1], [2], [0, 0, 0, 1, 1, 2], [0], [0]>} : vector<2x1x6xf32>, vector<2x6x32xf32>, vector<2x1x32xf32> -> vector<2x1x32xf32>
    "tpu.trace_stop"() : () -> ()
    %537 = vector.shape_cast %536 : vector<2x1x32xf32> to vector<2x32xf32>
    %538 = vector.extract_strided_slice %531 {offsets = [0, 0], sizes = [2, 1], strides = [1, 1]} : vector<2x3xf32> to vector<2x1xf32>
    %539 = vector.extract_strided_slice %531 {offsets = [0, 1], sizes = [2, 1], strides = [1, 1]} : vector<2x3xf32> to vector<2x1xf32>
    %540 = vector.broadcast %538 : vector<2x1xf32> to vector<2x32xf32>
    %541 = arith.mulf %540, %514 : vector<2x32xf32>
    %542 = vector.broadcast %539 : vector<2x1xf32> to vector<2x32xf32>
    %543 = arith.mulf %542, %537 : vector<2x32xf32>
    %544 = arith.addf %541, %543 : vector<2x32xf32>
    %cst_173 = arith.constant 1.000000e+00 : f32
    %545 = vector.broadcast %cst_173 : f32 to vector<2x1xf32>
    %546 = arith.subf %545, %539 : vector<2x1xf32>
    %547 = arith.subf %546, %538 : vector<2x1xf32>
    %548 = vector.broadcast %547 : vector<2x1xf32> to vector<2x32xf32>
    %549 = arith.mulf %548, %534 : vector<2x32xf32>
    %550 = arith.addf %544, %549 : vector<2x32xf32>
    %c0_174 = arith.constant 0 : index
    %c0_175 = arith.constant 0 : index
    %c3 = arith.constant 3 : index
    %c0_176 = arith.constant 0 : index
    %551 = vector.load %arg20[%c0_174, %c0_175, %c3, %c0_176] : memref<1x2x4x32xf32, #tpu.memory_space<vmem>>, vector<1x2x1x32xf32>
    %552 = vector.shape_cast %551 : vector<1x2x1x32xf32> to vector<2x32xf32>
    %553 = vector.shape_cast %550 : vector<2x32xf32> to vector<1x2x1x32xf32>
    tpu.vector_store %arg20[%c0_174, %c0_175, %c3, %c0_176], %553 {strides = array<i32>} : memref<1x2x4x32xf32, #tpu.memory_space<vmem>>, vector<1x2x1x32xf32>,
    return
  }
  func.func @transform_0(%arg0: i32) -> (i32, i32, i32) {
    %c0_i32 = arith.constant 0 : i32
    %c0_i32_0 = arith.constant 0 : i32
    %c0_i32_1 = arith.constant 0 : i32
    return %arg0, %c0_i32, %c0_i32_0 : i32, i32, i32
  }
  func.func @transform_1(%arg0: i32) -> (i32, i32) {
    %c0_i32 = arith.constant 0 : i32
    %c0_i32_0 = arith.constant 0 : i32
    %c0_i32_1 = arith.constant 0 : i32
    return %c0_i32, %c0_i32_0 : i32, i32
  }
  func.func @transform_2(%arg0: i32) -> (i32, i32, i32) {
    %c0_i32 = arith.constant 0 : i32
    %c0_i32_0 = arith.constant 0 : i32
    %c0_i32_1 = arith.constant 0 : i32
    %c0_i32_2 = arith.constant 0 : i32
    return %c0_i32, %c0_i32_0, %c0_i32_1 : i32, i32, i32
  }
  func.func @transform_3(%arg0: i32) -> (i32, i32) {
    %c0_i32 = arith.constant 0 : i32
    %c0_i32_0 = arith.constant 0 : i32
    %c0_i32_1 = arith.constant 0 : i32
    return %c0_i32, %c0_i32_0 : i32, i32
  }
  func.func @transform_4(%arg0: i32) -> (i32, i32, i32) {
    %c0_i32 = arith.constant 0 : i32
    %c0_i32_0 = arith.constant 0 : i32
    %c0_i32_1 = arith.constant 0 : i32
    %c0_i32_2 = arith.constant 0 : i32
    return %c0_i32, %c0_i32_0, %c0_i32_1 : i32, i32, i32
  }
  func.func @transform_5(%arg0: i32) -> (i32, i32) {
    %c0_i32 = arith.constant 0 : i32
    %c0_i32_0 = arith.constant 0 : i32
    %c0_i32_1 = arith.constant 0 : i32
    return %c0_i32, %c0_i32_0 : i32, i32
  }
  func.func @transform_6(%arg0: i32) -> (i32, i32, i32) {
    %c0_i32 = arith.constant 0 : i32
    %c0_i32_0 = arith.constant 0 : i32
    %c0_i32_1 = arith.constant 0 : i32
    %c0_i32_2 = arith.constant 0 : i32
    return %c0_i32, %c0_i32_0, %c0_i32_1 : i32, i32, i32
  }
  func.func @transform_7(%arg0: i32) -> (i32, i32, i32) {
    %c0_i32 = arith.constant 0 : i32
    %c0_i32_0 = arith.constant 0 : i32
    %c0_i32_1 = arith.constant 0 : i32
    %c0_i32_2 = arith.constant 0 : i32
    return %c0_i32, %c0_i32_0, %c0_i32_1 : i32, i32, i32
  }
  func.func @transform_8(%arg0: i32) -> (i32, i32) {
    %c0_i32 = arith.constant 0 : i32
    %c0_i32_0 = arith.constant 0 : i32
    %c0_i32_1 = arith.constant 0 : i32
    return %c0_i32, %c0_i32_0 : i32, i32
  }
  func.func @transform_9(%arg0: i32) -> (i32, i32) {
    %c0_i32 = arith.constant 0 : i32
    %c0_i32_0 = arith.constant 0 : i32
    %c0_i32_1 = arith.constant 0 : i32
    return %c0_i32, %c0_i32_0 : i32, i32
  }
  func.func @transform_10(%arg0: i32) -> (i32, i32) {
    %c0_i32 = arith.constant 0 : i32
    %c0_i32_0 = arith.constant 0 : i32
    %c0_i32_1 = arith.constant 0 : i32
    return %c0_i32, %c0_i32_0 : i32, i32
  }
  func.func @transform_11(%arg0: i32) -> (i32, i32) {
    %c0_i32 = arith.constant 0 : i32
    %c0_i32_0 = arith.constant 0 : i32
    %c0_i32_1 = arith.constant 0 : i32
    return %c0_i32, %c0_i32_0 : i32, i32
  }
  func.func @transform_12(%arg0: i32) -> (i32, i32) {
    %c0_i32 = arith.constant 0 : i32
    %c0_i32_0 = arith.constant 0 : i32
    %c0_i32_1 = arith.constant 0 : i32
    return %c0_i32, %c0_i32_0 : i32, i32
  }
  func.func @transform_13(%arg0: i32) -> (i32, i32) {
    %c0_i32 = arith.constant 0 : i32
    %c0_i32_0 = arith.constant 0 : i32
    %c0_i32_1 = arith.constant 0 : i32
    return %c0_i32, %c0_i32_0 : i32, i32
  }
  func.func @transform_14(%arg0: i32) -> (i32, i32) {
    %c0_i32 = arith.constant 0 : i32
    %c0_i32_0 = arith.constant 0 : i32
    %c0_i32_1 = arith.constant 0 : i32
    return %c0_i32, %c0_i32_0 : i32, i32
  }
  func.func @transform_15(%arg0: i32) -> (i32, i32) {
    %c0_i32 = arith.constant 0 : i32
    %c0_i32_0 = arith.constant 0 : i32
    %c0_i32_1 = arith.constant 0 : i32
    return %c0_i32, %c0_i32_0 : i32, i32
  }
  func.func @transform_16(%arg0: i32) -> (i32, i32) {
    %c0_i32 = arith.constant 0 : i32
    %c0_i32_0 = arith.constant 0 : i32
    %c0_i32_1 = arith.constant 0 : i32
    return %c0_i32, %c0_i32_0 : i32, i32
  }
  func.func @transform_17(%arg0: i32) -> (i32, i32) {
    %c0_i32 = arith.constant 0 : i32
    %c0_i32_0 = arith.constant 0 : i32
    %c0_i32_1 = arith.constant 0 : i32
    return %c0_i32, %c0_i32_0 : i32, i32
  }
  func.func @transform_18(%arg0: i32) -> (i32, i32) {
    %c0_i32 = arith.constant 0 : i32
    %c0_i32_0 = arith.constant 0 : i32
    %c0_i32_1 = arith.constant 0 : i32
    return %c0_i32, %c0_i32_0 : i32, i32
  }
  func.func @transform_19(%arg0: i32) -> (i32, i32, i32, i32) {
    %c0_i32 = arith.constant 0 : i32
    %c0_i32_0 = arith.constant 0 : i32
    %c0_i32_1 = arith.constant 0 : i32
    %c0_i32_2 = arith.constant 0 : i32
    return %arg0, %c0_i32, %c0_i32_0, %c0_i32_1 : i32, i32, i32, i32
  }
  func.func @transform_20(%arg0: i32) -> (i32, i32, i32) {
    %c0_i32 = arith.constant 0 : i32
    %c0_i32_0 = arith.constant 0 : i32
    %c0_i32_1 = arith.constant 0 : i32
    return %arg0, %c0_i32, %c0_i32_0 : i32, i32, i32
  }
}

</mosaic_0001>

<llo_original>
// kernel: run.5
$region0: #{run.5}
  #allocation0 [shape = 'u32[]', space=smem, size = 0x4, offset = 0x4, fixed_abs, tag = 'smem constant byte address 0x4 - core index']
  #allocation1 [shape = 'u32[72,128]{1,0:T(1,128)}', space=vmem, size = 0x9000, scoped, tag = 'internal scratch']
  #allocation2 [shape = 'f32[12,96]{1,0:T(8,128)}', space=vmem, size = 0x2000, scoped, tag = 'scratch operand']
  %s0 = inlined_call_operand.vmem [shape: f32[12,32], index: 0, kind: input, shape index: {}]
  %s1 = inlined_call_operand.vmem [shape: f32[12,1], index: 1, kind: input, shape index: {}]
  %s2 = inlined_call_operand.vmem [shape: f32[32,96], index: 2, kind: input, shape index: {}]
  %s3 = inlined_call_operand.vmem [shape: f32[32,96], index: 3, kind: input, shape index: {}]
  %s4 = inlined_call_operand.vmem [shape: f32[1,96], index: 4, kind: input, shape index: {}]
  %s5 = inlined_call_operand.vmem [shape: f32[1,96], index: 5, kind: input, shape index: {}]
  %s6 = inlined_call_operand.vmem [shape: f32[2,6,32], index: 6, kind: output, shape index: {0}]
  %s7 = inlined_call_operand.vmem [shape: f32[2,32], index: 7, kind: output, shape index: {1}]
  %8 = xla_tuple %s6, %s7
  %s9 = sld [smem:[#allocation0]]
  $region42: #{run.5} parent=0
    _
  %s11 = ssub.s32 1, %s9
  %s12 = scalar_select 0, %s11, %s9
  // Predicated region
  $region2: #{run.5} parent=0 // pred_check
    _
  $region3: #{run.5} parent=0 // pred_check_branch
    %14 = sbr.rel (0) target = $region5
  $region4: #{run.5} parent=0 // pred_region
    _
  $region5: #{run.5} parent=0 // pred_fallthru
    _
  // Predicated region
  $region6: #{run.5} parent=0 // pred_check
    _
  $region7: #{run.5} parent=0 // pred_check_branch
    %16 = sbr.rel (0) target = $region9
  $region8: #{run.5} parent=0 // pred_region
    _
  $region9: #{run.5} parent=0 // pred_fallthru
    _
  // Predicated region
  $region10: #{run.5} parent=0 // pred_check
    _
  $region11: #{run.5} parent=0 // pred_check_branch
    %18 = sbr.rel (0) target = $region13
  $region12: #{run.5} parent=0 // pred_region
    _
  $region13: #{run.5} parent=0 // pred_fallthru
    _
  // Predicated region
  $region14: #{run.5} parent=0 // pred_check
    _
  $region15: #{run.5} parent=0 // pred_check_branch
    %20 = sbr.rel (0) target = $region17
  $region16: #{run.5} parent=0 // pred_region
    _
  $region17: #{run.5} parent=0 // pred_fallthru
    _
  // Predicated region
  $region18: #{run.5} parent=0 // pred_check
    _
  $region19: #{run.5} parent=0 // pred_check_branch
    %22 = sbr.rel (0) target = $region21
  $region20: #{run.5} parent=0 // pred_region
    _
  $region21: #{run.5} parent=0 // pred_fallthru
    _
  // Predicated region
  $region22: #{run.5} parent=0 // pred_check
    _
  $region23: #{run.5} parent=0 // pred_check_branch
    %24 = sbr.rel (0) target = $region25
  $region24: #{run.5} parent=0 // pred_region
    _
  $region25: #{run.5} parent=0 // pred_fallthru
    _
  %v25 = vld [vmem:[%s0] sm:$0xff]
  %v26 = vld [vmem:[%s0 + $0x8] sm:$0xf]
  %v27 = vld [vmem:[%s2] sm:$0xff]
  %v28 = vld [vmem:[%s2 + $0x8] sm:$0xff]
  %v29 = vld [vmem:[%s2 + $0x10] sm:$0xff]
  %v30 = vld [vmem:[%s2 + $0x18] sm:$0xff]
  %v31 = vld [vmem:[%s4] sm:$0x1]
  %v33 = vperm.slane %v31, 0
  %vm35 = vcmask 261120
  %v37 = vsel %vm35, %v25, 0
  %v40 = vsel %vm35, %v26, 0
  %42 = vmatpush.msra.mxu0 0.0
  %43 = vmatpush.msra.mxu0 0.0
  %44 = vmatpush.msra.mxu0 0.0
  %45 = vmatpush.msra.mxu0 0.0
  %46 = vmatpush.msra.mxu0 0.0
  %47 = vmatpush.msra.mxu0 0.0
  %48 = vmatpush.msra.mxu0 0.0
  %49 = vmatpush.msra.mxu0 0.0
  %50 = vmatpush.msra.mxu0 0.0
  %51 = vmatpush.msra.mxu0 0.0
  %52 = vmatpush.msra.mxu0 0.0
  %53 = vmatpush.msra.mxu0 0.0
  %54 = vmatpush.msra.mxu0 %v30
  %55 = vmatpush.msra.mxu0 %v29
  %56 = vmatpush.msra.mxu0 %v28
  %57 = vmatpush.msra.mxu0 %v27
  %58 = vmatmul.f32.gmra.mxu0 %v37
  %v59 = vpop.f32.mrf.mxu0
  %v60 = vadd.f32 %v33, %v59
  %61 = vmatmul.f32.gmra.mxu0 %v40
  %v62 = vpop.f32.mrf.mxu0
  %v63 = vadd.f32 %v33, %v62
  %64 = vdwg.mxu0
  %vm65 = vcmask 785408
  %66 = vst.msk [vmem:[#allocation2] sm:$0xff] %vm65, %v60
  %vm67 = vcmask 781312
  %68 = vst.msk [vmem:[#allocation2 + $0x8] sm:$0xf] %vm67, %v63
  %v69 = vld [vmem:[%s3] sm:$0xff]
  %v70 = vld [vmem:[%s3 + $0x8] sm:$0xff]
  %v71 = vld [vmem:[%s3 + $0x10] sm:$0xff]
  %v72 = vld [vmem:[%s3 + $0x18] sm:$0xff]
  %v73 = vld [vmem:[%s5] sm:$0x1]
  %v74 = vld [vmem:[#allocation2] sm:$0x3]
  %v76 = vperm.slane %v73, 0
  %v79 = vsel %vm35, 0.0, 0
  %81 = vmatpush.msra.mxu0 0.0
  %82 = vmatpush.msra.mxu0 0.0
  %83 = vmatpush.msra.mxu0 0.0
  %84 = vmatpush.msra.mxu0 0.0
  %85 = vmatpush.msra.mxu0 0.0
  %86 = vmatpush.msra.mxu0 0.0
  %87 = vmatpush.msra.mxu0 0.0
  %88 = vmatpush.msra.mxu0 0.0
  %89 = vmatpush.msra.mxu0 0.0
  %90 = vmatpush.msra.mxu0 0.0
  %91 = vmatpush.msra.mxu0 0.0
  %92 = vmatpush.msra.mxu0 0.0
  %93 = vmatpush.msra.mxu0 %v72
  %94 = vmatpush.msra.mxu0 %v71
  %95 = vmatpush.msra.mxu0 %v70
  %96 = vmatpush.msra.mxu0 %v69
  %97 = vmatmul.f32.gmra.mxu0 %v79
  %v98 = vpop.f32.mrf.mxu0
  %v99 = vadd.f32 %v76, %v98
  %100 = vdwg.mxu0
  %v101 = vadd.f32 %v74, %v99
  %v102 = vxor.u32 %v101, 2147483648
  %v103 = vmul.f32 %v102, 1.442695
  %v104 = vpow.pop %v103
  %v105 = vadd.f32 %v104, 1.0
  %v106 = vrcp.pop %v105
  %v107 = vmul.f32 %v105, %v106
  %v108 = vsub.f32 1.0, %v107
  %v109 = vmul.f32 %v106, %v108
  %v110 = vadd.f32 %v106, %v109
  %vm111 = vweird.f32 %v105
  %vm112 = vweird.f32 %v106
  %vm113 = vmor %vm111, %vm112
  %v114 = vsel %vm113, %v106, %v110
  %v115 = vand.u32 2147483647, %v105
  %vm116 = vcmp.eq.f32.partialorder %v115, 8.507059e+37
  %v117 = vand.u32 %v105, 2147483648
  %v118 = vor.u32 1.1754944e-38, %v117
  %v119 = vsel %vm116, %v118, %v114
  %v120 = vmul.f32 1.0, %v119
  %122 = vrot.lane.b32.xlu0 %v99, 64
  %v123 = vpop.permute.xlu0 %122
  %v125 = vmul.f32 %v120, %v123
  %127 = vrot.lane.b32.xlu0 %v125, 64
  %v128 = vpop.permute.xlu0 %127
  %v130 = vadd.f32 %v74, %v128
  %v131 = vtanh.pop %v130
  %v132 = vsub.f32 1.0, %v120
  %134 = vrot.lane.b32.xlu0 %v131, 96
  %v135 = vpop.permute.xlu0 %134
  %v137 = vmul.f32 %v132, %v135
  %v138 = vmul.f32 %v120, 0.0
  %v139 = vadd.f32 %v137, %v138
  %v140 = vld [vmem:[%s1] sm:$0x3]
  %142 = vset.pattern.permute.xlu0 0
  %143 = vperm.xlu0 %142, %v140
  %v144 = vpop.permute.xlu0 %143
  %v146 = vmul.f32 %v144, %v139
  %v147 = vsub.f32 1.0, %v140
  %149 = vset.pattern.permute.xlu0 0
  %150 = vperm.xlu0 %149, %v147
  %v151 = vpop.permute.xlu0 %150
  %v153 = vmul.f32 %v151, 0.0
  %v154 = vadd.f32 %v146, %v153
  %v156 = vrot.slane %v146, 1
  %v157 = vperm.slane %v146, 0
  %v158 = vperm.slane %v156, 0
  %159 = vrot.lane.b32.xlu0 %v157, 96
  %v160 = vpop.permute.xlu0 %159
  %161 = vrot.lane.b32.xlu0 %v158, 96
  %v162 = vpop.permute.xlu0 %161
  %vm165 = vcmask 253952
  %166 = vst.msk [vmem:[%s6] sm:$0x1] %vm165, %v160
  %167 = vst.msk [vmem:[%s6 + $0x8] sm:$0x1] %vm165, %v162
  %v168 = vld [vmem:[#allocation2 + $0x2] sm:$0x3]
  %170 = vrot.lane.b32.xlu0 %v154, 96
  %v171 = vpop.permute.xlu0 %170
  %v172 = vsel %vm35, %v171, 0
  %174 = vmatpush.msra.mxu0 0.0
  %175 = vmatpush.msra.mxu0 0.0
  %176 = vmatpush.msra.mxu0 0.0
  %177 = vmatpush.msra.mxu0 0.0
  %178 = vmatpush.msra.mxu0 0.0
  %179 = vmatpush.msra.mxu0 0.0
  %180 = vmatpush.msra.mxu0 0.0
  %181 = vmatpush.msra.mxu0 0.0
  %182 = vmatpush.msra.mxu0 0.0
  %183 = vmatpush.msra.mxu0 0.0
  %184 = vmatpush.msra.mxu0 0.0
  %185 = vmatpush.msra.mxu0 0.0
  %186 = vmatpush.msra.mxu0 %v72
  %187 = vmatpush.msra.mxu0 %v71
  %188 = vmatpush.msra.mxu0 %v70
  %189 = vmatpush.msra.mxu0 %v69
  %190 = vmatmul.f32.gmra.mxu0 %v172
  %v191 = vpop.f32.mrf.mxu0
  %v192 = vadd.f32 %v76, %v191
  %193 = vdwg.mxu0
  %v194 = vadd.f32 %v168, %v192
  %v195 = vxor.u32 %v194, 2147483648
  %v196 = vmul.f32 %v195, 1.442695
  %v197 = vpow.pop %v196
  %v198 = vadd.f32 %v197, 1.0
  %v199 = vrcp.pop %v198
  %v200 = vmul.f32 %v198, %v199
  %v201 = vsub.f32 1.0, %v200
  %v202 = vmul.f32 %v199, %v201
  %v203 = vadd.f32 %v199, %v202
  %vm204 = vweird.f32 %v198
  %vm205 = vweird.f32 %v199
  %vm206 = vmor %vm204, %vm205
  %v207 = vsel %vm206, %v199, %v203
  %v208 = vand.u32 2147483647, %v198
  %vm209 = vcmp.eq.f32.partialorder %v208, 8.507059e+37
  %v210 = vand.u32 %v198, 2147483648
  %v211 = vor.u32 1.1754944e-38, %v210
  %v212 = vsel %vm209, %v211, %v207
  %v213 = vmul.f32 1.0, %v212
  %215 = vrot.lane.b32.xlu0 %v192, 64
  %v216 = vpop.permute.xlu0 %215
  %v218 = vmul.f32 %v213, %v216
  %220 = vrot.lane.b32.xlu0 %v218, 64
  %v221 = vpop.permute.xlu0 %220
  %v223 = vadd.f32 %v168, %v221
  %v224 = vtanh.pop %v223
  %v225 = vsub.f32 1.0, %v213
  %227 = vrot.lane.b32.xlu0 %v224, 96
  %v228 = vpop.permute.xlu0 %227
  %v230 = vmul.f32 %v225, %v228
  %v231 = vmul.f32 %v213, %v154
  %v232 = vadd.f32 %v230, %v231
  %v233 = vld [vmem:[%s1 + $0x2] sm:$0x3]
  %235 = vset.pattern.permute.xlu0 0
  %236 = vperm.xlu0 %235, %v233
  %v237 = vpop.permute.xlu0 %236
  %v239 = vmul.f32 %v237, %v232
  %v240 = vsub.f32 1.0, %v233
  %242 = vset.pattern.permute.xlu0 0
  %243 = vperm.xlu0 %242, %v240
  %v244 = vpop.permute.xlu0 %243
  %v246 = vmul.f32 %v244, %v154
  %v247 = vadd.f32 %v239, %v246
  %v249 = vrot.slane %v239, 1
  %v250 = vperm.slane %v239, 0
  %v251 = vperm.slane %v249, 0
  %252 = vrot.lane.b32.xlu0 %v250, 96
  %v253 = vpop.permute.xlu0 %252
  %254 = vrot.lane.b32.xlu0 %v251, 96
  %v255 = vpop.permute.xlu0 %254
  %258 = vst.msk [vmem:[%s6 + $0x1] sm:$0x1] %vm165, %v253
  %259 = vst.msk [vmem:[%s6 + $0x9] sm:$0x1] %vm165, %v255
  %v260 = vld [vmem:[#allocation2 + $0x4] sm:$0x3]
  %262 = vrot.lane.b32.xlu0 %v247, 96
  %v263 = vpop.permute.xlu0 %262
  %v264 = vsel %vm35, %v263, 0
  %266 = vmatpush.msra.mxu0 0.0
  %267 = vmatpush.msra.mxu0 0.0
  %268 = vmatpush.msra.mxu0 0.0
  %269 = vmatpush.msra.mxu0 0.0
  %270 = vmatpush.msra.mxu0 0.0
  %271 = vmatpush.msra.mxu0 0.0
  %272 = vmatpush.msra.mxu0 0.0
  %273 = vmatpush.msra.mxu0 0.0
  %274 = vmatpush.msra.mxu0 0.0
  %275 = vmatpush.msra.mxu0 0.0
  %276 = vmatpush.msra.mxu0 0.0
  %277 = vmatpush.msra.mxu0 0.0
  %278 = vmatpush.msra.mxu0 %v72
  %279 = vmatpush.msra.mxu0 %v71
  %280 = vmatpush.msra.mxu0 %v70
  %281 = vmatpush.msra.mxu0 %v69
  %282 = vmatmul.f32.gmra.mxu0 %v264
  %v283 = vpop.f32.mrf.mxu0
  %v284 = vadd.f32 %v76, %v283
  %285 = vdwg.mxu0
  %v286 = vadd.f32 %v260, %v284
  %v287 = vxor.u32 %v286, 2147483648
  %v288 = vmul.f32 %v287, 1.442695
  %v289 = vpow.pop %v288
  %v290 = vadd.f32 %v289, 1.0
  %v291 = vrcp.pop %v290
  %v292 = vmul.f32 %v290, %v291
  %v293 = vsub.f32 1.0, %v292
  %v294 = vmul.f32 %v291, %v293
  %v295 = vadd.f32 %v291, %v294
  %vm296 = vweird.f32 %v290
  %vm297 = vweird.f32 %v291
  %vm298 = vmor %vm296, %vm297
  %v299 = vsel %vm298, %v291, %v295
  %v300 = vand.u32 2147483647, %v290
  %vm301 = vcmp.eq.f32.partialorder %v300, 8.507059e+37
  %v302 = vand.u32 %v290, 2147483648
  %v303 = vor.u32 1.1754944e-38, %v302
  %v304 = vsel %vm301, %v303, %v299
  %v305 = vmul.f32 1.0, %v304
  %307 = vrot.lane.b32.xlu0 %v284, 64
  %v308 = vpop.permute.xlu0 %307
  %v310 = vmul.f32 %v305, %v308
  %312 = vrot.lane.b32.xlu0 %v310, 64
  %v313 = vpop.permute.xlu0 %312
  %v315 = vadd.f32 %v260, %v313
  %v316 = vtanh.pop %v315
  %v317 = vsub.f32 1.0, %v305
  %319 = vrot.lane.b32.xlu0 %v316, 96
  %v320 = vpop.permute.xlu0 %319
  %v322 = vmul.f32 %v317, %v320
  %v323 = vmul.f32 %v305, %v247
  %v324 = vadd.f32 %v322, %v323
  %v325 = vld [vmem:[%s1 + $0x4] sm:$0x3]
  %327 = vset.pattern.permute.xlu0 0
  %328 = vperm.xlu0 %327, %v325
  %v329 = vpop.permute.xlu0 %328
  %v331 = vmul.f32 %v329, %v324
  %v332 = vsub.f32 1.0, %v325
  %334 = vset.pattern.permute.xlu0 0
  %335 = vperm.xlu0 %334, %v332
  %v336 = vpop.permute.xlu0 %335
  %v338 = vmul.f32 %v336, %v247
  %v339 = vadd.f32 %v331, %v338
  %v341 = vrot.slane %v331, 1
  %v342 = vperm.slane %v331, 0
  %v343 = vperm.slane %v341, 0
  %344 = vrot.lane.b32.xlu0 %v342, 96
  %v345 = vpop.permute.xlu0 %344
  %346 = vrot.lane.b32.xlu0 %v343, 96
  %v347 = vpop.permute.xlu0 %346
  %350 = vst.msk [vmem:[%s6 + $0x2] sm:$0x1] %vm165, %v345
  %351 = vst.msk [vmem:[%s6 + $0xa] sm:$0x1] %vm165, %v347
  %v352 = vld [vmem:[#allocation2 + $0x6] sm:$0x3]
  %354 = vrot.lane.b32.xlu0 %v339, 96
  %v355 = vpop.permute.xlu0 %354
  %v356 = vsel %vm35, %v355, 0
  %358 = vmatpush.msra.mxu0 0.0
  %359 = vmatpush.msra.mxu0 0.0
  %360 = vmatpush.msra.mxu0 0.0
  %361 = vmatpush.msra.mxu0 0.0
  %362 = vmatpush.msra.mxu0 0.0
  %363 = vmatpush.msra.mxu0 0.0
  %364 = vmatpush.msra.mxu0 0.0
  %365 = vmatpush.msra.mxu0 0.0
  %366 = vmatpush.msra.mxu0 0.0
  %367 = vmatpush.msra.mxu0 0.0
  %368 = vmatpush.msra.mxu0 0.0
  %369 = vmatpush.msra.mxu0 0.0
  %370 = vmatpush.msra.mxu0 %v72
  %371 = vmatpush.msra.mxu0 %v71
  %372 = vmatpush.msra.mxu0 %v70
  %373 = vmatpush.msra.mxu0 %v69
  %374 = vmatmul.f32.gmra.mxu0 %v356
  %v375 = vpop.f32.mrf.mxu0
  %v376 = vadd.f32 %v76, %v375
  %377 = vdwg.mxu0
  %v378 = vadd.f32 %v352, %v376
  %v379 = vxor.u32 %v378, 2147483648
  %v380 = vmul.f32 %v379, 1.442695
  %v381 = vpow.pop %v380
  %v382 = vadd.f32 %v381, 1.0
  %v383 = vrcp.pop %v382
  %v384 = vmul.f32 %v382, %v383
  %v385 = vsub.f32 1.0, %v384
  %v386 = vmul.f32 %v383, %v385
  %v387 = vadd.f32 %v383, %v386
  %vm388 = vweird.f32 %v382
  %vm389 = vweird.f32 %v383
  %vm390 = vmor %vm388, %vm389
  %v391 = vsel %vm390, %v383, %v387
  %v392 = vand.u32 2147483647, %v382
  %vm393 = vcmp.eq.f32.partialorder %v392, 8.507059e+37
  %v394 = vand.u32 %v382, 2147483648
  %v395 = vor.u32 1.1754944e-38, %v394
  %v396 = vsel %vm393, %v395, %v391
  %v397 = vmul.f32 1.0, %v396
  %399 = vrot.lane.b32.xlu0 %v376, 64
  %v400 = vpop.permute.xlu0 %399
  %v402 = vmul.f32 %v397, %v400
  %404 = vrot.lane.b32.xlu0 %v402, 64
  %v405 = vpop.permute.xlu0 %404
  %v407 = vadd.f32 %v352, %v405
  %v408 = vtanh.pop %v407
  %v409 = vsub.f32 1.0, %v397
  %411 = vrot.lane.b32.xlu0 %v408, 96
  %v412 = vpop.permute.xlu0 %411
  %v414 = vmul.f32 %v409, %v412
  %v415 = vmul.f32 %v397, %v339
  %v416 = vadd.f32 %v414, %v415
  %v417 = vld [vmem:[%s1 + $0x6] sm:$0x3]
  %419 = vset.pattern.permute.xlu0 0
  %420 = vperm.xlu0 %419, %v417
  %v421 = vpop.permute.xlu0 %420
  %v423 = vmul.f32 %v421, %v416
  %v424 = vsub.f32 1.0, %v417
  %426 = vset.pattern.permute.xlu0 0
  %427 = vperm.xlu0 %426, %v424
  %v428 = vpop.permute.xlu0 %427
  %v430 = vmul.f32 %v428, %v339
  %v431 = vadd.f32 %v423, %v430
  %v433 = vrot.slane %v423, 1
  %v434 = vperm.slane %v423, 0
  %v435 = vperm.slane %v433, 0
  %436 = vrot.lane.b32.xlu0 %v434, 96
  %v437 = vpop.permute.xlu0 %436
  %438 = vrot.lane.b32.xlu0 %v435, 96
  %v439 = vpop.permute.xlu0 %438
  %442 = vst.msk [vmem:[%s6 + $0x3] sm:$0x1] %vm165, %v437
  %443 = vst.msk [vmem:[%s6 + $0xb] sm:$0x1] %vm165, %v439
  %v444 = vld [vmem:[#allocation2 + $0x8] sm:$0x3]
  %446 = vrot.lane.b32.xlu0 %v431, 96
  %v447 = vpop.permute.xlu0 %446
  %v448 = vsel %vm35, %v447, 0
  %450 = vmatpush.msra.mxu0 0.0
  %451 = vmatpush.msra.mxu0 0.0
  %452 = vmatpush.msra.mxu0 0.0
  %453 = vmatpush.msra.mxu0 0.0
  %454 = vmatpush.msra.mxu0 0.0
  %455 = vmatpush.msra.mxu0 0.0
  %456 = vmatpush.msra.mxu0 0.0
  %457 = vmatpush.msra.mxu0 0.0
  %458 = vmatpush.msra.mxu0 0.0
  %459 = vmatpush.msra.mxu0 0.0
  %460 = vmatpush.msra.mxu0 0.0
  %461 = vmatpush.msra.mxu0 0.0
  %462 = vmatpush.msra.mxu0 %v72
  %463 = vmatpush.msra.mxu0 %v71
  %464 = vmatpush.msra.mxu0 %v70
  %465 = vmatpush.msra.mxu0 %v69
  %466 = vmatmul.f32.gmra.mxu0 %v448
  %v467 = vpop.f32.mrf.mxu0
  %v468 = vadd.f32 %v76, %v467
  %469 = vdwg.mxu0
  %v470 = vadd.f32 %v444, %v468
  %v471 = vxor.u32 %v470, 2147483648
  %v472 = vmul.f32 %v471, 1.442695
  %v473 = vpow.pop %v472
  %v474 = vadd.f32 %v473, 1.0
  %v475 = vrcp.pop %v474
  %v476 = vmul.f32 %v474, %v475
  %v477 = vsub.f32 1.0, %v476
  %v478 = vmul.f32 %v475, %v477
  %v479 = vadd.f32 %v475, %v478
  %vm480 = vweird.f32 %v474
  %vm481 = vweird.f32 %v475
  %vm482 = vmor %vm480, %vm481
  %v483 = vsel %vm482, %v475, %v479
  %v484 = vand.u32 2147483647, %v474
  %vm485 = vcmp.eq.f32.partialorder %v484, 8.507059e+37
  %v486 = vand.u32 %v474, 2147483648
  %v487 = vor.u32 1.1754944e-38, %v486
  %v488 = vsel %vm485, %v487, %v483
  %v489 = vmul.f32 1.0, %v488
  %491 = vrot.lane.b32.xlu0 %v468, 64
  %v492 = vpop.permute.xlu0 %491
  %v494 = vmul.f32 %v489, %v492
  %496 = vrot.lane.b32.xlu0 %v494, 64
  %v497 = vpop.permute.xlu0 %496
  %v499 = vadd.f32 %v444, %v497
  %v500 = vtanh.pop %v499
  %v501 = vsub.f32 1.0, %v489
  %503 = vrot.lane.b32.xlu0 %v500, 96
  %v504 = vpop.permute.xlu0 %503
  %v506 = vmul.f32 %v501, %v504
  %v507 = vmul.f32 %v489, %v431
  %v508 = vadd.f32 %v506, %v507
  %v509 = vld [vmem:[%s1 + $0x8] sm:$0x3]
  %511 = vset.pattern.permute.xlu0 0
  %512 = vperm.xlu0 %511, %v509
  %v513 = vpop.permute.xlu0 %512
  %v515 = vmul.f32 %v513, %v508
  %v516 = vsub.f32 1.0, %v509
  %518 = vset.pattern.permute.xlu0 0
  %519 = vperm.xlu0 %518, %v516
  %v520 = vpop.permute.xlu0 %519
  %v522 = vmul.f32 %v520, %v431
  %v523 = vadd.f32 %v515, %v522
  %v525 = vrot.slane %v515, 1
  %v526 = vperm.slane %v515, 0
  %v527 = vperm.slane %v525, 0
  %528 = vrot.lane.b32.xlu0 %v526, 96
  %v529 = vpop.permute.xlu0 %528
  %530 = vrot.lane.b32.xlu0 %v527, 96
  %v531 = vpop.permute.xlu0 %530
  %534 = vst.msk [vmem:[%s6 + $0x4] sm:$0x1] %vm165, %v529
  %535 = vst.msk [vmem:[%s6 + $0xc] sm:$0x1] %vm165, %v531
  %v536 = vld [vmem:[#allocation2 + $0xa] sm:$0x3]
  %538 = vrot.lane.b32.xlu0 %v523, 96
  %v539 = vpop.permute.xlu0 %538
  %v540 = vsel %vm35, %v539, 0
  %542 = vmatpush.msra.mxu0 0.0
  %543 = vmatpush.msra.mxu0 0.0
  %544 = vmatpush.msra.mxu0 0.0
  %545 = vmatpush.msra.mxu0 0.0
  %546 = vmatpush.msra.mxu0 0.0
  %547 = vmatpush.msra.mxu0 0.0
  %548 = vmatpush.msra.mxu0 0.0
  %549 = vmatpush.msra.mxu0 0.0
  %550 = vmatpush.msra.mxu0 0.0
  %551 = vmatpush.msra.mxu0 0.0
  %552 = vmatpush.msra.mxu0 0.0
  %553 = vmatpush.msra.mxu0 0.0
  %554 = vmatpush.msra.mxu0 %v72
  %555 = vmatpush.msra.mxu0 %v71
  %556 = vmatpush.msra.mxu0 %v70
  %557 = vmatpush.msra.mxu0 %v69
  %558 = vmatmul.f32.gmra.mxu0 %v540
  %v559 = vpop.f32.mrf.mxu0
  %v560 = vadd.f32 %v76, %v559
  %561 = vdwg.mxu0
  %v562 = vadd.f32 %v536, %v560
  %v563 = vxor.u32 %v562, 2147483648
  %v564 = vmul.f32 %v563, 1.442695
  %v565 = vpow.pop %v564
  %v566 = vadd.f32 %v565, 1.0
  %v567 = vrcp.pop %v566
  %v568 = vmul.f32 %v566, %v567
  %v569 = vsub.f32 1.0, %v568
  %v570 = vmul.f32 %v567, %v569
  %v571 = vadd.f32 %v567, %v570
  %vm572 = vweird.f32 %v566
  %vm573 = vweird.f32 %v567
  %vm574 = vmor %vm572, %vm573
  %v575 = vsel %vm574, %v567, %v571
  %v576 = vand.u32 2147483647, %v566
  %vm577 = vcmp.eq.f32.partialorder %v576, 8.507059e+37
  %v578 = vand.u32 %v566, 2147483648
  %v579 = vor.u32 1.1754944e-38, %v578
  %v580 = vsel %vm577, %v579, %v575
  %v581 = vmul.f32 1.0, %v580
  %583 = vrot.lane.b32.xlu0 %v560, 64
  %v584 = vpop.permute.xlu0 %583
  %v586 = vmul.f32 %v581, %v584
  %588 = vrot.lane.b32.xlu0 %v586, 64
  %v589 = vpop.permute.xlu0 %588
  %v591 = vadd.f32 %v536, %v589
  %v592 = vtanh.pop %v591
  %v593 = vsub.f32 1.0, %v581
  %595 = vrot.lane.b32.xlu0 %v592, 96
  %v596 = vpop.permute.xlu0 %595
  %v598 = vmul.f32 %v593, %v596
  %v599 = vmul.f32 %v581, %v523
  %v600 = vadd.f32 %v598, %v599
  %v601 = vld [vmem:[%s1 + $0xa] sm:$0x3]
  %603 = vset.pattern.permute.xlu0 0
  %604 = vperm.xlu0 %603, %v601
  %v605 = vpop.permute.xlu0 %604
  %v607 = vmul.f32 %v605, %v600
  %v608 = vsub.f32 1.0, %v601
  %610 = vset.pattern.permute.xlu0 0
  %611 = vperm.xlu0 %610, %v608
  %v612 = vpop.permute.xlu0 %611
  %v614 = vmul.f32 %v612, %v523
  %v615 = vadd.f32 %v607, %v614
  %v617 = vrot.slane %v607, 1
  %v618 = vperm.slane %v607, 0
  %v619 = vperm.slane %v617, 0
  %620 = vrot.lane.b32.xlu0 %v618, 96
  %v621 = vpop.permute.xlu0 %620
  %622 = vrot.lane.b32.xlu0 %v619, 96
  %v623 = vpop.permute.xlu0 %622
  %626 = vst.msk [vmem:[%s6 + $0x5] sm:$0x1] %vm165, %v621
  %627 = vst.msk [vmem:[%s6 + $0xd] sm:$0x1] %vm165, %v623
  %629 = vrot.lane.b32.xlu0 %v615, 96
  %v630 = vpop.permute.xlu0 %629
  %vm632 = vcmask 254976
  %633 = vst.msk [vmem:[%s7] sm:$0x3] %vm632, %v630
  // Predicated region
  $region26: #{run.5} parent=0 // pred_check
    _
  $region27: #{run.5} parent=0 // pred_check_branch
    %635 = sbr.rel (0) target = $region29
  $region28: #{run.5} parent=0 // pred_region
    _
  $region29: #{run.5} parent=0 // pred_fallthru
    _
  // Predicated region
  $region30: #{run.5} parent=0 // pred_check
    _
  $region31: #{run.5} parent=0 // pred_check_branch
    %637 = sbr.rel (0) target = $region33
  $region32: #{run.5} parent=0 // pred_region
    _
  $region33: #{run.5} parent=0 // pred_fallthru
    _
  // Predicated region
  $region34: #{run.5} parent=0 // pred_check
    _
  $region35: #{run.5} parent=0 // pred_check_branch
    %639 = sbr.rel (0) target = $region37
  $region36: #{run.5} parent=0 // pred_region
    _
  $region37: #{run.5} parent=0 // pred_fallthru
    _
  // Predicated region
  $region38: #{run.5} parent=0 // pred_check
    _
  $region39: #{run.5} parent=0 // pred_check_branch
    %641 = sbr.rel (0) target = $region41
  $region40: #{run.5} parent=0 // pred_region
    _
  $region41: #{run.5} parent=0 // pred_fallthru
    _

// kernel: run.4
$region0: #{run.4}
  #allocation0 [shape = 'u32[]', space=smem, size = 0x4, offset = 0x4, fixed_abs, tag = 'smem constant byte address 0x4 - core index']
  #allocation1 [shape = 'u32[72,128]{1,0:T(1,128)}', space=vmem, size = 0x9000, scoped, tag = 'internal scratch']
  #allocation2 [shape = 'f32[16,96]{1,0:T(8,128)}', space=vmem, size = 0x2000, scoped, tag = 'scratch operand']
  #allocation3 [shape = 'f32[16,96]{1,0:T(8,128)}', space=vmem, size = 0x2000, scoped, tag = 'scratch operand']
  %s0 = inlined_call_operand.vmem [shape: f32[16,32], index: 0, kind: input, shape index: {}]
  %s1 = inlined_call_operand.vmem [shape: f32[16,1], index: 1, kind: input, shape index: {}]
  %s2 = inlined_call_operand.vmem [shape: f32[32,96], index: 2, kind: input, shape index: {}]
  %s3 = inlined_call_operand.vmem [shape: f32[32,96], index: 3, kind: input, shape index: {}]
  %s4 = inlined_call_operand.vmem [shape: f32[1,96], index: 4, kind: input, shape index: {}]
  %s5 = inlined_call_operand.vmem [shape: f32[1,96], index: 5, kind: input, shape index: {}]
  %s6 = inlined_call_operand.vmem [shape: f32[32,96], index: 6, kind: input, shape index: {}]
  %s7 = inlined_call_operand.vmem [shape: f32[32,96], index: 7, kind: input, shape index: {}]
  %s8 = inlined_call_operand.vmem [shape: f32[1,96], index: 8, kind: input, shape index: {}]
  %s9 = inlined_call_operand.vmem [shape: f32[1,96], index: 9, kind: input, shape index: {}]
  %s10 = inlined_call_operand.vmem [shape: f32[2,8,32], index: 10, kind: output, shape index: {0}]
  %s11 = inlined_call_operand.vmem [shape: f32[2,32], index: 11, kind: output, shape index: {1}]
  %12 = xla_tuple %s10, %s11
  %s13 = sld [smem:[#allocation0]]
  $region58: #{run.4} parent=0
    _
  %s15 = ssub.s32 1, %s13
  %s16 = scalar_select 0, %s15, %s13
  // Predicated region
  $region2: #{run.4} parent=0 // pred_check
    _
  $region3: #{run.4} parent=0 // pred_check_branch
    %18 = sbr.rel (0) target = $region5
  $region4: #{run.4} parent=0 // pred_region
    _
  $region5: #{run.4} parent=0 // pred_fallthru
    _
  // Predicated region
  $region6: #{run.4} parent=0 // pred_check
    _
  $region7: #{run.4} parent=0 // pred_check_branch
    %20 = sbr.rel (0) target = $region9
  $region8: #{run.4} parent=0 // pred_region
    _
  $region9: #{run.4} parent=0 // pred_fallthru
    _
  // Predicated region
  $region10: #{run.4} parent=0 // pred_check
    _
  $region11: #{run.4} parent=0 // pred_check_branch
    %22 = sbr.rel (0) target = $region13
  $region12: #{run.4} parent=0 // pred_region
    _
  $region13: #{run.4} parent=0 // pred_fallthru
    _
  // Predicated region
  $region14: #{run.4} parent=0 // pred_check
    _
  $region15: #{run.4} parent=0 // pred_check_branch
    %24 = sbr.rel (0) target = $region17
  $region16: #{run.4} parent=0 // pred_region
    _
  $region17: #{run.4} parent=0 // pred_fallthru
    _
  // Predicated region
  $region18: #{run.4} parent=0 // pred_check
    _
  $region19: #{run.4} parent=0 // pred_check_branch
    %26 = sbr.rel (0) target = $region21
  $region20: #{run.4} parent=0 // pred_region
    _
  $region21: #{run.4} parent=0 // pred_fallthru
    _
  // Predicated region
  $region22: #{run.4} parent=0 // pred_check
    _
  $region23: #{run.4} parent=0 // pred_check_branch
    %28 = sbr.rel (0) target = $region25
  $region24: #{run.4} parent=0 // pred_region
    _
  $region25: #{run.4} parent=0 // pred_fallthru
    _
  // Predicated region
  $region26: #{run.4} parent=0 // pred_check
    _
  $region27: #{run.4} parent=0 // pred_check_branch
    %30 = sbr.rel (0) target = $region29
  $region28: #{run.4} parent=0 // pred_region
    _
  $region29: #{run.4} parent=0 // pred_fallthru
    _
  // Predicated region
  $region30: #{run.4} parent=0 // pred_check
    _
  $region31: #{run.4} parent=0 // pred_check_branch
    %32 = sbr.rel (0) target = $region33
  $region32: #{run.4} parent=0 // pred_region
    _
  $region33: #{run.4} parent=0 // pred_fallthru
    _
  // Predicated region
  $region34: #{run.4} parent=0 // pred_check
    _
  $region35: #{run.4} parent=0 // pred_check_branch
    %34 = sbr.rel (0) target = $region37
  $region36: #{run.4} parent=0 // pred_region
    _
  $region37: #{run.4} parent=0 // pred_fallthru
    _
  // Predicated region
  $region38: #{run.4} parent=0 // pred_check
    _
  $region39: #{run.4} parent=0 // pred_check_branch
    %36 = sbr.rel (0) target = $region41
  $region40: #{run.4} parent=0 // pred_region
    _
  $region41: #{run.4} parent=0 // pred_fallthru
    _
  %v37 = vld [vmem:[%s0] sm:$0xff]
  %v38 = vld [vmem:[%s0 + $0x8] sm:$0xff]
  %v39 = vld [vmem:[%s2] sm:$0xff]
  %v40 = vld [vmem:[%s2 + $0x8] sm:$0xff]
  %v41 = vld [vmem:[%s2 + $0x10] sm:$0xff]
  %v42 = vld [vmem:[%s2 + $0x18] sm:$0xff]
  %v43 = vld [vmem:[%s4] sm:$0x1]
  %v45 = vperm.slane %v43, 0
  %vm47 = vcmask 261120
  %v49 = vsel %vm47, %v37, 0
  %v52 = vsel %vm47, %v38, 0
  %54 = vmatpush.msra.mxu0 0.0
  %55 = vmatpush.msra.mxu0 0.0
  %56 = vmatpush.msra.mxu0 0.0
  %57 = vmatpush.msra.mxu0 0.0
  %58 = vmatpush.msra.mxu0 0.0
  %59 = vmatpush.msra.mxu0 0.0
  %60 = vmatpush.msra.mxu0 0.0
  %61 = vmatpush.msra.mxu0 0.0
  %62 = vmatpush.msra.mxu0 0.0
  %63 = vmatpush.msra.mxu0 0.0
  %64 = vmatpush.msra.mxu0 0.0
  %65 = vmatpush.msra.mxu0 0.0
  %66 = vmatpush.msra.mxu0 %v42
  %67 = vmatpush.msra.mxu0 %v41
  %68 = vmatpush.msra.mxu0 %v40
  %69 = vmatpush.msra.mxu0 %v39
  %70 = vmatmul.f32.gmra.mxu0 %v49
  %v71 = vpop.f32.mrf.mxu0
  %v72 = vadd.f32 %v45, %v71
  %73 = vmatmul.f32.gmra.mxu0 %v52
  %v74 = vpop.f32.mrf.mxu0
  %v75 = vadd.f32 %v45, %v74
  %76 = vdwg.mxu0
  %vm77 = vcmask 785408
  %78 = vst.msk [vmem:[#allocation2] sm:$0xff] %vm77, %v72
  %79 = vst.msk [vmem:[#allocation2 + $0x8] sm:$0xff] %vm77, %v75
  %v80 = vld [vmem:[%s6] sm:$0xff]
  %v81 = vld [vmem:[%s6 + $0x8] sm:$0xff]
  %v82 = vld [vmem:[%s6 + $0x10] sm:$0xff]
  %v83 = vld [vmem:[%s6 + $0x18] sm:$0xff]
  %v84 = vld [vmem:[%s8] sm:$0x1]
  %v86 = vperm.slane %v84, 0
  %88 = vmatpush.msra.mxu0 0.0
  %89 = vmatpush.msra.mxu0 0.0
  %90 = vmatpush.msra.mxu0 0.0
  %91 = vmatpush.msra.mxu0 0.0
  %92 = vmatpush.msra.mxu0 0.0
  %93 = vmatpush.msra.mxu0 0.0
  %94 = vmatpush.msra.mxu0 0.0
  %95 = vmatpush.msra.mxu0 0.0
  %96 = vmatpush.msra.mxu0 0.0
  %97 = vmatpush.msra.mxu0 0.0
  %98 = vmatpush.msra.mxu0 0.0
  %99 = vmatpush.msra.mxu0 0.0
  %100 = vmatpush.msra.mxu0 %v83
  %101 = vmatpush.msra.mxu0 %v82
  %102 = vmatpush.msra.mxu0 %v81
  %103 = vmatpush.msra.mxu0 %v80
  %104 = vmatmul.f32.gmra.mxu0 %v49
  %v105 = vpop.f32.mrf.mxu0
  %v106 = vadd.f32 %v86, %v105
  %107 = vmatmul.f32.gmra.mxu0 %v52
  %v108 = vpop.f32.mrf.mxu0
  %v109 = vadd.f32 %v86, %v108
  %110 = vdwg.mxu0
  %111 = vst.msk [vmem:[#allocation3] sm:$0xff] %vm77, %v106
  %112 = vst.msk [vmem:[#allocation3 + $0x8] sm:$0xff] %vm77, %v109
  %v113 = vld [vmem:[%s3] sm:$0xff]
  %v114 = vld [vmem:[%s3 + $0x8] sm:$0xff]
  %v115 = vld [vmem:[%s3 + $0x10] sm:$0xff]
  %v116 = vld [vmem:[%s3 + $0x18] sm:$0xff]
  %v117 = vld [vmem:[%s5] sm:$0x1]
  %v118 = vld [vmem:[%s7] sm:$0xff]
  %v119 = vld [vmem:[%s7 + $0x8] sm:$0xff]
  %v120 = vld [vmem:[%s7 + $0x10] sm:$0xff]
  %v121 = vld [vmem:[%s7 + $0x18] sm:$0xff]
  %v122 = vld [vmem:[%s9] sm:$0x1]
  %v123 = vld [vmem:[#allocation2] sm:$0x3]
  %v125 = vperm.slane %v117, 0
  %v128 = vsel %vm47, 0.0, 0
  %130 = vmatpush.msra.mxu0 0.0
  %131 = vmatpush.msra.mxu0 0.0
  %132 = vmatpush.msra.mxu0 0.0
  %133 = vmatpush.msra.mxu0 0.0
  %134 = vmatpush.msra.mxu0 0.0
  %135 = vmatpush.msra.mxu0 0.0
  %136 = vmatpush.msra.mxu0 0.0
  %137 = vmatpush.msra.mxu0 0.0
  %138 = vmatpush.msra.mxu0 0.0
  %139 = vmatpush.msra.mxu0 0.0
  %140 = vmatpush.msra.mxu0 0.0
  %141 = vmatpush.msra.mxu0 0.0
  %142 = vmatpush.msra.mxu0 %v116
  %143 = vmatpush.msra.mxu0 %v115
  %144 = vmatpush.msra.mxu0 %v114
  %145 = vmatpush.msra.mxu0 %v113
  %146 = vmatmul.f32.gmra.mxu0 %v128
  %v147 = vpop.f32.mrf.mxu0
  %v148 = vadd.f32 %v125, %v147
  %149 = vdwg.mxu0
  %v150 = vadd.f32 %v123, %v148
  %v151 = vxor.u32 %v150, 2147483648
  %v152 = vmul.f32 %v151, 1.442695
  %v153 = vpow.pop %v152
  %v154 = vadd.f32 %v153, 1.0
  %v155 = vrcp.pop %v154
  %v156 = vmul.f32 %v154, %v155
  %v157 = vsub.f32 1.0, %v156
  %v158 = vmul.f32 %v155, %v157
  %v159 = vadd.f32 %v155, %v158
  %vm160 = vweird.f32 %v154
  %vm161 = vweird.f32 %v155
  %vm162 = vmor %vm160, %vm161
  %v163 = vsel %vm162, %v155, %v159
  %v164 = vand.u32 2147483647, %v154
  %vm165 = vcmp.eq.f32.partialorder %v164, 8.507059e+37
  %v166 = vand.u32 %v154, 2147483648
  %v167 = vor.u32 1.1754944e-38, %v166
  %v168 = vsel %vm165, %v167, %v163
  %v169 = vmul.f32 1.0, %v168
  %171 = vrot.lane.b32.xlu0 %v148, 64
  %v172 = vpop.permute.xlu0 %171
  %v174 = vmul.f32 %v169, %v172
  %176 = vrot.lane.b32.xlu0 %v174, 64
  %v177 = vpop.permute.xlu0 %176
  %v179 = vadd.f32 %v123, %v177
  %v180 = vtanh.pop %v179
  %v181 = vsub.f32 1.0, %v169
  %183 = vrot.lane.b32.xlu0 %v180, 96
  %v184 = vpop.permute.xlu0 %183
  %v186 = vmul.f32 %v181, %v184
  %v187 = vmul.f32 %v169, 0.0
  %v188 = vadd.f32 %v186, %v187
  %v189 = vld [vmem:[%s1] sm:$0x3]
  %191 = vset.pattern.permute.xlu0 0
  %192 = vperm.xlu0 %191, %v189
  %v193 = vpop.permute.xlu0 %192
  %v195 = vmul.f32 %v193, %v188
  %v196 = vsub.f32 1.0, %v189
  %198 = vset.pattern.permute.xlu0 0
  %199 = vperm.xlu0 %198, %v196
  %v200 = vpop.permute.xlu0 %199
  %v202 = vmul.f32 %v200, 0.0
  %v203 = vadd.f32 %v195, %v202
  %v205 = vrot.slane %v195, 1
  %v206 = vperm.slane %v195, 0
  %v207 = vperm.slane %v205, 0
  %208 = vrot.lane.b32.xlu0 %v206, 96
  %v209 = vpop.permute.xlu0 %208
  %210 = vrot.lane.b32.xlu0 %v207, 96
  %v211 = vpop.permute.xlu0 %210
  %vm214 = vcmask 253952
  %215 = vst.msk [vmem:[%s10] sm:$0x1] %vm214, %v209
  %216 = vst.msk [vmem:[%s10 + $0x8] sm:$0x1] %vm214, %v211
  %v217 = vld [vmem:[#allocation2 + $0x2] sm:$0x3]
  %219 = vrot.lane.b32.xlu0 %v203, 96
  %v220 = vpop.permute.xlu0 %219
  %v221 = vsel %vm47, %v220, 0
  %223 = vmatpush.msra.mxu0 0.0
  %224 = vmatpush.msra.mxu0 0.0
  %225 = vmatpush.msra.mxu0 0.0
  %226 = vmatpush.msra.mxu0 0.0
  %227 = vmatpush.msra.mxu0 0.0
  %228 = vmatpush.msra.mxu0 0.0
  %229 = vmatpush.msra.mxu0 0.0
  %230 = vmatpush.msra.mxu0 0.0
  %231 = vmatpush.msra.mxu0 0.0
  %232 = vmatpush.msra.mxu0 0.0
  %233 = vmatpush.msra.mxu0 0.0
  %234 = vmatpush.msra.mxu0 0.0
  %235 = vmatpush.msra.mxu0 %v116
  %236 = vmatpush.msra.mxu0 %v115
  %237 = vmatpush.msra.mxu0 %v114
  %238 = vmatpush.msra.mxu0 %v113
  %239 = vmatmul.f32.gmra.mxu0 %v221
  %v240 = vpop.f32.mrf.mxu0
  %v241 = vadd.f32 %v125, %v240
  %242 = vdwg.mxu0
  %v243 = vadd.f32 %v217, %v241
  %v244 = vxor.u32 %v243, 2147483648
  %v245 = vmul.f32 %v244, 1.442695
  %v246 = vpow.pop %v245
  %v247 = vadd.f32 %v246, 1.0
  %v248 = vrcp.pop %v247
  %v249 = vmul.f32 %v247, %v248
  %v250 = vsub.f32 1.0, %v249
  %v251 = vmul.f32 %v248, %v250
  %v252 = vadd.f32 %v248, %v251
  %vm253 = vweird.f32 %v247
  %vm254 = vweird.f32 %v248
  %vm255 = vmor %vm253, %vm254
  %v256 = vsel %vm255, %v248, %v252
  %v257 = vand.u32 2147483647, %v247
  %vm258 = vcmp.eq.f32.partialorder %v257, 8.507059e+37
  %v259 = vand.u32 %v247, 2147483648
  %v260 = vor.u32 1.1754944e-38, %v259
  %v261 = vsel %vm258, %v260, %v256
  %v262 = vmul.f32 1.0, %v261
  %264 = vrot.lane.b32.xlu0 %v241, 64
  %v265 = vpop.permute.xlu0 %264
  %v267 = vmul.f32 %v262, %v265
  %269 = vrot.lane.b32.xlu0 %v267, 64
  %v270 = vpop.permute.xlu0 %269
  %v272 = vadd.f32 %v217, %v270
  %v273 = vtanh.pop %v272
  %v274 = vsub.f32 1.0, %v262
  %276 = vrot.lane.b32.xlu0 %v273, 96
  %v277 = vpop.permute.xlu0 %276
  %v279 = vmul.f32 %v274, %v277
  %v280 = vmul.f32 %v262, %v203
  %v281 = vadd.f32 %v279, %v280
  %v282 = vld [vmem:[%s1 + $0x2] sm:$0x3]
  %284 = vset.pattern.permute.xlu0 0
  %285 = vperm.xlu0 %284, %v282
  %v286 = vpop.permute.xlu0 %285
  %v288 = vmul.f32 %v286, %v281
  %v289 = vsub.f32 1.0, %v282
  %291 = vset.pattern.permute.xlu0 0
  %292 = vperm.xlu0 %291, %v289
  %v293 = vpop.permute.xlu0 %292
  %v295 = vmul.f32 %v293, %v203
  %v296 = vadd.f32 %v288, %v295
  %v298 = vrot.slane %v288, 1
  %v299 = vperm.slane %v288, 0
  %v300 = vperm.slane %v298, 0
  %301 = vrot.lane.b32.xlu0 %v299, 96
  %v302 = vpop.permute.xlu0 %301
  %303 = vrot.lane.b32.xlu0 %v300, 96
  %v304 = vpop.permute.xlu0 %303
  %307 = vst.msk [vmem:[%s10 + $0x1] sm:$0x1] %vm214, %v302
  %308 = vst.msk [vmem:[%s10 + $0x9] sm:$0x1] %vm214, %v304
  %v309 = vld [vmem:[#allocation2 + $0x4] sm:$0x3]
  %311 = vrot.lane.b32.xlu0 %v296, 96
  %v312 = vpop.permute.xlu0 %311
  %v313 = vsel %vm47, %v312, 0
  %315 = vmatpush.msra.mxu0 0.0
  %316 = vmatpush.msra.mxu0 0.0
  %317 = vmatpush.msra.mxu0 0.0
  %318 = vmatpush.msra.mxu0 0.0
  %319 = vmatpush.msra.mxu0 0.0
  %320 = vmatpush.msra.mxu0 0.0
  %321 = vmatpush.msra.mxu0 0.0
  %322 = vmatpush.msra.mxu0 0.0
  %323 = vmatpush.msra.mxu0 0.0
  %324 = vmatpush.msra.mxu0 0.0
  %325 = vmatpush.msra.mxu0 0.0
  %326 = vmatpush.msra.mxu0 0.0
  %327 = vmatpush.msra.mxu0 %v116
  %328 = vmatpush.msra.mxu0 %v115
  %329 = vmatpush.msra.mxu0 %v114
  %330 = vmatpush.msra.mxu0 %v113
  %331 = vmatmul.f32.gmra.mxu0 %v313
  %v332 = vpop.f32.mrf.mxu0
  %v333 = vadd.f32 %v125, %v332
  %334 = vdwg.mxu0
  %v335 = vadd.f32 %v309, %v333
  %v336 = vxor.u32 %v335, 2147483648
  %v337 = vmul.f32 %v336, 1.442695
  %v338 = vpow.pop %v337
  %v339 = vadd.f32 %v338, 1.0
  %v340 = vrcp.pop %v339
  %v341 = vmul.f32 %v339, %v340
  %v342 = vsub.f32 1.0, %v341
  %v343 = vmul.f32 %v340, %v342
  %v344 = vadd.f32 %v340, %v343
  %vm345 = vweird.f32 %v339
  %vm346 = vweird.f32 %v340
  %vm347 = vmor %vm345, %vm346
  %v348 = vsel %vm347, %v340, %v344
  %v349 = vand.u32 2147483647, %v339
  %vm350 = vcmp.eq.f32.partialorder %v349, 8.507059e+37
  %v351 = vand.u32 %v339, 2147483648
  %v352 = vor.u32 1.1754944e-38, %v351
  %v353 = vsel %vm350, %v352, %v348
  %v354 = vmul.f32 1.0, %v353
  %356 = vrot.lane.b32.xlu0 %v333, 64
  %v357 = vpop.permute.xlu0 %356
  %v359 = vmul.f32 %v354, %v357
  %361 = vrot.lane.b32.xlu0 %v359, 64
  %v362 = vpop.permute.xlu0 %361
  %v364 = vadd.f32 %v309, %v362
  %v365 = vtanh.pop %v364
  %v366 = vsub.f32 1.0, %v354
  %368 = vrot.lane.b32.xlu0 %v365, 96
  %v369 = vpop.permute.xlu0 %368
  %v371 = vmul.f32 %v366, %v369
  %v372 = vmul.f32 %v354, %v296
  %v373 = vadd.f32 %v371, %v372
  %v374 = vld [vmem:[%s1 + $0x4] sm:$0x3]
  %376 = vset.pattern.permute.xlu0 0
  %377 = vperm.xlu0 %376, %v374
  %v378 = vpop.permute.xlu0 %377
  %v380 = vmul.f32 %v378, %v373
  %v381 = vsub.f32 1.0, %v374
  %383 = vset.pattern.permute.xlu0 0
  %384 = vperm.xlu0 %383, %v381
  %v385 = vpop.permute.xlu0 %384
  %v387 = vmul.f32 %v385, %v296
  %v388 = vadd.f32 %v380, %v387
  %v390 = vrot.slane %v380, 1
  %v391 = vperm.slane %v380, 0
  %v392 = vperm.slane %v390, 0
  %393 = vrot.lane.b32.xlu0 %v391, 96
  %v394 = vpop.permute.xlu0 %393
  %395 = vrot.lane.b32.xlu0 %v392, 96
  %v396 = vpop.permute.xlu0 %395
  %399 = vst.msk [vmem:[%s10 + $0x2] sm:$0x1] %vm214, %v394
  %400 = vst.msk [vmem:[%s10 + $0xa] sm:$0x1] %vm214, %v396
  %v401 = vld [vmem:[#allocation2 + $0x6] sm:$0x3]
  %403 = vrot.lane.b32.xlu0 %v388, 96
  %v404 = vpop.permute.xlu0 %403
  %v405 = vsel %vm47, %v404, 0
  %407 = vmatpush.msra.mxu0 0.0
  %408 = vmatpush.msra.mxu0 0.0
  %409 = vmatpush.msra.mxu0 0.0
  %410 = vmatpush.msra.mxu0 0.0
  %411 = vmatpush.msra.mxu0 0.0
  %412 = vmatpush.msra.mxu0 0.0
  %413 = vmatpush.msra.mxu0 0.0
  %414 = vmatpush.msra.mxu0 0.0
  %415 = vmatpush.msra.mxu0 0.0
  %416 = vmatpush.msra.mxu0 0.0
  %417 = vmatpush.msra.mxu0 0.0
  %418 = vmatpush.msra.mxu0 0.0
  %419 = vmatpush.msra.mxu0 %v116
  %420 = vmatpush.msra.mxu0 %v115
  %421 = vmatpush.msra.mxu0 %v114
  %422 = vmatpush.msra.mxu0 %v113
  %423 = vmatmul.f32.gmra.mxu0 %v405
  %v424 = vpop.f32.mrf.mxu0
  %v425 = vadd.f32 %v125, %v424
  %426 = vdwg.mxu0
  %v427 = vadd.f32 %v401, %v425
  %v428 = vxor.u32 %v427, 2147483648
  %v429 = vmul.f32 %v428, 1.442695
  %v430 = vpow.pop %v429
  %v431 = vadd.f32 %v430, 1.0
  %v432 = vrcp.pop %v431
  %v433 = vmul.f32 %v431, %v432
  %v434 = vsub.f32 1.0, %v433
  %v435 = vmul.f32 %v432, %v434
  %v436 = vadd.f32 %v432, %v435
  %vm437 = vweird.f32 %v431
  %vm438 = vweird.f32 %v432
  %vm439 = vmor %vm437, %vm438
  %v440 = vsel %vm439, %v432, %v436
  %v441 = vand.u32 2147483647, %v431
  %vm442 = vcmp.eq.f32.partialorder %v441, 8.507059e+37
  %v443 = vand.u32 %v431, 2147483648
  %v444 = vor.u32 1.1754944e-38, %v443
  %v445 = vsel %vm442, %v444, %v440
  %v446 = vmul.f32 1.0, %v445
  %448 = vrot.lane.b32.xlu0 %v425, 64
  %v449 = vpop.permute.xlu0 %448
  %v451 = vmul.f32 %v446, %v449
  %453 = vrot.lane.b32.xlu0 %v451, 64
  %v454 = vpop.permute.xlu0 %453
  %v456 = vadd.f32 %v401, %v454
  %v457 = vtanh.pop %v456
  %v458 = vsub.f32 1.0, %v446
  %460 = vrot.lane.b32.xlu0 %v457, 96
  %v461 = vpop.permute.xlu0 %460
  %v463 = vmul.f32 %v458, %v461
  %v464 = vmul.f32 %v446, %v388
  %v465 = vadd.f32 %v463, %v464
  %v466 = vld [vmem:[%s1 + $0x6] sm:$0x3]
  %468 = vset.pattern.permute.xlu0 0
  %469 = vperm.xlu0 %468, %v466
  %v470 = vpop.permute.xlu0 %469
  %v472 = vmul.f32 %v470, %v465
  %v473 = vsub.f32 1.0, %v466
  %475 = vset.pattern.permute.xlu0 0
  %476 = vperm.xlu0 %475, %v473
  %v477 = vpop.permute.xlu0 %476
  %v479 = vmul.f32 %v477, %v388
  %v480 = vadd.f32 %v472, %v479
  %v482 = vrot.slane %v472, 1
  %v483 = vperm.slane %v472, 0
  %v484 = vperm.slane %v482, 0
  %485 = vrot.lane.b32.xlu0 %v483, 96
  %v486 = vpop.permute.xlu0 %485
  %487 = vrot.lane.b32.xlu0 %v484, 96
  %v488 = vpop.permute.xlu0 %487
  %491 = vst.msk [vmem:[%s10 + $0x3] sm:$0x1] %vm214, %v486
  %492 = vst.msk [vmem:[%s10 + $0xb] sm:$0x1] %vm214, %v488
  %v493 = vld [vmem:[#allocation2 + $0x8] sm:$0x3]
  %495 = vrot.lane.b32.xlu0 %v480, 96
  %v496 = vpop.permute.xlu0 %495
  %v497 = vsel %vm47, %v496, 0
  %499 = vmatpush.msra.mxu0 0.0
  %500 = vmatpush.msra.mxu0 0.0
  %501 = vmatpush.msra.mxu0 0.0
  %502 = vmatpush.msra.mxu0 0.0
  %503 = vmatpush.msra.mxu0 0.0
  %504 = vmatpush.msra.mxu0 0.0
  %505 = vmatpush.msra.mxu0 0.0
  %506 = vmatpush.msra.mxu0 0.0
  %507 = vmatpush.msra.mxu0 0.0
  %508 = vmatpush.msra.mxu0 0.0
  %509 = vmatpush.msra.mxu0 0.0
  %510 = vmatpush.msra.mxu0 0.0
  %511 = vmatpush.msra.mxu0 %v116
  %512 = vmatpush.msra.mxu0 %v115
  %513 = vmatpush.msra.mxu0 %v114
  %514 = vmatpush.msra.mxu0 %v113
  %515 = vmatmul.f32.gmra.mxu0 %v497
  %v516 = vpop.f32.mrf.mxu0
  %v517 = vadd.f32 %v125, %v516
  %518 = vdwg.mxu0
  %v519 = vadd.f32 %v493, %v517
  %v520 = vxor.u32 %v519, 2147483648
  %v521 = vmul.f32 %v520, 1.442695
  %v522 = vpow.pop %v521
  %v523 = vadd.f32 %v522, 1.0
  %v524 = vrcp.pop %v523
  %v525 = vmul.f32 %v523, %v524
  %v526 = vsub.f32 1.0, %v525
  %v527 = vmul.f32 %v524, %v526
  %v528 = vadd.f32 %v524, %v527
  %vm529 = vweird.f32 %v523
  %vm530 = vweird.f32 %v524
  %vm531 = vmor %vm529, %vm530
  %v532 = vsel %vm531, %v524, %v528
  %v533 = vand.u32 2147483647, %v523
  %vm534 = vcmp.eq.f32.partialorder %v533, 8.507059e+37
  %v535 = vand.u32 %v523, 2147483648
  %v536 = vor.u32 1.1754944e-38, %v535
  %v537 = vsel %vm534, %v536, %v532
  %v538 = vmul.f32 1.0, %v537
  %540 = vrot.lane.b32.xlu0 %v517, 64
  %v541 = vpop.permute.xlu0 %540
  %v543 = vmul.f32 %v538, %v541
  %545 = vrot.lane.b32.xlu0 %v543, 64
  %v546 = vpop.permute.xlu0 %545
  %v548 = vadd.f32 %v493, %v546
  %v549 = vtanh.pop %v548
  %v550 = vsub.f32 1.0, %v538
  %552 = vrot.lane.b32.xlu0 %v549, 96
  %v553 = vpop.permute.xlu0 %552
  %v555 = vmul.f32 %v550, %v553
  %v556 = vmul.f32 %v538, %v480
  %v557 = vadd.f32 %v555, %v556
  %v558 = vld [vmem:[%s1 + $0x8] sm:$0x3]
  %560 = vset.pattern.permute.xlu0 0
  %561 = vperm.xlu0 %560, %v558
  %v562 = vpop.permute.xlu0 %561
  %v564 = vmul.f32 %v562, %v557
  %v565 = vsub.f32 1.0, %v558
  %567 = vset.pattern.permute.xlu0 0
  %568 = vperm.xlu0 %567, %v565
  %v569 = vpop.permute.xlu0 %568
  %v571 = vmul.f32 %v569, %v480
  %v572 = vadd.f32 %v564, %v571
  %v574 = vrot.slane %v564, 1
  %v575 = vperm.slane %v564, 0
  %v576 = vperm.slane %v574, 0
  %577 = vrot.lane.b32.xlu0 %v575, 96
  %v578 = vpop.permute.xlu0 %577
  %579 = vrot.lane.b32.xlu0 %v576, 96
  %v580 = vpop.permute.xlu0 %579
  %583 = vst.msk [vmem:[%s10 + $0x4] sm:$0x1] %vm214, %v578
  %584 = vst.msk [vmem:[%s10 + $0xc] sm:$0x1] %vm214, %v580
  %v585 = vld [vmem:[#allocation2 + $0xa] sm:$0x3]
  %587 = vrot.lane.b32.xlu0 %v572, 96
  %v588 = vpop.permute.xlu0 %587
  %v589 = vsel %vm47, %v588, 0
  %591 = vmatpush.msra.mxu0 0.0
  %592 = vmatpush.msra.mxu0 0.0
  %593 = vmatpush.msra.mxu0 0.0
  %594 = vmatpush.msra.mxu0 0.0
  %595 = vmatpush.msra.mxu0 0.0
  %596 = vmatpush.msra.mxu0 0.0
  %597 = vmatpush.msra.mxu0 0.0
  %598 = vmatpush.msra.mxu0 0.0
  %599 = vmatpush.msra.mxu0 0.0
  %600 = vmatpush.msra.mxu0 0.0
  %601 = vmatpush.msra.mxu0 0.0
  %602 = vmatpush.msra.mxu0 0.0
  %603 = vmatpush.msra.mxu0 %v116
  %604 = vmatpush.msra.mxu0 %v115
  %605 = vmatpush.msra.mxu0 %v114
  %606 = vmatpush.msra.mxu0 %v113
  %607 = vmatmul.f32.gmra.mxu0 %v589
  %v608 = vpop.f32.mrf.mxu0
  %v609 = vadd.f32 %v125, %v608
  %610 = vdwg.mxu0
  %v611 = vadd.f32 %v585, %v609
  %v612 = vxor.u32 %v611, 2147483648
  %v613 = vmul.f32 %v612, 1.442695
  %v614 = vpow.pop %v613
  %v615 = vadd.f32 %v614, 1.0
  %v616 = vrcp.pop %v615
  %v617 = vmul.f32 %v615, %v616
  %v618 = vsub.f32 1.0, %v617
  %v619 = vmul.f32 %v616, %v618
  %v620 = vadd.f32 %v616, %v619
  %vm621 = vweird.f32 %v615
  %vm622 = vweird.f32 %v616
  %vm623 = vmor %vm621, %vm622
  %v624 = vsel %vm623, %v616, %v620
  %v625 = vand.u32 2147483647, %v615
  %vm626 = vcmp.eq.f32.partialorder %v625, 8.507059e+37
  %v627 = vand.u32 %v615, 2147483648
  %v628 = vor.u32 1.1754944e-38, %v627
  %v629 = vsel %vm626, %v628, %v624
  %v630 = vmul.f32 1.0, %v629
  %632 = vrot.lane.b32.xlu0 %v609, 64
  %v633 = vpop.permute.xlu0 %632
  %v635 = vmul.f32 %v630, %v633
  %637 = vrot.lane.b32.xlu0 %v635, 64
  %v638 = vpop.permute.xlu0 %637
  %v640 = vadd.f32 %v585, %v638
  %v641 = vtanh.pop %v640
  %v642 = vsub.f32 1.0, %v630
  %644 = vrot.lane.b32.xlu0 %v641, 96
  %v645 = vpop.permute.xlu0 %644
  %v647 = vmul.f32 %v642, %v645
  %v648 = vmul.f32 %v630, %v572
  %v649 = vadd.f32 %v647, %v648
  %v650 = vld [vmem:[%s1 + $0xa] sm:$0x3]
  %652 = vset.pattern.permute.xlu0 0
  %653 = vperm.xlu0 %652, %v650
  %v654 = vpop.permute.xlu0 %653
  %v656 = vmul.f32 %v654, %v649
  %v657 = vsub.f32 1.0, %v650
  %659 = vset.pattern.permute.xlu0 0
  %660 = vperm.xlu0 %659, %v657
  %v661 = vpop.permute.xlu0 %660
  %v663 = vmul.f32 %v661, %v572
  %v664 = vadd.f32 %v656, %v663
  %v666 = vrot.slane %v656, 1
  %v667 = vperm.slane %v656, 0
  %v668 = vperm.slane %v666, 0
  %669 = vrot.lane.b32.xlu0 %v667, 96
  %v670 = vpop.permute.xlu0 %669
  %671 = vrot.lane.b32.xlu0 %v668, 96
  %v672 = vpop.permute.xlu0 %671
  %675 = vst.msk [vmem:[%s10 + $0x5] sm:$0x1] %vm214, %v670
  %676 = vst.msk [vmem:[%s10 + $0xd] sm:$0x1] %vm214, %v672
  %v677 = vld [vmem:[#allocation2 + $0xc] sm:$0x3]
  %679 = vrot.lane.b32.xlu0 %v664, 96
  %v680 = vpop.permute.xlu0 %679
  %v681 = vsel %vm47, %v680, 0
  %683 = vmatpush.msra.mxu0 0.0
  %684 = vmatpush.msra.mxu0 0.0
  %685 = vmatpush.msra.mxu0 0.0
  %686 = vmatpush.msra.mxu0 0.0
  %687 = vmatpush.msra.mxu0 0.0
  %688 = vmatpush.msra.mxu0 0.0
  %689 = vmatpush.msra.mxu0 0.0
  %690 = vmatpush.msra.mxu0 0.0
  %691 = vmatpush.msra.mxu0 0.0
  %692 = vmatpush.msra.mxu0 0.0
  %693 = vmatpush.msra.mxu0 0.0
  %694 = vmatpush.msra.mxu0 0.0
  %695 = vmatpush.msra.mxu0 %v116
  %696 = vmatpush.msra.mxu0 %v115
  %697 = vmatpush.msra.mxu0 %v114
  %698 = vmatpush.msra.mxu0 %v113
  %699 = vmatmul.f32.gmra.mxu0 %v681
  %v700 = vpop.f32.mrf.mxu0
  %v701 = vadd.f32 %v125, %v700
  %702 = vdwg.mxu0
  %v703 = vadd.f32 %v677, %v701
  %v704 = vxor.u32 %v703, 2147483648
  %v705 = vmul.f32 %v704, 1.442695
  %v706 = vpow.pop %v705
  %v707 = vadd.f32 %v706, 1.0
  %v708 = vrcp.pop %v707
  %v709 = vmul.f32 %v707, %v708
  %v710 = vsub.f32 1.0, %v709
  %v711 = vmul.f32 %v708, %v710
  %v712 = vadd.f32 %v708, %v711
  %vm713 = vweird.f32 %v707
  %vm714 = vweird.f32 %v708
  %vm715 = vmor %vm713, %vm714
  %v716 = vsel %vm715, %v708, %v712
  %v717 = vand.u32 2147483647, %v707
  %vm718 = vcmp.eq.f32.partialorder %v717, 8.507059e+37
  %v719 = vand.u32 %v707, 2147483648
  %v720 = vor.u32 1.1754944e-38, %v719
  %v721 = vsel %vm718, %v720, %v716
  %v722 = vmul.f32 1.0, %v721
  %724 = vrot.lane.b32.xlu0 %v701, 64
  %v725 = vpop.permute.xlu0 %724
  %v727 = vmul.f32 %v722, %v725
  %729 = vrot.lane.b32.xlu0 %v727, 64
  %v730 = vpop.permute.xlu0 %729
  %v732 = vadd.f32 %v677, %v730
  %v733 = vtanh.pop %v732
  %v734 = vsub.f32 1.0, %v722
  %736 = vrot.lane.b32.xlu0 %v733, 96
  %v737 = vpop.permute.xlu0 %736
  %v739 = vmul.f32 %v734, %v737
  %v740 = vmul.f32 %v722, %v664
  %v741 = vadd.f32 %v739, %v740
  %v742 = vld [vmem:[%s1 + $0xc] sm:$0x3]
  %744 = vset.pattern.permute.xlu0 0
  %745 = vperm.xlu0 %744, %v742
  %v746 = vpop.permute.xlu0 %745
  %v748 = vmul.f32 %v746, %v741
  %v749 = vsub.f32 1.0, %v742
  %751 = vset.pattern.permute.xlu0 0
  %752 = vperm.xlu0 %751, %v749
  %v753 = vpop.permute.xlu0 %752
  %v755 = vmul.f32 %v753, %v664
  %v756 = vadd.f32 %v748, %v755
  %v758 = vrot.slane %v748, 1
  %v759 = vperm.slane %v748, 0
  %v760 = vperm.slane %v758, 0
  %761 = vrot.lane.b32.xlu0 %v759, 96
  %v762 = vpop.permute.xlu0 %761
  %763 = vrot.lane.b32.xlu0 %v760, 96
  %v764 = vpop.permute.xlu0 %763
  %767 = vst.msk [vmem:[%s10 + $0x6] sm:$0x1] %vm214, %v762
  %768 = vst.msk [vmem:[%s10 + $0xe] sm:$0x1] %vm214, %v764
  %v769 = vld [vmem:[#allocation2 + $0xe] sm:$0x3]
  %771 = vrot.lane.b32.xlu0 %v756, 96
  %v772 = vpop.permute.xlu0 %771
  %v773 = vsel %vm47, %v772, 0
  %775 = vmatpush.msra.mxu0 0.0
  %776 = vmatpush.msra.mxu0 0.0
  %777 = vmatpush.msra.mxu0 0.0
  %778 = vmatpush.msra.mxu0 0.0
  %779 = vmatpush.msra.mxu0 0.0
  %780 = vmatpush.msra.mxu0 0.0
  %781 = vmatpush.msra.mxu0 0.0
  %782 = vmatpush.msra.mxu0 0.0
  %783 = vmatpush.msra.mxu0 0.0
  %784 = vmatpush.msra.mxu0 0.0
  %785 = vmatpush.msra.mxu0 0.0
  %786 = vmatpush.msra.mxu0 0.0
  %787 = vmatpush.msra.mxu0 %v116
  %788 = vmatpush.msra.mxu0 %v115
  %789 = vmatpush.msra.mxu0 %v114
  %790 = vmatpush.msra.mxu0 %v113
  %791 = vmatmul.f32.gmra.mxu0 %v773
  %v792 = vpop.f32.mrf.mxu0
  %v793 = vadd.f32 %v125, %v792
  %794 = vdwg.mxu0
  %v795 = vadd.f32 %v769, %v793
  %v796 = vxor.u32 %v795, 2147483648
  %v797 = vmul.f32 %v796, 1.442695
  %v798 = vpow.pop %v797
  %v799 = vadd.f32 %v798, 1.0
  %v800 = vrcp.pop %v799
  %v801 = vmul.f32 %v799, %v800
  %v802 = vsub.f32 1.0, %v801
  %v803 = vmul.f32 %v800, %v802
  %v804 = vadd.f32 %v800, %v803
  %vm805 = vweird.f32 %v799
  %vm806 = vweird.f32 %v800
  %vm807 = vmor %vm805, %vm806
  %v808 = vsel %vm807, %v800, %v804
  %v809 = vand.u32 2147483647, %v799
  %vm810 = vcmp.eq.f32.partialorder %v809, 8.507059e+37
  %v811 = vand.u32 %v799, 2147483648
  %v812 = vor.u32 1.1754944e-38, %v811
  %v813 = vsel %vm810, %v812, %v808
  %v814 = vmul.f32 1.0, %v813
  %816 = vrot.lane.b32.xlu0 %v793, 64
  %v817 = vpop.permute.xlu0 %816
  %v819 = vmul.f32 %v814, %v817
  %821 = vrot.lane.b32.xlu0 %v819, 64
  %v822 = vpop.permute.xlu0 %821
  %v824 = vadd.f32 %v769, %v822
  %v825 = vtanh.pop %v824
  %v826 = vsub.f32 1.0, %v814
  %828 = vrot.lane.b32.xlu0 %v825, 96
  %v829 = vpop.permute.xlu0 %828
  %v831 = vmul.f32 %v826, %v829
  %v832 = vmul.f32 %v814, %v756
  %v833 = vadd.f32 %v831, %v832
  %v834 = vld [vmem:[%s1 + $0xe] sm:$0x3]
  %836 = vset.pattern.permute.xlu0 0
  %837 = vperm.xlu0 %836, %v834
  %v838 = vpop.permute.xlu0 %837
  %v840 = vmul.f32 %v838, %v833
  %v841 = vsub.f32 1.0, %v834
  %843 = vset.pattern.permute.xlu0 0
  %844 = vperm.xlu0 %843, %v841
  %v845 = vpop.permute.xlu0 %844
  %v847 = vmul.f32 %v845, %v756
  %v848 = vadd.f32 %v840, %v847
  %v850 = vrot.slane %v840, 1
  %v851 = vperm.slane %v840, 0
  %v852 = vperm.slane %v850, 0
  %853 = vrot.lane.b32.xlu0 %v851, 96
  %v854 = vpop.permute.xlu0 %853
  %855 = vrot.lane.b32.xlu0 %v852, 96
  %v856 = vpop.permute.xlu0 %855
  %859 = vst.msk [vmem:[%s10 + $0x7] sm:$0x1] %vm214, %v854
  %860 = vst.msk [vmem:[%s10 + $0xf] sm:$0x1] %vm214, %v856
  %v861 = vld [vmem:[#allocation3 + $0xe] sm:$0x3]
  %v863 = vperm.slane %v122, 0
  %865 = vmatpush.msra.mxu0 0.0
  %866 = vmatpush.msra.mxu0 0.0
  %867 = vmatpush.msra.mxu0 0.0
  %868 = vmatpush.msra.mxu0 0.0
  %869 = vmatpush.msra.mxu0 0.0
  %870 = vmatpush.msra.mxu0 0.0
  %871 = vmatpush.msra.mxu0 0.0
  %872 = vmatpush.msra.mxu0 0.0
  %873 = vmatpush.msra.mxu0 0.0
  %874 = vmatpush.msra.mxu0 0.0
  %875 = vmatpush.msra.mxu0 0.0
  %876 = vmatpush.msra.mxu0 0.0
  %877 = vmatpush.msra.mxu0 %v121
  %878 = vmatpush.msra.mxu0 %v120
  %879 = vmatpush.msra.mxu0 %v119
  %880 = vmatpush.msra.mxu0 %v118
  %881 = vmatmul.f32.gmra.mxu0 %v128
  %v882 = vpop.f32.mrf.mxu0
  %v883 = vadd.f32 %v863, %v882
  %884 = vdwg.mxu0
  %v885 = vadd.f32 %v861, %v883
  %v886 = vxor.u32 %v885, 2147483648
  %v887 = vmul.f32 %v886, 1.442695
  %v888 = vpow.pop %v887
  %v889 = vadd.f32 %v888, 1.0
  %v890 = vrcp.pop %v889
  %v891 = vmul.f32 %v889, %v890
  %v892 = vsub.f32 1.0, %v891
  %v893 = vmul.f32 %v890, %v892
  %v894 = vadd.f32 %v890, %v893
  %vm895 = vweird.f32 %v889
  %vm896 = vweird.f32 %v890
  %vm897 = vmor %vm895, %vm896
  %v898 = vsel %vm897, %v890, %v894
  %v899 = vand.u32 2147483647, %v889
  %vm900 = vcmp.eq.f32.partialorder %v899, 8.507059e+37
  %v901 = vand.u32 %v889, 2147483648
  %v902 = vor.u32 1.1754944e-38, %v901
  %v903 = vsel %vm900, %v902, %v898
  %v904 = vmul.f32 1.0, %v903
  %906 = vrot.lane.b32.xlu0 %v883, 64
  %v907 = vpop.permute.xlu0 %906
  %v909 = vmul.f32 %v904, %v907
  %911 = vrot.lane.b32.xlu0 %v909, 64
  %v912 = vpop.permute.xlu0 %911
  %v914 = vadd.f32 %v861, %v912
  %v915 = vtanh.pop %v914
  %v916 = vsub.f32 1.0, %v904
  %918 = vrot.lane.b32.xlu0 %v915, 96
  %v919 = vpop.permute.xlu0 %918
  %v921 = vmul.f32 %v916, %v919
  %v922 = vmul.f32 %v904, 0.0
  %v923 = vadd.f32 %v921, %v922
  %v924 = vld [vmem:[%s1 + $0xe] sm:$0x3]
  %926 = vset.pattern.permute.xlu0 0
  %927 = vperm.xlu0 %926, %v924
  %v928 = vpop.permute.xlu0 %927
  %v930 = vmul.f32 %v928, %v923
  %v931 = vsub.f32 1.0, %v924
  %933 = vset.pattern.permute.xlu0 0
  %934 = vperm.xlu0 %933, %v931
  %v935 = vpop.permute.xlu0 %934
  %v937 = vmul.f32 %v935, 0.0
  %v938 = vadd.f32 %v930, %v937
  %v939 = vld [vmem:[%s10 + $0x7] sm:$0x1]
  %v940 = vld [vmem:[%s10 + $0xf] sm:$0x1]
  %v942 = vrot.slane %v930, 1
  %943 = vrot.lane.b32.xlu0 %v930, 96
  %v944 = vpop.permute.xlu0 %943
  %945 = vrot.lane.b32.xlu0 %v942, 96
  %v946 = vpop.permute.xlu0 %945
  %v949 = vadd.f32 %v939, %v944
  %v950 = vadd.f32 %v940, %v946
  %951 = vst.msk [vmem:[%s10 + $0x7] sm:$0x1] %vm214, %v949
  %952 = vst.msk [vmem:[%s10 + $0xf] sm:$0x1] %vm214, %v950
  %v953 = vld [vmem:[#allocation3 + $0xc] sm:$0x3]
  %955 = vrot.lane.b32.xlu0 %v938, 96
  %v956 = vpop.permute.xlu0 %955
  %v957 = vsel %vm47, %v956, 0
  %959 = vmatpush.msra.mxu0 0.0
  %960 = vmatpush.msra.mxu0 0.0
  %961 = vmatpush.msra.mxu0 0.0
  %962 = vmatpush.msra.mxu0 0.0
  %963 = vmatpush.msra.mxu0 0.0
  %964 = vmatpush.msra.mxu0 0.0
  %965 = vmatpush.msra.mxu0 0.0
  %966 = vmatpush.msra.mxu0 0.0
  %967 = vmatpush.msra.mxu0 0.0
  %968 = vmatpush.msra.mxu0 0.0
  %969 = vmatpush.msra.mxu0 0.0
  %970 = vmatpush.msra.mxu0 0.0
  %971 = vmatpush.msra.mxu0 %v121
  %972 = vmatpush.msra.mxu0 %v120
  %973 = vmatpush.msra.mxu0 %v119
  %974 = vmatpush.msra.mxu0 %v118
  %975 = vmatmul.f32.gmra.mxu0 %v957
  %v976 = vpop.f32.mrf.mxu0
  %v977 = vadd.f32 %v863, %v976
  %978 = vdwg.mxu0
  %v979 = vadd.f32 %v953, %v977
  %v980 = vxor.u32 %v979, 2147483648
  %v981 = vmul.f32 %v980, 1.442695
  %v982 = vpow.pop %v981
  %v983 = vadd.f32 %v982, 1.0
  %v984 = vrcp.pop %v983
  %v985 = vmul.f32 %v983, %v984
  %v986 = vsub.f32 1.0, %v985
  %v987 = vmul.f32 %v984, %v986
  %v988 = vadd.f32 %v984, %v987
  %vm989 = vweird.f32 %v983
  %vm990 = vweird.f32 %v984
  %vm991 = vmor %vm989, %vm990
  %v992 = vsel %vm991, %v984, %v988
  %v993 = vand.u32 2147483647, %v983
  %vm994 = vcmp.eq.f32.partialorder %v993, 8.507059e+37
  %v995 = vand.u32 %v983, 2147483648
  %v996 = vor.u32 1.1754944e-38, %v995
  %v997 = vsel %vm994, %v996, %v992
  %v998 = vmul.f32 1.0, %v997
  %1000 = vrot.lane.b32.xlu0 %v977, 64
  %v1001 = vpop.permute.xlu0 %1000
  %v1003 = vmul.f32 %v998, %v1001
  %1005 = vrot.lane.b32.xlu0 %v1003, 64
  %v1006 = vpop.permute.xlu0 %1005
  %v1008 = vadd.f32 %v953, %v1006
  %v1009 = vtanh.pop %v1008
  %v1010 = vsub.f32 1.0, %v998
  %1012 = vrot.lane.b32.xlu0 %v1009, 96
  %v1013 = vpop.permute.xlu0 %1012
  %v1015 = vmul.f32 %v1010, %v1013
  %v1016 = vmul.f32 %v998, %v938
  %v1017 = vadd.f32 %v1015, %v1016
  %v1018 = vld [vmem:[%s1 + $0xc] sm:$0x3]
  %1020 = vset.pattern.permute.xlu0 0
  %1021 = vperm.xlu0 %1020, %v1018
  %v1022 = vpop.permute.xlu0 %1021
  %v1024 = vmul.f32 %v1022, %v1017
  %v1025 = vsub.f32 1.0, %v1018
  %1027 = vset.pattern.permute.xlu0 0
  %1028 = vperm.xlu0 %1027, %v1025
  %v1029 = vpop.permute.xlu0 %1028
  %v1031 = vmul.f32 %v1029, %v938
  %v1032 = vadd.f32 %v1024, %v1031
  %v1033 = vld [vmem:[%s10 + $0x6] sm:$0x1]
  %v1034 = vld [vmem:[%s10 + $0xe] sm:$0x1]
  %v1036 = vrot.slane %v1024, 1
  %1037 = vrot.lane.b32.xlu0 %v1024, 96
  %v1038 = vpop.permute.xlu0 %1037
  %1039 = vrot.lane.b32.xlu0 %v1036, 96
  %v1040 = vpop.permute.xlu0 %1039
  %v1043 = vadd.f32 %v1033, %v1038
  %v1044 = vadd.f32 %v1034, %v1040
  %1045 = vst.msk [vmem:[%s10 + $0x6] sm:$0x1] %vm214, %v1043
  %1046 = vst.msk [vmem:[%s10 + $0xe] sm:$0x1] %vm214, %v1044
  %v1047 = vld [vmem:[#allocation3 + $0xa] sm:$0x3]
  %1049 = vrot.lane.b32.xlu0 %v1032, 96
  %v1050 = vpop.permute.xlu0 %1049
  %v1051 = vsel %vm47, %v1050, 0
  %1053 = vmatpush.msra.mxu0 0.0
  %1054 = vmatpush.msra.mxu0 0.0
  %1055 = vmatpush.msra.mxu0 0.0
  %1056 = vmatpush.msra.mxu0 0.0
  %1057 = vmatpush.msra.mxu0 0.0
  %1058 = vmatpush.msra.mxu0 0.0
  %1059 = vmatpush.msra.mxu0 0.0
  %1060 = vmatpush.msra.mxu0 0.0
  %1061 = vmatpush.msra.mxu0 0.0
  %1062 = vmatpush.msra.mxu0 0.0
  %1063 = vmatpush.msra.mxu0 0.0
  %1064 = vmatpush.msra.mxu0 0.0
  %1065 = vmatpush.msra.mxu0 %v121
  %1066 = vmatpush.msra.mxu0 %v120
  %1067 = vmatpush.msra.mxu0 %v119
  %1068 = vmatpush.msra.mxu0 %v118
  %1069 = vmatmul.f32.gmra.mxu0 %v1051
  %v1070 = vpop.f32.mrf.mxu0
  %v1071 = vadd.f32 %v863, %v1070
  %1072 = vdwg.mxu0
  %v1073 = vadd.f32 %v1047, %v1071
  %v1074 = vxor.u32 %v1073, 2147483648
  %v1075 = vmul.f32 %v1074, 1.442695
  %v1076 = vpow.pop %v1075
  %v1077 = vadd.f32 %v1076, 1.0
  %v1078 = vrcp.pop %v1077
  %v1079 = vmul.f32 %v1077, %v1078
  %v1080 = vsub.f32 1.0, %v1079
  %v1081 = vmul.f32 %v1078, %v1080
  %v1082 = vadd.f32 %v1078, %v1081
  %vm1083 = vweird.f32 %v1077
  %vm1084 = vweird.f32 %v1078
  %vm1085 = vmor %vm1083, %vm1084
  %v1086 = vsel %vm1085, %v1078, %v1082
  %v1087 = vand.u32 2147483647, %v1077
  %vm1088 = vcmp.eq.f32.partialorder %v1087, 8.507059e+37
  %v1089 = vand.u32 %v1077, 2147483648
  %v1090 = vor.u32 1.1754944e-38, %v1089
  %v1091 = vsel %vm1088, %v1090, %v1086
  %v1092 = vmul.f32 1.0, %v1091
  %1094 = vrot.lane.b32.xlu0 %v1071, 64
  %v1095 = vpop.permute.xlu0 %1094
  %v1097 = vmul.f32 %v1092, %v1095
  %1099 = vrot.lane.b32.xlu0 %v1097, 64
  %v1100 = vpop.permute.xlu0 %1099
  %v1102 = vadd.f32 %v1047, %v1100
  %v1103 = vtanh.pop %v1102
  %v1104 = vsub.f32 1.0, %v1092
  %1106 = vrot.lane.b32.xlu0 %v1103, 96
  %v1107 = vpop.permute.xlu0 %1106
  %v1109 = vmul.f32 %v1104, %v1107
  %v1110 = vmul.f32 %v1092, %v1032
  %v1111 = vadd.f32 %v1109, %v1110
  %v1112 = vld [vmem:[%s1 + $0xa] sm:$0x3]
  %1114 = vset.pattern.permute.xlu0 0
  %1115 = vperm.xlu0 %1114, %v1112
  %v1116 = vpop.permute.xlu0 %1115
  %v1118 = vmul.f32 %v1116, %v1111
  %v1119 = vsub.f32 1.0, %v1112
  %1121 = vset.pattern.permute.xlu0 0
  %1122 = vperm.xlu0 %1121, %v1119
  %v1123 = vpop.permute.xlu0 %1122
  %v1125 = vmul.f32 %v1123, %v1032
  %v1126 = vadd.f32 %v1118, %v1125
  %v1127 = vld [vmem:[%s10 + $0x5] sm:$0x1]
  %v1128 = vld [vmem:[%s10 + $0xd] sm:$0x1]
  %v1130 = vrot.slane %v1118, 1
  %1131 = vrot.lane.b32.xlu0 %v1118, 96
  %v1132 = vpop.permute.xlu0 %1131
  %1133 = vrot.lane.b32.xlu0 %v1130, 96
  %v1134 = vpop.permute.xlu0 %1133
  %v1137 = vadd.f32 %v1127, %v1132
  %v1138 = vadd.f32 %v1128, %v1134
  %1139 = vst.msk [vmem:[%s10 + $0x5] sm:$0x1] %vm214, %v1137
  %1140 = vst.msk [vmem:[%s10 + $0xd] sm:$0x1] %vm214, %v1138
  %v1141 = vld [vmem:[#allocation3 + $0x8] sm:$0x3]
  %1143 = vrot.lane.b32.xlu0 %v1126, 96
  %v1144 = vpop.permute.xlu0 %1143
  %v1145 = vsel %vm47, %v1144, 0
  %1147 = vmatpush.msra.mxu0 0.0
  %1148 = vmatpush.msra.mxu0 0.0
  %1149 = vmatpush.msra.mxu0 0.0
  %1150 = vmatpush.msra.mxu0 0.0
  %1151 = vmatpush.msra.mxu0 0.0
  %1152 = vmatpush.msra.mxu0 0.0
  %1153 = vmatpush.msra.mxu0 0.0
  %1154 = vmatpush.msra.mxu0 0.0
  %1155 = vmatpush.msra.mxu0 0.0
  %1156 = vmatpush.msra.mxu0 0.0
  %1157 = vmatpush.msra.mxu0 0.0
  %1158 = vmatpush.msra.mxu0 0.0
  %1159 = vmatpush.msra.mxu0 %v121
  %1160 = vmatpush.msra.mxu0 %v120
  %1161 = vmatpush.msra.mxu0 %v119
  %1162 = vmatpush.msra.mxu0 %v118
  %1163 = vmatmul.f32.gmra.mxu0 %v1145
  %v1164 = vpop.f32.mrf.mxu0
  %v1165 = vadd.f32 %v863, %v1164
  %1166 = vdwg.mxu0
  %v1167 = vadd.f32 %v1141, %v1165
  %v1168 = vxor.u32 %v1167, 2147483648
  %v1169 = vmul.f32 %v1168, 1.442695
  %v1170 = vpow.pop %v1169
  %v1171 = vadd.f32 %v1170, 1.0
  %v1172 = vrcp.pop %v1171
  %v1173 = vmul.f32 %v1171, %v1172
  %v1174 = vsub.f32 1.0, %v1173
  %v1175 = vmul.f32 %v1172, %v1174
  %v1176 = vadd.f32 %v1172, %v1175
  %vm1177 = vweird.f32 %v1171
  %vm1178 = vweird.f32 %v1172
  %vm1179 = vmor %vm1177, %vm1178
  %v1180 = vsel %vm1179, %v1172, %v1176
  %v1181 = vand.u32 2147483647, %v1171
  %vm1182 = vcmp.eq.f32.partialorder %v1181, 8.507059e+37
  %v1183 = vand.u32 %v1171, 2147483648
  %v1184 = vor.u32 1.1754944e-38, %v1183
  %v1185 = vsel %vm1182, %v1184, %v1180
  %v1186 = vmul.f32 1.0, %v1185
  %1188 = vrot.lane.b32.xlu0 %v1165, 64
  %v1189 = vpop.permute.xlu0 %1188
  %v1191 = vmul.f32 %v1186, %v1189
  %1193 = vrot.lane.b32.xlu0 %v1191, 64
  %v1194 = vpop.permute.xlu0 %1193
  %v1196 = vadd.f32 %v1141, %v1194
  %v1197 = vtanh.pop %v1196
  %v1198 = vsub.f32 1.0, %v1186
  %1200 = vrot.lane.b32.xlu0 %v1197, 96
  %v1201 = vpop.permute.xlu0 %1200
  %v1203 = vmul.f32 %v1198, %v1201
  %v1204 = vmul.f32 %v1186, %v1126
  %v1205 = vadd.f32 %v1203, %v1204
  %v1206 = vld [vmem:[%s1 + $0x8] sm:$0x3]
  %1208 = vset.pattern.permute.xlu0 0
  %1209 = vperm.xlu0 %1208, %v1206
  %v1210 = vpop.permute.xlu0 %1209
  %v1212 = vmul.f32 %v1210, %v1205
  %v1213 = vsub.f32 1.0, %v1206
  %1215 = vset.pattern.permute.xlu0 0
  %1216 = vperm.xlu0 %1215, %v1213
  %v1217 = vpop.permute.xlu0 %1216
  %v1219 = vmul.f32 %v1217, %v1126
  %v1220 = vadd.f32 %v1212, %v1219
  %v1221 = vld [vmem:[%s10 + $0x4] sm:$0x1]
  %v1222 = vld [vmem:[%s10 + $0xc] sm:$0x1]
  %v1224 = vrot.slane %v1212, 1
  %1225 = vrot.lane.b32.xlu0 %v1212, 96
  %v1226 = vpop.permute.xlu0 %1225
  %1227 = vrot.lane.b32.xlu0 %v1224, 96
  %v1228 = vpop.permute.xlu0 %1227
  %v1231 = vadd.f32 %v1221, %v1226
  %v1232 = vadd.f32 %v1222, %v1228
  %1233 = vst.msk [vmem:[%s10 + $0x4] sm:$0x1] %vm214, %v1231
  %1234 = vst.msk [vmem:[%s10 + $0xc] sm:$0x1] %vm214, %v1232
  %v1235 = vld [vmem:[#allocation3 + $0x6] sm:$0x3]
  %1237 = vrot.lane.b32.xlu0 %v1220, 96
  %v1238 = vpop.permute.xlu0 %1237
  %v1239 = vsel %vm47, %v1238, 0
  %1241 = vmatpush.msra.mxu0 0.0
  %1242 = vmatpush.msra.mxu0 0.0
  %1243 = vmatpush.msra.mxu0 0.0
  %1244 = vmatpush.msra.mxu0 0.0
  %1245 = vmatpush.msra.mxu0 0.0
  %1246 = vmatpush.msra.mxu0 0.0
  %1247 = vmatpush.msra.mxu0 0.0
  %1248 = vmatpush.msra.mxu0 0.0
  %1249 = vmatpush.msra.mxu0 0.0
  %1250 = vmatpush.msra.mxu0 0.0
  %1251 = vmatpush.msra.mxu0 0.0
  %1252 = vmatpush.msra.mxu0 0.0
  %1253 = vmatpush.msra.mxu0 %v121
  %1254 = vmatpush.msra.mxu0 %v120
  %1255 = vmatpush.msra.mxu0 %v119
  %1256 = vmatpush.msra.mxu0 %v118
  %1257 = vmatmul.f32.gmra.mxu0 %v1239
  %v1258 = vpop.f32.mrf.mxu0
  %v1259 = vadd.f32 %v863, %v1258
  %1260 = vdwg.mxu0
  %v1261 = vadd.f32 %v1235, %v1259
  %v1262 = vxor.u32 %v1261, 2147483648
  %v1263 = vmul.f32 %v1262, 1.442695
  %v1264 = vpow.pop %v1263
  %v1265 = vadd.f32 %v1264, 1.0
  %v1266 = vrcp.pop %v1265
  %v1267 = vmul.f32 %v1265, %v1266
  %v1268 = vsub.f32 1.0, %v1267
  %v1269 = vmul.f32 %v1266, %v1268
  %v1270 = vadd.f32 %v1266, %v1269
  %vm1271 = vweird.f32 %v1265
  %vm1272 = vweird.f32 %v1266
  %vm1273 = vmor %vm1271, %vm1272
  %v1274 = vsel %vm1273, %v1266, %v1270
  %v1275 = vand.u32 2147483647, %v1265
  %vm1276 = vcmp.eq.f32.partialorder %v1275, 8.507059e+37
  %v1277 = vand.u32 %v1265, 2147483648
  %v1278 = vor.u32 1.1754944e-38, %v1277
  %v1279 = vsel %vm1276, %v1278, %v1274
  %v1280 = vmul.f32 1.0, %v1279
  %1282 = vrot.lane.b32.xlu0 %v1259, 64
  %v1283 = vpop.permute.xlu0 %1282
  %v1285 = vmul.f32 %v1280, %v1283
  %1287 = vrot.lane.b32.xlu0 %v1285, 64
  %v1288 = vpop.permute.xlu0 %1287
  %v1290 = vadd.f32 %v1235, %v1288
  %v1291 = vtanh.pop %v1290
  %v1292 = vsub.f32 1.0, %v1280
  %1294 = vrot.lane.b32.xlu0 %v1291, 96
  %v1295 = vpop.permute.xlu0 %1294
  %v1297 = vmul.f32 %v1292, %v1295
  %v1298 = vmul.f32 %v1280, %v1220
  %v1299 = vadd.f32 %v1297, %v1298
  %v1300 = vld [vmem:[%s1 + $0x6] sm:$0x3]
  %1302 = vset.pattern.permute.xlu0 0
  %1303 = vperm.xlu0 %1302, %v1300
  %v1304 = vpop.permute.xlu0 %1303
  %v1306 = vmul.f32 %v1304, %v1299
  %v1307 = vsub.f32 1.0, %v1300
  %1309 = vset.pattern.permute.xlu0 0
  %1310 = vperm.xlu0 %1309, %v1307
  %v1311 = vpop.permute.xlu0 %1310
  %v1313 = vmul.f32 %v1311, %v1220
  %v1314 = vadd.f32 %v1306, %v1313
  %v1315 = vld [vmem:[%s10 + $0x3] sm:$0x1]
  %v1316 = vld [vmem:[%s10 + $0xb] sm:$0x1]
  %v1318 = vrot.slane %v1306, 1
  %1319 = vrot.lane.b32.xlu0 %v1306, 96
  %v1320 = vpop.permute.xlu0 %1319
  %1321 = vrot.lane.b32.xlu0 %v1318, 96
  %v1322 = vpop.permute.xlu0 %1321
  %v1325 = vadd.f32 %v1315, %v1320
  %v1326 = vadd.f32 %v1316, %v1322
  %1327 = vst.msk [vmem:[%s10 + $0x3] sm:$0x1] %vm214, %v1325
  %1328 = vst.msk [vmem:[%s10 + $0xb] sm:$0x1] %vm214, %v1326
  %v1329 = vld [vmem:[#allocation3 + $0x4] sm:$0x3]
  %1331 = vrot.lane.b32.xlu0 %v1314, 96
  %v1332 = vpop.permute.xlu0 %1331
  %v1333 = vsel %vm47, %v1332, 0
  %1335 = vmatpush.msra.mxu0 0.0
  %1336 = vmatpush.msra.mxu0 0.0
  %1337 = vmatpush.msra.mxu0 0.0
  %1338 = vmatpush.msra.mxu0 0.0
  %1339 = vmatpush.msra.mxu0 0.0
  %1340 = vmatpush.msra.mxu0 0.0
  %1341 = vmatpush.msra.mxu0 0.0
  %1342 = vmatpush.msra.mxu0 0.0
  %1343 = vmatpush.msra.mxu0 0.0
  %1344 = vmatpush.msra.mxu0 0.0
  %1345 = vmatpush.msra.mxu0 0.0
  %1346 = vmatpush.msra.mxu0 0.0
  %1347 = vmatpush.msra.mxu0 %v121
  %1348 = vmatpush.msra.mxu0 %v120
  %1349 = vmatpush.msra.mxu0 %v119
  %1350 = vmatpush.msra.mxu0 %v118
  %1351 = vmatmul.f32.gmra.mxu0 %v1333
  %v1352 = vpop.f32.mrf.mxu0
  %v1353 = vadd.f32 %v863, %v1352
  %1354 = vdwg.mxu0
  %v1355 = vadd.f32 %v1329, %v1353
  %v1356 = vxor.u32 %v1355, 2147483648
  %v1357 = vmul.f32 %v1356, 1.442695
  %v1358 = vpow.pop %v1357
  %v1359 = vadd.f32 %v1358, 1.0
  %v1360 = vrcp.pop %v1359
  %v1361 = vmul.f32 %v1359, %v1360
  %v1362 = vsub.f32 1.0, %v1361
  %v1363 = vmul.f32 %v1360, %v1362
  %v1364 = vadd.f32 %v1360, %v1363
  %vm1365 = vweird.f32 %v1359
  %vm1366 = vweird.f32 %v1360
  %vm1367 = vmor %vm1365, %vm1366
  %v1368 = vsel %vm1367, %v1360, %v1364
  %v1369 = vand.u32 2147483647, %v1359
  %vm1370 = vcmp.eq.f32.partialorder %v1369, 8.507059e+37
  %v1371 = vand.u32 %v1359, 2147483648
  %v1372 = vor.u32 1.1754944e-38, %v1371
  %v1373 = vsel %vm1370, %v1372, %v1368
  %v1374 = vmul.f32 1.0, %v1373
  %1376 = vrot.lane.b32.xlu0 %v1353, 64
  %v1377 = vpop.permute.xlu0 %1376
  %v1379 = vmul.f32 %v1374, %v1377
  %1381 = vrot.lane.b32.xlu0 %v1379, 64
  %v1382 = vpop.permute.xlu0 %1381
  %v1384 = vadd.f32 %v1329, %v1382
  %v1385 = vtanh.pop %v1384
  %v1386 = vsub.f32 1.0, %v1374
  %1388 = vrot.lane.b32.xlu0 %v1385, 96
  %v1389 = vpop.permute.xlu0 %1388
  %v1391 = vmul.f32 %v1386, %v1389
  %v1392 = vmul.f32 %v1374, %v1314
  %v1393 = vadd.f32 %v1391, %v1392
  %v1394 = vld [vmem:[%s1 + $0x4] sm:$0x3]
  %1396 = vset.pattern.permute.xlu0 0
  %1397 = vperm.xlu0 %1396, %v1394
  %v1398 = vpop.permute.xlu0 %1397
  %v1400 = vmul.f32 %v1398, %v1393
  %v1401 = vsub.f32 1.0, %v1394
  %1403 = vset.pattern.permute.xlu0 0
  %1404 = vperm.xlu0 %1403, %v1401
  %v1405 = vpop.permute.xlu0 %1404
  %v1407 = vmul.f32 %v1405, %v1314
  %v1408 = vadd.f32 %v1400, %v1407
  %v1409 = vld [vmem:[%s10 + $0x2] sm:$0x1]
  %v1410 = vld [vmem:[%s10 + $0xa] sm:$0x1]
  %v1412 = vrot.slane %v1400, 1
  %1413 = vrot.lane.b32.xlu0 %v1400, 96
  %v1414 = vpop.permute.xlu0 %1413
  %1415 = vrot.lane.b32.xlu0 %v1412, 96
  %v1416 = vpop.permute.xlu0 %1415
  %v1419 = vadd.f32 %v1409, %v1414
  %v1420 = vadd.f32 %v1410, %v1416
  %1421 = vst.msk [vmem:[%s10 + $0x2] sm:$0x1] %vm214, %v1419
  %1422 = vst.msk [vmem:[%s10 + $0xa] sm:$0x1] %vm214, %v1420
  %v1423 = vld [vmem:[#allocation3 + $0x2] sm:$0x3]
  %1425 = vrot.lane.b32.xlu0 %v1408, 96
  %v1426 = vpop.permute.xlu0 %1425
  %v1427 = vsel %vm47, %v1426, 0
  %1429 = vmatpush.msra.mxu0 0.0
  %1430 = vmatpush.msra.mxu0 0.0
  %1431 = vmatpush.msra.mxu0 0.0
  %1432 = vmatpush.msra.mxu0 0.0
  %1433 = vmatpush.msra.mxu0 0.0
  %1434 = vmatpush.msra.mxu0 0.0
  %1435 = vmatpush.msra.mxu0 0.0
  %1436 = vmatpush.msra.mxu0 0.0
  %1437 = vmatpush.msra.mxu0 0.0
  %1438 = vmatpush.msra.mxu0 0.0
  %1439 = vmatpush.msra.mxu0 0.0
  %1440 = vmatpush.msra.mxu0 0.0
  %1441 = vmatpush.msra.mxu0 %v121
  %1442 = vmatpush.msra.mxu0 %v120
  %1443 = vmatpush.msra.mxu0 %v119
  %1444 = vmatpush.msra.mxu0 %v118
  %1445 = vmatmul.f32.gmra.mxu0 %v1427
  %v1446 = vpop.f32.mrf.mxu0
  %v1447 = vadd.f32 %v863, %v1446
  %1448 = vdwg.mxu0
  %v1449 = vadd.f32 %v1423, %v1447
  %v1450 = vxor.u32 %v1449, 2147483648
  %v1451 = vmul.f32 %v1450, 1.442695
  %v1452 = vpow.pop %v1451
  %v1453 = vadd.f32 %v1452, 1.0
  %v1454 = vrcp.pop %v1453
  %v1455 = vmul.f32 %v1453, %v1454
  %v1456 = vsub.f32 1.0, %v1455
  %v1457 = vmul.f32 %v1454, %v1456
  %v1458 = vadd.f32 %v1454, %v1457
  %vm1459 = vweird.f32 %v1453
  %vm1460 = vweird.f32 %v1454
  %vm1461 = vmor %vm1459, %vm1460
  %v1462 = vsel %vm1461, %v1454, %v1458
  %v1463 = vand.u32 2147483647, %v1453
  %vm1464 = vcmp.eq.f32.partialorder %v1463, 8.507059e+37
  %v1465 = vand.u32 %v1453, 2147483648
  %v1466 = vor.u32 1.1754944e-38, %v1465
  %v1467 = vsel %vm1464, %v1466, %v1462
  %v1468 = vmul.f32 1.0, %v1467
  %1470 = vrot.lane.b32.xlu0 %v1447, 64
  %v1471 = vpop.permute.xlu0 %1470
  %v1473 = vmul.f32 %v1468, %v1471
  %1475 = vrot.lane.b32.xlu0 %v1473, 64
  %v1476 = vpop.permute.xlu0 %1475
  %v1478 = vadd.f32 %v1423, %v1476
  %v1479 = vtanh.pop %v1478
  %v1480 = vsub.f32 1.0, %v1468
  %1482 = vrot.lane.b32.xlu0 %v1479, 96
  %v1483 = vpop.permute.xlu0 %1482
  %v1485 = vmul.f32 %v1480, %v1483
  %v1486 = vmul.f32 %v1468, %v1408
  %v1487 = vadd.f32 %v1485, %v1486
  %v1488 = vld [vmem:[%s1 + $0x2] sm:$0x3]
  %1490 = vset.pattern.permute.xlu0 0
  %1491 = vperm.xlu0 %1490, %v1488
  %v1492 = vpop.permute.xlu0 %1491
  %v1494 = vmul.f32 %v1492, %v1487
  %v1495 = vsub.f32 1.0, %v1488
  %1497 = vset.pattern.permute.xlu0 0
  %1498 = vperm.xlu0 %1497, %v1495
  %v1499 = vpop.permute.xlu0 %1498
  %v1501 = vmul.f32 %v1499, %v1408
  %v1502 = vadd.f32 %v1494, %v1501
  %v1503 = vld [vmem:[%s10 + $0x1] sm:$0x1]
  %v1504 = vld [vmem:[%s10 + $0x9] sm:$0x1]
  %v1506 = vrot.slane %v1494, 1
  %1507 = vrot.lane.b32.xlu0 %v1494, 96
  %v1508 = vpop.permute.xlu0 %1507
  %1509 = vrot.lane.b32.xlu0 %v1506, 96
  %v1510 = vpop.permute.xlu0 %1509
  %v1513 = vadd.f32 %v1503, %v1508
  %v1514 = vadd.f32 %v1504, %v1510
  %1515 = vst.msk [vmem:[%s10 + $0x1] sm:$0x1] %vm214, %v1513
  %1516 = vst.msk [vmem:[%s10 + $0x9] sm:$0x1] %vm214, %v1514
  %v1517 = vld [vmem:[#allocation3] sm:$0x3]
  %1519 = vrot.lane.b32.xlu0 %v1502, 96
  %v1520 = vpop.permute.xlu0 %1519
  %v1521 = vsel %vm47, %v1520, 0
  %1523 = vmatpush.msra.mxu0 0.0
  %1524 = vmatpush.msra.mxu0 0.0
  %1525 = vmatpush.msra.mxu0 0.0
  %1526 = vmatpush.msra.mxu0 0.0
  %1527 = vmatpush.msra.mxu0 0.0
  %1528 = vmatpush.msra.mxu0 0.0
  %1529 = vmatpush.msra.mxu0 0.0
  %1530 = vmatpush.msra.mxu0 0.0
  %1531 = vmatpush.msra.mxu0 0.0
  %1532 = vmatpush.msra.mxu0 0.0
  %1533 = vmatpush.msra.mxu0 0.0
  %1534 = vmatpush.msra.mxu0 0.0
  %1535 = vmatpush.msra.mxu0 %v121
  %1536 = vmatpush.msra.mxu0 %v120
  %1537 = vmatpush.msra.mxu0 %v119
  %1538 = vmatpush.msra.mxu0 %v118
  %1539 = vmatmul.f32.gmra.mxu0 %v1521
  %v1540 = vpop.f32.mrf.mxu0
  %v1541 = vadd.f32 %v863, %v1540
  %1542 = vdwg.mxu0
  %v1543 = vadd.f32 %v1517, %v1541
  %v1544 = vxor.u32 %v1543, 2147483648
  %v1545 = vmul.f32 %v1544, 1.442695
  %v1546 = vpow.pop %v1545
  %v1547 = vadd.f32 %v1546, 1.0
  %v1548 = vrcp.pop %v1547
  %v1549 = vmul.f32 %v1547, %v1548
  %v1550 = vsub.f32 1.0, %v1549
  %v1551 = vmul.f32 %v1548, %v1550
  %v1552 = vadd.f32 %v1548, %v1551
  %vm1553 = vweird.f32 %v1547
  %vm1554 = vweird.f32 %v1548
  %vm1555 = vmor %vm1553, %vm1554
  %v1556 = vsel %vm1555, %v1548, %v1552
  %v1557 = vand.u32 2147483647, %v1547
  %vm1558 = vcmp.eq.f32.partialorder %v1557, 8.507059e+37
  %v1559 = vand.u32 %v1547, 2147483648
  %v1560 = vor.u32 1.1754944e-38, %v1559
  %v1561 = vsel %vm1558, %v1560, %v1556
  %v1562 = vmul.f32 1.0, %v1561
  %1564 = vrot.lane.b32.xlu0 %v1541, 64
  %v1565 = vpop.permute.xlu0 %1564
  %v1567 = vmul.f32 %v1562, %v1565
  %1569 = vrot.lane.b32.xlu0 %v1567, 64
  %v1570 = vpop.permute.xlu0 %1569
  %v1572 = vadd.f32 %v1517, %v1570
  %v1573 = vtanh.pop %v1572
  %v1574 = vsub.f32 1.0, %v1562
  %1576 = vrot.lane.b32.xlu0 %v1573, 96
  %v1577 = vpop.permute.xlu0 %1576
  %v1579 = vmul.f32 %v1574, %v1577
  %v1580 = vmul.f32 %v1562, %v1502
  %v1581 = vadd.f32 %v1579, %v1580
  %v1582 = vld [vmem:[%s1] sm:$0x3]
  %1584 = vset.pattern.permute.xlu0 0
  %1585 = vperm.xlu0 %1584, %v1582
  %v1586 = vpop.permute.xlu0 %1585
  %v1588 = vmul.f32 %v1586, %v1581
  %v1589 = vsub.f32 1.0, %v1582
  %1591 = vset.pattern.permute.xlu0 0
  %1592 = vperm.xlu0 %1591, %v1589
  %v1593 = vpop.permute.xlu0 %1592
  %v1595 = vmul.f32 %v1593, %v1502
  %v1596 = vadd.f32 %v1588, %v1595
  %v1597 = vld [vmem:[%s10] sm:$0x1]
  %v1598 = vld [vmem:[%s10 + $0x8] sm:$0x1]
  %v1600 = vrot.slane %v1588, 1
  %1601 = vrot.lane.b32.xlu0 %v1588, 96
  %v1602 = vpop.permute.xlu0 %1601
  %1603 = vrot.lane.b32.xlu0 %v1600, 96
  %v1604 = vpop.permute.xlu0 %1603
  %v1607 = vadd.f32 %v1597, %v1602
  %v1608 = vadd.f32 %v1598, %v1604
  %1609 = vst.msk [vmem:[%s10] sm:$0x1] %vm214, %v1607
  %1610 = vst.msk [vmem:[%s10 + $0x8] sm:$0x1] %vm214, %v1608
  %v1611 = vadd.f32 %v848, %v1596
  %1613 = vrot.lane.b32.xlu0 %v1611, 96
  %v1614 = vpop.permute.xlu0 %1613
  %vm1616 = vcmask 254976
  %1617 = vst.msk [vmem:[%s11] sm:$0x3] %vm1616, %v1614
  // Predicated region
  $region42: #{run.4} parent=0 // pred_check
    _
  $region43: #{run.4} parent=0 // pred_check_branch
    %1619 = sbr.rel (0) target = $region45
  $region44: #{run.4} parent=0 // pred_region
    _
  $region45: #{run.4} parent=0 // pred_fallthru
    _
  // Predicated region
  $region46: #{run.4} parent=0 // pred_check
    _
  $region47: #{run.4} parent=0 // pred_check_branch
    %1621 = sbr.rel (0) target = $region49
  $region48: #{run.4} parent=0 // pred_region
    _
  $region49: #{run.4} parent=0 // pred_fallthru
    _
  // Predicated region
  $region50: #{run.4} parent=0 // pred_check
    _
  $region51: #{run.4} parent=0 // pred_check_branch
    %1623 = sbr.rel (0) target = $region53
  $region52: #{run.4} parent=0 // pred_region
    _
  $region53: #{run.4} parent=0 // pred_fallthru
    _
  // Predicated region
  $region54: #{run.4} parent=0 // pred_check
    _
  $region55: #{run.4} parent=0 // pred_check_branch
    %1625 = sbr.rel (0) target = $region57
  $region56: #{run.4} parent=0 // pred_region
    _
  $region57: #{run.4} parent=0 // pred_fallthru
    _

// kernel: run.6
$region0: #{run.6}
  #allocation0 [shape = 'u32[]', space=smem, size = 0x4, offset = 0x4, fixed_abs, tag = 'smem constant byte address 0x4 - core index']
  #allocation1 [shape = 'u32[72,128]{1,0:T(1,128)}', space=vmem, size = 0x9000, scoped, tag = 'internal scratch']
  #allocation2 [shape = 'f32[10,96]{1,0:T(8,128)}', space=vmem, size = 0x2000, scoped, tag = 'scratch operand']
  #allocation3 [shape = 'f32[1,1]{1,0:T(1,128)S(1)}', space=vmem, size = 0x200, scoped, tag = 'scoped memory for run.6']
  %s0 = inlined_call_operand.smem [shape: u32[41], index: -1, kind: input, shape index: {}]
  %s1 = sld [smem:[%s0]]
  %s2 = scalar_lea.smem %s0, 1
  %s3 = sld [smem:[%s2]]
  %s4 = scalar_lea.smem %s0, 2
  %s5 = sld [smem:[%s4]]
  %s6 = scalar_lea.smem %s0, 3
  %s7 = sld [smem:[%s6]]
  %s8 = scalar_lea.smem %s0, 4
  %s9 = sld [smem:[%s8]]
  %s10 = scalar_lea.smem %s0, 5
  %s11 = sld [smem:[%s10]]
  %s12 = scalar_lea.smem %s0, 6
  %s13 = sld [smem:[%s12]]
  %s14 = scalar_lea.smem %s0, 7
  %s15 = sld [smem:[%s14]]
  %s16 = scalar_lea.smem %s0, 8
  %s17 = sld [smem:[%s16]]
  %s18 = scalar_lea.smem %s0, 9
  %s19 = sld [smem:[%s18]]
  %s20 = scalar_lea.smem %s0, 10
  %s21 = sld [smem:[%s20]]
  %s22 = scalar_lea.smem %s0, 11
  %s23 = sld [smem:[%s22]]
  %s24 = scalar_lea.smem %s0, 12
  %s25 = sld [smem:[%s24]]
  %s26 = scalar_lea.smem %s0, 13
  %s27 = sld [smem:[%s26]]
  %s28 = scalar_lea.smem %s0, 14
  %s29 = sld [smem:[%s28]]
  %s30 = scalar_lea.smem %s0, 15
  %s31 = sld [smem:[%s30]]
  %s32 = scalar_lea.smem %s0, 16
  %s33 = sld [smem:[%s32]]
  %s34 = scalar_lea.smem %s0, 17
  %s35 = sld [smem:[%s34]]
  %s36 = scalar_lea.smem %s0, 18
  %s37 = sld [smem:[%s36]]
  %s38 = scalar_lea.smem %s0, 19
  %s39 = sld [smem:[%s38]]
  %s40 = scalar_lea.smem %s0, 20
  %s41 = sld [smem:[%s40]]
  %s42 = scalar_lea.smem %s0, 21
  %s43 = sld [smem:[%s42]]
  %s44 = scalar_lea.smem %s0, 22
  %s45 = sld [smem:[%s44]]
  %s46 = scalar_lea.smem %s0, 23
  %s47 = sld [smem:[%s46]]
  %s48 = scalar_lea.smem %s0, 24
  %s49 = sld [smem:[%s48]]
  %s50 = scalar_lea.smem %s0, 25
  %s51 = sld [smem:[%s50]]
  %s52 = scalar_lea.smem %s0, 26
  %s53 = sld [smem:[%s52]]
  %s54 = scalar_lea.smem %s0, 27
  %s55 = sld [smem:[%s54]]
  %s56 = scalar_lea.smem %s0, 28
  %s57 = sld [smem:[%s56]]
  %s58 = scalar_lea.smem %s0, 29
  %s59 = sld [smem:[%s58]]
  %s60 = scalar_lea.smem %s0, 30
  %s61 = sld [smem:[%s60]]
  %s62 = scalar_lea.smem %s0, 31
  %s63 = sld [smem:[%s62]]
  %s64 = scalar_lea.smem %s0, 32
  %s65 = sld [smem:[%s64]]
  %s66 = scalar_lea.smem %s0, 33
  %s67 = sld [smem:[%s66]]
  %s68 = scalar_lea.smem %s0, 34
  %s69 = sld [smem:[%s68]]
  %s70 = scalar_lea.smem %s0, 35
  %s71 = sld [smem:[%s70]]
  %s72 = scalar_lea.smem %s0, 36
  %s73 = sld [smem:[%s72]]
  %s74 = scalar_lea.smem %s0, 37
  %s75 = sld [smem:[%s74]]
  %s76 = scalar_lea.smem %s0, 38
  %s77 = sld [smem:[%s76]]
  %s78 = scalar_lea.smem %s0, 39
  %s79 = sld [smem:[%s78]]
  %s80 = scalar_lea.smem %s0, 40
  %s81 = sld [smem:[%s80]]
  %82 = xla_tuple %s71, %s73, %s75, %s77, %s79, %s81
  %s83 = sld [smem:[#allocation0]]
  $region190: #{run.6} parent=0
    _
  %s85 = ssub.s32 1, %s83
  %s86 = scalar_select 0, %s85, %s83
  %v87 = vstv %s69
  %88 = vst [vmem:[#allocation3] sm:$0x1] %v87
  $region1: #{run.6} parent=0
    #allocation4 [shape = 'u8[1024]{0}', space=vmem, size = 0x400, scoped, tag = 'output window, operand 1, single buffered']
    #allocation5 [shape = 's32[1]{0}', space=sflag, size = 0x4, scoped, tag = 'scoped memory for run.6']
    #allocation6 [shape = 'u8[1024]{0}', space=vmem, size = 0x400, scoped, tag = 'output window, operand 2, single buffered']
    #allocation7 [shape = 's32[1]{0}', space=sflag, size = 0x4, scoped, tag = 'scoped memory for run.6']
    #allocation8 [shape = 'u8[1024]{0}', space=vmem, size = 0x400, scoped, tag = 'output window, operand 3, single buffered']
    %89 = vsyncpa [#allocation5], 0
    %90 = vsyncpa [#allocation7], 0
    // Predicated region
    $region2: #{run.6} parent=1 // pred_check
      _
    $region3: #{run.6} parent=1 // pred_check_branch
      %92 = sbr.rel (0) target = $region5
    $region4: #{run.6} parent=1 // pred_region
      _
    $region5: #{run.6} parent=1 // pred_fallthru
      _
    // Predicated region
    $region6: #{run.6} parent=1 // pred_check
      _
    $region7: #{run.6} parent=1 // pred_check_branch
      %94 = sbr.rel (0) target = $region9
    $region8: #{run.6} parent=1 // pred_region
      _
    $region9: #{run.6} parent=1 // pred_fallthru
      _
    // Predicated region
    $region10: #{run.6} parent=1 // pred_check
      _
    $region11: #{run.6} parent=1 // pred_check_branch
      %96 = sbr.rel (0) target = $region13
    $region12: #{run.6} parent=1 // pred_region
      _
    $region13: #{run.6} parent=1 // pred_fallthru
      _
    // Predicated region
    $region14: #{run.6} parent=1 // pred_check
      _
    $region15: #{run.6} parent=1 // pred_check_branch
      %98 = sbr.rel (0) target = $region17
    $region16: #{run.6} parent=1 // pred_region
      _
    $region17: #{run.6} parent=1 // pred_fallthru
      _
    // Predicated region
    $region18: #{run.6} parent=1 // pred_check
      _
    $region19: #{run.6} parent=1 // pred_check_branch
      %100 = sbr.rel (0) target = $region21
    $region20: #{run.6} parent=1 // pred_region
      _
    $region21: #{run.6} parent=1 // pred_fallthru
      _
    // Predicated region
    $region22: #{run.6} parent=1 // pred_check
      _
    $region23: #{run.6} parent=1 // pred_check_branch
      %102 = sbr.rel (0) target = $region25
    $region24: #{run.6} parent=1 // pred_region
      _
    $region25: #{run.6} parent=1 // pred_fallthru
      _
    // Predicated region
    $region26: #{run.6} parent=1 // pred_check
      _
    $region27: #{run.6} parent=1 // pred_check_branch
      %104 = sbr.rel (0) target = $region29
    $region28: #{run.6} parent=1 // pred_region
      _
    $region29: #{run.6} parent=1 // pred_fallthru
      _
    // Predicated region
    $region30: #{run.6} parent=1 // pred_check
      _
    $region31: #{run.6} parent=1 // pred_check_branch
      %106 = sbr.rel (0) target = $region33
    $region32: #{run.6} parent=1 // pred_region
      _
    $region33: #{run.6} parent=1 // pred_fallthru
      _
    // Predicated region
    $region34: #{run.6} parent=1 // pred_check
      _
    $region35: #{run.6} parent=1 // pred_check_branch
      %108 = sbr.rel (0) target = $region37
    $region36: #{run.6} parent=1 // pred_region
      _
    $region37: #{run.6} parent=1 // pred_fallthru
      _
    // Predicated region
    $region38: #{run.6} parent=1 // pred_check
      _
    $region39: #{run.6} parent=1 // pred_check_branch
      %110 = sbr.rel (0) target = $region41
    $region40: #{run.6} parent=1 // pred_region
      _
    $region41: #{run.6} parent=1 // pred_fallthru
      _
    // Predicated region
    $region42: #{run.6} parent=1 // pred_check
      _
    $region43: #{run.6} parent=1 // pred_check_branch
      %112 = sbr.rel (0) target = $region45
    $region44: #{run.6} parent=1 // pred_region
      _
    $region45: #{run.6} parent=1 // pred_fallthru
      _
    // Predicated region
    $region46: #{run.6} parent=1 // pred_check
      _
    $region47: #{run.6} parent=1 // pred_check_branch
      %114 = sbr.rel (0) target = $region49
    $region48: #{run.6} parent=1 // pred_region
      _
    $region49: #{run.6} parent=1 // pred_fallthru
      _
    // Predicated region
    $region50: #{run.6} parent=1 // pred_check
      _
    $region51: #{run.6} parent=1 // pred_check_branch
      %116 = sbr.rel (0) target = $region53
    $region52: #{run.6} parent=1 // pred_region
      _
    $region53: #{run.6} parent=1 // pred_fallthru
      _
    // Predicated region
    $region54: #{run.6} parent=1 // pred_check
      _
    $region55: #{run.6} parent=1 // pred_check_branch
      %118 = sbr.rel (0) target = $region57
    $region56: #{run.6} parent=1 // pred_region
      _
    $region57: #{run.6} parent=1 // pred_fallthru
      _
    // Predicated region
    $region58: #{run.6} parent=1 // pred_check
      _
    $region59: #{run.6} parent=1 // pred_check_branch
      %120 = sbr.rel (0) target = $region61
    $region60: #{run.6} parent=1 // pred_region
      _
    $region61: #{run.6} parent=1 // pred_fallthru
      _
    // Predicated region
    $region62: #{run.6} parent=1 // pred_check
      _
    $region63: #{run.6} parent=1 // pred_check_branch
      %122 = sbr.rel (0) target = $region65
    $region64: #{run.6} parent=1 // pred_region
      _
    $region65: #{run.6} parent=1 // pred_fallthru
      _
    // Predicated region
    $region66: #{run.6} parent=1 // pred_check
      _
    $region67: #{run.6} parent=1 // pred_check_branch
      %124 = sbr.rel (0) target = $region69
    $region68: #{run.6} parent=1 // pred_region
      _
    $region69: #{run.6} parent=1 // pred_fallthru
      _
    // Predicated region
    $region70: #{run.6} parent=1 // pred_check
      _
    $region71: #{run.6} parent=1 // pred_check_branch
      %126 = sbr.rel (0) target = $region73
    $region72: #{run.6} parent=1 // pred_region
      _
    $region73: #{run.6} parent=1 // pred_fallthru
      _
    // Predicated region
    $region74: #{run.6} parent=1 // pred_check
      _
    $region75: #{run.6} parent=1 // pred_check_branch
      %128 = sbr.rel (0) target = $region77
    $region76: #{run.6} parent=1 // pred_region
      _
    $region77: #{run.6} parent=1 // pred_fallthru
      _
    // Predicated region
    $region78: #{run.6} parent=1 // pred_check
      _
    $region79: #{run.6} parent=1 // pred_check_branch
      %130 = sbr.rel (0) target = $region81
    $region80: #{run.6} parent=1 // pred_region
      _
    $region81: #{run.6} parent=1 // pred_fallthru
      _
    // Predicated region
    $region82: #{run.6} parent=1 // pred_check
      _
    $region83: #{run.6} parent=1 // pred_check_branch
      %132 = sbr.rel (0) target = $region85
    $region84: #{run.6} parent=1 // pred_region
      _
    $region85: #{run.6} parent=1 // pred_fallthru
      _
    // Predicated region
    $region86: #{run.6} parent=1 // pred_check
      _
    $region87: #{run.6} parent=1 // pred_check_branch
      %134 = sbr.rel (0) target = $region89
    $region88: #{run.6} parent=1 // pred_region
      _
    $region89: #{run.6} parent=1 // pred_fallthru
      _
    // Predicated region
    $region90: #{run.6} parent=1 // pred_check
      _
    $region91: #{run.6} parent=1 // pred_check_branch
      %136 = sbr.rel (0) target = $region93
    $region92: #{run.6} parent=1 // pred_region
      _
    $region93: #{run.6} parent=1 // pred_fallthru
      _
    // Predicated region
    $region94: #{run.6} parent=1 // pred_check
      _
    $region95: #{run.6} parent=1 // pred_check_branch
      %138 = sbr.rel (0) target = $region97
    $region96: #{run.6} parent=1 // pred_region
      _
    $region97: #{run.6} parent=1 // pred_fallthru
      _
    // Predicated region
    $region98: #{run.6} parent=1 // pred_check
      _
    $region99: #{run.6} parent=1 // pred_check_branch
      %140 = sbr.rel (0) target = $region101
    $region100: #{run.6} parent=1 // pred_region
      _
    $region101: #{run.6} parent=1 // pred_fallthru
      _
    // Predicated region
    $region102: #{run.6} parent=1 // pred_check
      _
    $region103: #{run.6} parent=1 // pred_check_branch
      %142 = sbr.rel (0) target = $region105
    $region104: #{run.6} parent=1 // pred_region
      _
    $region105: #{run.6} parent=1 // pred_fallthru
      _
    // Predicated region
    $region106: #{run.6} parent=1 // pred_check
      _
    $region107: #{run.6} parent=1 // pred_check_branch
      %144 = sbr.rel (0) target = $region109
    $region108: #{run.6} parent=1 // pred_region
      _
    $region109: #{run.6} parent=1 // pred_fallthru
      _
    // Predicated region
    $region110: #{run.6} parent=1 // pred_check
      _
    $region111: #{run.6} parent=1 // pred_check_branch
      %146 = sbr.rel (0) target = $region113
    $region112: #{run.6} parent=1 // pred_region
      _
    $region113: #{run.6} parent=1 // pred_fallthru
      _
    // Predicated region
    $region114: #{run.6} parent=1 // pred_check
      _
    $region115: #{run.6} parent=1 // pred_check_branch
      %148 = sbr.rel (0) target = $region117
    $region116: #{run.6} parent=1 // pred_region
      _
    $region117: #{run.6} parent=1 // pred_fallthru
      _
    // Predicated region
    $region118: #{run.6} parent=1 // pred_check
      _
    $region119: #{run.6} parent=1 // pred_check_branch
      %150 = sbr.rel (0) target = $region121
    $region120: #{run.6} parent=1 // pred_region
      _
    $region121: #{run.6} parent=1 // pred_fallthru
      _
    // Predicated region
    $region122: #{run.6} parent=1 // pred_check
      _
    $region123: #{run.6} parent=1 // pred_check_branch
      %152 = sbr.rel (0) target = $region125
    $region124: #{run.6} parent=1 // pred_region
      _
    $region125: #{run.6} parent=1 // pred_fallthru
      _
    // Predicated region
    $region126: #{run.6} parent=1 // pred_check
      _
    $region127: #{run.6} parent=1 // pred_check_branch
      %154 = sbr.rel (0) target = $region129
    $region128: #{run.6} parent=1 // pred_region
      _
    $region129: #{run.6} parent=1 // pred_fallthru
      _
    // Predicated region
    $region130: #{run.6} parent=1 // pred_check
      _
    $region131: #{run.6} parent=1 // pred_check_branch
      %156 = sbr.rel (0) target = $region133
    $region132: #{run.6} parent=1 // pred_region
      _
    $region133: #{run.6} parent=1 // pred_fallthru
      _
    // Predicated region
    $region134: #{run.6} parent=1 // pred_check
      _
    $region135: #{run.6} parent=1 // pred_check_branch
      %158 = sbr.rel (0) target = $region137
    $region136: #{run.6} parent=1 // pred_region
      _
    $region137: #{run.6} parent=1 // pred_fallthru
      _
    // Predicated region
    $region138: #{run.6} parent=1 // pred_check
      _
    $region139: #{run.6} parent=1 // pred_check_branch
      %160 = sbr.rel (0) target = $region141
    $region140: #{run.6} parent=1 // pred_region
      _
    $region141: #{run.6} parent=1 // pred_fallthru
      _
    %v161 = vld [vmem:[%s1] sm:$0x3]
    %v162 = vld [vmem:[%s3] sm:$0x3]
    %v163 = vld [vmem:[%s15] sm:$0x1]
    %v164 = vld [vmem:[%s13] sm:$0xff]
    %v165 = vld [vmem:[%s13 + $0x8] sm:$0xff]
    %v166 = vld [vmem:[%s13 + $0x10] sm:$0xff]
    %v167 = vld [vmem:[%s13 + $0x18] sm:$0xff]
    %vm168 = vcmask 261120
    %v170 = vsel %vm168, %v161, 0
    %172 = vmatpush.msra.mxu0 0.0
    %173 = vmatpush.msra.mxu0 0.0
    %174 = vmatpush.msra.mxu0 0.0
    %175 = vmatpush.msra.mxu0 0.0
    %176 = vmatpush.msra.mxu0 0.0
    %177 = vmatpush.msra.mxu0 0.0
    %178 = vmatpush.msra.mxu0 0.0
    %179 = vmatpush.msra.mxu0 0.0
    %180 = vmatpush.msra.mxu0 0.0
    %181 = vmatpush.msra.mxu0 0.0
    %182 = vmatpush.msra.mxu0 0.0
    %183 = vmatpush.msra.mxu0 0.0
    %184 = vmatpush.msra.mxu0 %v167
    %185 = vmatpush.msra.mxu0 %v166
    %186 = vmatpush.msra.mxu0 %v165
    %187 = vmatpush.msra.mxu0 %v164
    %188 = vmatmul.f32.gmra.mxu0 %v170
    %v189 = vpop.f32.mrf.mxu0
    %v190 = vadd.f32 0.0, %v189
    %191 = vdwg.mxu0
    %v193 = vperm.slane %v163, 0
    %v195 = vadd.f32 %v193, %v190
    %v196 = vld [vmem:[%s13 + $0x20] sm:$0xff]
    %v197 = vld [vmem:[%s13 + $0x28] sm:$0xff]
    %v198 = vld [vmem:[%s13 + $0x30] sm:$0xff]
    %v199 = vld [vmem:[%s13 + $0x38] sm:$0xff]
    %v201 = vsel %vm168, %v162, 0
    %203 = vmatpush.msra.mxu0 0.0
    %204 = vmatpush.msra.mxu0 0.0
    %205 = vmatpush.msra.mxu0 0.0
    %206 = vmatpush.msra.mxu0 0.0
    %207 = vmatpush.msra.mxu0 0.0
    %208 = vmatpush.msra.mxu0 0.0
    %209 = vmatpush.msra.mxu0 0.0
    %210 = vmatpush.msra.mxu0 0.0
    %211 = vmatpush.msra.mxu0 0.0
    %212 = vmatpush.msra.mxu0 0.0
    %213 = vmatpush.msra.mxu0 0.0
    %214 = vmatpush.msra.mxu0 0.0
    %215 = vmatpush.msra.mxu0 %v199
    %216 = vmatpush.msra.mxu0 %v198
    %217 = vmatpush.msra.mxu0 %v197
    %218 = vmatpush.msra.mxu0 %v196
    %219 = vmatmul.f32.gmra.mxu0 %v201
    %v220 = vpop.f32.mrf.mxu0
    %v221 = vadd.f32 0.0, %v220
    %222 = vdwg.mxu0
    %v223 = vadd.f32 %v195, %v221
    %v224 = vld [vmem:[%s17] sm:$0xff]
    %v225 = vld [vmem:[%s17 + $0x8] sm:$0xff]
    %v226 = vld [vmem:[%s17 + $0x10] sm:$0xff]
    %v227 = vld [vmem:[%s17 + $0x18] sm:$0xff]
    %v228 = vld [vmem:[%s19] sm:$0x1]
    %v230 = vperm.slane %v228, 0
    %v233 = vsel %vm168, %v223, 0
    %235 = vmatpush.msra.mxu0 0.0
    %236 = vmatpush.msra.mxu0 0.0
    %237 = vmatpush.msra.mxu0 0.0
    %238 = vmatpush.msra.mxu0 0.0
    %239 = vmatpush.msra.mxu0 0.0
    %240 = vmatpush.msra.mxu0 0.0
    %241 = vmatpush.msra.mxu0 0.0
    %242 = vmatpush.msra.mxu0 0.0
    %243 = vmatpush.msra.mxu0 0.0
    %244 = vmatpush.msra.mxu0 0.0
    %245 = vmatpush.msra.mxu0 0.0
    %246 = vmatpush.msra.mxu0 0.0
    %247 = vmatpush.msra.mxu0 %v227
    %248 = vmatpush.msra.mxu0 %v226
    %249 = vmatpush.msra.mxu0 %v225
    %250 = vmatpush.msra.mxu0 %v224
    %251 = vmatmul.f32.gmra.mxu0 %v233
    %v252 = vpop.f32.mrf.mxu0
    %v253 = vadd.f32 %v230, %v252
    %254 = vdwg.mxu0
    %vm255 = vcmask 41984
    %256 = vst.msk [vmem:[#allocation4] sm:$0x3] %vm255, %v253
    %v257 = vld [vmem:[%s5] sm:$0x3]
    %v258 = vld [vmem:[%s25] sm:$0x1]
    %v259 = vld [vmem:[%s21] sm:$0xff]
    %v260 = vld [vmem:[%s21 + $0x8] sm:$0xff]
    %v261 = vld [vmem:[%s21 + $0x10] sm:$0xff]
    %v262 = vld [vmem:[%s21 + $0x18] sm:$0xff]
    %263 = vmatpush.msra.mxu0 0.0
    %264 = vmatpush.msra.mxu0 0.0
    %265 = vmatpush.msra.mxu0 0.0
    %266 = vmatpush.msra.mxu0 0.0
    %267 = vmatpush.msra.mxu0 0.0
    %268 = vmatpush.msra.mxu0 0.0
    %269 = vmatpush.msra.mxu0 0.0
    %270 = vmatpush.msra.mxu0 0.0
    %271 = vmatpush.msra.mxu0 0.0
    %272 = vmatpush.msra.mxu0 0.0
    %273 = vmatpush.msra.mxu0 0.0
    %274 = vmatpush.msra.mxu0 0.0
    %275 = vmatpush.msra.mxu0 %v262
    %276 = vmatpush.msra.mxu0 %v261
    %277 = vmatpush.msra.mxu0 %v260
    %278 = vmatpush.msra.mxu0 %v259
    %279 = vmatmul.f32.gmra.mxu0 %v233
    %v280 = vpop.f32.mrf.mxu0
    %v281 = vadd.f32 0.0, %v280
    %282 = vdwg.mxu0
    %v284 = vperm.slane %v258, 0
    %v286 = vadd.f32 %v284, %v281
    %v287 = vld [vmem:[%s21 + $0x20] sm:$0xff]
    %vm288 = vcmask 64512
    %v290 = vsel %vm288, %v257, 0
    %292 = vmatpush.msra.mxu0 0.0
    %293 = vmatpush.msra.mxu0 0.0
    %294 = vmatpush.msra.mxu0 0.0
    %295 = vmatpush.msra.mxu0 0.0
    %296 = vmatpush.msra.mxu0 0.0
    %297 = vmatpush.msra.mxu0 0.0
    %298 = vmatpush.msra.mxu0 0.0
    %299 = vmatpush.msra.mxu0 0.0
    %300 = vmatpush.msra.mxu0 0.0
    %301 = vmatpush.msra.mxu0 0.0
    %302 = vmatpush.msra.mxu0 0.0
    %303 = vmatpush.msra.mxu0 0.0
    %304 = vmatpush.msra.mxu0 0.0
    %305 = vmatpush.msra.mxu0 0.0
    %306 = vmatpush.msra.mxu0 0.0
    %307 = vmatpush.msra.mxu0 %v287
    %308 = vmatmul.f32.gmra.mxu0 %v290
    %v309 = vpop.f32.mrf.mxu0
    %v310 = vadd.f32 0.0, %v309
    %311 = vdwg.mxu0
    %v312 = vadd.f32 %v286, %v310
    %v313 = vld [vmem:[%s7] sm:$0x3]
    %v314 = vld [vmem:[%s23] sm:$0xff]
    %v315 = vld [vmem:[%s23 + $0x8] sm:$0xff]
    %v316 = vld [vmem:[%s23 + $0x10] sm:$0xff]
    %v317 = vld [vmem:[%s23 + $0x18] sm:$0xff]
    %v318 = vld [vmem:[%s27] sm:$0x1]
    %v320 = vperm.slane %v318, 0
    %v323 = vsel %vm168, %v313, 0
    %325 = vmatpush.msra.mxu0 0.0
    %326 = vmatpush.msra.mxu0 0.0
    %327 = vmatpush.msra.mxu0 0.0
    %328 = vmatpush.msra.mxu0 0.0
    %329 = vmatpush.msra.mxu0 0.0
    %330 = vmatpush.msra.mxu0 0.0
    %331 = vmatpush.msra.mxu0 0.0
    %332 = vmatpush.msra.mxu0 0.0
    %333 = vmatpush.msra.mxu0 0.0
    %334 = vmatpush.msra.mxu0 0.0
    %335 = vmatpush.msra.mxu0 0.0
    %336 = vmatpush.msra.mxu0 0.0
    %337 = vmatpush.msra.mxu0 %v317
    %338 = vmatpush.msra.mxu0 %v316
    %339 = vmatpush.msra.mxu0 %v315
    %340 = vmatpush.msra.mxu0 %v314
    %341 = vmatmul.f32.gmra.mxu0 %v323
    %v342 = vpop.f32.mrf.mxu0
    %v343 = vadd.f32 %v320, %v342
    %344 = vdwg.mxu0
    %v345 = vadd.f32 %v312, %v343
    %v346 = vxor.u32 %v345, 2147483648
    %v347 = vmul.f32 %v346, 1.442695
    %v348 = vpow.pop %v347
    %v349 = vadd.f32 %v348, 1.0
    %v350 = vrcp.pop %v349
    %v351 = vmul.f32 %v349, %v350
    %v352 = vsub.f32 1.0, %v351
    %v353 = vmul.f32 %v350, %v352
    %v354 = vadd.f32 %v350, %v353
    %vm355 = vweird.f32 %v349
    %vm356 = vweird.f32 %v350
    %vm357 = vmor %vm355, %vm356
    %v358 = vsel %vm357, %v350, %v354
    %v359 = vand.u32 2147483647, %v349
    %vm360 = vcmp.eq.f32.partialorder %v359, 8.507059e+37
    %v361 = vand.u32 %v349, 2147483648
    %v362 = vor.u32 1.1754944e-38, %v361
    %v363 = vsel %vm360, %v362, %v358
    %v364 = vmul.f32 1.0, %v363
    %366 = vrot.lane.b32.xlu0 %v343, 64
    %v367 = vpop.permute.xlu0 %366
    %v369 = vmul.f32 %v364, %v367
    %371 = vrot.lane.b32.xlu0 %v369, 64
    %v372 = vpop.permute.xlu0 %371
    %v374 = vadd.f32 %v312, %v372
    %v375 = vtanh.pop %v374
    %v376 = vsub.f32 1.0, %v364
    %378 = vrot.lane.b32.xlu0 %v375, 96
    %v379 = vpop.permute.xlu0 %378
    %v381 = vmul.f32 %v376, %v379
    %382 = vrot.lane.b32.xlu0 %v313, 32
    %v383 = vpop.permute.xlu0 %382
    %v385 = vmul.f32 %v364, %v383
    %v386 = vadd.f32 %v381, %v385
    %vm387 = vcmask 254976
    %388 = vst.msk [vmem:[%s71] sm:$0x3] %vm387, %v223
    %390 = vrot.lane.b32.xlu0 %v386, 96
    %v391 = vpop.permute.xlu0 %390
    %393 = vst.msk [vmem:[#allocation6] sm:$0x3] %vm387, %v391
    %v394 = vld [vmem:[%s29] sm:$0xff]
    %v395 = vld [vmem:[%s29 + $0x8] sm:$0xff]
    %v396 = vld [vmem:[%s29 + $0x10] sm:$0xff]
    %v397 = vld [vmem:[%s29 + $0x18] sm:$0xff]
    %v398 = vld [vmem:[%s31] sm:$0x1]
    %v400 = vperm.slane %v398, 0
    %v402 = vsel %vm168, %v391, 0
    %404 = vmatpush.msra.mxu0 0.0
    %405 = vmatpush.msra.mxu0 0.0
    %406 = vmatpush.msra.mxu0 0.0
    %407 = vmatpush.msra.mxu0 0.0
    %408 = vmatpush.msra.mxu0 0.0
    %409 = vmatpush.msra.mxu0 0.0
    %410 = vmatpush.msra.mxu0 0.0
    %411 = vmatpush.msra.mxu0 0.0
    %412 = vmatpush.msra.mxu0 0.0
    %413 = vmatpush.msra.mxu0 0.0
    %414 = vmatpush.msra.mxu0 0.0
    %415 = vmatpush.msra.mxu0 0.0
    %416 = vmatpush.msra.mxu0 %v397
    %417 = vmatpush.msra.mxu0 %v396
    %418 = vmatpush.msra.mxu0 %v395
    %419 = vmatpush.msra.mxu0 %v394
    %420 = vmatmul.f32.gmra.mxu0 %v402
    %v421 = vpop.f32.mrf.mxu0
    %v422 = vadd.f32 %v400, %v421
    %423 = vdwg.mxu0
    %v424 = vmax.f32 %v422, 0.0
    %v425 = vld [vmem:[%s33] sm:$0xff]
    %v426 = vld [vmem:[%s33 + $0x8] sm:$0xff]
    %v427 = vld [vmem:[%s33 + $0x10] sm:$0xff]
    %v428 = vld [vmem:[%s33 + $0x18] sm:$0xff]
    %v429 = vld [vmem:[%s35] sm:$0x1]
    %v431 = vperm.slane %v429, 0
    %v434 = vsel %vm168, %v424, 0
    %436 = vmatpush.msra.mxu0 0.0
    %437 = vmatpush.msra.mxu0 0.0
    %438 = vmatpush.msra.mxu0 0.0
    %439 = vmatpush.msra.mxu0 0.0
    %440 = vmatpush.msra.mxu0 0.0
    %441 = vmatpush.msra.mxu0 0.0
    %442 = vmatpush.msra.mxu0 0.0
    %443 = vmatpush.msra.mxu0 0.0
    %444 = vmatpush.msra.mxu0 0.0
    %445 = vmatpush.msra.mxu0 0.0
    %446 = vmatpush.msra.mxu0 0.0
    %447 = vmatpush.msra.mxu0 0.0
    %448 = vmatpush.msra.mxu0 %v428
    %449 = vmatpush.msra.mxu0 %v427
    %450 = vmatpush.msra.mxu0 %v426
    %451 = vmatpush.msra.mxu0 %v425
    %452 = vmatmul.f32.gmra.mxu0 %v434
    %v453 = vpop.f32.mrf.mxu0
    %v454 = vadd.f32 %v431, %v453
    %455 = vdwg.mxu0
    %v456 = vmax.f32 %v454, 0.0
    %v457 = vld [vmem:[%s9] sm:$0xff]
    %v458 = vld [vmem:[%s9 + $0x8] sm:$0x3]
    %v459 = vld [vmem:[%s37] sm:$0xff]
    %v460 = vld [vmem:[%s37 + $0x8] sm:$0xff]
    %v461 = vld [vmem:[%s41] sm:$0x1]
    %v463 = vperm.slane %v461, 0
    %vm465 = vcmask 130048
    %v467 = vsel %vm465, %v457, 0
    %v470 = vsel %vm465, %v458, 0
    %472 = vmatpush.msra.mxu0 0.0
    %473 = vmatpush.msra.mxu0 0.0
    %474 = vmatpush.msra.mxu0 0.0
    %475 = vmatpush.msra.mxu0 0.0
    %476 = vmatpush.msra.mxu0 0.0
    %477 = vmatpush.msra.mxu0 0.0
    %478 = vmatpush.msra.mxu0 0.0
    %479 = vmatpush.msra.mxu0 0.0
    %480 = vmatpush.msra.mxu0 0.0
    %481 = vmatpush.msra.mxu0 0.0
    %482 = vmatpush.msra.mxu0 0.0
    %483 = vmatpush.msra.mxu0 0.0
    %484 = vmatpush.msra.mxu0 0.0
    %485 = vmatpush.msra.mxu0 0.0
    %486 = vmatpush.msra.mxu0 %v460
    %487 = vmatpush.msra.mxu0 %v459
    %488 = vmatmul.f32.gmra.mxu0 %v467
    %v489 = vpop.f32.mrf.mxu0
    %v490 = vadd.f32 %v463, %v489
    %491 = vmatmul.f32.gmra.mxu0 %v470
    %v492 = vpop.f32.mrf.mxu0
    %v493 = vadd.f32 %v463, %v492
    %494 = vdwg.mxu0
    %vm495 = vcmask 785408
    %496 = vst.msk [vmem:[#allocation2] sm:$0xff] %vm495, %v490
    %vm497 = vcmask 779264
    %498 = vst.msk [vmem:[#allocation2 + $0x8] sm:$0x3] %vm497, %v493
    %v499 = vld [vmem:[%s39] sm:$0xff]
    %v500 = vld [vmem:[%s39 + $0x8] sm:$0xff]
    %v501 = vld [vmem:[%s39 + $0x10] sm:$0xff]
    %v502 = vld [vmem:[%s39 + $0x18] sm:$0xff]
    %v503 = vld [vmem:[%s43] sm:$0x1]
    %v504 = vld [vmem:[#allocation2] sm:$0x3]
    %v506 = vperm.slane %v503, 0
    %v509 = vsel %vm168, 0.0, 0
    %511 = vmatpush.msra.mxu0 0.0
    %512 = vmatpush.msra.mxu0 0.0
    %513 = vmatpush.msra.mxu0 0.0
    %514 = vmatpush.msra.mxu0 0.0
    %515 = vmatpush.msra.mxu0 0.0
    %516 = vmatpush.msra.mxu0 0.0
    %517 = vmatpush.msra.mxu0 0.0
    %518 = vmatpush.msra.mxu0 0.0
    %519 = vmatpush.msra.mxu0 0.0
    %520 = vmatpush.msra.mxu0 0.0
    %521 = vmatpush.msra.mxu0 0.0
    %522 = vmatpush.msra.mxu0 0.0
    %523 = vmatpush.msra.mxu0 %v502
    %524 = vmatpush.msra.mxu0 %v501
    %525 = vmatpush.msra.mxu0 %v500
    %526 = vmatpush.msra.mxu0 %v499
    %527 = vmatmul.f32.gmra.mxu0 %v509
    %v528 = vpop.f32.mrf.mxu0
    %v529 = vadd.f32 %v506, %v528
    %530 = vdwg.mxu0
    %v531 = vadd.f32 %v504, %v529
    %v532 = vxor.u32 %v531, 2147483648
    %v533 = vmul.f32 %v532, 1.442695
    %v534 = vpow.pop %v533
    %v535 = vadd.f32 %v534, 1.0
    %v536 = vrcp.pop %v535
    %v537 = vmul.f32 %v535, %v536
    %v538 = vsub.f32 1.0, %v537
    %v539 = vmul.f32 %v536, %v538
    %v540 = vadd.f32 %v536, %v539
    %vm541 = vweird.f32 %v535
    %vm542 = vweird.f32 %v536
    %vm543 = vmor %vm541, %vm542
    %v544 = vsel %vm543, %v536, %v540
    %v545 = vand.u32 2147483647, %v535
    %vm546 = vcmp.eq.f32.partialorder %v545, 8.507059e+37
    %v547 = vand.u32 %v535, 2147483648
    %v548 = vor.u32 1.1754944e-38, %v547
    %v549 = vsel %vm546, %v548, %v544
    %v550 = vmul.f32 1.0, %v549
    %552 = vrot.lane.b32.xlu0 %v529, 64
    %v553 = vpop.permute.xlu0 %552
    %v555 = vmul.f32 %v550, %v553
    %557 = vrot.lane.b32.xlu0 %v555, 64
    %v558 = vpop.permute.xlu0 %557
    %v560 = vadd.f32 %v504, %v558
    %v561 = vtanh.pop %v560
    %v562 = vsub.f32 1.0, %v550
    %564 = vrot.lane.b32.xlu0 %v561, 96
    %v565 = vpop.permute.xlu0 %564
    %v567 = vmul.f32 %v562, %v565
    %v568 = vmul.f32 %v550, 0.0
    %v569 = vadd.f32 %v567, %v568
    %v570 = vld [vmem:[#allocation2 + $0x2] sm:$0x3]
    %572 = vrot.lane.b32.xlu0 %v569, 96
    %v573 = vpop.permute.xlu0 %572
    %v574 = vsel %vm168, %v573, 0
    %576 = vmatpush.msra.mxu0 0.0
    %577 = vmatpush.msra.mxu0 0.0
    %578 = vmatpush.msra.mxu0 0.0
    %579 = vmatpush.msra.mxu0 0.0
    %580 = vmatpush.msra.mxu0 0.0
    %581 = vmatpush.msra.mxu0 0.0
    %582 = vmatpush.msra.mxu0 0.0
    %583 = vmatpush.msra.mxu0 0.0
    %584 = vmatpush.msra.mxu0 0.0
    %585 = vmatpush.msra.mxu0 0.0
    %586 = vmatpush.msra.mxu0 0.0
    %587 = vmatpush.msra.mxu0 0.0
    %588 = vmatpush.msra.mxu0 %v502
    %589 = vmatpush.msra.mxu0 %v501
    %590 = vmatpush.msra.mxu0 %v500
    %591 = vmatpush.msra.mxu0 %v499
    %592 = vmatmul.f32.gmra.mxu0 %v574
    %v593 = vpop.f32.mrf.mxu0
    %v594 = vadd.f32 %v506, %v593
    %595 = vdwg.mxu0
    %v596 = vadd.f32 %v570, %v594
    %v597 = vxor.u32 %v596, 2147483648
    %v598 = vmul.f32 %v597, 1.442695
    %v599 = vpow.pop %v598
    %v600 = vadd.f32 %v599, 1.0
    %v601 = vrcp.pop %v600
    %v602 = vmul.f32 %v600, %v601
    %v603 = vsub.f32 1.0, %v602
    %v604 = vmul.f32 %v601, %v603
    %v605 = vadd.f32 %v601, %v604
    %vm606 = vweird.f32 %v600
    %vm607 = vweird.f32 %v601
    %vm608 = vmor %vm606, %vm607
    %v609 = vsel %vm608, %v601, %v605
    %v610 = vand.u32 2147483647, %v600
    %vm611 = vcmp.eq.f32.partialorder %v610, 8.507059e+37
    %v612 = vand.u32 %v600, 2147483648
    %v613 = vor.u32 1.1754944e-38, %v612
    %v614 = vsel %vm611, %v613, %v609
    %v615 = vmul.f32 1.0, %v614
    %617 = vrot.lane.b32.xlu0 %v594, 64
    %v618 = vpop.permute.xlu0 %617
    %v620 = vmul.f32 %v615, %v618
    %622 = vrot.lane.b32.xlu0 %v620, 64
    %v623 = vpop.permute.xlu0 %622
    %v625 = vadd.f32 %v570, %v623
    %v626 = vtanh.pop %v625
    %v627 = vsub.f32 1.0, %v615
    %629 = vrot.lane.b32.xlu0 %v626, 96
    %v630 = vpop.permute.xlu0 %629
    %v632 = vmul.f32 %v627, %v630
    %v633 = vmul.f32 %v615, %v569
    %v634 = vadd.f32 %v632, %v633
    %v635 = vld [vmem:[#allocation2 + $0x4] sm:$0x3]
    %637 = vrot.lane.b32.xlu0 %v634, 96
    %v638 = vpop.permute.xlu0 %637
    %v639 = vsel %vm168, %v638, 0
    %641 = vmatpush.msra.mxu0 0.0
    %642 = vmatpush.msra.mxu0 0.0
    %643 = vmatpush.msra.mxu0 0.0
    %644 = vmatpush.msra.mxu0 0.0
    %645 = vmatpush.msra.mxu0 0.0
    %646 = vmatpush.msra.mxu0 0.0
    %647 = vmatpush.msra.mxu0 0.0
    %648 = vmatpush.msra.mxu0 0.0
    %649 = vmatpush.msra.mxu0 0.0
    %650 = vmatpush.msra.mxu0 0.0
    %651 = vmatpush.msra.mxu0 0.0
    %652 = vmatpush.msra.mxu0 0.0
    %653 = vmatpush.msra.mxu0 %v502
    %654 = vmatpush.msra.mxu0 %v501
    %655 = vmatpush.msra.mxu0 %v500
    %656 = vmatpush.msra.mxu0 %v499
    %657 = vmatmul.f32.gmra.mxu0 %v639
    %v658 = vpop.f32.mrf.mxu0
    %v659 = vadd.f32 %v506, %v658
    %660 = vdwg.mxu0
    %v661 = vadd.f32 %v635, %v659
    %v662 = vxor.u32 %v661, 2147483648
    %v663 = vmul.f32 %v662, 1.442695
    %v664 = vpow.pop %v663
    %v665 = vadd.f32 %v664, 1.0
    %v666 = vrcp.pop %v665
    %v667 = vmul.f32 %v665, %v666
    %v668 = vsub.f32 1.0, %v667
    %v669 = vmul.f32 %v666, %v668
    %v670 = vadd.f32 %v666, %v669
    %vm671 = vweird.f32 %v665
    %vm672 = vweird.f32 %v666
    %vm673 = vmor %vm671, %vm672
    %v674 = vsel %vm673, %v666, %v670
    %v675 = vand.u32 2147483647, %v665
    %vm676 = vcmp.eq.f32.partialorder %v675, 8.507059e+37
    %v677 = vand.u32 %v665, 2147483648
    %v678 = vor.u32 1.1754944e-38, %v677
    %v679 = vsel %vm676, %v678, %v674
    %v680 = vmul.f32 1.0, %v679
    %682 = vrot.lane.b32.xlu0 %v659, 64
    %v683 = vpop.permute.xlu0 %682
    %v685 = vmul.f32 %v680, %v683
    %687 = vrot.lane.b32.xlu0 %v685, 64
    %v688 = vpop.permute.xlu0 %687
    %v690 = vadd.f32 %v635, %v688
    %v691 = vtanh.pop %v690
    %v692 = vsub.f32 1.0, %v680
    %694 = vrot.lane.b32.xlu0 %v691, 96
    %v695 = vpop.permute.xlu0 %694
    %v697 = vmul.f32 %v692, %v695
    %v698 = vmul.f32 %v680, %v634
    %v699 = vadd.f32 %v697, %v698
    %v700 = vld [vmem:[#allocation2 + $0x6] sm:$0x3]
    %702 = vrot.lane.b32.xlu0 %v699, 96
    %v703 = vpop.permute.xlu0 %702
    %v704 = vsel %vm168, %v703, 0
    %706 = vmatpush.msra.mxu0 0.0
    %707 = vmatpush.msra.mxu0 0.0
    %708 = vmatpush.msra.mxu0 0.0
    %709 = vmatpush.msra.mxu0 0.0
    %710 = vmatpush.msra.mxu0 0.0
    %711 = vmatpush.msra.mxu0 0.0
    %712 = vmatpush.msra.mxu0 0.0
    %713 = vmatpush.msra.mxu0 0.0
    %714 = vmatpush.msra.mxu0 0.0
    %715 = vmatpush.msra.mxu0 0.0
    %716 = vmatpush.msra.mxu0 0.0
    %717 = vmatpush.msra.mxu0 0.0
    %718 = vmatpush.msra.mxu0 %v502
    %719 = vmatpush.msra.mxu0 %v501
    %720 = vmatpush.msra.mxu0 %v500
    %721 = vmatpush.msra.mxu0 %v499
    %722 = vmatmul.f32.gmra.mxu0 %v704
    %v723 = vpop.f32.mrf.mxu0
    %v724 = vadd.f32 %v506, %v723
    %725 = vdwg.mxu0
    %v726 = vadd.f32 %v700, %v724
    %v727 = vxor.u32 %v726, 2147483648
    %v728 = vmul.f32 %v727, 1.442695
    %v729 = vpow.pop %v728
    %v730 = vadd.f32 %v729, 1.0
    %v731 = vrcp.pop %v730
    %v732 = vmul.f32 %v730, %v731
    %v733 = vsub.f32 1.0, %v732
    %v734 = vmul.f32 %v731, %v733
    %v735 = vadd.f32 %v731, %v734
    %vm736 = vweird.f32 %v730
    %vm737 = vweird.f32 %v731
    %vm738 = vmor %vm736, %vm737
    %v739 = vsel %vm738, %v731, %v735
    %v740 = vand.u32 2147483647, %v730
    %vm741 = vcmp.eq.f32.partialorder %v740, 8.507059e+37
    %v742 = vand.u32 %v730, 2147483648
    %v743 = vor.u32 1.1754944e-38, %v742
    %v744 = vsel %vm741, %v743, %v739
    %v745 = vmul.f32 1.0, %v744
    %747 = vrot.lane.b32.xlu0 %v724, 64
    %v748 = vpop.permute.xlu0 %747
    %v750 = vmul.f32 %v745, %v748
    %752 = vrot.lane.b32.xlu0 %v750, 64
    %v753 = vpop.permute.xlu0 %752
    %v755 = vadd.f32 %v700, %v753
    %v756 = vtanh.pop %v755
    %v757 = vsub.f32 1.0, %v745
    %759 = vrot.lane.b32.xlu0 %v756, 96
    %v760 = vpop.permute.xlu0 %759
    %v762 = vmul.f32 %v757, %v760
    %v763 = vmul.f32 %v745, %v699
    %v764 = vadd.f32 %v762, %v763
    %v765 = vld [vmem:[#allocation2 + $0x8] sm:$0x3]
    %767 = vrot.lane.b32.xlu0 %v764, 96
    %v768 = vpop.permute.xlu0 %767
    %v769 = vsel %vm168, %v768, 0
    %771 = vmatpush.msra.mxu0 0.0
    %772 = vmatpush.msra.mxu0 0.0
    %773 = vmatpush.msra.mxu0 0.0
    %774 = vmatpush.msra.mxu0 0.0
    %775 = vmatpush.msra.mxu0 0.0
    %776 = vmatpush.msra.mxu0 0.0
    %777 = vmatpush.msra.mxu0 0.0
    %778 = vmatpush.msra.mxu0 0.0
    %779 = vmatpush.msra.mxu0 0.0
    %780 = vmatpush.msra.mxu0 0.0
    %781 = vmatpush.msra.mxu0 0.0
    %782 = vmatpush.msra.mxu0 0.0
    %783 = vmatpush.msra.mxu0 %v502
    %784 = vmatpush.msra.mxu0 %v501
    %785 = vmatpush.msra.mxu0 %v500
    %786 = vmatpush.msra.mxu0 %v499
    %787 = vmatmul.f32.gmra.mxu0 %v769
    %v788 = vpop.f32.mrf.mxu0
    %v789 = vadd.f32 %v506, %v788
    %790 = vdwg.mxu0
    %v791 = vadd.f32 %v765, %v789
    %v792 = vxor.u32 %v791, 2147483648
    %v793 = vmul.f32 %v792, 1.442695
    %v794 = vpow.pop %v793
    %v795 = vadd.f32 %v794, 1.0
    %v796 = vrcp.pop %v795
    %v797 = vmul.f32 %v795, %v796
    %v798 = vsub.f32 1.0, %v797
    %v799 = vmul.f32 %v796, %v798
    %v800 = vadd.f32 %v796, %v799
    %vm801 = vweird.f32 %v795
    %vm802 = vweird.f32 %v796
    %vm803 = vmor %vm801, %vm802
    %v804 = vsel %vm803, %v796, %v800
    %v805 = vand.u32 2147483647, %v795
    %vm806 = vcmp.eq.f32.partialorder %v805, 8.507059e+37
    %v807 = vand.u32 %v795, 2147483648
    %v808 = vor.u32 1.1754944e-38, %v807
    %v809 = vsel %vm806, %v808, %v804
    %v810 = vmul.f32 1.0, %v809
    %812 = vrot.lane.b32.xlu0 %v789, 64
    %v813 = vpop.permute.xlu0 %812
    %v815 = vmul.f32 %v810, %v813
    %817 = vrot.lane.b32.xlu0 %v815, 64
    %v818 = vpop.permute.xlu0 %817
    %v820 = vadd.f32 %v765, %v818
    %v821 = vtanh.pop %v820
    %v822 = vsub.f32 1.0, %v810
    %824 = vrot.lane.b32.xlu0 %v821, 96
    %v825 = vpop.permute.xlu0 %824
    %v827 = vmul.f32 %v822, %v825
    %v828 = vmul.f32 %v810, %v764
    %v829 = vadd.f32 %v827, %v828
    %v830 = vld [vmem:[%s11] sm:$0x3]
    %v831 = vld [vmem:[%s45] sm:$0x1f]
    %v832 = vld [vmem:[%s47] sm:$0x1]
    %v834 = vperm.slane %v832, 0
    %vm836 = vcmask 39936
    %v838 = vsel %vm836, %v830, 0
    %vm840 = vcmask 1044480
    %v842 = vsel %vm840, %v831, 0
    %844 = vmatpush.msra.mxu0 0.0
    %845 = vmatpush.msra.mxu0 0.0
    %846 = vmatpush.msra.mxu0 0.0
    %847 = vmatpush.msra.mxu0 0.0
    %848 = vmatpush.msra.mxu0 0.0
    %849 = vmatpush.msra.mxu0 0.0
    %850 = vmatpush.msra.mxu0 0.0
    %851 = vmatpush.msra.mxu0 0.0
    %852 = vmatpush.msra.mxu0 0.0
    %853 = vmatpush.msra.mxu0 0.0
    %854 = vmatpush.msra.mxu0 0.0
    %855 = vmatpush.msra.mxu0 0.0
    %856 = vmatpush.msra.mxu0 0.0
    %857 = vmatpush.msra.mxu0 0.0
    %858 = vmatpush.msra.mxu0 0.0
    %859 = vmatpush.msra.mxu0 %v842
    %860 = vmatmul.f32.gmra.mxu0 %v838
    %v861 = vpop.f32.mrf.mxu0
    %v862 = vadd.f32 %v834, %v861
    %863 = vdwg.mxu0
    %v864 = vld [vmem:[%s5] sm:$0x3]
    %v865 = vld [vmem:[%s49] sm:$0xff]
    %v866 = vld [vmem:[%s51] sm:$0x1]
    %v868 = vperm.slane %v866, 0
    %v871 = vsel %vm288, %v864, 0
    %873 = vmatpush.msra.mxu0 0.0
    %874 = vmatpush.msra.mxu0 0.0
    %875 = vmatpush.msra.mxu0 0.0
    %876 = vmatpush.msra.mxu0 0.0
    %877 = vmatpush.msra.mxu0 0.0
    %878 = vmatpush.msra.mxu0 0.0
    %879 = vmatpush.msra.mxu0 0.0
    %880 = vmatpush.msra.mxu0 0.0
    %881 = vmatpush.msra.mxu0 0.0
    %882 = vmatpush.msra.mxu0 0.0
    %883 = vmatpush.msra.mxu0 0.0
    %884 = vmatpush.msra.mxu0 0.0
    %885 = vmatpush.msra.mxu0 0.0
    %886 = vmatpush.msra.mxu0 0.0
    %887 = vmatpush.msra.mxu0 0.0
    %888 = vmatpush.msra.mxu0 %v865
    %889 = vmatmul.f32.gmra.mxu0 %v871
    %v890 = vpop.f32.mrf.mxu0
    %v891 = vadd.f32 %v868, %v890
    %892 = vdwg.mxu0
    %v893 = vld [vmem:[%s55] sm:$0x1]
    %v894 = vld [vmem:[%s53] sm:$0xff]
    %v895 = vld [vmem:[%s53 + $0x8] sm:$0xff]
    %v896 = vld [vmem:[%s53 + $0x10] sm:$0xff]
    %v897 = vld [vmem:[%s53 + $0x18] sm:$0xff]
    %v899 = vsel %vm168, %v891, 0
    %901 = vmatpush.msra.mxu0 0.0
    %902 = vmatpush.msra.mxu0 0.0
    %903 = vmatpush.msra.mxu0 0.0
    %904 = vmatpush.msra.mxu0 0.0
    %905 = vmatpush.msra.mxu0 0.0
    %906 = vmatpush.msra.mxu0 0.0
    %907 = vmatpush.msra.mxu0 0.0
    %908 = vmatpush.msra.mxu0 0.0
    %909 = vmatpush.msra.mxu0 0.0
    %910 = vmatpush.msra.mxu0 0.0
    %911 = vmatpush.msra.mxu0 0.0
    %912 = vmatpush.msra.mxu0 0.0
    %913 = vmatpush.msra.mxu0 %v897
    %914 = vmatpush.msra.mxu0 %v896
    %915 = vmatpush.msra.mxu0 %v895
    %916 = vmatpush.msra.mxu0 %v894
    %917 = vmatmul.f32.gmra.mxu0 %v899
    %v918 = vpop.f32.mrf.mxu0
    %v919 = vadd.f32 0.0, %v918
    %920 = vdwg.mxu0
    %v922 = vperm.slane %v893, 0
    %v924 = vadd.f32 %v922, %v919
    %v925 = vld [vmem:[%s53 + $0x20] sm:$0xff]
    %v926 = vld [vmem:[%s53 + $0x28] sm:$0xff]
    %v927 = vld [vmem:[%s53 + $0x30] sm:$0xff]
    %v928 = vld [vmem:[%s53 + $0x38] sm:$0xff]
    %v930 = vsel %vm168, %v456, 0
    %932 = vmatpush.msra.mxu0 0.0
    %933 = vmatpush.msra.mxu0 0.0
    %934 = vmatpush.msra.mxu0 0.0
    %935 = vmatpush.msra.mxu0 0.0
    %936 = vmatpush.msra.mxu0 0.0
    %937 = vmatpush.msra.mxu0 0.0
    %938 = vmatpush.msra.mxu0 0.0
    %939 = vmatpush.msra.mxu0 0.0
    %940 = vmatpush.msra.mxu0 0.0
    %941 = vmatpush.msra.mxu0 0.0
    %942 = vmatpush.msra.mxu0 0.0
    %943 = vmatpush.msra.mxu0 0.0
    %944 = vmatpush.msra.mxu0 %v928
    %945 = vmatpush.msra.mxu0 %v927
    %946 = vmatpush.msra.mxu0 %v926
    %947 = vmatpush.msra.mxu0 %v925
    %948 = vmatmul.f32.gmra.mxu0 %v930
    %v949 = vpop.f32.mrf.mxu0
    %v950 = vadd.f32 0.0, %v949
    %951 = vdwg.mxu0
    %v952 = vadd.f32 %v924, %v950
    %v953 = vld [vmem:[%s53 + $0x40] sm:$0xff]
    %v954 = vld [vmem:[%s53 + $0x48] sm:$0xff]
    %v955 = vld [vmem:[%s53 + $0x50] sm:$0xff]
    %v956 = vld [vmem:[%s53 + $0x58] sm:$0xff]
    %958 = vrot.lane.b32.xlu0 %v829, 96
    %v959 = vpop.permute.xlu0 %958
    %v960 = vsel %vm168, %v959, 0
    %962 = vmatpush.msra.mxu0 0.0
    %963 = vmatpush.msra.mxu0 0.0
    %964 = vmatpush.msra.mxu0 0.0
    %965 = vmatpush.msra.mxu0 0.0
    %966 = vmatpush.msra.mxu0 0.0
    %967 = vmatpush.msra.mxu0 0.0
    %968 = vmatpush.msra.mxu0 0.0
    %969 = vmatpush.msra.mxu0 0.0
    %970 = vmatpush.msra.mxu0 0.0
    %971 = vmatpush.msra.mxu0 0.0
    %972 = vmatpush.msra.mxu0 0.0
    %973 = vmatpush.msra.mxu0 0.0
    %974 = vmatpush.msra.mxu0 %v956
    %975 = vmatpush.msra.mxu0 %v955
    %976 = vmatpush.msra.mxu0 %v954
    %977 = vmatpush.msra.mxu0 %v953
    %978 = vmatmul.f32.gmra.mxu0 %v960
    %v979 = vpop.f32.mrf.mxu0
    %v980 = vadd.f32 0.0, %v979
    %981 = vdwg.mxu0
    %v982 = vadd.f32 %v952, %v980
    %v983 = vld [vmem:[%s53 + $0x60] sm:$0xff]
    %v984 = vld [vmem:[%s53 + $0x68] sm:$0xff]
    %v985 = vld [vmem:[%s53 + $0x70] sm:$0xff]
    %v986 = vld [vmem:[%s53 + $0x78] sm:$0xff]
    %v988 = vsel %vm168, %v862, 0
    %990 = vmatpush.msra.mxu0 0.0
    %991 = vmatpush.msra.mxu0 0.0
    %992 = vmatpush.msra.mxu0 0.0
    %993 = vmatpush.msra.mxu0 0.0
    %994 = vmatpush.msra.mxu0 0.0
    %995 = vmatpush.msra.mxu0 0.0
    %996 = vmatpush.msra.mxu0 0.0
    %997 = vmatpush.msra.mxu0 0.0
    %998 = vmatpush.msra.mxu0 0.0
    %999 = vmatpush.msra.mxu0 0.0
    %1000 = vmatpush.msra.mxu0 0.0
    %1001 = vmatpush.msra.mxu0 0.0
    %1002 = vmatpush.msra.mxu0 %v986
    %1003 = vmatpush.msra.mxu0 %v985
    %1004 = vmatpush.msra.mxu0 %v984
    %1005 = vmatpush.msra.mxu0 %v983
    %1006 = vmatmul.f32.gmra.mxu0 %v988
    %v1007 = vpop.f32.mrf.mxu0
    %v1008 = vadd.f32 0.0, %v1007
    %1009 = vdwg.mxu0
    %v1010 = vadd.f32 %v982, %v1008
    %v1011 = vld [vmem:[%s57] sm:$0xff]
    %v1012 = vld [vmem:[%s57 + $0x8] sm:$0xff]
    %v1013 = vld [vmem:[%s57 + $0x10] sm:$0xff]
    %v1014 = vld [vmem:[%s57 + $0x18] sm:$0xff]
    %v1015 = vld [vmem:[%s59] sm:$0x1]
    %v1017 = vperm.slane %v1015, 0
    %v1020 = vsel %vm168, %v1010, 0
    %1022 = vmatpush.msra.mxu0 0.0
    %1023 = vmatpush.msra.mxu0 0.0
    %1024 = vmatpush.msra.mxu0 0.0
    %1025 = vmatpush.msra.mxu0 0.0
    %1026 = vmatpush.msra.mxu0 0.0
    %1027 = vmatpush.msra.mxu0 0.0
    %1028 = vmatpush.msra.mxu0 0.0
    %1029 = vmatpush.msra.mxu0 0.0
    %1030 = vmatpush.msra.mxu0 0.0
    %1031 = vmatpush.msra.mxu0 0.0
    %1032 = vmatpush.msra.mxu0 0.0
    %1033 = vmatpush.msra.mxu0 0.0
    %1034 = vmatpush.msra.mxu0 %v1014
    %1035 = vmatpush.msra.mxu0 %v1013
    %1036 = vmatpush.msra.mxu0 %v1012
    %1037 = vmatpush.msra.mxu0 %v1011
    %1038 = vmatmul.f32.gmra.mxu0 %v1020
    %v1039 = vpop.f32.mrf.mxu0
    %v1040 = vadd.f32 %v1017, %v1039
    %1041 = vdwg.mxu0
    %vm1042 = vcmask 58368
    %v1043 = vsel %vm1042, %v1040, -inf
    %1044 = vmax.xlane.f32.xlu0 %v1043
    %v1045 = vpop.xlane.xlu0 %1044
    %v1046 = vsub.f32 %v1040, %v1045
    %v1047 = vmul.f32 %v1046, 1.442695
    %v1048 = vpow.pop %v1047
    %v1049 = vsel %vm1042, %v1048, 0.0
    %1050 = vadd.xlane.f32.xlu0 %v1049
    %v1051 = vpop.xlane.xlu0 %1050
    %v1052 = vrcp.pop %v1051
    %v1053 = vmul.f32 %v1051, %v1052
    %v1054 = vsub.f32 1.0, %v1053
    %v1055 = vmul.f32 %v1052, %v1054
    %v1056 = vadd.f32 %v1052, %v1055
    %vm1057 = vweird.f32 %v1051
    %vm1058 = vweird.f32 %v1052
    %vm1059 = vmor %vm1057, %vm1058
    %v1060 = vsel %vm1059, %v1052, %v1056
    %v1061 = vand.u32 2147483647, %v1051
    %vm1062 = vcmp.eq.f32.partialorder %v1061, 8.507059e+37
    %v1063 = vand.u32 %v1051, 2147483648
    %v1064 = vor.u32 1.1754944e-38, %v1063
    %v1065 = vsel %vm1062, %v1064, %v1060
    %v1066 = vmul.f32 %v1048, %v1065
    %v1067 = vld [vmem:[%s61] sm:$0xff]
    %v1069 = vsel %vm288, %v1066, 0
    %1071 = vmatpush.msra.mxu0 0.0
    %1072 = vmatpush.msra.mxu0 0.0
    %1073 = vmatpush.msra.mxu0 0.0
    %1074 = vmatpush.msra.mxu0 0.0
    %1075 = vmatpush.msra.mxu0 0.0
    %1076 = vmatpush.msra.mxu0 0.0
    %1077 = vmatpush.msra.mxu0 0.0
    %1078 = vmatpush.msra.mxu0 0.0
    %1079 = vmatpush.msra.mxu0 0.0
    %1080 = vmatpush.msra.mxu0 0.0
    %1081 = vmatpush.msra.mxu0 0.0
    %1082 = vmatpush.msra.mxu0 0.0
    %1083 = vmatpush.msra.mxu0 0.0
    %1084 = vmatpush.msra.mxu0 0.0
    %1085 = vmatpush.msra.mxu0 0.0
    %1086 = vmatpush.msra.mxu0 %v1067
    %1087 = vmatmul.f32.gmra.mxu0 %v1069
    %v1088 = vpop.f32.mrf.mxu0
    %v1089 = vadd.f32 0.0, %v1088
    %1090 = vdwg.mxu0
    %1092 = vrot.lane.b32.xlu0 %v1089, 32
    %v1093 = vpop.permute.xlu0 %1092
    %v1095 = vadd.f32 %v1010, %v1093
    %v1096 = vmul.f32 %v1095, 2.0
    %v1097 = vsub.f32 %v1096, 1.0
    %v1098 = vxor.u32 %v1097, 2147483648
    %v1099 = vmul.f32 %v1098, 1.442695
    %v1100 = vpow.pop %v1099
    %v1101 = vadd.f32 %v1100, 1.0
    %v1102 = vrcp.pop %v1101
    %v1103 = vmul.f32 %v1101, %v1102
    %v1104 = vsub.f32 1.0, %v1103
    %v1105 = vmul.f32 %v1102, %v1104
    %v1106 = vadd.f32 %v1102, %v1105
    %vm1107 = vweird.f32 %v1101
    %vm1108 = vweird.f32 %v1102
    %vm1109 = vmor %vm1107, %vm1108
    %v1110 = vsel %vm1109, %v1102, %v1106
    %v1111 = vand.u32 2147483647, %v1101
    %vm1112 = vcmp.eq.f32.partialorder %v1111, 8.507059e+37
    %v1113 = vand.u32 %v1101, 2147483648
    %v1114 = vor.u32 1.1754944e-38, %v1113
    %v1115 = vsel %vm1112, %v1114, %v1110
    %v1116 = vmul.f32 1.0, %v1115
    %1118 = vrot.lane.b32.xlu0 %v1116, 96
    %v1119 = vpop.permute.xlu0 %1118
    %1121 = vst.msk [vmem:[%s79] sm:$0x3] %vm255, %v1119
    %v1122 = vld [vmem:[%s63] sm:$0xff]
    %v1123 = vld [vmem:[%s63 + $0x8] sm:$0xff]
    %v1124 = vld [vmem:[%s63 + $0x10] sm:$0xff]
    %v1125 = vld [vmem:[%s63 + $0x18] sm:$0xff]
    %v1126 = vld [vmem:[%s65] sm:$0x1]
    %v1128 = vperm.slane %v1126, 0
    %1130 = vmatpush.msra.mxu0 0.0
    %1131 = vmatpush.msra.mxu0 0.0
    %1132 = vmatpush.msra.mxu0 0.0
    %1133 = vmatpush.msra.mxu0 0.0
    %1134 = vmatpush.msra.mxu0 0.0
    %1135 = vmatpush.msra.mxu0 0.0
    %1136 = vmatpush.msra.mxu0 0.0
    %1137 = vmatpush.msra.mxu0 0.0
    %1138 = vmatpush.msra.mxu0 0.0
    %1139 = vmatpush.msra.mxu0 0.0
    %1140 = vmatpush.msra.mxu0 0.0
    %1141 = vmatpush.msra.mxu0 0.0
    %1142 = vmatpush.msra.mxu0 %v1125
    %1143 = vmatpush.msra.mxu0 %v1124
    %1144 = vmatpush.msra.mxu0 %v1123
    %1145 = vmatpush.msra.mxu0 %v1122
    %1146 = vmatmul.f32.gmra.mxu0 %v1020
    %v1147 = vpop.f32.mrf.mxu0
    %v1148 = vadd.f32 %v1128, %v1147
    %1149 = vdwg.mxu0
    %v1150 = vld [vmem:[%s67] sm:$0xff]
    %v1151 = vld [vmem:[%s67 + $0x8] sm:$0xff]
    %v1152 = vld [vmem:[%s67 + $0x10] sm:$0xff]
    %v1153 = vld [vmem:[%s67 + $0x18] sm:$0xff]
    %v1154 = vld [vmem:[#allocation3] sm:$0x1]
    %v1156 = vperm.slane %v1154, 0
    %v1159 = vsel %vm168, %v1148, 0
    %1161 = vmatpush.msra.mxu0 0.0
    %1162 = vmatpush.msra.mxu0 0.0
    %1163 = vmatpush.msra.mxu0 0.0
    %1164 = vmatpush.msra.mxu0 0.0
    %1165 = vmatpush.msra.mxu0 0.0
    %1166 = vmatpush.msra.mxu0 0.0
    %1167 = vmatpush.msra.mxu0 0.0
    %1168 = vmatpush.msra.mxu0 0.0
    %1169 = vmatpush.msra.mxu0 0.0
    %1170 = vmatpush.msra.mxu0 0.0
    %1171 = vmatpush.msra.mxu0 0.0
    %1172 = vmatpush.msra.mxu0 0.0
    %1173 = vmatpush.msra.mxu0 %v1153
    %1174 = vmatpush.msra.mxu0 %v1152
    %1175 = vmatpush.msra.mxu0 %v1151
    %1176 = vmatpush.msra.mxu0 %v1150
    %1177 = vmatmul.f32.gmra.mxu0 %v1159
    %v1178 = vpop.f32.mrf.mxu0
    %v1179 = vadd.f32 %v1156, %v1178
    %1180 = vdwg.mxu0
    %vm1181 = vcmask 1024
    %1182 = vst.msk [vmem:[%s81] sm:$0x3] %vm1181, %v1179
    %1183 = vst.msk [vmem:[#allocation8] sm:$0x3] %vm1042, %v1040
    // Predicated region
    $region142: #{run.6} parent=1 // pred_check
      _
    $region143: #{run.6} parent=1 // pred_check_branch
      %1185 = sbr.rel (0) target = $region145
    $region144: #{run.6} parent=1 // pred_region
      _
    $region145: #{run.6} parent=1 // pred_fallthru
      _
    // Predicated region
    $region146: #{run.6} parent=1 // pred_check
      _
    $region147: #{run.6} parent=1 // pred_check_branch
      %1187 = sbr.rel (0) target = $region149
    $region148: #{run.6} parent=1 // pred_region
      %1189 = vsyncadd [#allocation5], 0
      %s1191 = sshll.u32 [#allocation4], 4
      %s1192 = int_to_ptr.vmem [resolvable:$true] %s1191
      %s1193 = sshll.u32 %s73, 4
      %s1194 = int_to_ptr.hbm [resolvable:$true] %s1193
      %1196 = dma.vmem_to_hbm [thread:$0]  %s1192, 32, %s1194, [#allocation5]
    $region149: #{run.6} parent=1 // pred_fallthru
      _
    // Predicated region
    $region150: #{run.6} parent=1 // pred_check
      _
    $region151: #{run.6} parent=1 // pred_check_branch
      %1198 = sbr.rel (0) target = $region153
    $region152: #{run.6} parent=1 // pred_region
      %1200 = vsyncadd [#allocation7], 0
      %s1202 = sshll.u32 [#allocation6], 4
      %s1203 = int_to_ptr.vmem [resolvable:$true] %s1202
      %s1204 = sshll.u32 %s75, 4
      %s1205 = int_to_ptr.hbm [resolvable:$true] %s1204
      %1207 = dma.vmem_to_hbm [thread:$0]  %s1203, 32, %s1205, [#allocation7]
    $region153: #{run.6} parent=1 // pred_fallthru
      _
    // Predicated region
    $region154: #{run.6} parent=1 // pred_check
      _
    $region155: #{run.6} parent=1 // pred_check_branch
      %1209 = sbr.rel (0) target = $region157
    $region156: #{run.6} parent=1 // pred_region
      %1211 = vsyncadd [#allocation7], 0
      %s1213 = sshll.u32 [#allocation8], 4
      %s1214 = int_to_ptr.vmem [resolvable:$true] %s1213
      %s1215 = sshll.u32 %s77, 4
      %s1216 = int_to_ptr.hbm [resolvable:$true] %s1215
      %1218 = dma.vmem_to_hbm [thread:$0]  %s1214, 32, %s1216, [#allocation7]
    $region157: #{run.6} parent=1 // pred_fallthru
      _
    // Predicated region
    $region158: #{run.6} parent=1 // pred_check
      _
    $region159: #{run.6} parent=1 // pred_check_branch
      %1220 = sbr.rel (0) target = $region161
    $region160: #{run.6} parent=1 // pred_region
      _
    $region161: #{run.6} parent=1 // pred_fallthru
      _
    // Predicated region
    $region162: #{run.6} parent=1 // pred_check
      _
    $region163: #{run.6} parent=1 // pred_check_branch
      %1222 = sbr.rel (0) target = $region165
    $region164: #{run.6} parent=1 // pred_region
      _
    $region165: #{run.6} parent=1 // pred_fallthru
      _
    // Predicated region
    $region166: #{run.6} parent=1 // pred_check
      _
    $region167: #{run.6} parent=1 // pred_check_branch
      %1224 = sbr.rel (0) target = $region169
    $region168: #{run.6} parent=1 // pred_region
      _
    $region169: #{run.6} parent=1 // pred_fallthru
      _
    // Predicated region
    $region170: #{run.6} parent=1 // pred_check
      _
    $region171: #{run.6} parent=1 // pred_check_branch
      %1226 = sbr.rel (0) target = $region173
    $region172: #{run.6} parent=1 // pred_region
      %1228 = dma.done [#allocation5], 32
    $region173: #{run.6} parent=1 // pred_fallthru
      _
    // Predicated region
    $region174: #{run.6} parent=1 // pred_check
      _
    $region175: #{run.6} parent=1 // pred_check_branch
      %1230 = sbr.rel (0) target = $region177
    $region176: #{run.6} parent=1 // pred_region
      %1232 = dma.done [#allocation7], 32
    $region177: #{run.6} parent=1 // pred_fallthru
      _
    // Predicated region
    $region178: #{run.6} parent=1 // pred_check
      _
    $region179: #{run.6} parent=1 // pred_check_branch
      %1234 = sbr.rel (0) target = $region181
    $region180: #{run.6} parent=1 // pred_region
      %1236 = dma.done [#allocation7], 32
    $region181: #{run.6} parent=1 // pred_fallthru
      _
    // Predicated region
    $region182: #{run.6} parent=1 // pred_check
      _
    $region183: #{run.6} parent=1 // pred_check_branch
      %1238 = sbr.rel (0) target = $region185
    $region184: #{run.6} parent=1 // pred_region
      _
    $region185: #{run.6} parent=1 // pred_fallthru
      _
    // Predicated region
    $region186: #{run.6} parent=1 // pred_check
      _
    $region187: #{run.6} parent=1 // pred_check_branch
      %1240 = sbr.rel (0) target = $region189
    $region188: #{run.6} parent=1 // pred_region
      _
    $region189: #{run.6} parent=1 // pred_fallthru
      _
    %1241 = vsyncpa [#allocation5], 1
    %1242 = vsyncpa [#allocation7], 1

// kernel: run.7
$region0: #{run.7}
  #allocation0 [shape = 'u32[]', space=smem, size = 0x4, offset = 0x4, fixed_abs, tag = 'smem constant byte address 0x4 - core index']
  #allocation1 [shape = 'u32[72,128]{1,0:T(1,128)}', space=vmem, size = 0x9000, scoped, tag = 'internal scratch']
  %s0 = inlined_call_operand.vmem [shape: f32[3,2,32], index: 0, kind: input, shape index: {}]
  %s1 = inlined_call_operand.vmem [shape: f32[2,32], index: 1, kind: input, shape index: {}]
  %s2 = inlined_call_operand.vmem [shape: f32[2,8,32], index: 2, kind: input, shape index: {}]
  %s3 = inlined_call_operand.vmem [shape: f32[2,8], index: 3, kind: input, shape index: {}]
  %s4 = inlined_call_operand.vmem [shape: f32[2,6,32], index: 4, kind: input, shape index: {}]
  %s5 = inlined_call_operand.vmem [shape: f32[2,6], index: 5, kind: input, shape index: {}]
  %s6 = inlined_call_operand.vmem [shape: f32[2,8,32], index: 6, kind: input, shape index: {}]
  %s7 = inlined_call_operand.vmem [shape: f32[2,6,32], index: 7, kind: input, shape index: {}]
  %s8 = inlined_call_operand.vmem [shape: f32[32,32], index: 8, kind: input, shape index: {}]
  %s9 = inlined_call_operand.vmem [shape: f32[32,35], index: 9, kind: input, shape index: {}]
  %s10 = inlined_call_operand.vmem [shape: f32[32,99], index: 10, kind: input, shape index: {}]
  %s11 = inlined_call_operand.vmem [shape: f32[32,96], index: 11, kind: input, shape index: {}]
  %s12 = inlined_call_operand.vmem [shape: f32[1,96], index: 12, kind: input, shape index: {}]
  %s13 = inlined_call_operand.vmem [shape: f32[1,96], index: 13, kind: input, shape index: {}]
  %s14 = inlined_call_operand.vmem [shape: f32[32,3], index: 14, kind: input, shape index: {}]
  %s15 = inlined_call_operand.vmem [shape: f32[32,3], index: 15, kind: input, shape index: {}]
  %s16 = inlined_call_operand.vmem [shape: f32[1,3], index: 16, kind: input, shape index: {}]
  %s17 = inlined_call_operand.vmem [shape: f32[32,3], index: 17, kind: input, shape index: {}]
  %s18 = inlined_call_operand.vmem [shape: f32[1,3], index: 18, kind: input, shape index: {}]
  %s19 = inlined_call_operand.vmem [shape: f32[3,2,4,32], index: 19, kind: output, shape index: {0}]
  %s20 = inlined_call_operand.hbm [shape: f32[3,2,3], index: 20, kind: output, shape index: {1}]
  %21 = xla_tuple %s19, %s20
  %s22 = sld [smem:[#allocation0]]
  $region117: #{run.7} parent=0
    _
  %s24 = ssub.s32 1, %s22
  %s25 = scalar_select 0, %s24, %s22
  $region1: #{run.7} parent=0
    #allocation2 [shape = 'u8[2048]{0}', space=vmem, size = 0x800, scoped, tag = 'output window, operand 1']
    #allocation3 [shape = 's32[2]{0}', space=sflag, size = 0x8, scoped, tag = 'scoped memory for run.7']
    %26 = vsyncpa [#allocation3], 0
    %s27 = scalar_lea.sflag [#allocation3], 1
    %28 = vsyncpa %s27, 0
    loop: start=0, step=1, limit=5
    $region2: #{run.7} parent=1 // loop_pre_header
      _
    $region3: #{run.7} parent=1 // loop_header
      %s30 = sphi 0, %s34
      %p31 = scmp.ge.s32.totalorder %s30, 5
      %s40 = sphi 0, %s42
      %s43 = sphi 0, %s40
      %s44 = sphi 0, %s43
      %s60 = sphi 0, %s44
      %s64 = sphi 0, %s64
      %s66 = sphi 0, %s64
      %s67 = sphi 0, %s66
      %s81 = sphi 0, %s67
      %s85 = sphi 0, %s85
      %s87 = sphi 0, %s85
      %s88 = sphi 0, %s87
      %s102 = sphi 0, %s88
      %s106 = sphi 0, %s106
      %s108 = sphi 0, %s106
      %s109 = sphi 0, %s108
      %s123 = sphi 0, %s109
      %s127 = sphi 0, %s127
      %s129 = sphi 0, %s127
      %s130 = sphi 0, %s129
      %s144 = sphi 0, %s130
      %s148 = sphi 0, %s148
      %s150 = sphi 0, %s148
      %s151 = sphi 0, %s150
      %s165 = sphi 0, %s151
      %s169 = sphi 0, %s169
      %s171 = sphi 0, %s169
      %s172 = sphi 0, %s171
      %s186 = sphi 0, %s172
      %s190 = sphi 0, %s190
      %s192 = sphi 0, %s190
      %s193 = sphi 0, %s192
      %s207 = sphi 0, %s193
      %s211 = sphi 0, %s211
      %s213 = sphi 0, %s211
      %s214 = sphi 0, %s213
      %s228 = sphi 0, %s214
      %s232 = sphi 0, %s232
      %s234 = sphi 0, %s232
      %s235 = sphi 0, %s234
      %s249 = sphi 0, %s235
      %s253 = sphi 0, %s253
      %s255 = sphi 0, %s253
      %s256 = sphi 0, %s255
      %s270 = sphi 0, %s256
      %s274 = sphi 0, %s274
      %s276 = sphi 0, %s274
      %s277 = sphi 0, %s276
      %s291 = sphi 0, %s277
      %s295 = sphi 0, %s295
      %s297 = sphi 0, %s295
      %s298 = sphi 0, %s297
      %s312 = sphi 0, %s298
      %s316 = sphi 0, %s316
      %s318 = sphi 0, %s316
      %s319 = sphi 0, %s318
      %s333 = sphi 0, %s319
      %s337 = sphi 0, %s337
      %s339 = sphi 0, %s337
      %s340 = sphi 0, %s339
      %s354 = sphi 0, %s340
      %s358 = sphi 0, %s358
      %s360 = sphi 0, %s358
      %s361 = sphi 0, %s360
      %s375 = sphi 0, %s361
      %s379 = sphi 0, %s379
      %s381 = sphi 0, %s379
      %s382 = sphi 0, %s381
      %s396 = sphi 0, %s382
      %s400 = sphi 0, %s400
      %s402 = sphi 0, %s400
      %s403 = sphi 0, %s402
      %s417 = sphi 0, %s403
      %s421 = sphi 0, %s421
      %s423 = sphi 0, %s421
      %s424 = sphi 0, %s423
      %s438 = sphi 0, %s424
      %s444 = sphi 0, %s446
      %s447 = sphi 0, %s444
      %s448 = sphi 0, %s447
      %s464 = sphi 0, %s448
      %s470 = sphi 0, %s472
      %s473 = sphi 0, %s470
      %s474 = sphi 0, %s473
      %s490 = sphi 0, %s474
    $region4: #{run.7} parent=1 // loop_header_branch
      %33 = sbr.rel (%p31) target = $region8
    $region5: #{run.7} parent=1 // loop_body
      %s35 = ssub.s32 %s30, 1
      %s36 = ssub.s32 %s30, 2
      %s37 = sadd.s32 %s30, 1
      %s38 = ssub.s32 %s30, %s37
      %p39 = scmp.eq.s32.totalorder %s38, 0
      %s41 = sadd.s32 %s40, 1
      %s42 = scalar_select %p39, %s40, %s41
      %p45 = pneg %p39
      %p46 = scmp.eq.s32.totalorder %s30, 2
      %p47 = por %p45, %p46
      %p48 = scmp.ne.s32.totalorder %s40, %s43
      %p49 = scmp.eq.s32.totalorder %s30, 0
      %p50 = por %p48, %p49
      %p51 = scmp.ne.s32.totalorder %s40, %s43
      %p52 = scmp.eq.s32.totalorder %s35, 2
      %p53 = por %p51, %p52
      %p54 = scmp.ne.s32.totalorder %s43, %s44
      %p55 = scmp.eq.s32.totalorder %s35, 0
      %p56 = por %p54, %p55
      %p57 = scmp.ne.s32.totalorder %s43, %s44
      %p58 = scmp.eq.s32.totalorder %s36, 2
      %p59 = por %p57, %p58
      %p61 = scmp.ne.s32.totalorder %s44, %s60
      %p62 = scmp.eq.s32.totalorder %s36, 0
      %p63 = por %p61, %p62
      %s65 = sadd.s32 %s64, 1
      %p68 = scmp.eq.s32.totalorder %s30, 2
      %p69 = scmp.ne.s32.totalorder %s64, %s66
      %p70 = scmp.eq.s32.totalorder %s30, 0
      %p71 = por %p69, %p70
      %p72 = scmp.ne.s32.totalorder %s64, %s66
      %p73 = scmp.eq.s32.totalorder %s35, 2
      %p74 = por %p72, %p73
      %p75 = scmp.ne.s32.totalorder %s66, %s67
      %p76 = scmp.eq.s32.totalorder %s35, 0
      %p77 = por %p75, %p76
      %p78 = scmp.ne.s32.totalorder %s66, %s67
      %p79 = scmp.eq.s32.totalorder %s36, 2
      %p80 = por %p78, %p79
      %p82 = scmp.ne.s32.totalorder %s67, %s81
      %p83 = scmp.eq.s32.totalorder %s36, 0
      %p84 = por %p82, %p83
      %s86 = sadd.s32 %s85, 1
      %p89 = scmp.eq.s32.totalorder %s30, 2
      %p90 = scmp.ne.s32.totalorder %s85, %s87
      %p91 = scmp.eq.s32.totalorder %s30, 0
      %p92 = por %p90, %p91
      %p93 = scmp.ne.s32.totalorder %s85, %s87
      %p94 = scmp.eq.s32.totalorder %s35, 2
      %p95 = por %p93, %p94
      %p96 = scmp.ne.s32.totalorder %s87, %s88
      %p97 = scmp.eq.s32.totalorder %s35, 0
      %p98 = por %p96, %p97
      %p99 = scmp.ne.s32.totalorder %s87, %s88
      %p100 = scmp.eq.s32.totalorder %s36, 2
      %p101 = por %p99, %p100
      %p103 = scmp.ne.s32.totalorder %s88, %s102
      %p104 = scmp.eq.s32.totalorder %s36, 0
      %p105 = por %p103, %p104
      %s107 = sadd.s32 %s106, 1
      %p110 = scmp.eq.s32.totalorder %s30, 2
      %p111 = scmp.ne.s32.totalorder %s106, %s108
      %p112 = scmp.eq.s32.totalorder %s30, 0
      %p113 = por %p111, %p112
      %p114 = scmp.ne.s32.totalorder %s106, %s108
      %p115 = scmp.eq.s32.totalorder %s35, 2
      %p116 = por %p114, %p115
      %p117 = scmp.ne.s32.totalorder %s108, %s109
      %p118 = scmp.eq.s32.totalorder %s35, 0
      %p119 = por %p117, %p118
      %p120 = scmp.ne.s32.totalorder %s108, %s109
      %p121 = scmp.eq.s32.totalorder %s36, 2
      %p122 = por %p120, %p121
      %p124 = scmp.ne.s32.totalorder %s109, %s123
      %p125 = scmp.eq.s32.totalorder %s36, 0
      %p126 = por %p124, %p125
      %s128 = sadd.s32 %s127, 1
      %p131 = scmp.eq.s32.totalorder %s30, 2
      %p132 = scmp.ne.s32.totalorder %s127, %s129
      %p133 = scmp.eq.s32.totalorder %s30, 0
      %p134 = por %p132, %p133
      %p135 = scmp.ne.s32.totalorder %s127, %s129
      %p136 = scmp.eq.s32.totalorder %s35, 2
      %p137 = por %p135, %p136
      %p138 = scmp.ne.s32.totalorder %s129, %s130
      %p139 = scmp.eq.s32.totalorder %s35, 0
      %p140 = por %p138, %p139
      %p141 = scmp.ne.s32.totalorder %s129, %s130
      %p142 = scmp.eq.s32.totalorder %s36, 2
      %p143 = por %p141, %p142
      %p145 = scmp.ne.s32.totalorder %s130, %s144
      %p146 = scmp.eq.s32.totalorder %s36, 0
      %p147 = por %p145, %p146
      %s149 = sadd.s32 %s148, 1
      %p152 = scmp.eq.s32.totalorder %s30, 2
      %p153 = scmp.ne.s32.totalorder %s148, %s150
      %p154 = scmp.eq.s32.totalorder %s30, 0
      %p155 = por %p153, %p154
      %p156 = scmp.ne.s32.totalorder %s148, %s150
      %p157 = scmp.eq.s32.totalorder %s35, 2
      %p158 = por %p156, %p157
      %p159 = scmp.ne.s32.totalorder %s150, %s151
      %p160 = scmp.eq.s32.totalorder %s35, 0
      %p161 = por %p159, %p160
      %p162 = scmp.ne.s32.totalorder %s150, %s151
      %p163 = scmp.eq.s32.totalorder %s36, 2
      %p164 = por %p162, %p163
      %p166 = scmp.ne.s32.totalorder %s151, %s165
      %p167 = scmp.eq.s32.totalorder %s36, 0
      %p168 = por %p166, %p167
      %s170 = sadd.s32 %s169, 1
      %p173 = scmp.eq.s32.totalorder %s30, 2
      %p174 = scmp.ne.s32.totalorder %s169, %s171
      %p175 = scmp.eq.s32.totalorder %s30, 0
      %p176 = por %p174, %p175
      %p177 = scmp.ne.s32.totalorder %s169, %s171
      %p178 = scmp.eq.s32.totalorder %s35, 2
      %p179 = por %p177, %p178
      %p180 = scmp.ne.s32.totalorder %s171, %s172
      %p181 = scmp.eq.s32.totalorder %s35, 0
      %p182 = por %p180, %p181
      %p183 = scmp.ne.s32.totalorder %s171, %s172
      %p184 = scmp.eq.s32.totalorder %s36, 2
      %p185 = por %p183, %p184
      %p187 = scmp.ne.s32.totalorder %s172, %s186
      %p188 = scmp.eq.s32.totalorder %s36, 0
      %p189 = por %p187, %p188
      %s191 = sadd.s32 %s190, 1
      %p194 = scmp.eq.s32.totalorder %s30, 2
      %p195 = scmp.ne.s32.totalorder %s190, %s192
      %p196 = scmp.eq.s32.totalorder %s30, 0
      %p197 = por %p195, %p196
      %p198 = scmp.ne.s32.totalorder %s190, %s192
      %p199 = scmp.eq.s32.totalorder %s35, 2
      %p200 = por %p198, %p199
      %p201 = scmp.ne.s32.totalorder %s192, %s193
      %p202 = scmp.eq.s32.totalorder %s35, 0
      %p203 = por %p201, %p202
      %p204 = scmp.ne.s32.totalorder %s192, %s193
      %p205 = scmp.eq.s32.totalorder %s36, 2
      %p206 = por %p204, %p205
      %p208 = scmp.ne.s32.totalorder %s193, %s207
      %p209 = scmp.eq.s32.totalorder %s36, 0
      %p210 = por %p208, %p209
      %s212 = sadd.s32 %s211, 1
      %p215 = scmp.eq.s32.totalorder %s30, 2
      %p216 = scmp.ne.s32.totalorder %s211, %s213
      %p217 = scmp.eq.s32.totalorder %s30, 0
      %p218 = por %p216, %p217
      %p219 = scmp.ne.s32.totalorder %s211, %s213
      %p220 = scmp.eq.s32.totalorder %s35, 2
      %p221 = por %p219, %p220
      %p222 = scmp.ne.s32.totalorder %s213, %s214
      %p223 = scmp.eq.s32.totalorder %s35, 0
      %p224 = por %p222, %p223
      %p225 = scmp.ne.s32.totalorder %s213, %s214
      %p226 = scmp.eq.s32.totalorder %s36, 2
      %p227 = por %p225, %p226
      %p229 = scmp.ne.s32.totalorder %s214, %s228
      %p230 = scmp.eq.s32.totalorder %s36, 0
      %p231 = por %p229, %p230
      %s233 = sadd.s32 %s232, 1
      %p236 = scmp.eq.s32.totalorder %s30, 2
      %p237 = scmp.ne.s32.totalorder %s232, %s234
      %p238 = scmp.eq.s32.totalorder %s30, 0
      %p239 = por %p237, %p238
      %p240 = scmp.ne.s32.totalorder %s232, %s234
      %p241 = scmp.eq.s32.totalorder %s35, 2
      %p242 = por %p240, %p241
      %p243 = scmp.ne.s32.totalorder %s234, %s235
      %p244 = scmp.eq.s32.totalorder %s35, 0
      %p245 = por %p243, %p244
      %p246 = scmp.ne.s32.totalorder %s234, %s235
      %p247 = scmp.eq.s32.totalorder %s36, 2
      %p248 = por %p246, %p247
      %p250 = scmp.ne.s32.totalorder %s235, %s249
      %p251 = scmp.eq.s32.totalorder %s36, 0
      %p252 = por %p250, %p251
      %s254 = sadd.s32 %s253, 1
      %p257 = scmp.eq.s32.totalorder %s30, 2
      %p258 = scmp.ne.s32.totalorder %s253, %s255
      %p259 = scmp.eq.s32.totalorder %s30, 0
      %p260 = por %p258, %p259
      %p261 = scmp.ne.s32.totalorder %s253, %s255
      %p262 = scmp.eq.s32.totalorder %s35, 2
      %p263 = por %p261, %p262
      %p264 = scmp.ne.s32.totalorder %s255, %s256
      %p265 = scmp.eq.s32.totalorder %s35, 0
      %p266 = por %p264, %p265
      %p267 = scmp.ne.s32.totalorder %s255, %s256
      %p268 = scmp.eq.s32.totalorder %s36, 2
      %p269 = por %p267, %p268
      %p271 = scmp.ne.s32.totalorder %s256, %s270
      %p272 = scmp.eq.s32.totalorder %s36, 0
      %p273 = por %p271, %p272
      %s275 = sadd.s32 %s274, 1
      %p278 = scmp.eq.s32.totalorder %s30, 2
      %p279 = scmp.ne.s32.totalorder %s274, %s276
      %p280 = scmp.eq.s32.totalorder %s30, 0
      %p281 = por %p279, %p280
      %p282 = scmp.ne.s32.totalorder %s274, %s276
      %p283 = scmp.eq.s32.totalorder %s35, 2
      %p284 = por %p282, %p283
      %p285 = scmp.ne.s32.totalorder %s276, %s277
      %p286 = scmp.eq.s32.totalorder %s35, 0
      %p287 = por %p285, %p286
      %p288 = scmp.ne.s32.totalorder %s276, %s277
      %p289 = scmp.eq.s32.totalorder %s36, 2
      %p290 = por %p288, %p289
      %p292 = scmp.ne.s32.totalorder %s277, %s291
      %p293 = scmp.eq.s32.totalorder %s36, 0
      %p294 = por %p292, %p293
      %s296 = sadd.s32 %s295, 1
      %p299 = scmp.eq.s32.totalorder %s30, 2
      %p300 = scmp.ne.s32.totalorder %s295, %s297
      %p301 = scmp.eq.s32.totalorder %s30, 0
      %p302 = por %p300, %p301
      %p303 = scmp.ne.s32.totalorder %s295, %s297
      %p304 = scmp.eq.s32.totalorder %s35, 2
      %p305 = por %p303, %p304
      %p306 = scmp.ne.s32.totalorder %s297, %s298
      %p307 = scmp.eq.s32.totalorder %s35, 0
      %p308 = por %p306, %p307
      %p309 = scmp.ne.s32.totalorder %s297, %s298
      %p310 = scmp.eq.s32.totalorder %s36, 2
      %p311 = por %p309, %p310
      %p313 = scmp.ne.s32.totalorder %s298, %s312
      %p314 = scmp.eq.s32.totalorder %s36, 0
      %p315 = por %p313, %p314
      %s317 = sadd.s32 %s316, 1
      %p320 = scmp.eq.s32.totalorder %s30, 2
      %p321 = scmp.ne.s32.totalorder %s316, %s318
      %p322 = scmp.eq.s32.totalorder %s30, 0
      %p323 = por %p321, %p322
      %p324 = scmp.ne.s32.totalorder %s316, %s318
      %p325 = scmp.eq.s32.totalorder %s35, 2
      %p326 = por %p324, %p325
      %p327 = scmp.ne.s32.totalorder %s318, %s319
      %p328 = scmp.eq.s32.totalorder %s35, 0
      %p329 = por %p327, %p328
      %p330 = scmp.ne.s32.totalorder %s318, %s319
      %p331 = scmp.eq.s32.totalorder %s36, 2
      %p332 = por %p330, %p331
      %p334 = scmp.ne.s32.totalorder %s319, %s333
      %p335 = scmp.eq.s32.totalorder %s36, 0
      %p336 = por %p334, %p335
      %s338 = sadd.s32 %s337, 1
      %p341 = scmp.eq.s32.totalorder %s30, 2
      %p342 = scmp.ne.s32.totalorder %s337, %s339
      %p343 = scmp.eq.s32.totalorder %s30, 0
      %p344 = por %p342, %p343
      %p345 = scmp.ne.s32.totalorder %s337, %s339
      %p346 = scmp.eq.s32.totalorder %s35, 2
      %p347 = por %p345, %p346
      %p348 = scmp.ne.s32.totalorder %s339, %s340
      %p349 = scmp.eq.s32.totalorder %s35, 0
      %p350 = por %p348, %p349
      %p351 = scmp.ne.s32.totalorder %s339, %s340
      %p352 = scmp.eq.s32.totalorder %s36, 2
      %p353 = por %p351, %p352
      %p355 = scmp.ne.s32.totalorder %s340, %s354
      %p356 = scmp.eq.s32.totalorder %s36, 0
      %p357 = por %p355, %p356
      %s359 = sadd.s32 %s358, 1
      %p362 = scmp.eq.s32.totalorder %s30, 2
      %p363 = scmp.ne.s32.totalorder %s358, %s360
      %p364 = scmp.eq.s32.totalorder %s30, 0
      %p365 = por %p363, %p364
      %p366 = scmp.ne.s32.totalorder %s358, %s360
      %p367 = scmp.eq.s32.totalorder %s35, 2
      %p368 = por %p366, %p367
      %p369 = scmp.ne.s32.totalorder %s360, %s361
      %p370 = scmp.eq.s32.totalorder %s35, 0
      %p371 = por %p369, %p370
      %p372 = scmp.ne.s32.totalorder %s360, %s361
      %p373 = scmp.eq.s32.totalorder %s36, 2
      %p374 = por %p372, %p373
      %p376 = scmp.ne.s32.totalorder %s361, %s375
      %p377 = scmp.eq.s32.totalorder %s36, 0
      %p378 = por %p376, %p377
      %s380 = sadd.s32 %s379, 1
      %p383 = scmp.eq.s32.totalorder %s30, 2
      %p384 = scmp.ne.s32.totalorder %s379, %s381
      %p385 = scmp.eq.s32.totalorder %s30, 0
      %p386 = por %p384, %p385
      %p387 = scmp.ne.s32.totalorder %s379, %s381
      %p388 = scmp.eq.s32.totalorder %s35, 2
      %p389 = por %p387, %p388
      %p390 = scmp.ne.s32.totalorder %s381, %s382
      %p391 = scmp.eq.s32.totalorder %s35, 0
      %p392 = por %p390, %p391
      %p393 = scmp.ne.s32.totalorder %s381, %s382
      %p394 = scmp.eq.s32.totalorder %s36, 2
      %p395 = por %p393, %p394
      %p397 = scmp.ne.s32.totalorder %s382, %s396
      %p398 = scmp.eq.s32.totalorder %s36, 0
      %p399 = por %p397, %p398
      %s401 = sadd.s32 %s400, 1
      %p404 = scmp.eq.s32.totalorder %s30, 2
      %p405 = scmp.ne.s32.totalorder %s400, %s402
      %p406 = scmp.eq.s32.totalorder %s30, 0
      %p407 = por %p405, %p406
      %p408 = scmp.ne.s32.totalorder %s400, %s402
      %p409 = scmp.eq.s32.totalorder %s35, 2
      %p410 = por %p408, %p409
      %p411 = scmp.ne.s32.totalorder %s402, %s403
      %p412 = scmp.eq.s32.totalorder %s35, 0
      %p413 = por %p411, %p412
      %p414 = scmp.ne.s32.totalorder %s402, %s403
      %p415 = scmp.eq.s32.totalorder %s36, 2
      %p416 = por %p414, %p415
      %p418 = scmp.ne.s32.totalorder %s403, %s417
      %p419 = scmp.eq.s32.totalorder %s36, 0
      %p420 = por %p418, %p419
      %s422 = sadd.s32 %s421, 1
      %p425 = scmp.eq.s32.totalorder %s30, 2
      %p426 = scmp.ne.s32.totalorder %s421, %s423
      %p427 = scmp.eq.s32.totalorder %s30, 0
      %p428 = por %p426, %p427
      %p429 = scmp.ne.s32.totalorder %s421, %s423
      %p430 = scmp.eq.s32.totalorder %s35, 2
      %p431 = por %p429, %p430
      %p432 = scmp.ne.s32.totalorder %s423, %s424
      %p433 = scmp.eq.s32.totalorder %s35, 0
      %p434 = por %p432, %p433
      %p435 = scmp.ne.s32.totalorder %s423, %s424
      %p436 = scmp.eq.s32.totalorder %s36, 2
      %p437 = por %p435, %p436
      %p439 = scmp.ne.s32.totalorder %s424, %s438
      %p440 = scmp.eq.s32.totalorder %s36, 0
      %p441 = por %p439, %p440
      %s442 = ssub.s32 %s30, %s37
      %p443 = scmp.eq.s32.totalorder %s442, 0
      %s445 = sadd.s32 %s444, 1
      %s446 = scalar_select %p443, %s444, %s445
      %p449 = pneg %p443
      %p450 = scmp.eq.s32.totalorder %s30, 2
      %p451 = por %p449, %p450
      %p452 = scmp.ne.s32.totalorder %s444, %s447
      %p453 = scmp.eq.s32.totalorder %s30, 0
      %p454 = por %p452, %p453
      %p455 = scmp.ne.s32.totalorder %s444, %s447
      %p456 = scmp.eq.s32.totalorder %s35, 2
      %p457 = por %p455, %p456
      %p458 = scmp.ne.s32.totalorder %s447, %s448
      %p459 = scmp.eq.s32.totalorder %s35, 0
      %p460 = por %p458, %p459
      %p461 = scmp.ne.s32.totalorder %s447, %s448
      %p462 = scmp.eq.s32.totalorder %s36, 2
      %p463 = por %p461, %p462
      %p465 = scmp.ne.s32.totalorder %s448, %s464
      %p466 = scmp.eq.s32.totalorder %s36, 0
      %p467 = por %p465, %p466
      %s468 = ssub.s32 %s30, %s37
      %p469 = scmp.eq.s32.totalorder %s468, 0
      %s471 = sadd.s32 %s470, 1
      %s472 = scalar_select %p469, %s470, %s471
      %p475 = pneg %p469
      %p476 = scmp.eq.s32.totalorder %s30, 2
      %p477 = por %p475, %p476
      %p478 = scmp.ne.s32.totalorder %s470, %s473
      %p479 = scmp.eq.s32.totalorder %s30, 0
      %p480 = por %p478, %p479
      %p481 = scmp.ne.s32.totalorder %s470, %s473
      %p482 = scmp.eq.s32.totalorder %s35, 2
      %p483 = por %p481, %p482
      %p484 = scmp.ne.s32.totalorder %s473, %s474
      %p485 = scmp.eq.s32.totalorder %s35, 0
      %p486 = por %p484, %p485
      %p487 = scmp.ne.s32.totalorder %s473, %s474
      %p488 = scmp.eq.s32.totalorder %s36, 2
      %p489 = por %p487, %p488
      %p491 = scmp.ne.s32.totalorder %s474, %s490
      %p492 = scmp.eq.s32.totalorder %s36, 0
      %p493 = por %p491, %p492
      %p494 = scmp.le.s32.totalorder 1, %s30
      %p495 = scmp.lt.s32.totalorder %s30, 4
      %p496 = pnand %p494, %p495
      %p497 = pneg %p496
      // Predicated region
      $region9: #{run.7} parent=5 // pred_check
        _
      $region10: #{run.7} parent=5 // pred_check_branch
        %499 = sbr.rel (%p496) target = $region12
      $region11: #{run.7} parent=5 // pred_region
        %s500 = ssub.s32 %s30, 1
        // Predicated region
        $region13: #{run.7} parent=11 // pred_check
          %p501 = pneg %p77
        $region14: #{run.7} parent=11 // pred_check_branch
          %503 = sbr.rel (%p501) target = $region16
        $region15: #{run.7} parent=11 // pred_region
          _
        $region16: #{run.7} parent=11 // pred_fallthru
          _
        // Predicated region
        $region17: #{run.7} parent=11 // pred_check
          %p504 = pneg %p98
        $region18: #{run.7} parent=11 // pred_check_branch
          %506 = sbr.rel (%p504) target = $region20
        $region19: #{run.7} parent=11 // pred_region
          _
        $region20: #{run.7} parent=11 // pred_fallthru
          _
        // Predicated region
        $region21: #{run.7} parent=11 // pred_check
          %p507 = pneg %p119
        $region22: #{run.7} parent=11 // pred_check_branch
          %509 = sbr.rel (%p507) target = $region24
        $region23: #{run.7} parent=11 // pred_region
          _
        $region24: #{run.7} parent=11 // pred_fallthru
          _
        // Predicated region
        $region25: #{run.7} parent=11 // pred_check
          %p510 = pneg %p140
        $region26: #{run.7} parent=11 // pred_check_branch
          %512 = sbr.rel (%p510) target = $region28
        $region27: #{run.7} parent=11 // pred_region
          _
        $region28: #{run.7} parent=11 // pred_fallthru
          _
        // Predicated region
        $region29: #{run.7} parent=11 // pred_check
          %p513 = pneg %p161
        $region30: #{run.7} parent=11 // pred_check_branch
          %515 = sbr.rel (%p513) target = $region32
        $region31: #{run.7} parent=11 // pred_region
          _
        $region32: #{run.7} parent=11 // pred_fallthru
          _
        // Predicated region
        $region33: #{run.7} parent=11 // pred_check
          %p516 = pneg %p182
        $region34: #{run.7} parent=11 // pred_check_branch
          %518 = sbr.rel (%p516) target = $region36
        $region35: #{run.7} parent=11 // pred_region
          _
        $region36: #{run.7} parent=11 // pred_fallthru
          _
        // Predicated region
        $region37: #{run.7} parent=11 // pred_check
          %p519 = pneg %p203
        $region38: #{run.7} parent=11 // pred_check_branch
          %521 = sbr.rel (%p519) target = $region40
        $region39: #{run.7} parent=11 // pred_region
          _
        $region40: #{run.7} parent=11 // pred_fallthru
          _
        // Predicated region
        $region41: #{run.7} parent=11 // pred_check
          %p522 = pneg %p224
        $region42: #{run.7} parent=11 // pred_check_branch
          %524 = sbr.rel (%p522) target = $region44
        $region43: #{run.7} parent=11 // pred_region
          _
        $region44: #{run.7} parent=11 // pred_fallthru
          _
        // Predicated region
        $region45: #{run.7} parent=11 // pred_check
          %p525 = pneg %p245
        $region46: #{run.7} parent=11 // pred_check_branch
          %527 = sbr.rel (%p525) target = $region48
        $region47: #{run.7} parent=11 // pred_region
          _
        $region48: #{run.7} parent=11 // pred_fallthru
          _
        // Predicated region
        $region49: #{run.7} parent=11 // pred_check
          %p528 = pneg %p266
        $region50: #{run.7} parent=11 // pred_check_branch
          %530 = sbr.rel (%p528) target = $region52
        $region51: #{run.7} parent=11 // pred_region
          _
        $region52: #{run.7} parent=11 // pred_fallthru
          _
        // Predicated region
        $region53: #{run.7} parent=11 // pred_check
          %p531 = pneg %p287
        $region54: #{run.7} parent=11 // pred_check_branch
          %533 = sbr.rel (%p531) target = $region56
        $region55: #{run.7} parent=11 // pred_region
          _
        $region56: #{run.7} parent=11 // pred_fallthru
          _
        // Predicated region
        $region57: #{run.7} parent=11 // pred_check
          %p534 = pneg %p308
        $region58: #{run.7} parent=11 // pred_check_branch
          %536 = sbr.rel (%p534) target = $region60
        $region59: #{run.7} parent=11 // pred_region
          _
        $region60: #{run.7} parent=11 // pred_fallthru
          _
        // Predicated region
        $region61: #{run.7} parent=11 // pred_check
          %p537 = pneg %p329
        $region62: #{run.7} parent=11 // pred_check_branch
          %539 = sbr.rel (%p537) target = $region64
        $region63: #{run.7} parent=11 // pred_region
          _
        $region64: #{run.7} parent=11 // pred_fallthru
          _
        // Predicated region
        $region65: #{run.7} parent=11 // pred_check
          %p540 = pneg %p350
        $region66: #{run.7} parent=11 // pred_check_branch
          %542 = sbr.rel (%p540) target = $region68
        $region67: #{run.7} parent=11 // pred_region
          _
        $region68: #{run.7} parent=11 // pred_fallthru
          _
        // Predicated region
        $region69: #{run.7} parent=11 // pred_check
          %p543 = pneg %p371
        $region70: #{run.7} parent=11 // pred_check_branch
          %545 = sbr.rel (%p543) target = $region72
        $region71: #{run.7} parent=11 // pred_region
          _
        $region72: #{run.7} parent=11 // pred_fallthru
          _
        // Predicated region
        $region73: #{run.7} parent=11 // pred_check
          %p546 = pneg %p392
        $region74: #{run.7} parent=11 // pred_check_branch
          %548 = sbr.rel (%p546) target = $region76
        $region75: #{run.7} parent=11 // pred_region
          _
        $region76: #{run.7} parent=11 // pred_fallthru
          _
        // Predicated region
        $region77: #{run.7} parent=11 // pred_check
          %p549 = pneg %p413
        $region78: #{run.7} parent=11 // pred_check_branch
          %551 = sbr.rel (%p549) target = $region80
        $region79: #{run.7} parent=11 // pred_region
          _
        $region80: #{run.7} parent=11 // pred_fallthru
          _
        // Predicated region
        $region81: #{run.7} parent=11 // pred_check
          %p552 = pneg %p434
        $region82: #{run.7} parent=11 // pred_check_branch
          %554 = sbr.rel (%p552) target = $region84
        $region83: #{run.7} parent=11 // pred_region
          _
        $region84: #{run.7} parent=11 // pred_fallthru
          _
      $region12: #{run.7} parent=5 // pred_fallthru
        _
      %p555 = scmp.lt.s32.totalorder %s30, 3
      // Predicated region
      $region85: #{run.7} parent=5 // pred_check
        %p556 = pneg %p555
      $region86: #{run.7} parent=5 // pred_check_branch
        %558 = sbr.rel (%p556) target = $region88
      $region87: #{run.7} parent=5 // pred_region
        // Predicated region
        $region89: #{run.7} parent=87 // pred_check
          %p559 = pneg %p50
        $region90: #{run.7} parent=87 // pred_check_branch
          %561 = sbr.rel (%p559) target = $region92
        $region91: #{run.7} parent=87 // pred_region
          %p562 = scmp.lt.s32.totalorder %s30, 2
          %s563 = scalar_select %p562, %s30, 2
          %s564 = smul.addr %s563, 2
          %s565 = scalar_lea.vmem %s0, %s564
        $region92: #{run.7} parent=87 // pred_fallthru
          _
      $region88: #{run.7} parent=5 // pred_fallthru
        _
      %p566 = scmp.le.s32.totalorder 1, %s30
      %p567 = scmp.lt.s32.totalorder %s30, 4
      %p568 = pnand %p566, %p567
      %p569 = pneg %p568
      // Predicated region
      $region93: #{run.7} parent=5 // pred_check
        _
      $region94: #{run.7} parent=5 // pred_check_branch
        %571 = sbr.rel (%p568) target = $region96
      $region95: #{run.7} parent=5 // pred_region
        %s572 = ssub.s32 %s30, 1
        %p573 = scmp.lt.s32.totalorder %s35, 2
        %s574 = scalar_select %p573, %s35, 2
        %s575 = smul.addr %s574, 2
        %s576 = scalar_lea.vmem %s0, %s575
        %p577 = pneg %p56
        %p578 = pneg %p53
        %p579 = pneg %p77
        %p580 = pneg %p74
        %p581 = pneg %p98
        %p582 = pneg %p95
        %p583 = pneg %p119
        %p584 = pneg %p116
        %p585 = pneg %p140
        %p586 = pneg %p137
        %p587 = pneg %p161
        %p588 = pneg %p158
        %p589 = pneg %p182
        %p590 = pneg %p179
        %p591 = pneg %p203
        %p592 = pneg %p200
        %p593 = pneg %p224
        %p594 = pneg %p221
        %p595 = pneg %p245
        %p596 = pneg %p242
        %p597 = pneg %p266
        %p598 = pneg %p263
        %p599 = pneg %p287
        %p600 = pneg %p284
        %p601 = pneg %p308
        %p602 = pneg %p305
        %p603 = pneg %p329
        %p604 = pneg %p326
        %p605 = pneg %p350
        %p606 = pneg %p347
        %p607 = pneg %p371
        %p608 = pneg %p368
        %p609 = pneg %p392
        %p610 = pneg %p389
        %p611 = pneg %p413
        %p612 = pneg %p410
        %p613 = pneg %p434
        %p614 = pneg %p431
        %p615 = pneg %p460
        %p616 = pneg %p457
        %p617 = scmp.lt.s32.totalorder %s35, 2
        %s618 = scalar_select %p617, %s35, 2
        %s619 = smul.addr %s618, 2
        %s620 = smul.addr %s619, 4
        %s621 = scalar_lea.vmem %s19, %s620
        %p622 = pneg %p486
        %p623 = pneg %p483
        %s624 = sand.u32 %s473, 1
        %s625 = scalar_lea.sflag [#allocation3], %s624
        %s626 = sand.u32 %s473, 1
        %s627 = smul.addr %s626, 2
        %s628 = scalar_lea.vmem [#allocation2], %s627
        %p629 = scmp.lt.s32.totalorder %s35, 2
        %s630 = scalar_select %p629, %s35, 2
        %s631 = smul.addr %s630, 2
        %s632 = scalar_lea.vmem %s0, %s631
        %p633 = scmp.lt.s32.totalorder %s35, 2
        %s634 = scalar_select %p633, %s35, 2
        %s635 = smul.addr %s634, 2
        %s636 = smul.addr %s635, 4
        %s637 = scalar_lea.vmem %s19, %s636
        %v638 = vld [vmem:[%s632] sm:$0x3]
        %v639 = vld [vmem:[%s1] sm:$0x3]
        %v640 = vld [vmem:[%s2] sm:$0xff]
        %v641 = vld [vmem:[%s2 + $0x8] sm:$0xff]
        %v642 = vld [vmem:[%s4] sm:$0x3f]
        %v643 = vld [vmem:[%s4 + $0x8] sm:$0x3f]
        %v644 = vld [vmem:[%s3] sm:$0x3]
        %v645 = vld [vmem:[%s5] sm:$0x3]
        %v646 = vld [vmem:[%s6] sm:$0xff]
        %v647 = vld [vmem:[%s6 + $0x8] sm:$0xff]
        %v648 = vld [vmem:[%s7] sm:$0x3f]
        %v649 = vld [vmem:[%s7 + $0x8] sm:$0x3f]
        %v650 = vld [vmem:[%s8] sm:$0xff]
        %v651 = vld [vmem:[%s8 + $0x8] sm:$0xff]
        %v652 = vld [vmem:[%s8 + $0x10] sm:$0xff]
        %v653 = vld [vmem:[%s8 + $0x18] sm:$0xff]
        %v654 = vld [vmem:[%s9] sm:$0xff]
        %v655 = vld [vmem:[%s9 + $0x8] sm:$0xff]
        %v656 = vld [vmem:[%s9 + $0x10] sm:$0xff]
        %v657 = vld [vmem:[%s9 + $0x18] sm:$0xff]
        %v658 = vld [vmem:[%s10] sm:$0xff]
        %v659 = vld [vmem:[%s10 + $0x8] sm:$0xff]
        %v660 = vld [vmem:[%s10 + $0x10] sm:$0xff]
        %v661 = vld [vmem:[%s10 + $0x18] sm:$0xff]
        %v662 = vld [vmem:[%s11] sm:$0xff]
        %v663 = vld [vmem:[%s11 + $0x8] sm:$0xff]
        %v664 = vld [vmem:[%s11 + $0x10] sm:$0xff]
        %v665 = vld [vmem:[%s11 + $0x18] sm:$0xff]
        %v666 = vld [vmem:[%s12] sm:$0x1]
        %v667 = vld [vmem:[%s13] sm:$0x1]
        %v668 = vld [vmem:[%s14] sm:$0xff]
        %v669 = vld [vmem:[%s14 + $0x8] sm:$0xff]
        %v670 = vld [vmem:[%s14 + $0x10] sm:$0xff]
        %v671 = vld [vmem:[%s14 + $0x18] sm:$0xff]
        %v672 = vld [vmem:[%s15] sm:$0xff]
        %v673 = vld [vmem:[%s15 + $0x8] sm:$0xff]
        %v674 = vld [vmem:[%s15 + $0x10] sm:$0xff]
        %v675 = vld [vmem:[%s15 + $0x18] sm:$0xff]
        %v676 = vld [vmem:[%s16] sm:$0x1]
        %v677 = vlaneseq
        %v678 = vand.u32 %v677, 127
        %vm679 = vcmask 261120
        %v681 = vsel %vm679, %v638, 0
        %683 = vmatpush.msra.mxu0 0.0
        %684 = vmatpush.msra.mxu0 0.0
        %685 = vmatpush.msra.mxu0 0.0
        %686 = vmatpush.msra.mxu0 0.0
        %687 = vmatpush.msra.mxu0 0.0
        %688 = vmatpush.msra.mxu0 0.0
        %689 = vmatpush.msra.mxu0 0.0
        %690 = vmatpush.msra.mxu0 0.0
        %691 = vmatpush.msra.mxu0 0.0
        %692 = vmatpush.msra.mxu0 0.0
        %693 = vmatpush.msra.mxu0 0.0
        %694 = vmatpush.msra.mxu0 0.0
        %695 = vmatpush.msra.mxu0 %v661
        %696 = vmatpush.msra.mxu0 %v660
        %697 = vmatpush.msra.mxu0 %v659
        %698 = vmatpush.msra.mxu0 %v658
        %699 = vmatmul.f32.gmra.mxu0 %v681
        %v700 = vpop.f32.mrf.mxu0
        %v701 = vadd.f32 0.0, %v700
        %702 = vdwg.mxu0
        %v704 = vperm.slane %v666, 0
        %v706 = vadd.f32 %v701, %v704
        %v708 = vperm.slane %v667, 0
        %v711 = vsel %vm679, %v639, 0
        %713 = vmatpush.msra.mxu0 0.0
        %714 = vmatpush.msra.mxu0 0.0
        %715 = vmatpush.msra.mxu0 0.0
        %716 = vmatpush.msra.mxu0 0.0
        %717 = vmatpush.msra.mxu0 0.0
        %718 = vmatpush.msra.mxu0 0.0
        %719 = vmatpush.msra.mxu0 0.0
        %720 = vmatpush.msra.mxu0 0.0
        %721 = vmatpush.msra.mxu0 0.0
        %722 = vmatpush.msra.mxu0 0.0
        %723 = vmatpush.msra.mxu0 0.0
        %724 = vmatpush.msra.mxu0 0.0
        %725 = vmatpush.msra.mxu0 %v665
        %726 = vmatpush.msra.mxu0 %v664
        %727 = vmatpush.msra.mxu0 %v663
        %728 = vmatpush.msra.mxu0 %v662
        %729 = vmatmul.f32.gmra.mxu0 %v711
        %v730 = vpop.f32.mrf.mxu0
        %v731 = vadd.f32 %v708, %v730
        %732 = vdwg.mxu0
        %v733 = vadd.f32 %v706, %v731
        %v734 = vxor.u32 %v733, 2147483648
        %v735 = vmul.f32 %v734, 1.442695
        %v736 = vpow.pop %v735
        %v737 = vadd.f32 %v736, 1.0
        %v738 = vrcp.pop %v737
        %v739 = vmul.f32 %v737, %v738
        %v740 = vsub.f32 1.0, %v739
        %v741 = vmul.f32 %v738, %v740
        %v742 = vadd.f32 %v738, %v741
        %vm743 = vweird.f32 %v737
        %vm744 = vweird.f32 %v738
        %vm745 = vmor %vm743, %vm744
        %v746 = vsel %vm745, %v738, %v742
        %v747 = vand.u32 2147483647, %v737
        %vm748 = vcmp.eq.f32.partialorder %v747, 8.507059e+37
        %v749 = vand.u32 %v737, 2147483648
        %v750 = vor.u32 1.1754944e-38, %v749
        %v751 = vsel %vm748, %v750, %v746
        %v752 = vmul.f32 1.0, %v751
        %754 = vrot.lane.b32.xlu0 %v731, 64
        %v755 = vpop.permute.xlu0 %754
        %v757 = vmul.f32 %v752, %v755
        %759 = vrot.lane.b32.xlu0 %v757, 64
        %v760 = vpop.permute.xlu0 %759
        %v762 = vadd.f32 %v706, %v760
        %v763 = vtanh.pop %v762
        %v764 = vsub.f32 1.0, %v752
        %766 = vrot.lane.b32.xlu0 %v763, 96
        %v767 = vpop.permute.xlu0 %766
        %v769 = vmul.f32 %v764, %v767
        %770 = vrot.lane.b32.xlu0 %v639, 32
        %v771 = vpop.permute.xlu0 %770
        %v773 = vmul.f32 %v752, %v771
        %v774 = vadd.f32 %v769, %v773
        %v776 = vrot.slane %v774, 1
        %v777 = vperm.slane %v774, 0
        %778 = vrot.lane.b32.xlu0 %v777, 96
        %v779 = vpop.permute.xlu0 %778
        %v780 = vsel %vm679, %v779, 0
        %v783 = vsel %vm679, %v640, 0
        %785 = vmatpush.xpose.msra.mxu0 0.0
        %786 = vmatpush.xpose.msra.mxu0 0.0
        %787 = vmatpush.xpose.msra.mxu0 0.0
        %788 = vmatpush.xpose.msra.mxu0 0.0
        %789 = vmatpush.xpose.msra.mxu0 0.0
        %790 = vmatpush.xpose.msra.mxu0 0.0
        %791 = vmatpush.xpose.msra.mxu0 0.0
        %792 = vmatpush.xpose.msra.mxu0 0.0
        %793 = vmatpush.xpose.msra.mxu0 0.0
        %794 = vmatpush.xpose.msra.mxu0 0.0
        %795 = vmatpush.xpose.msra.mxu0 0.0
        %796 = vmatpush.xpose.msra.mxu0 0.0
        %797 = vmatpush.xpose.msra.mxu0 0.0
        %798 = vmatpush.xpose.msra.mxu0 0.0
        %799 = vmatpush.xpose.msra.mxu0 0.0
        %800 = vmatpush.xpose.msra.mxu0 %v783
        %801 = vmatmul.f32.gmra.mxu0 %v780
        %v802 = vpop.f32.mrf.mxu0
        %v803 = vadd.f32 0.0, %v802
        %804 = vdwg.mxu0
        %v805 = vperm.slane %v776, 0
        %806 = vrot.lane.b32.xlu0 %v805, 96
        %v807 = vpop.permute.xlu0 %806
        %v808 = vsel %vm679, %v807, 0
        %v811 = vsel %vm679, %v641, 0
        %813 = vmatpush.xpose.msra.mxu0 0.0
        %814 = vmatpush.xpose.msra.mxu0 0.0
        %815 = vmatpush.xpose.msra.mxu0 0.0
        %816 = vmatpush.xpose.msra.mxu0 0.0
        %817 = vmatpush.xpose.msra.mxu0 0.0
        %818 = vmatpush.xpose.msra.mxu0 0.0
        %819 = vmatpush.xpose.msra.mxu0 0.0
        %820 = vmatpush.xpose.msra.mxu0 0.0
        %821 = vmatpush.xpose.msra.mxu0 0.0
        %822 = vmatpush.xpose.msra.mxu0 0.0
        %823 = vmatpush.xpose.msra.mxu0 0.0
        %824 = vmatpush.xpose.msra.mxu0 0.0
        %825 = vmatpush.xpose.msra.mxu0 0.0
        %826 = vmatpush.xpose.msra.mxu0 0.0
        %827 = vmatpush.xpose.msra.mxu0 0.0
        %828 = vmatpush.xpose.msra.mxu0 %v811
        %829 = vmatmul.f32.gmra.mxu0 %v808
        %v830 = vpop.f32.mrf.mxu0
        %v831 = vadd.f32 0.0, %v830
        %832 = vdwg.mxu0
        %vm833 = vcmp.gt.f32.partialorder %v644, 0.0
        %v836 = vrot.slane %v831, 7
        %vm837 = vcmask 1041409
        %v838 = vsel %vm837, %v836, %v803
        %v840 = vsel %vm833, %v838, -1e+30
        %vm841 = vcmask 58368
        %v842 = vsel %vm841, %v840, -inf
        %843 = vmax.xlane.f32.xlu0 %v842
        %v844 = vpop.xlane.xlu0 %843
        %v845 = vsub.f32 %v840, %v844
        %v846 = vmul.f32 %v845, 1.442695
        %v847 = vpow.pop %v846
        %v848 = vsel %vm841, %v847, 0.0
        %849 = vadd.xlane.f32.xlu0 %v848
        %v850 = vpop.xlane.xlu0 %849
        %v851 = vrcp.pop %v850
        %v852 = vmul.f32 %v850, %v851
        %v853 = vsub.f32 1.0, %v852
        %v854 = vmul.f32 %v851, %v853
        %v855 = vadd.f32 %v851, %v854
        %vm856 = vweird.f32 %v850
        %vm857 = vweird.f32 %v851
        %vm858 = vmor %vm856, %vm857
        %v859 = vsel %vm858, %v851, %v855
        %v860 = vand.u32 2147483647, %v850
        %vm861 = vcmp.eq.f32.partialorder %v860, 8.507059e+37
        %v862 = vand.u32 %v850, 2147483648
        %v863 = vor.u32 1.1754944e-38, %v862
        %v864 = vsel %vm861, %v863, %v859
        %v865 = vmul.f32 %v847, %v864
        %v867 = vrot.slane %v865, 1
        %vm868 = vcmask 64512
        %v869 = vsel %vm868, %v865, 0
        %871 = vmatpush.msra.mxu0 0.0
        %872 = vmatpush.msra.mxu0 0.0
        %873 = vmatpush.msra.mxu0 0.0
        %874 = vmatpush.msra.mxu0 0.0
        %875 = vmatpush.msra.mxu0 0.0
        %876 = vmatpush.msra.mxu0 0.0
        %877 = vmatpush.msra.mxu0 0.0
        %878 = vmatpush.msra.mxu0 0.0
        %879 = vmatpush.msra.mxu0 0.0
        %880 = vmatpush.msra.mxu0 0.0
        %881 = vmatpush.msra.mxu0 0.0
        %882 = vmatpush.msra.mxu0 0.0
        %883 = vmatpush.msra.mxu0 0.0
        %884 = vmatpush.msra.mxu0 0.0
        %885 = vmatpush.msra.mxu0 0.0
        %886 = vmatpush.msra.mxu0 %v640
        %887 = vmatmul.f32.gmra.mxu0 %v869
        %v888 = vpop.f32.mrf.mxu0
        %v889 = vadd.f32 0.0, %v888
        %890 = vdwg.mxu0
        %v891 = vsel %vm868, %v867, 0
        %893 = vmatpush.msra.mxu0 0.0
        %894 = vmatpush.msra.mxu0 0.0
        %895 = vmatpush.msra.mxu0 0.0
        %896 = vmatpush.msra.mxu0 0.0
        %897 = vmatpush.msra.mxu0 0.0
        %898 = vmatpush.msra.mxu0 0.0
        %899 = vmatpush.msra.mxu0 0.0
        %900 = vmatpush.msra.mxu0 0.0
        %901 = vmatpush.msra.mxu0 0.0
        %902 = vmatpush.msra.mxu0 0.0
        %903 = vmatpush.msra.mxu0 0.0
        %904 = vmatpush.msra.mxu0 0.0
        %905 = vmatpush.msra.mxu0 0.0
        %906 = vmatpush.msra.mxu0 0.0
        %907 = vmatpush.msra.mxu0 0.0
        %908 = vmatpush.msra.mxu0 %v641
        %909 = vmatmul.f32.gmra.mxu0 %v891
        %v910 = vpop.f32.mrf.mxu0
        %v911 = vadd.f32 0.0, %v910
        %912 = vdwg.mxu0
        %v914 = vsel %vm679, %v642, 0
        %916 = vmatpush.xpose.msra.mxu0 0.0
        %917 = vmatpush.xpose.msra.mxu0 0.0
        %918 = vmatpush.xpose.msra.mxu0 0.0
        %919 = vmatpush.xpose.msra.mxu0 0.0
        %920 = vmatpush.xpose.msra.mxu0 0.0
        %921 = vmatpush.xpose.msra.mxu0 0.0
        %922 = vmatpush.xpose.msra.mxu0 0.0
        %923 = vmatpush.xpose.msra.mxu0 0.0
        %924 = vmatpush.xpose.msra.mxu0 0.0
        %925 = vmatpush.xpose.msra.mxu0 0.0
        %926 = vmatpush.xpose.msra.mxu0 0.0
        %927 = vmatpush.xpose.msra.mxu0 0.0
        %928 = vmatpush.xpose.msra.mxu0 0.0
        %929 = vmatpush.xpose.msra.mxu0 0.0
        %930 = vmatpush.xpose.msra.mxu0 0.0
        %931 = vmatpush.xpose.msra.mxu0 %v914
        %932 = vmatmul.f32.gmra.mxu0 %v780
        %v933 = vpop.f32.mrf.mxu0
        %v934 = vadd.f32 0.0, %v933
        %935 = vdwg.mxu0
        %v937 = vsel %vm679, %v643, 0
        %939 = vmatpush.xpose.msra.mxu0 0.0
        %940 = vmatpush.xpose.msra.mxu0 0.0
        %941 = vmatpush.xpose.msra.mxu0 0.0
        %942 = vmatpush.xpose.msra.mxu0 0.0
        %943 = vmatpush.xpose.msra.mxu0 0.0
        %944 = vmatpush.xpose.msra.mxu0 0.0
        %945 = vmatpush.xpose.msra.mxu0 0.0
        %946 = vmatpush.xpose.msra.mxu0 0.0
        %947 = vmatpush.xpose.msra.mxu0 0.0
        %948 = vmatpush.xpose.msra.mxu0 0.0
        %949 = vmatpush.xpose.msra.mxu0 0.0
        %950 = vmatpush.xpose.msra.mxu0 0.0
        %951 = vmatpush.xpose.msra.mxu0 0.0
        %952 = vmatpush.xpose.msra.mxu0 0.0
        %953 = vmatpush.xpose.msra.mxu0 0.0
        %954 = vmatpush.xpose.msra.mxu0 %v937
        %955 = vmatmul.f32.gmra.mxu0 %v808
        %v956 = vpop.f32.mrf.mxu0
        %v957 = vadd.f32 0.0, %v956
        %958 = vdwg.mxu0
        %vm959 = vcmp.gt.f32.partialorder %v645, 0.0
        %v962 = vrot.slane %v957, 7
        %v963 = vsel %vm837, %v962, %v934
        %v965 = vsel %vm959, %v963, -1e+30
        %vm966 = vcmask 41984
        %v967 = vsel %vm966, %v965, -inf
        %968 = vmax.xlane.f32.xlu0 %v967
        %v969 = vpop.xlane.xlu0 %968
        %v970 = vsub.f32 %v965, %v969
        %v971 = vmul.f32 %v970, 1.442695
        %v972 = vpow.pop %v971
        %v973 = vsel %vm966, %v972, 0.0
        %974 = vadd.xlane.f32.xlu0 %v973
        %v975 = vpop.xlane.xlu0 %974
        %v976 = vrcp.pop %v975
        %v977 = vmul.f32 %v975, %v976
        %v978 = vsub.f32 1.0, %v977
        %v979 = vmul.f32 %v976, %v978
        %v980 = vadd.f32 %v976, %v979
        %vm981 = vweird.f32 %v975
        %vm982 = vweird.f32 %v976
        %vm983 = vmor %vm981, %vm982
        %v984 = vsel %vm983, %v976, %v980
        %v985 = vand.u32 2147483647, %v975
        %vm986 = vcmp.eq.f32.partialorder %v985, 8.507059e+37
        %v987 = vand.u32 %v975, 2147483648
        %v988 = vor.u32 1.1754944e-38, %v987
        %v989 = vsel %vm986, %v988, %v984
        %v990 = vmul.f32 %v972, %v989
        %v992 = vrot.slane %v990, 1
        %vm993 = vcmask 48128
        %v994 = vsel %vm993, %v990, 0
        %vm996 = vcmask 1045504
        %v997 = vsel %vm996, %v642, 0
        %999 = vmatpush.msra.mxu0 0.0
        %1000 = vmatpush.msra.mxu0 0.0
        %1001 = vmatpush.msra.mxu0 0.0
        %1002 = vmatpush.msra.mxu0 0.0
        %1003 = vmatpush.msra.mxu0 0.0
        %1004 = vmatpush.msra.mxu0 0.0
        %1005 = vmatpush.msra.mxu0 0.0
        %1006 = vmatpush.msra.mxu0 0.0
        %1007 = vmatpush.msra.mxu0 0.0
        %1008 = vmatpush.msra.mxu0 0.0
        %1009 = vmatpush.msra.mxu0 0.0
        %1010 = vmatpush.msra.mxu0 0.0
        %1011 = vmatpush.msra.mxu0 0.0
        %1012 = vmatpush.msra.mxu0 0.0
        %1013 = vmatpush.msra.mxu0 0.0
        %1014 = vmatpush.msra.mxu0 %v997
        %1015 = vmatmul.f32.gmra.mxu0 %v994
        %v1016 = vpop.f32.mrf.mxu0
        %v1017 = vadd.f32 0.0, %v1016
        %1018 = vdwg.mxu0
        %v1019 = vsel %vm993, %v992, 0
        %v1021 = vsel %vm996, %v643, 0
        %1023 = vmatpush.msra.mxu0 0.0
        %1024 = vmatpush.msra.mxu0 0.0
        %1025 = vmatpush.msra.mxu0 0.0
        %1026 = vmatpush.msra.mxu0 0.0
        %1027 = vmatpush.msra.mxu0 0.0
        %1028 = vmatpush.msra.mxu0 0.0
        %1029 = vmatpush.msra.mxu0 0.0
        %1030 = vmatpush.msra.mxu0 0.0
        %1031 = vmatpush.msra.mxu0 0.0
        %1032 = vmatpush.msra.mxu0 0.0
        %1033 = vmatpush.msra.mxu0 0.0
        %1034 = vmatpush.msra.mxu0 0.0
        %1035 = vmatpush.msra.mxu0 0.0
        %1036 = vmatpush.msra.mxu0 0.0
        %1037 = vmatpush.msra.mxu0 0.0
        %1038 = vmatpush.msra.mxu0 %v1021
        %1039 = vmatmul.f32.gmra.mxu0 %v1019
        %v1040 = vpop.f32.mrf.mxu0
        %v1041 = vadd.f32 0.0, %v1040
        %1042 = vdwg.mxu0
        %v1043 = vld [vmem:[%s17] sm:$0xff]
        %v1044 = vld [vmem:[%s17 + $0x8] sm:$0xff]
        %v1045 = vld [vmem:[%s17 + $0x10] sm:$0xff]
        %v1046 = vld [vmem:[%s17 + $0x18] sm:$0xff]
        %v1047 = vld [vmem:[%s18] sm:$0x1]
        %v1049 = vperm.slane %v1047, 0
        %v1053 = vrot.slane %v911, 7
        %v1054 = vsel %vm837, %v1053, %v889
        %v1055 = vsel %vm679, %v1054, 0
        %1057 = vmatpush.msra.mxu0 0.0
        %1058 = vmatpush.msra.mxu0 0.0
        %1059 = vmatpush.msra.mxu0 0.0
        %1060 = vmatpush.msra.mxu0 0.0
        %1061 = vmatpush.msra.mxu0 0.0
        %1062 = vmatpush.msra.mxu0 0.0
        %1063 = vmatpush.msra.mxu0 0.0
        %1064 = vmatpush.msra.mxu0 0.0
        %1065 = vmatpush.msra.mxu0 0.0
        %1066 = vmatpush.msra.mxu0 0.0
        %1067 = vmatpush.msra.mxu0 0.0
        %1068 = vmatpush.msra.mxu0 0.0
        %1069 = vmatpush.msra.mxu0 %v1046
        %1070 = vmatpush.msra.mxu0 %v1045
        %1071 = vmatpush.msra.mxu0 %v1044
        %1072 = vmatpush.msra.mxu0 %v1043
        %1073 = vmatmul.f32.gmra.mxu0 %v1055
        %v1074 = vpop.f32.mrf.mxu0
        %v1075 = vadd.f32 %v1049, %v1074
        %1076 = vdwg.mxu0
        %vm1077 = vcmask 17408
        %1078 = vst.msk [vmem:[%s628] sm:$0x3] %vm1077, %v1075
        %1079 = vrot.lane.b32.xlu0 %v774, 96
        %v1080 = vpop.permute.xlu0 %1079
        %v1081 = vsel %vm679, %v1080, 0
        %1083 = vmatpush.msra.mxu0 0.0
        %1084 = vmatpush.msra.mxu0 0.0
        %1085 = vmatpush.msra.mxu0 0.0
        %1086 = vmatpush.msra.mxu0 0.0
        %1087 = vmatpush.msra.mxu0 0.0
        %1088 = vmatpush.msra.mxu0 0.0
        %1089 = vmatpush.msra.mxu0 0.0
        %1090 = vmatpush.msra.mxu0 0.0
        %1091 = vmatpush.msra.mxu0 0.0
        %1092 = vmatpush.msra.mxu0 0.0
        %1093 = vmatpush.msra.mxu0 0.0
        %1094 = vmatpush.msra.mxu0 0.0
        %1095 = vmatpush.msra.mxu0 %v657
        %1096 = vmatpush.msra.mxu0 %v656
        %1097 = vmatpush.msra.mxu0 %v655
        %1098 = vmatpush.msra.mxu0 %v654
        %1099 = vmatmul.f32.gmra.mxu0 %v1081
        %v1100 = vpop.f32.mrf.mxu0
        %v1101 = vadd.f32 0.0, %v1100
        %1102 = vdwg.mxu0
        %vm1103 = vcmask 254976
        %v1104 = vsel %vm1103, %v1101, -inf
        %1105 = vmax.xlane.f32.xlu0 %v1104
        %v1106 = vpop.xlane.xlu0 %1105
        %v1107 = vsub.f32 %v1101, %v1106
        %v1108 = vmul.f32 %v1107, 1.442695
        %v1109 = vpow.pop %v1108
        %v1110 = vsel %vm1103, %v1109, 0.0
        %1111 = vadd.xlane.f32.xlu0 %v1110
        %v1112 = vpop.xlane.xlu0 %1111
        %v1113 = vrcp.pop %v1112
        %v1114 = vmul.f32 %v1112, %v1113
        %v1115 = vsub.f32 1.0, %v1114
        %v1116 = vmul.f32 %v1113, %v1115
        %v1117 = vadd.f32 %v1113, %v1116
        %vm1118 = vweird.f32 %v1112
        %vm1119 = vweird.f32 %v1113
        %vm1120 = vmor %vm1118, %vm1119
        %v1121 = vsel %vm1120, %v1113, %v1117
        %v1122 = vand.u32 2147483647, %v1112
        %vm1123 = vcmp.eq.f32.partialorder %v1122, 8.507059e+37
        %v1124 = vand.u32 %v1112, 2147483648
        %v1125 = vor.u32 1.1754944e-38, %v1124
        %v1126 = vsel %vm1123, %v1125, %v1121
        %v1127 = vmul.f32 %v1109, %v1126
        %1129 = vrot.lane.b32.xlu0 %v701, 64
        %v1130 = vpop.permute.xlu0 %1129
        %v1132 = vadd.f32 %v1101, %v1130
        %v1134 = vperm.slane %v676, 0
        %1135 = vrot.lane.b32.xlu0 %v1134, 32
        %v1136 = vpop.permute.xlu0 %1135
        %v1138 = vadd.f32 %v1132, %v1136
        %1139 = vmatpush.msra.mxu0 0.0
        %1140 = vmatpush.msra.mxu0 0.0
        %1141 = vmatpush.msra.mxu0 0.0
        %1142 = vmatpush.msra.mxu0 0.0
        %1143 = vmatpush.msra.mxu0 0.0
        %1144 = vmatpush.msra.mxu0 0.0
        %1145 = vmatpush.msra.mxu0 0.0
        %1146 = vmatpush.msra.mxu0 0.0
        %1147 = vmatpush.msra.mxu0 0.0
        %1148 = vmatpush.msra.mxu0 0.0
        %1149 = vmatpush.msra.mxu0 0.0
        %1150 = vmatpush.msra.mxu0 0.0
        %1151 = vmatpush.msra.mxu0 %v671
        %1152 = vmatpush.msra.mxu0 %v670
        %1153 = vmatpush.msra.mxu0 %v669
        %1154 = vmatpush.msra.mxu0 %v668
        %1155 = vmatmul.f32.gmra.mxu0 %v1055
        %v1156 = vpop.f32.mrf.mxu0
        %v1157 = vadd.f32 0.0, %v1156
        %1158 = vdwg.mxu0
        %1160 = vrot.lane.b32.xlu0 %v1157, 32
        %v1161 = vpop.permute.xlu0 %1160
        %v1163 = vadd.f32 %v1138, %v1161
        %v1166 = vrot.slane %v1041, 7
        %v1167 = vsel %vm837, %v1166, %v1017
        %v1168 = vsel %vm679, %v1167, 0
        %1170 = vmatpush.msra.mxu0 0.0
        %1171 = vmatpush.msra.mxu0 0.0
        %1172 = vmatpush.msra.mxu0 0.0
        %1173 = vmatpush.msra.mxu0 0.0
        %1174 = vmatpush.msra.mxu0 0.0
        %1175 = vmatpush.msra.mxu0 0.0
        %1176 = vmatpush.msra.mxu0 0.0
        %1177 = vmatpush.msra.mxu0 0.0
        %1178 = vmatpush.msra.mxu0 0.0
        %1179 = vmatpush.msra.mxu0 0.0
        %1180 = vmatpush.msra.mxu0 0.0
        %1181 = vmatpush.msra.mxu0 0.0
        %1182 = vmatpush.msra.mxu0 %v675
        %1183 = vmatpush.msra.mxu0 %v674
        %1184 = vmatpush.msra.mxu0 %v673
        %1185 = vmatpush.msra.mxu0 %v672
        %1186 = vmatmul.f32.gmra.mxu0 %v1168
        %v1187 = vpop.f32.mrf.mxu0
        %v1188 = vadd.f32 0.0, %v1187
        %1189 = vdwg.mxu0
        %1191 = vrot.lane.b32.xlu0 %v1188, 32
        %v1192 = vpop.permute.xlu0 %1191
        %v1194 = vadd.f32 %v1163, %v1192
        %vm1195 = vcmask 279808
        %v1196 = vsel %vm1195, %v1194, -inf
        %1197 = vmax.xlane.f32.xlu0 %v1196
        %v1198 = vpop.xlane.xlu0 %1197
        %v1199 = vsub.f32 %v1194, %v1198
        %v1200 = vmul.f32 %v1199, 1.442695
        %v1201 = vpow.pop %v1200
        %1203 = vrot.lane.b32.xlu0 %v1201, 96
        %v1204 = vpop.permute.xlu0 %1203
        %v1206 = vsel %vm1077, %v1204, 0.0
        %1207 = vadd.xlane.f32.xlu0 %v1206
        %v1208 = vpop.xlane.xlu0 %1207
        %v1209 = vrcp.pop %v1208
        %v1210 = vmul.f32 %v1208, %v1209
        %v1211 = vsub.f32 1.0, %v1210
        %v1212 = vmul.f32 %v1209, %v1211
        %v1213 = vadd.f32 %v1209, %v1212
        %vm1214 = vweird.f32 %v1208
        %vm1215 = vweird.f32 %v1209
        %vm1216 = vmor %vm1214, %vm1215
        %v1217 = vsel %vm1216, %v1209, %v1213
        %v1218 = vand.u32 2147483647, %v1208
        %vm1219 = vcmp.eq.f32.partialorder %v1218, 8.507059e+37
        %v1220 = vand.u32 %v1208, 2147483648
        %v1221 = vor.u32 1.1754944e-38, %v1220
        %v1222 = vsel %vm1219, %v1221, %v1217
        %v1223 = vmul.f32 %v1201, %v1222
        %1224 = vmatpush.msra.mxu0 0.0
        %1225 = vmatpush.msra.mxu0 0.0
        %1226 = vmatpush.msra.mxu0 0.0
        %1227 = vmatpush.msra.mxu0 0.0
        %1228 = vmatpush.msra.mxu0 0.0
        %1229 = vmatpush.msra.mxu0 0.0
        %1230 = vmatpush.msra.mxu0 0.0
        %1231 = vmatpush.msra.mxu0 0.0
        %1232 = vmatpush.msra.mxu0 0.0
        %1233 = vmatpush.msra.mxu0 0.0
        %1234 = vmatpush.msra.mxu0 0.0
        %1235 = vmatpush.msra.mxu0 0.0
        %1236 = vmatpush.msra.mxu0 0.0
        %1237 = vmatpush.msra.mxu0 0.0
        %1238 = vmatpush.msra.mxu0 0.0
        %1239 = vmatpush.msra.mxu0 %v646
        %1240 = vmatmul.f32.gmra.mxu0 %v869
        %v1241 = vpop.f32.mrf.mxu0
        %v1242 = vadd.f32 0.0, %v1241
        %1243 = vdwg.mxu0
        %1244 = vmatpush.msra.mxu0 0.0
        %1245 = vmatpush.msra.mxu0 0.0
        %1246 = vmatpush.msra.mxu0 0.0
        %1247 = vmatpush.msra.mxu0 0.0
        %1248 = vmatpush.msra.mxu0 0.0
        %1249 = vmatpush.msra.mxu0 0.0
        %1250 = vmatpush.msra.mxu0 0.0
        %1251 = vmatpush.msra.mxu0 0.0
        %1252 = vmatpush.msra.mxu0 0.0
        %1253 = vmatpush.msra.mxu0 0.0
        %1254 = vmatpush.msra.mxu0 0.0
        %1255 = vmatpush.msra.mxu0 0.0
        %1256 = vmatpush.msra.mxu0 0.0
        %1257 = vmatpush.msra.mxu0 0.0
        %1258 = vmatpush.msra.mxu0 0.0
        %1259 = vmatpush.msra.mxu0 %v647
        %1260 = vmatmul.f32.gmra.mxu0 %v891
        %v1261 = vpop.f32.mrf.mxu0
        %v1262 = vadd.f32 0.0, %v1261
        %1263 = vdwg.mxu0
        %v1265 = vsel %vm996, %v648, 0
        %1267 = vmatpush.msra.mxu0 0.0
        %1268 = vmatpush.msra.mxu0 0.0
        %1269 = vmatpush.msra.mxu0 0.0
        %1270 = vmatpush.msra.mxu0 0.0
        %1271 = vmatpush.msra.mxu0 0.0
        %1272 = vmatpush.msra.mxu0 0.0
        %1273 = vmatpush.msra.mxu0 0.0
        %1274 = vmatpush.msra.mxu0 0.0
        %1275 = vmatpush.msra.mxu0 0.0
        %1276 = vmatpush.msra.mxu0 0.0
        %1277 = vmatpush.msra.mxu0 0.0
        %1278 = vmatpush.msra.mxu0 0.0
        %1279 = vmatpush.msra.mxu0 0.0
        %1280 = vmatpush.msra.mxu0 0.0
        %1281 = vmatpush.msra.mxu0 0.0
        %1282 = vmatpush.msra.mxu0 %v1265
        %1283 = vmatmul.f32.gmra.mxu0 %v994
        %v1284 = vpop.f32.mrf.mxu0
        %v1285 = vadd.f32 0.0, %v1284
        %1286 = vdwg.mxu0
        %v1288 = vsel %vm996, %v649, 0
        %1290 = vmatpush.msra.mxu0 0.0
        %1291 = vmatpush.msra.mxu0 0.0
        %1292 = vmatpush.msra.mxu0 0.0
        %1293 = vmatpush.msra.mxu0 0.0
        %1294 = vmatpush.msra.mxu0 0.0
        %1295 = vmatpush.msra.mxu0 0.0
        %1296 = vmatpush.msra.mxu0 0.0
        %1297 = vmatpush.msra.mxu0 0.0
        %1298 = vmatpush.msra.mxu0 0.0
        %1299 = vmatpush.msra.mxu0 0.0
        %1300 = vmatpush.msra.mxu0 0.0
        %1301 = vmatpush.msra.mxu0 0.0
        %1302 = vmatpush.msra.mxu0 0.0
        %1303 = vmatpush.msra.mxu0 0.0
        %1304 = vmatpush.msra.mxu0 0.0
        %1305 = vmatpush.msra.mxu0 %v1288
        %1306 = vmatmul.f32.gmra.mxu0 %v1019
        %v1307 = vpop.f32.mrf.mxu0
        %v1308 = vadd.f32 0.0, %v1307
        %1309 = vdwg.mxu0
        %1311 = vset.pattern.permute.xlu0 32
        %1312 = vperm.xlu0 %1311, %v1223
        %v1313 = vpop.permute.xlu0 %1312
        %v1315 = vmul.f32 %v1313, %v1127
        %1316 = vset.pattern.permute.xlu0 33
        %1317 = vperm.xlu0 %1316, %v1223
        %v1318 = vpop.permute.xlu0 %1317
        %v1322 = vrot.slane %v1308, 7
        %v1323 = vsel %vm837, %v1322, %v1285
        %v1325 = vmul.f32 %v1318, %v1323
        %v1326 = vadd.f32 %v1315, %v1325
        %v1327 = vsub.f32 1.0, %v1223
        %1328 = vrot.lane.b32.xlu0 %v1223, 1
        %v1329 = vpop.permute.xlu0 %1328
        %v1331 = vsub.f32 %v1327, %v1329
        %1333 = vset.pattern.permute.xlu0 33
        %1334 = vperm.xlu0 %1333, %v1331
        %v1335 = vpop.permute.xlu0 %1334
        %v1339 = vrot.slane %v1262, 7
        %v1340 = vsel %vm837, %v1339, %v1242
        %v1342 = vmul.f32 %v1335, %v1340
        %v1343 = vadd.f32 %v1326, %v1342
        %v1345 = vrot.slane %v1343, 1
        %vm1347 = vcmask 253952
        %1348 = vst.msk [vmem:[%s637] sm:$0x1] %vm1347, %v1343
        %1349 = vst.msk [vmem:[%s637 + $0x4] sm:$0x1] %vm1347, %v1345
        %v1350 = vsel %vm1103, %v1343, -inf
        %1351 = vmax.xlane.f32.xlu0 %v1350
        %v1352 = vpop.xlane.xlu0 %1351
        %vm1353 = vcmp.ge.f32.partialorder %v1343, %v1352
        %v1354 = vsel %vm1353, %v678, 32
        %v1355 = vsel %vm1103, %v1354, 2147483647
        %v1356 = vand.u32 %v1355, 65535
        %v1357 = vshra.s32 %v1355, 16
        %v1358 = vcvt.s32.f32 %v1356
        %v1359 = vcvt.s32.f32 %v1357
        %1360 = vmin.xlane.f32.xlu0 %v1359
        %v1361 = vpop.xlane.xlu0 %1360
        %vm1362 = vcmp.eq.f32.partialorder %v1359, %v1361
        %v1363 = vsel %vm1362, %v1358, inf
        %1364 = vmin.xlane.f32.xlu0 %v1363
        %v1365 = vpop.xlane.xlu0 %1364
        %v1366 = vcvt.f32.s32 %v1365
        %v1367 = vcvt.f32.s32 %v1361
        %v1368 = vshll.u32 %v1367, 16
        %v1369 = vadd.s32 %v1368, %v1366
        %vm1370 = vcmp.eq.s32.totalorder %v678, %v1369
        %v1371 = vsel %vm1370, 1, 0
        %v1372 = vcvt.s32.f32 %v1371
        %v1374 = vsel %vm679, %v1372, 0
        %1376 = vmatpush.msra.mxu0 0.0
        %1377 = vmatpush.msra.mxu0 0.0
        %1378 = vmatpush.msra.mxu0 0.0
        %1379 = vmatpush.msra.mxu0 0.0
        %1380 = vmatpush.msra.mxu0 0.0
        %1381 = vmatpush.msra.mxu0 0.0
        %1382 = vmatpush.msra.mxu0 0.0
        %1383 = vmatpush.msra.mxu0 0.0
        %1384 = vmatpush.msra.mxu0 0.0
        %1385 = vmatpush.msra.mxu0 0.0
        %1386 = vmatpush.msra.mxu0 0.0
        %1387 = vmatpush.msra.mxu0 0.0
        %1388 = vmatpush.msra.mxu0 %v653
        %1389 = vmatpush.msra.mxu0 %v652
        %1390 = vmatpush.msra.mxu0 %v651
        %1391 = vmatpush.msra.mxu0 %v650
        %1392 = vmatmul.f32.gmra.mxu0 %v1374
        %v1393 = vpop.f32.mrf.mxu0
        %v1394 = vadd.f32 0.0, %v1393
        %1395 = vdwg.mxu0
        %v1397 = vsel %vm679, %v1394, 0
        %1399 = vmatpush.msra.mxu0 0.0
        %1400 = vmatpush.msra.mxu0 0.0
        %1401 = vmatpush.msra.mxu0 0.0
        %1402 = vmatpush.msra.mxu0 0.0
        %1403 = vmatpush.msra.mxu0 0.0
        %1404 = vmatpush.msra.mxu0 0.0
        %1405 = vmatpush.msra.mxu0 0.0
        %1406 = vmatpush.msra.mxu0 0.0
        %1407 = vmatpush.msra.mxu0 0.0
        %1408 = vmatpush.msra.mxu0 0.0
        %1409 = vmatpush.msra.mxu0 0.0
        %1410 = vmatpush.msra.mxu0 0.0
        %1411 = vmatpush.msra.mxu0 %v661
        %1412 = vmatpush.msra.mxu0 %v660
        %1413 = vmatpush.msra.mxu0 %v659
        %1414 = vmatpush.msra.mxu0 %v658
        %1415 = vmatmul.f32.gmra.mxu0 %v1397
        %v1416 = vpop.f32.mrf.mxu0
        %v1417 = vadd.f32 0.0, %v1416
        %1418 = vdwg.mxu0
        %v1419 = vadd.f32 %v1417, %v704
        %1420 = vmatpush.msra.mxu0 0.0
        %1421 = vmatpush.msra.mxu0 0.0
        %1422 = vmatpush.msra.mxu0 0.0
        %1423 = vmatpush.msra.mxu0 0.0
        %1424 = vmatpush.msra.mxu0 0.0
        %1425 = vmatpush.msra.mxu0 0.0
        %1426 = vmatpush.msra.mxu0 0.0
        %1427 = vmatpush.msra.mxu0 0.0
        %1428 = vmatpush.msra.mxu0 0.0
        %1429 = vmatpush.msra.mxu0 0.0
        %1430 = vmatpush.msra.mxu0 0.0
        %1431 = vmatpush.msra.mxu0 0.0
        %1432 = vmatpush.msra.mxu0 %v665
        %1433 = vmatpush.msra.mxu0 %v664
        %1434 = vmatpush.msra.mxu0 %v663
        %1435 = vmatpush.msra.mxu0 %v662
        %1436 = vmatmul.f32.gmra.mxu0 %v1081
        %v1437 = vpop.f32.mrf.mxu0
        %v1438 = vadd.f32 %v708, %v1437
        %1439 = vdwg.mxu0
        %v1440 = vadd.f32 %v1419, %v1438
        %v1441 = vxor.u32 %v1440, 2147483648
        %v1442 = vmul.f32 %v1441, 1.442695
        %v1443 = vpow.pop %v1442
        %v1444 = vadd.f32 %v1443, 1.0
        %v1445 = vrcp.pop %v1444
        %v1446 = vmul.f32 %v1444, %v1445
        %v1447 = vsub.f32 1.0, %v1446
        %v1448 = vmul.f32 %v1445, %v1447
        %v1449 = vadd.f32 %v1445, %v1448
        %vm1450 = vweird.f32 %v1444
        %vm1451 = vweird.f32 %v1445
        %vm1452 = vmor %vm1450, %vm1451
        %v1453 = vsel %vm1452, %v1445, %v1449
        %v1454 = vand.u32 2147483647, %v1444
        %vm1455 = vcmp.eq.f32.partialorder %v1454, 8.507059e+37
        %v1456 = vand.u32 %v1444, 2147483648
        %v1457 = vor.u32 1.1754944e-38, %v1456
        %v1458 = vsel %vm1455, %v1457, %v1453
        %v1459 = vmul.f32 1.0, %v1458
        %1461 = vrot.lane.b32.xlu0 %v1438, 64
        %v1462 = vpop.permute.xlu0 %1461
        %v1464 = vmul.f32 %v1459, %v1462
        %1466 = vrot.lane.b32.xlu0 %v1464, 64
        %v1467 = vpop.permute.xlu0 %1466
        %v1469 = vadd.f32 %v1419, %v1467
        %v1470 = vtanh.pop %v1469
        %v1471 = vsub.f32 1.0, %v1459
        %1473 = vrot.lane.b32.xlu0 %v1470, 96
        %v1474 = vpop.permute.xlu0 %1473
        %v1476 = vmul.f32 %v1471, %v1474
        %v1477 = vmul.f32 %v1459, %v774
        %v1478 = vadd.f32 %v1476, %v1477
        %v1480 = vrot.slane %v1478, 1
        %v1481 = vperm.slane %v1478, 0
        %1482 = vrot.lane.b32.xlu0 %v1481, 96
        %v1483 = vpop.permute.xlu0 %1482
        %v1484 = vsel %vm679, %v1483, 0
        %1486 = vmatpush.xpose.msra.mxu0 0.0
        %1487 = vmatpush.xpose.msra.mxu0 0.0
        %1488 = vmatpush.xpose.msra.mxu0 0.0
        %1489 = vmatpush.xpose.msra.mxu0 0.0
        %1490 = vmatpush.xpose.msra.mxu0 0.0
        %1491 = vmatpush.xpose.msra.mxu0 0.0
        %1492 = vmatpush.xpose.msra.mxu0 0.0
        %1493 = vmatpush.xpose.msra.mxu0 0.0
        %1494 = vmatpush.xpose.msra.mxu0 0.0
        %1495 = vmatpush.xpose.msra.mxu0 0.0
        %1496 = vmatpush.xpose.msra.mxu0 0.0
        %1497 = vmatpush.xpose.msra.mxu0 0.0
        %1498 = vmatpush.xpose.msra.mxu0 0.0
        %1499 = vmatpush.xpose.msra.mxu0 0.0
        %1500 = vmatpush.xpose.msra.mxu0 0.0
        %1501 = vmatpush.xpose.msra.mxu0 %v783
        %1502 = vmatmul.f32.gmra.mxu0 %v1484
        %v1503 = vpop.f32.mrf.mxu0
        %v1504 = vadd.f32 0.0, %v1503
        %1505 = vdwg.mxu0
        %v1506 = vperm.slane %v1480, 0
        %1507 = vrot.lane.b32.xlu0 %v1506, 96
        %v1508 = vpop.permute.xlu0 %1507
        %v1509 = vsel %vm679, %v1508, 0
        %1511 = vmatpush.xpose.msra.mxu0 0.0
        %1512 = vmatpush.xpose.msra.mxu0 0.0
        %1513 = vmatpush.xpose.msra.mxu0 0.0
        %1514 = vmatpush.xpose.msra.mxu0 0.0
        %1515 = vmatpush.xpose.msra.mxu0 0.0
        %1516 = vmatpush.xpose.msra.mxu0 0.0
        %1517 = vmatpush.xpose.msra.mxu0 0.0
        %1518 = vmatpush.xpose.msra.mxu0 0.0
        %1519 = vmatpush.xpose.msra.mxu0 0.0
        %1520 = vmatpush.xpose.msra.mxu0 0.0
        %1521 = vmatpush.xpose.msra.mxu0 0.0
        %1522 = vmatpush.xpose.msra.mxu0 0.0
        %1523 = vmatpush.xpose.msra.mxu0 0.0
        %1524 = vmatpush.xpose.msra.mxu0 0.0
        %1525 = vmatpush.xpose.msra.mxu0 0.0
        %1526 = vmatpush.xpose.msra.mxu0 %v811
        %1527 = vmatmul.f32.gmra.mxu0 %v1509
        %v1528 = vpop.f32.mrf.mxu0
        %v1529 = vadd.f32 0.0, %v1528
        %1530 = vdwg.mxu0
        %v1533 = vrot.slane %v1529, 7
        %v1534 = vsel %vm837, %v1533, %v1504
        %v1536 = vsel %vm833, %v1534, -1e+30
        %v1537 = vsel %vm841, %v1536, -inf
        %1538 = vmax.xlane.f32.xlu0 %v1537
        %v1539 = vpop.xlane.xlu0 %1538
        %v1540 = vsub.f32 %v1536, %v1539
        %v1541 = vmul.f32 %v1540, 1.442695
        %v1542 = vpow.pop %v1541
        %v1543 = vsel %vm841, %v1542, 0.0
        %1544 = vadd.xlane.f32.xlu0 %v1543
        %v1545 = vpop.xlane.xlu0 %1544
        %v1546 = vrcp.pop %v1545
        %v1547 = vmul.f32 %v1545, %v1546
        %v1548 = vsub.f32 1.0, %v1547
        %v1549 = vmul.f32 %v1546, %v1548
        %v1550 = vadd.f32 %v1546, %v1549
        %vm1551 = vweird.f32 %v1545
        %vm1552 = vweird.f32 %v1546
        %vm1553 = vmor %vm1551, %vm1552
        %v1554 = vsel %vm1553, %v1546, %v1550
        %v1555 = vand.u32 2147483647, %v1545
        %vm1556 = vcmp.eq.f32.partialorder %v1555, 8.507059e+37
        %v1557 = vand.u32 %v1545, 2147483648
        %v1558 = vor.u32 1.1754944e-38, %v1557
        %v1559 = vsel %vm1556, %v1558, %v1554
        %v1560 = vmul.f32 %v1542, %v1559
        %v1562 = vrot.slane %v1560, 1
        %v1563 = vsel %vm868, %v1560, 0
        %1565 = vmatpush.msra.mxu0 0.0
        %1566 = vmatpush.msra.mxu0 0.0
        %1567 = vmatpush.msra.mxu0 0.0
        %1568 = vmatpush.msra.mxu0 0.0
        %1569 = vmatpush.msra.mxu0 0.0
        %1570 = vmatpush.msra.mxu0 0.0
        %1571 = vmatpush.msra.mxu0 0.0
        %1572 = vmatpush.msra.mxu0 0.0
        %1573 = vmatpush.msra.mxu0 0.0
        %1574 = vmatpush.msra.mxu0 0.0
        %1575 = vmatpush.msra.mxu0 0.0
        %1576 = vmatpush.msra.mxu0 0.0
        %1577 = vmatpush.msra.mxu0 0.0
        %1578 = vmatpush.msra.mxu0 0.0
        %1579 = vmatpush.msra.mxu0 0.0
        %1580 = vmatpush.msra.mxu0 %v640
        %1581 = vmatmul.f32.gmra.mxu0 %v1563
        %v1582 = vpop.f32.mrf.mxu0
        %v1583 = vadd.f32 0.0, %v1582
        %1584 = vdwg.mxu0
        %v1585 = vsel %vm868, %v1562, 0
        %1587 = vmatpush.msra.mxu0 0.0
        %1588 = vmatpush.msra.mxu0 0.0
        %1589 = vmatpush.msra.mxu0 0.0
        %1590 = vmatpush.msra.mxu0 0.0
        %1591 = vmatpush.msra.mxu0 0.0
        %1592 = vmatpush.msra.mxu0 0.0
        %1593 = vmatpush.msra.mxu0 0.0
        %1594 = vmatpush.msra.mxu0 0.0
        %1595 = vmatpush.msra.mxu0 0.0
        %1596 = vmatpush.msra.mxu0 0.0
        %1597 = vmatpush.msra.mxu0 0.0
        %1598 = vmatpush.msra.mxu0 0.0
        %1599 = vmatpush.msra.mxu0 0.0
        %1600 = vmatpush.msra.mxu0 0.0
        %1601 = vmatpush.msra.mxu0 0.0
        %1602 = vmatpush.msra.mxu0 %v641
        %1603 = vmatmul.f32.gmra.mxu0 %v1585
        %v1604 = vpop.f32.mrf.mxu0
        %v1605 = vadd.f32 0.0, %v1604
        %1606 = vdwg.mxu0
        %1607 = vmatpush.xpose.msra.mxu0 0.0
        %1608 = vmatpush.xpose.msra.mxu0 0.0
        %1609 = vmatpush.xpose.msra.mxu0 0.0
        %1610 = vmatpush.xpose.msra.mxu0 0.0
        %1611 = vmatpush.xpose.msra.mxu0 0.0
        %1612 = vmatpush.xpose.msra.mxu0 0.0
        %1613 = vmatpush.xpose.msra.mxu0 0.0
        %1614 = vmatpush.xpose.msra.mxu0 0.0
        %1615 = vmatpush.xpose.msra.mxu0 0.0
        %1616 = vmatpush.xpose.msra.mxu0 0.0
        %1617 = vmatpush.xpose.msra.mxu0 0.0
        %1618 = vmatpush.xpose.msra.mxu0 0.0
        %1619 = vmatpush.xpose.msra.mxu0 0.0
        %1620 = vmatpush.xpose.msra.mxu0 0.0
        %1621 = vmatpush.xpose.msra.mxu0 0.0
        %1622 = vmatpush.xpose.msra.mxu0 %v914
        %1623 = vmatmul.f32.gmra.mxu0 %v1484
        %v1624 = vpop.f32.mrf.mxu0
        %v1625 = vadd.f32 0.0, %v1624
        %1626 = vdwg.mxu0
        %1627 = vmatpush.xpose.msra.mxu0 0.0
        %1628 = vmatpush.xpose.msra.mxu0 0.0
        %1629 = vmatpush.xpose.msra.mxu0 0.0
        %1630 = vmatpush.xpose.msra.mxu0 0.0
        %1631 = vmatpush.xpose.msra.mxu0 0.0
        %1632 = vmatpush.xpose.msra.mxu0 0.0
        %1633 = vmatpush.xpose.msra.mxu0 0.0
        %1634 = vmatpush.xpose.msra.mxu0 0.0
        %1635 = vmatpush.xpose.msra.mxu0 0.0
        %1636 = vmatpush.xpose.msra.mxu0 0.0
        %1637 = vmatpush.xpose.msra.mxu0 0.0
        %1638 = vmatpush.xpose.msra.mxu0 0.0
        %1639 = vmatpush.xpose.msra.mxu0 0.0
        %1640 = vmatpush.xpose.msra.mxu0 0.0
        %1641 = vmatpush.xpose.msra.mxu0 0.0
        %1642 = vmatpush.xpose.msra.mxu0 %v937
        %1643 = vmatmul.f32.gmra.mxu0 %v1509
        %v1644 = vpop.f32.mrf.mxu0
        %v1645 = vadd.f32 0.0, %v1644
        %1646 = vdwg.mxu0
        %v1649 = vrot.slane %v1645, 7
        %v1650 = vsel %vm837, %v1649, %v1625
        %v1652 = vsel %vm959, %v1650, -1e+30
        %v1653 = vsel %vm966, %v1652, -inf
        %1654 = vmax.xlane.f32.xlu0 %v1653
        %v1655 = vpop.xlane.xlu0 %1654
        %v1656 = vsub.f32 %v1652, %v1655
        %v1657 = vmul.f32 %v1656, 1.442695
        %v1658 = vpow.pop %v1657
        %v1659 = vsel %vm966, %v1658, 0.0
        %1660 = vadd.xlane.f32.xlu0 %v1659
        %v1661 = vpop.xlane.xlu0 %1660
        %v1662 = vrcp.pop %v1661
        %v1663 = vmul.f32 %v1661, %v1662
        %v1664 = vsub.f32 1.0, %v1663
        %v1665 = vmul.f32 %v1662, %v1664
        %v1666 = vadd.f32 %v1662, %v1665
        %vm1667 = vweird.f32 %v1661
        %vm1668 = vweird.f32 %v1662
        %vm1669 = vmor %vm1667, %vm1668
        %v1670 = vsel %vm1669, %v1662, %v1666
        %v1671 = vand.u32 2147483647, %v1661
        %vm1672 = vcmp.eq.f32.partialorder %v1671, 8.507059e+37
        %v1673 = vand.u32 %v1661, 2147483648
        %v1674 = vor.u32 1.1754944e-38, %v1673
        %v1675 = vsel %vm1672, %v1674, %v1670
        %v1676 = vmul.f32 %v1658, %v1675
        %v1678 = vrot.slane %v1676, 1
        %v1679 = vsel %vm993, %v1676, 0
        %1681 = vmatpush.msra.mxu0 0.0
        %1682 = vmatpush.msra.mxu0 0.0
        %1683 = vmatpush.msra.mxu0 0.0
        %1684 = vmatpush.msra.mxu0 0.0
        %1685 = vmatpush.msra.mxu0 0.0
        %1686 = vmatpush.msra.mxu0 0.0
        %1687 = vmatpush.msra.mxu0 0.0
        %1688 = vmatpush.msra.mxu0 0.0
        %1689 = vmatpush.msra.mxu0 0.0
        %1690 = vmatpush.msra.mxu0 0.0
        %1691 = vmatpush.msra.mxu0 0.0
        %1692 = vmatpush.msra.mxu0 0.0
        %1693 = vmatpush.msra.mxu0 0.0
        %1694 = vmatpush.msra.mxu0 0.0
        %1695 = vmatpush.msra.mxu0 0.0
        %1696 = vmatpush.msra.mxu0 %v997
        %1697 = vmatmul.f32.gmra.mxu0 %v1679
        %v1698 = vpop.f32.mrf.mxu0
        %v1699 = vadd.f32 0.0, %v1698
        %1700 = vdwg.mxu0
        %v1701 = vsel %vm993, %v1678, 0
        %1703 = vmatpush.msra.mxu0 0.0
        %1704 = vmatpush.msra.mxu0 0.0
        %1705 = vmatpush.msra.mxu0 0.0
        %1706 = vmatpush.msra.mxu0 0.0
        %1707 = vmatpush.msra.mxu0 0.0
        %1708 = vmatpush.msra.mxu0 0.0
        %1709 = vmatpush.msra.mxu0 0.0
        %1710 = vmatpush.msra.mxu0 0.0
        %1711 = vmatpush.msra.mxu0 0.0
        %1712 = vmatpush.msra.mxu0 0.0
        %1713 = vmatpush.msra.mxu0 0.0
        %1714 = vmatpush.msra.mxu0 0.0
        %1715 = vmatpush.msra.mxu0 0.0
        %1716 = vmatpush.msra.mxu0 0.0
        %1717 = vmatpush.msra.mxu0 0.0
        %1718 = vmatpush.msra.mxu0 %v1021
        %1719 = vmatmul.f32.gmra.mxu0 %v1701
        %v1720 = vpop.f32.mrf.mxu0
        %v1721 = vadd.f32 0.0, %v1720
        %1722 = vdwg.mxu0
        %1723 = vrot.lane.b32.xlu0 %v1478, 96
        %v1724 = vpop.permute.xlu0 %1723
        %v1725 = vsel %vm679, %v1724, 0
        %1727 = vmatpush.msra.mxu0 0.0
        %1728 = vmatpush.msra.mxu0 0.0
        %1729 = vmatpush.msra.mxu0 0.0
        %1730 = vmatpush.msra.mxu0 0.0
        %1731 = vmatpush.msra.mxu0 0.0
        %1732 = vmatpush.msra.mxu0 0.0
        %1733 = vmatpush.msra.mxu0 0.0
        %1734 = vmatpush.msra.mxu0 0.0
        %1735 = vmatpush.msra.mxu0 0.0
        %1736 = vmatpush.msra.mxu0 0.0
        %1737 = vmatpush.msra.mxu0 0.0
        %1738 = vmatpush.msra.mxu0 0.0
        %1739 = vmatpush.msra.mxu0 %v657
        %1740 = vmatpush.msra.mxu0 %v656
        %1741 = vmatpush.msra.mxu0 %v655
        %1742 = vmatpush.msra.mxu0 %v654
        %1743 = vmatmul.f32.gmra.mxu0 %v1725
        %v1744 = vpop.f32.mrf.mxu0
        %v1745 = vadd.f32 0.0, %v1744
        %1746 = vdwg.mxu0
        %v1747 = vsel %vm1103, %v1745, -inf
        %1748 = vmax.xlane.f32.xlu0 %v1747
        %v1749 = vpop.xlane.xlu0 %1748
        %v1750 = vsub.f32 %v1745, %v1749
        %v1751 = vmul.f32 %v1750, 1.442695
        %v1752 = vpow.pop %v1751
        %v1753 = vsel %vm1103, %v1752, 0.0
        %1754 = vadd.xlane.f32.xlu0 %v1753
        %v1755 = vpop.xlane.xlu0 %1754
        %v1756 = vrcp.pop %v1755
        %v1757 = vmul.f32 %v1755, %v1756
        %v1758 = vsub.f32 1.0, %v1757
        %v1759 = vmul.f32 %v1756, %v1758
        %v1760 = vadd.f32 %v1756, %v1759
        %vm1761 = vweird.f32 %v1755
        %vm1762 = vweird.f32 %v1756
        %vm1763 = vmor %vm1761, %vm1762
        %v1764 = vsel %vm1763, %v1756, %v1760
        %v1765 = vand.u32 2147483647, %v1755
        %vm1766 = vcmp.eq.f32.partialorder %v1765, 8.507059e+37
        %v1767 = vand.u32 %v1755, 2147483648
        %v1768 = vor.u32 1.1754944e-38, %v1767
        %v1769 = vsel %vm1766, %v1768, %v1764
        %v1770 = vmul.f32 %v1752, %v1769
        %1772 = vrot.lane.b32.xlu0 %v1417, 64
        %v1773 = vpop.permute.xlu0 %1772
        %v1775 = vadd.f32 %v1745, %v1773
        %v1776 = vadd.f32 %v1775, %v1136
        %v1779 = vrot.slane %v1605, 7
        %v1780 = vsel %vm837, %v1779, %v1583
        %v1781 = vsel %vm679, %v1780, 0
        %1783 = vmatpush.msra.mxu0 0.0
        %1784 = vmatpush.msra.mxu0 0.0
        %1785 = vmatpush.msra.mxu0 0.0
        %1786 = vmatpush.msra.mxu0 0.0
        %1787 = vmatpush.msra.mxu0 0.0
        %1788 = vmatpush.msra.mxu0 0.0
        %1789 = vmatpush.msra.mxu0 0.0
        %1790 = vmatpush.msra.mxu0 0.0
        %1791 = vmatpush.msra.mxu0 0.0
        %1792 = vmatpush.msra.mxu0 0.0
        %1793 = vmatpush.msra.mxu0 0.0
        %1794 = vmatpush.msra.mxu0 0.0
        %1795 = vmatpush.msra.mxu0 %v671
        %1796 = vmatpush.msra.mxu0 %v670
        %1797 = vmatpush.msra.mxu0 %v669
        %1798 = vmatpush.msra.mxu0 %v668
        %1799 = vmatmul.f32.gmra.mxu0 %v1781
        %v1800 = vpop.f32.mrf.mxu0
        %v1801 = vadd.f32 0.0, %v1800
        %1802 = vdwg.mxu0
        %1804 = vrot.lane.b32.xlu0 %v1801, 32
        %v1805 = vpop.permute.xlu0 %1804
        %v1807 = vadd.f32 %v1776, %v1805
        %v1810 = vrot.slane %v1721, 7
        %v1811 = vsel %vm837, %v1810, %v1699
        %v1812 = vsel %vm679, %v1811, 0
        %1814 = vmatpush.msra.mxu0 0.0
        %1815 = vmatpush.msra.mxu0 0.0
        %1816 = vmatpush.msra.mxu0 0.0
        %1817 = vmatpush.msra.mxu0 0.0
        %1818 = vmatpush.msra.mxu0 0.0
        %1819 = vmatpush.msra.mxu0 0.0
        %1820 = vmatpush.msra.mxu0 0.0
        %1821 = vmatpush.msra.mxu0 0.0
        %1822 = vmatpush.msra.mxu0 0.0
        %1823 = vmatpush.msra.mxu0 0.0
        %1824 = vmatpush.msra.mxu0 0.0
        %1825 = vmatpush.msra.mxu0 0.0
        %1826 = vmatpush.msra.mxu0 %v675
        %1827 = vmatpush.msra.mxu0 %v674
        %1828 = vmatpush.msra.mxu0 %v673
        %1829 = vmatpush.msra.mxu0 %v672
        %1830 = vmatmul.f32.gmra.mxu0 %v1812
        %v1831 = vpop.f32.mrf.mxu0
        %v1832 = vadd.f32 0.0, %v1831
        %1833 = vdwg.mxu0
        %1835 = vrot.lane.b32.xlu0 %v1832, 32
        %v1836 = vpop.permute.xlu0 %1835
        %v1838 = vadd.f32 %v1807, %v1836
        %v1839 = vsel %vm1195, %v1838, -inf
        %1840 = vmax.xlane.f32.xlu0 %v1839
        %v1841 = vpop.xlane.xlu0 %1840
        %v1842 = vsub.f32 %v1838, %v1841
        %v1843 = vmul.f32 %v1842, 1.442695
        %v1844 = vpow.pop %v1843
        %1846 = vrot.lane.b32.xlu0 %v1844, 96
        %v1847 = vpop.permute.xlu0 %1846
        %v1849 = vsel %vm1077, %v1847, 0.0
        %1850 = vadd.xlane.f32.xlu0 %v1849
        %v1851 = vpop.xlane.xlu0 %1850
        %v1852 = vrcp.pop %v1851
        %v1853 = vmul.f32 %v1851, %v1852
        %v1854 = vsub.f32 1.0, %v1853
        %v1855 = vmul.f32 %v1852, %v1854
        %v1856 = vadd.f32 %v1852, %v1855
        %vm1857 = vweird.f32 %v1851
        %vm1858 = vweird.f32 %v1852
        %vm1859 = vmor %vm1857, %vm1858
        %v1860 = vsel %vm1859, %v1852, %v1856
        %v1861 = vand.u32 2147483647, %v1851
        %vm1862 = vcmp.eq.f32.partialorder %v1861, 8.507059e+37
        %v1863 = vand.u32 %v1851, 2147483648
        %v1864 = vor.u32 1.1754944e-38, %v1863
        %v1865 = vsel %vm1862, %v1864, %v1860
        %v1866 = vmul.f32 %v1844, %v1865
        %1867 = vmatpush.msra.mxu0 0.0
        %1868 = vmatpush.msra.mxu0 0.0
        %1869 = vmatpush.msra.mxu0 0.0
        %1870 = vmatpush.msra.mxu0 0.0
        %1871 = vmatpush.msra.mxu0 0.0
        %1872 = vmatpush.msra.mxu0 0.0
        %1873 = vmatpush.msra.mxu0 0.0
        %1874 = vmatpush.msra.mxu0 0.0
        %1875 = vmatpush.msra.mxu0 0.0
        %1876 = vmatpush.msra.mxu0 0.0
        %1877 = vmatpush.msra.mxu0 0.0
        %1878 = vmatpush.msra.mxu0 0.0
        %1879 = vmatpush.msra.mxu0 0.0
        %1880 = vmatpush.msra.mxu0 0.0
        %1881 = vmatpush.msra.mxu0 0.0
        %1882 = vmatpush.msra.mxu0 %v646
        %1883 = vmatmul.f32.gmra.mxu0 %v1563
        %v1884 = vpop.f32.mrf.mxu0
        %v1885 = vadd.f32 0.0, %v1884
        %1886 = vdwg.mxu0
        %1887 = vmatpush.msra.mxu0 0.0
        %1888 = vmatpush.msra.mxu0 0.0
        %1889 = vmatpush.msra.mxu0 0.0
        %1890 = vmatpush.msra.mxu0 0.0
        %1891 = vmatpush.msra.mxu0 0.0
        %1892 = vmatpush.msra.mxu0 0.0
        %1893 = vmatpush.msra.mxu0 0.0
        %1894 = vmatpush.msra.mxu0 0.0
        %1895 = vmatpush.msra.mxu0 0.0
        %1896 = vmatpush.msra.mxu0 0.0
        %1897 = vmatpush.msra.mxu0 0.0
        %1898 = vmatpush.msra.mxu0 0.0
        %1899 = vmatpush.msra.mxu0 0.0
        %1900 = vmatpush.msra.mxu0 0.0
        %1901 = vmatpush.msra.mxu0 0.0
        %1902 = vmatpush.msra.mxu0 %v647
        %1903 = vmatmul.f32.gmra.mxu0 %v1585
        %v1904 = vpop.f32.mrf.mxu0
        %v1905 = vadd.f32 0.0, %v1904
        %1906 = vdwg.mxu0
        %1907 = vmatpush.msra.mxu0 0.0
        %1908 = vmatpush.msra.mxu0 0.0
        %1909 = vmatpush.msra.mxu0 0.0
        %1910 = vmatpush.msra.mxu0 0.0
        %1911 = vmatpush.msra.mxu0 0.0
        %1912 = vmatpush.msra.mxu0 0.0
        %1913 = vmatpush.msra.mxu0 0.0
        %1914 = vmatpush.msra.mxu0 0.0
        %1915 = vmatpush.msra.mxu0 0.0
        %1916 = vmatpush.msra.mxu0 0.0
        %1917 = vmatpush.msra.mxu0 0.0
        %1918 = vmatpush.msra.mxu0 0.0
        %1919 = vmatpush.msra.mxu0 0.0
        %1920 = vmatpush.msra.mxu0 0.0
        %1921 = vmatpush.msra.mxu0 0.0
        %1922 = vmatpush.msra.mxu0 %v1265
        %1923 = vmatmul.f32.gmra.mxu0 %v1679
        %v1924 = vpop.f32.mrf.mxu0
        %v1925 = vadd.f32 0.0, %v1924
        %1926 = vdwg.mxu0
        %1927 = vmatpush.msra.mxu0 0.0
        %1928 = vmatpush.msra.mxu0 0.0
        %1929 = vmatpush.msra.mxu0 0.0
        %1930 = vmatpush.msra.mxu0 0.0
        %1931 = vmatpush.msra.mxu0 0.0
        %1932 = vmatpush.msra.mxu0 0.0
        %1933 = vmatpush.msra.mxu0 0.0
        %1934 = vmatpush.msra.mxu0 0.0
        %1935 = vmatpush.msra.mxu0 0.0
        %1936 = vmatpush.msra.mxu0 0.0
        %1937 = vmatpush.msra.mxu0 0.0
        %1938 = vmatpush.msra.mxu0 0.0
        %1939 = vmatpush.msra.mxu0 0.0
        %1940 = vmatpush.msra.mxu0 0.0
        %1941 = vmatpush.msra.mxu0 0.0
        %1942 = vmatpush.msra.mxu0 %v1288
        %1943 = vmatmul.f32.gmra.mxu0 %v1701
        %v1944 = vpop.f32.mrf.mxu0
        %v1945 = vadd.f32 0.0, %v1944
        %1946 = vdwg.mxu0
        %1948 = vset.pattern.permute.xlu0 32
        %1949 = vperm.xlu0 %1948, %v1866
        %v1950 = vpop.permute.xlu0 %1949
        %v1952 = vmul.f32 %v1950, %v1770
        %1953 = vset.pattern.permute.xlu0 33
        %1954 = vperm.xlu0 %1953, %v1866
        %v1955 = vpop.permute.xlu0 %1954
        %v1959 = vrot.slane %v1945, 7
        %v1960 = vsel %vm837, %v1959, %v1925
        %v1962 = vmul.f32 %v1955, %v1960
        %v1963 = vadd.f32 %v1952, %v1962
        %v1964 = vsub.f32 1.0, %v1866
        %1965 = vrot.lane.b32.xlu0 %v1866, 1
        %v1966 = vpop.permute.xlu0 %1965
        %v1968 = vsub.f32 %v1964, %v1966
        %1970 = vset.pattern.permute.xlu0 33
        %1971 = vperm.xlu0 %1970, %v1968
        %v1972 = vpop.permute.xlu0 %1971
        %v1976 = vrot.slane %v1905, 7
        %v1977 = vsel %vm837, %v1976, %v1885
        %v1979 = vmul.f32 %v1972, %v1977
        %v1980 = vadd.f32 %v1963, %v1979
        %v1982 = vrot.slane %v1980, 1
        %1984 = vst.msk [vmem:[%s637 + $0x1] sm:$0x1] %vm1347, %v1980
        %1985 = vst.msk [vmem:[%s637 + $0x5] sm:$0x1] %vm1347, %v1982
        %v1986 = vsel %vm1103, %v1980, -inf
        %1987 = vmax.xlane.f32.xlu0 %v1986
        %v1988 = vpop.xlane.xlu0 %1987
        %vm1989 = vcmp.ge.f32.partialorder %v1980, %v1988
        %v1990 = vsel %vm1989, %v678, 32
        %v1991 = vsel %vm1103, %v1990, 2147483647
        %v1992 = vand.u32 %v1991, 65535
        %v1993 = vshra.s32 %v1991, 16
        %v1994 = vcvt.s32.f32 %v1992
        %v1995 = vcvt.s32.f32 %v1993
        %1996 = vmin.xlane.f32.xlu0 %v1995
        %v1997 = vpop.xlane.xlu0 %1996
        %vm1998 = vcmp.eq.f32.partialorder %v1995, %v1997
        %v1999 = vsel %vm1998, %v1994, inf
        %2000 = vmin.xlane.f32.xlu0 %v1999
        %v2001 = vpop.xlane.xlu0 %2000
        %v2002 = vcvt.f32.s32 %v2001
        %v2003 = vcvt.f32.s32 %v1997
        %v2004 = vshll.u32 %v2003, 16
        %v2005 = vadd.s32 %v2004, %v2002
        %vm2006 = vcmp.eq.s32.totalorder %v678, %v2005
        %v2007 = vsel %vm2006, 1, 0
        %v2008 = vcvt.s32.f32 %v2007
        %v2010 = vsel %vm679, %v2008, 0
        %2012 = vmatpush.msra.mxu0 0.0
        %2013 = vmatpush.msra.mxu0 0.0
        %2014 = vmatpush.msra.mxu0 0.0
        %2015 = vmatpush.msra.mxu0 0.0
        %2016 = vmatpush.msra.mxu0 0.0
        %2017 = vmatpush.msra.mxu0 0.0
        %2018 = vmatpush.msra.mxu0 0.0
        %2019 = vmatpush.msra.mxu0 0.0
        %2020 = vmatpush.msra.mxu0 0.0
        %2021 = vmatpush.msra.mxu0 0.0
        %2022 = vmatpush.msra.mxu0 0.0
        %2023 = vmatpush.msra.mxu0 0.0
        %2024 = vmatpush.msra.mxu0 %v653
        %2025 = vmatpush.msra.mxu0 %v652
        %2026 = vmatpush.msra.mxu0 %v651
        %2027 = vmatpush.msra.mxu0 %v650
        %2028 = vmatmul.f32.gmra.mxu0 %v2010
        %v2029 = vpop.f32.mrf.mxu0
        %v2030 = vadd.f32 0.0, %v2029
        %2031 = vdwg.mxu0
        %v2033 = vsel %vm679, %v2030, 0
        %2035 = vmatpush.msra.mxu0 0.0
        %2036 = vmatpush.msra.mxu0 0.0
        %2037 = vmatpush.msra.mxu0 0.0
        %2038 = vmatpush.msra.mxu0 0.0
        %2039 = vmatpush.msra.mxu0 0.0
        %2040 = vmatpush.msra.mxu0 0.0
        %2041 = vmatpush.msra.mxu0 0.0
        %2042 = vmatpush.msra.mxu0 0.0
        %2043 = vmatpush.msra.mxu0 0.0
        %2044 = vmatpush.msra.mxu0 0.0
        %2045 = vmatpush.msra.mxu0 0.0
        %2046 = vmatpush.msra.mxu0 0.0
        %2047 = vmatpush.msra.mxu0 %v661
        %2048 = vmatpush.msra.mxu0 %v660
        %2049 = vmatpush.msra.mxu0 %v659
        %2050 = vmatpush.msra.mxu0 %v658
        %2051 = vmatmul.f32.gmra.mxu0 %v2033
        %v2052 = vpop.f32.mrf.mxu0
        %v2053 = vadd.f32 0.0, %v2052
        %2054 = vdwg.mxu0
        %v2055 = vadd.f32 %v2053, %v704
        %2056 = vmatpush.msra.mxu0 0.0
        %2057 = vmatpush.msra.mxu0 0.0
        %2058 = vmatpush.msra.mxu0 0.0
        %2059 = vmatpush.msra.mxu0 0.0
        %2060 = vmatpush.msra.mxu0 0.0
        %2061 = vmatpush.msra.mxu0 0.0
        %2062 = vmatpush.msra.mxu0 0.0
        %2063 = vmatpush.msra.mxu0 0.0
        %2064 = vmatpush.msra.mxu0 0.0
        %2065 = vmatpush.msra.mxu0 0.0
        %2066 = vmatpush.msra.mxu0 0.0
        %2067 = vmatpush.msra.mxu0 0.0
        %2068 = vmatpush.msra.mxu0 %v665
        %2069 = vmatpush.msra.mxu0 %v664
        %2070 = vmatpush.msra.mxu0 %v663
        %2071 = vmatpush.msra.mxu0 %v662
        %2072 = vmatmul.f32.gmra.mxu0 %v1725
        %v2073 = vpop.f32.mrf.mxu0
        %v2074 = vadd.f32 %v708, %v2073
        %2075 = vdwg.mxu0
        %v2076 = vadd.f32 %v2055, %v2074
        %v2077 = vxor.u32 %v2076, 2147483648
        %v2078 = vmul.f32 %v2077, 1.442695
        %v2079 = vpow.pop %v2078
        %v2080 = vadd.f32 %v2079, 1.0
        %v2081 = vrcp.pop %v2080
        %v2082 = vmul.f32 %v2080, %v2081
        %v2083 = vsub.f32 1.0, %v2082
        %v2084 = vmul.f32 %v2081, %v2083
        %v2085 = vadd.f32 %v2081, %v2084
        %vm2086 = vweird.f32 %v2080
        %vm2087 = vweird.f32 %v2081
        %vm2088 = vmor %vm2086, %vm2087
        %v2089 = vsel %vm2088, %v2081, %v2085
        %v2090 = vand.u32 2147483647, %v2080
        %vm2091 = vcmp.eq.f32.partialorder %v2090, 8.507059e+37
        %v2092 = vand.u32 %v2080, 2147483648
        %v2093 = vor.u32 1.1754944e-38, %v2092
        %v2094 = vsel %vm2091, %v2093, %v2089
        %v2095 = vmul.f32 1.0, %v2094
        %2097 = vrot.lane.b32.xlu0 %v2074, 64
        %v2098 = vpop.permute.xlu0 %2097
        %v2100 = vmul.f32 %v2095, %v2098
        %2102 = vrot.lane.b32.xlu0 %v2100, 64
        %v2103 = vpop.permute.xlu0 %2102
        %v2105 = vadd.f32 %v2055, %v2103
        %v2106 = vtanh.pop %v2105
        %v2107 = vsub.f32 1.0, %v2095
        %2109 = vrot.lane.b32.xlu0 %v2106, 96
        %v2110 = vpop.permute.xlu0 %2109
        %v2112 = vmul.f32 %v2107, %v2110
        %v2113 = vmul.f32 %v2095, %v1478
        %v2114 = vadd.f32 %v2112, %v2113
        %v2116 = vrot.slane %v2114, 1
        %v2117 = vperm.slane %v2114, 0
        %2118 = vrot.lane.b32.xlu0 %v2117, 96
        %v2119 = vpop.permute.xlu0 %2118
        %v2120 = vsel %vm679, %v2119, 0
        %2122 = vmatpush.xpose.msra.mxu0 0.0
        %2123 = vmatpush.xpose.msra.mxu0 0.0
        %2124 = vmatpush.xpose.msra.mxu0 0.0
        %2125 = vmatpush.xpose.msra.mxu0 0.0
        %2126 = vmatpush.xpose.msra.mxu0 0.0
        %2127 = vmatpush.xpose.msra.mxu0 0.0
        %2128 = vmatpush.xpose.msra.mxu0 0.0
        %2129 = vmatpush.xpose.msra.mxu0 0.0
        %2130 = vmatpush.xpose.msra.mxu0 0.0
        %2131 = vmatpush.xpose.msra.mxu0 0.0
        %2132 = vmatpush.xpose.msra.mxu0 0.0
        %2133 = vmatpush.xpose.msra.mxu0 0.0
        %2134 = vmatpush.xpose.msra.mxu0 0.0
        %2135 = vmatpush.xpose.msra.mxu0 0.0
        %2136 = vmatpush.xpose.msra.mxu0 0.0
        %2137 = vmatpush.xpose.msra.mxu0 %v783
        %2138 = vmatmul.f32.gmra.mxu0 %v2120
        %v2139 = vpop.f32.mrf.mxu0
        %v2140 = vadd.f32 0.0, %v2139
        %2141 = vdwg.mxu0
        %v2142 = vperm.slane %v2116, 0
        %2143 = vrot.lane.b32.xlu0 %v2142, 96
        %v2144 = vpop.permute.xlu0 %2143
        %v2145 = vsel %vm679, %v2144, 0
        %2147 = vmatpush.xpose.msra.mxu0 0.0
        %2148 = vmatpush.xpose.msra.mxu0 0.0
        %2149 = vmatpush.xpose.msra.mxu0 0.0
        %2150 = vmatpush.xpose.msra.mxu0 0.0
        %2151 = vmatpush.xpose.msra.mxu0 0.0
        %2152 = vmatpush.xpose.msra.mxu0 0.0
        %2153 = vmatpush.xpose.msra.mxu0 0.0
        %2154 = vmatpush.xpose.msra.mxu0 0.0
        %2155 = vmatpush.xpose.msra.mxu0 0.0
        %2156 = vmatpush.xpose.msra.mxu0 0.0
        %2157 = vmatpush.xpose.msra.mxu0 0.0
        %2158 = vmatpush.xpose.msra.mxu0 0.0
        %2159 = vmatpush.xpose.msra.mxu0 0.0
        %2160 = vmatpush.xpose.msra.mxu0 0.0
        %2161 = vmatpush.xpose.msra.mxu0 0.0
        %2162 = vmatpush.xpose.msra.mxu0 %v811
        %2163 = vmatmul.f32.gmra.mxu0 %v2145
        %v2164 = vpop.f32.mrf.mxu0
        %v2165 = vadd.f32 0.0, %v2164
        %2166 = vdwg.mxu0
        %v2169 = vrot.slane %v2165, 7
        %v2170 = vsel %vm837, %v2169, %v2140
        %v2172 = vsel %vm833, %v2170, -1e+30
        %v2173 = vsel %vm841, %v2172, -inf
        %2174 = vmax.xlane.f32.xlu0 %v2173
        %v2175 = vpop.xlane.xlu0 %2174
        %v2176 = vsub.f32 %v2172, %v2175
        %v2177 = vmul.f32 %v2176, 1.442695
        %v2178 = vpow.pop %v2177
        %v2179 = vsel %vm841, %v2178, 0.0
        %2180 = vadd.xlane.f32.xlu0 %v2179
        %v2181 = vpop.xlane.xlu0 %2180
        %v2182 = vrcp.pop %v2181
        %v2183 = vmul.f32 %v2181, %v2182
        %v2184 = vsub.f32 1.0, %v2183
        %v2185 = vmul.f32 %v2182, %v2184
        %v2186 = vadd.f32 %v2182, %v2185
        %vm2187 = vweird.f32 %v2181
        %vm2188 = vweird.f32 %v2182
        %vm2189 = vmor %vm2187, %vm2188
        %v2190 = vsel %vm2189, %v2182, %v2186
        %v2191 = vand.u32 2147483647, %v2181
        %vm2192 = vcmp.eq.f32.partialorder %v2191, 8.507059e+37
        %v2193 = vand.u32 %v2181, 2147483648
        %v2194 = vor.u32 1.1754944e-38, %v2193
        %v2195 = vsel %vm2192, %v2194, %v2190
        %v2196 = vmul.f32 %v2178, %v2195
        %v2198 = vrot.slane %v2196, 1
        %v2199 = vsel %vm868, %v2196, 0
        %2201 = vmatpush.msra.mxu0 0.0
        %2202 = vmatpush.msra.mxu0 0.0
        %2203 = vmatpush.msra.mxu0 0.0
        %2204 = vmatpush.msra.mxu0 0.0
        %2205 = vmatpush.msra.mxu0 0.0
        %2206 = vmatpush.msra.mxu0 0.0
        %2207 = vmatpush.msra.mxu0 0.0
        %2208 = vmatpush.msra.mxu0 0.0
        %2209 = vmatpush.msra.mxu0 0.0
        %2210 = vmatpush.msra.mxu0 0.0
        %2211 = vmatpush.msra.mxu0 0.0
        %2212 = vmatpush.msra.mxu0 0.0
        %2213 = vmatpush.msra.mxu0 0.0
        %2214 = vmatpush.msra.mxu0 0.0
        %2215 = vmatpush.msra.mxu0 0.0
        %2216 = vmatpush.msra.mxu0 %v640
        %2217 = vmatmul.f32.gmra.mxu0 %v2199
        %v2218 = vpop.f32.mrf.mxu0
        %v2219 = vadd.f32 0.0, %v2218
        %2220 = vdwg.mxu0
        %v2221 = vsel %vm868, %v2198, 0
        %2223 = vmatpush.msra.mxu0 0.0
        %2224 = vmatpush.msra.mxu0 0.0
        %2225 = vmatpush.msra.mxu0 0.0
        %2226 = vmatpush.msra.mxu0 0.0
        %2227 = vmatpush.msra.mxu0 0.0
        %2228 = vmatpush.msra.mxu0 0.0
        %2229 = vmatpush.msra.mxu0 0.0
        %2230 = vmatpush.msra.mxu0 0.0
        %2231 = vmatpush.msra.mxu0 0.0
        %2232 = vmatpush.msra.mxu0 0.0
        %2233 = vmatpush.msra.mxu0 0.0
        %2234 = vmatpush.msra.mxu0 0.0
        %2235 = vmatpush.msra.mxu0 0.0
        %2236 = vmatpush.msra.mxu0 0.0
        %2237 = vmatpush.msra.mxu0 0.0
        %2238 = vmatpush.msra.mxu0 %v641
        %2239 = vmatmul.f32.gmra.mxu0 %v2221
        %v2240 = vpop.f32.mrf.mxu0
        %v2241 = vadd.f32 0.0, %v2240
        %2242 = vdwg.mxu0
        %2243 = vmatpush.xpose.msra.mxu0 0.0
        %2244 = vmatpush.xpose.msra.mxu0 0.0
        %2245 = vmatpush.xpose.msra.mxu0 0.0
        %2246 = vmatpush.xpose.msra.mxu0 0.0
        %2247 = vmatpush.xpose.msra.mxu0 0.0
        %2248 = vmatpush.xpose.msra.mxu0 0.0
        %2249 = vmatpush.xpose.msra.mxu0 0.0
        %2250 = vmatpush.xpose.msra.mxu0 0.0
        %2251 = vmatpush.xpose.msra.mxu0 0.0
        %2252 = vmatpush.xpose.msra.mxu0 0.0
        %2253 = vmatpush.xpose.msra.mxu0 0.0
        %2254 = vmatpush.xpose.msra.mxu0 0.0
        %2255 = vmatpush.xpose.msra.mxu0 0.0
        %2256 = vmatpush.xpose.msra.mxu0 0.0
        %2257 = vmatpush.xpose.msra.mxu0 0.0
        %2258 = vmatpush.xpose.msra.mxu0 %v914
        %2259 = vmatmul.f32.gmra.mxu0 %v2120
        %v2260 = vpop.f32.mrf.mxu0
        %v2261 = vadd.f32 0.0, %v2260
        %2262 = vdwg.mxu0
        %2263 = vmatpush.xpose.msra.mxu0 0.0
        %2264 = vmatpush.xpose.msra.mxu0 0.0
        %2265 = vmatpush.xpose.msra.mxu0 0.0
        %2266 = vmatpush.xpose.msra.mxu0 0.0
        %2267 = vmatpush.xpose.msra.mxu0 0.0
        %2268 = vmatpush.xpose.msra.mxu0 0.0
        %2269 = vmatpush.xpose.msra.mxu0 0.0
        %2270 = vmatpush.xpose.msra.mxu0 0.0
        %2271 = vmatpush.xpose.msra.mxu0 0.0
        %2272 = vmatpush.xpose.msra.mxu0 0.0
        %2273 = vmatpush.xpose.msra.mxu0 0.0
        %2274 = vmatpush.xpose.msra.mxu0 0.0
        %2275 = vmatpush.xpose.msra.mxu0 0.0
        %2276 = vmatpush.xpose.msra.mxu0 0.0
        %2277 = vmatpush.xpose.msra.mxu0 0.0
        %2278 = vmatpush.xpose.msra.mxu0 %v937
        %2279 = vmatmul.f32.gmra.mxu0 %v2145
        %v2280 = vpop.f32.mrf.mxu0
        %v2281 = vadd.f32 0.0, %v2280
        %2282 = vdwg.mxu0
        %v2285 = vrot.slane %v2281, 7
        %v2286 = vsel %vm837, %v2285, %v2261
        %v2288 = vsel %vm959, %v2286, -1e+30
        %v2289 = vsel %vm966, %v2288, -inf
        %2290 = vmax.xlane.f32.xlu0 %v2289
        %v2291 = vpop.xlane.xlu0 %2290
        %v2292 = vsub.f32 %v2288, %v2291
        %v2293 = vmul.f32 %v2292, 1.442695
        %v2294 = vpow.pop %v2293
        %v2295 = vsel %vm966, %v2294, 0.0
        %2296 = vadd.xlane.f32.xlu0 %v2295
        %v2297 = vpop.xlane.xlu0 %2296
        %v2298 = vrcp.pop %v2297
        %v2299 = vmul.f32 %v2297, %v2298
        %v2300 = vsub.f32 1.0, %v2299
        %v2301 = vmul.f32 %v2298, %v2300
        %v2302 = vadd.f32 %v2298, %v2301
        %vm2303 = vweird.f32 %v2297
        %vm2304 = vweird.f32 %v2298
        %vm2305 = vmor %vm2303, %vm2304
        %v2306 = vsel %vm2305, %v2298, %v2302
        %v2307 = vand.u32 2147483647, %v2297
        %vm2308 = vcmp.eq.f32.partialorder %v2307, 8.507059e+37
        %v2309 = vand.u32 %v2297, 2147483648
        %v2310 = vor.u32 1.1754944e-38, %v2309
        %v2311 = vsel %vm2308, %v2310, %v2306
        %v2312 = vmul.f32 %v2294, %v2311
        %v2314 = vrot.slane %v2312, 1
        %v2315 = vsel %vm993, %v2312, 0
        %2317 = vmatpush.msra.mxu0 0.0
        %2318 = vmatpush.msra.mxu0 0.0
        %2319 = vmatpush.msra.mxu0 0.0
        %2320 = vmatpush.msra.mxu0 0.0
        %2321 = vmatpush.msra.mxu0 0.0
        %2322 = vmatpush.msra.mxu0 0.0
        %2323 = vmatpush.msra.mxu0 0.0
        %2324 = vmatpush.msra.mxu0 0.0
        %2325 = vmatpush.msra.mxu0 0.0
        %2326 = vmatpush.msra.mxu0 0.0
        %2327 = vmatpush.msra.mxu0 0.0
        %2328 = vmatpush.msra.mxu0 0.0
        %2329 = vmatpush.msra.mxu0 0.0
        %2330 = vmatpush.msra.mxu0 0.0
        %2331 = vmatpush.msra.mxu0 0.0
        %2332 = vmatpush.msra.mxu0 %v997
        %2333 = vmatmul.f32.gmra.mxu0 %v2315
        %v2334 = vpop.f32.mrf.mxu0
        %v2335 = vadd.f32 0.0, %v2334
        %2336 = vdwg.mxu0
        %v2337 = vsel %vm993, %v2314, 0
        %2339 = vmatpush.msra.mxu0 0.0
        %2340 = vmatpush.msra.mxu0 0.0
        %2341 = vmatpush.msra.mxu0 0.0
        %2342 = vmatpush.msra.mxu0 0.0
        %2343 = vmatpush.msra.mxu0 0.0
        %2344 = vmatpush.msra.mxu0 0.0
        %2345 = vmatpush.msra.mxu0 0.0
        %2346 = vmatpush.msra.mxu0 0.0
        %2347 = vmatpush.msra.mxu0 0.0
        %2348 = vmatpush.msra.mxu0 0.0
        %2349 = vmatpush.msra.mxu0 0.0
        %2350 = vmatpush.msra.mxu0 0.0
        %2351 = vmatpush.msra.mxu0 0.0
        %2352 = vmatpush.msra.mxu0 0.0
        %2353 = vmatpush.msra.mxu0 0.0
        %2354 = vmatpush.msra.mxu0 %v1021
        %2355 = vmatmul.f32.gmra.mxu0 %v2337
        %v2356 = vpop.f32.mrf.mxu0
        %v2357 = vadd.f32 0.0, %v2356
        %2358 = vdwg.mxu0
        %2359 = vrot.lane.b32.xlu0 %v2114, 96
        %v2360 = vpop.permute.xlu0 %2359
        %v2361 = vsel %vm679, %v2360, 0
        %2363 = vmatpush.msra.mxu0 0.0
        %2364 = vmatpush.msra.mxu0 0.0
        %2365 = vmatpush.msra.mxu0 0.0
        %2366 = vmatpush.msra.mxu0 0.0
        %2367 = vmatpush.msra.mxu0 0.0
        %2368 = vmatpush.msra.mxu0 0.0
        %2369 = vmatpush.msra.mxu0 0.0
        %2370 = vmatpush.msra.mxu0 0.0
        %2371 = vmatpush.msra.mxu0 0.0
        %2372 = vmatpush.msra.mxu0 0.0
        %2373 = vmatpush.msra.mxu0 0.0
        %2374 = vmatpush.msra.mxu0 0.0
        %2375 = vmatpush.msra.mxu0 %v657
        %2376 = vmatpush.msra.mxu0 %v656
        %2377 = vmatpush.msra.mxu0 %v655
        %2378 = vmatpush.msra.mxu0 %v654
        %2379 = vmatmul.f32.gmra.mxu0 %v2361
        %v2380 = vpop.f32.mrf.mxu0
        %v2381 = vadd.f32 0.0, %v2380
        %2382 = vdwg.mxu0
        %v2383 = vsel %vm1103, %v2381, -inf
        %2384 = vmax.xlane.f32.xlu0 %v2383
        %v2385 = vpop.xlane.xlu0 %2384
        %v2386 = vsub.f32 %v2381, %v2385
        %v2387 = vmul.f32 %v2386, 1.442695
        %v2388 = vpow.pop %v2387
        %v2389 = vsel %vm1103, %v2388, 0.0
        %2390 = vadd.xlane.f32.xlu0 %v2389
        %v2391 = vpop.xlane.xlu0 %2390
        %v2392 = vrcp.pop %v2391
        %v2393 = vmul.f32 %v2391, %v2392
        %v2394 = vsub.f32 1.0, %v2393
        %v2395 = vmul.f32 %v2392, %v2394
        %v2396 = vadd.f32 %v2392, %v2395
        %vm2397 = vweird.f32 %v2391
        %vm2398 = vweird.f32 %v2392
        %vm2399 = vmor %vm2397, %vm2398
        %v2400 = vsel %vm2399, %v2392, %v2396
        %v2401 = vand.u32 2147483647, %v2391
        %vm2402 = vcmp.eq.f32.partialorder %v2401, 8.507059e+37
        %v2403 = vand.u32 %v2391, 2147483648
        %v2404 = vor.u32 1.1754944e-38, %v2403
        %v2405 = vsel %vm2402, %v2404, %v2400
        %v2406 = vmul.f32 %v2388, %v2405
        %2408 = vrot.lane.b32.xlu0 %v2053, 64
        %v2409 = vpop.permute.xlu0 %2408
        %v2411 = vadd.f32 %v2381, %v2409
        %v2412 = vadd.f32 %v2411, %v1136
        %v2415 = vrot.slane %v2241, 7
        %v2416 = vsel %vm837, %v2415, %v2219
        %v2417 = vsel %vm679, %v2416, 0
        %2419 = vmatpush.msra.mxu0 0.0
        %2420 = vmatpush.msra.mxu0 0.0
        %2421 = vmatpush.msra.mxu0 0.0
        %2422 = vmatpush.msra.mxu0 0.0
        %2423 = vmatpush.msra.mxu0 0.0
        %2424 = vmatpush.msra.mxu0 0.0
        %2425 = vmatpush.msra.mxu0 0.0
        %2426 = vmatpush.msra.mxu0 0.0
        %2427 = vmatpush.msra.mxu0 0.0
        %2428 = vmatpush.msra.mxu0 0.0
        %2429 = vmatpush.msra.mxu0 0.0
        %2430 = vmatpush.msra.mxu0 0.0
        %2431 = vmatpush.msra.mxu0 %v671
        %2432 = vmatpush.msra.mxu0 %v670
        %2433 = vmatpush.msra.mxu0 %v669
        %2434 = vmatpush.msra.mxu0 %v668
        %2435 = vmatmul.f32.gmra.mxu0 %v2417
        %v2436 = vpop.f32.mrf.mxu0
        %v2437 = vadd.f32 0.0, %v2436
        %2438 = vdwg.mxu0
        %2440 = vrot.lane.b32.xlu0 %v2437, 32
        %v2441 = vpop.permute.xlu0 %2440
        %v2443 = vadd.f32 %v2412, %v2441
        %v2446 = vrot.slane %v2357, 7
        %v2447 = vsel %vm837, %v2446, %v2335
        %v2448 = vsel %vm679, %v2447, 0
        %2450 = vmatpush.msra.mxu0 0.0
        %2451 = vmatpush.msra.mxu0 0.0
        %2452 = vmatpush.msra.mxu0 0.0
        %2453 = vmatpush.msra.mxu0 0.0
        %2454 = vmatpush.msra.mxu0 0.0
        %2455 = vmatpush.msra.mxu0 0.0
        %2456 = vmatpush.msra.mxu0 0.0
        %2457 = vmatpush.msra.mxu0 0.0
        %2458 = vmatpush.msra.mxu0 0.0
        %2459 = vmatpush.msra.mxu0 0.0
        %2460 = vmatpush.msra.mxu0 0.0
        %2461 = vmatpush.msra.mxu0 0.0
        %2462 = vmatpush.msra.mxu0 %v675
        %2463 = vmatpush.msra.mxu0 %v674
        %2464 = vmatpush.msra.mxu0 %v673
        %2465 = vmatpush.msra.mxu0 %v672
        %2466 = vmatmul.f32.gmra.mxu0 %v2448
        %v2467 = vpop.f32.mrf.mxu0
        %v2468 = vadd.f32 0.0, %v2467
        %2469 = vdwg.mxu0
        %2471 = vrot.lane.b32.xlu0 %v2468, 32
        %v2472 = vpop.permute.xlu0 %2471
        %v2474 = vadd.f32 %v2443, %v2472
        %v2475 = vsel %vm1195, %v2474, -inf
        %2476 = vmax.xlane.f32.xlu0 %v2475
        %v2477 = vpop.xlane.xlu0 %2476
        %v2478 = vsub.f32 %v2474, %v2477
        %v2479 = vmul.f32 %v2478, 1.442695
        %v2480 = vpow.pop %v2479
        %2482 = vrot.lane.b32.xlu0 %v2480, 96
        %v2483 = vpop.permute.xlu0 %2482
        %v2485 = vsel %vm1077, %v2483, 0.0
        %2486 = vadd.xlane.f32.xlu0 %v2485
        %v2487 = vpop.xlane.xlu0 %2486
        %v2488 = vrcp.pop %v2487
        %v2489 = vmul.f32 %v2487, %v2488
        %v2490 = vsub.f32 1.0, %v2489
        %v2491 = vmul.f32 %v2488, %v2490
        %v2492 = vadd.f32 %v2488, %v2491
        %vm2493 = vweird.f32 %v2487
        %vm2494 = vweird.f32 %v2488
        %vm2495 = vmor %vm2493, %vm2494
        %v2496 = vsel %vm2495, %v2488, %v2492
        %v2497 = vand.u32 2147483647, %v2487
        %vm2498 = vcmp.eq.f32.partialorder %v2497, 8.507059e+37
        %v2499 = vand.u32 %v2487, 2147483648
        %v2500 = vor.u32 1.1754944e-38, %v2499
        %v2501 = vsel %vm2498, %v2500, %v2496
        %v2502 = vmul.f32 %v2480, %v2501
        %2503 = vmatpush.msra.mxu0 0.0
        %2504 = vmatpush.msra.mxu0 0.0
        %2505 = vmatpush.msra.mxu0 0.0
        %2506 = vmatpush.msra.mxu0 0.0
        %2507 = vmatpush.msra.mxu0 0.0
        %2508 = vmatpush.msra.mxu0 0.0
        %2509 = vmatpush.msra.mxu0 0.0
        %2510 = vmatpush.msra.mxu0 0.0
        %2511 = vmatpush.msra.mxu0 0.0
        %2512 = vmatpush.msra.mxu0 0.0
        %2513 = vmatpush.msra.mxu0 0.0
        %2514 = vmatpush.msra.mxu0 0.0
        %2515 = vmatpush.msra.mxu0 0.0
        %2516 = vmatpush.msra.mxu0 0.0
        %2517 = vmatpush.msra.mxu0 0.0
        %2518 = vmatpush.msra.mxu0 %v646
        %2519 = vmatmul.f32.gmra.mxu0 %v2199
        %v2520 = vpop.f32.mrf.mxu0
        %v2521 = vadd.f32 0.0, %v2520
        %2522 = vdwg.mxu0
        %2523 = vmatpush.msra.mxu0 0.0
        %2524 = vmatpush.msra.mxu0 0.0
        %2525 = vmatpush.msra.mxu0 0.0
        %2526 = vmatpush.msra.mxu0 0.0
        %2527 = vmatpush.msra.mxu0 0.0
        %2528 = vmatpush.msra.mxu0 0.0
        %2529 = vmatpush.msra.mxu0 0.0
        %2530 = vmatpush.msra.mxu0 0.0
        %2531 = vmatpush.msra.mxu0 0.0
        %2532 = vmatpush.msra.mxu0 0.0
        %2533 = vmatpush.msra.mxu0 0.0
        %2534 = vmatpush.msra.mxu0 0.0
        %2535 = vmatpush.msra.mxu0 0.0
        %2536 = vmatpush.msra.mxu0 0.0
        %2537 = vmatpush.msra.mxu0 0.0
        %2538 = vmatpush.msra.mxu0 %v647
        %2539 = vmatmul.f32.gmra.mxu0 %v2221
        %v2540 = vpop.f32.mrf.mxu0
        %v2541 = vadd.f32 0.0, %v2540
        %2542 = vdwg.mxu0
        %2543 = vmatpush.msra.mxu0 0.0
        %2544 = vmatpush.msra.mxu0 0.0
        %2545 = vmatpush.msra.mxu0 0.0
        %2546 = vmatpush.msra.mxu0 0.0
        %2547 = vmatpush.msra.mxu0 0.0
        %2548 = vmatpush.msra.mxu0 0.0
        %2549 = vmatpush.msra.mxu0 0.0
        %2550 = vmatpush.msra.mxu0 0.0
        %2551 = vmatpush.msra.mxu0 0.0
        %2552 = vmatpush.msra.mxu0 0.0
        %2553 = vmatpush.msra.mxu0 0.0
        %2554 = vmatpush.msra.mxu0 0.0
        %2555 = vmatpush.msra.mxu0 0.0
        %2556 = vmatpush.msra.mxu0 0.0
        %2557 = vmatpush.msra.mxu0 0.0
        %2558 = vmatpush.msra.mxu0 %v1265
        %2559 = vmatmul.f32.gmra.mxu0 %v2315
        %v2560 = vpop.f32.mrf.mxu0
        %v2561 = vadd.f32 0.0, %v2560
        %2562 = vdwg.mxu0
        %2563 = vmatpush.msra.mxu0 0.0
        %2564 = vmatpush.msra.mxu0 0.0
        %2565 = vmatpush.msra.mxu0 0.0
        %2566 = vmatpush.msra.mxu0 0.0
        %2567 = vmatpush.msra.mxu0 0.0
        %2568 = vmatpush.msra.mxu0 0.0
        %2569 = vmatpush.msra.mxu0 0.0
        %2570 = vmatpush.msra.mxu0 0.0
        %2571 = vmatpush.msra.mxu0 0.0
        %2572 = vmatpush.msra.mxu0 0.0
        %2573 = vmatpush.msra.mxu0 0.0
        %2574 = vmatpush.msra.mxu0 0.0
        %2575 = vmatpush.msra.mxu0 0.0
        %2576 = vmatpush.msra.mxu0 0.0
        %2577 = vmatpush.msra.mxu0 0.0
        %2578 = vmatpush.msra.mxu0 %v1288
        %2579 = vmatmul.f32.gmra.mxu0 %v2337
        %v2580 = vpop.f32.mrf.mxu0
        %v2581 = vadd.f32 0.0, %v2580
        %2582 = vdwg.mxu0
        %2584 = vset.pattern.permute.xlu0 32
        %2585 = vperm.xlu0 %2584, %v2502
        %v2586 = vpop.permute.xlu0 %2585
        %v2588 = vmul.f32 %v2586, %v2406
        %2589 = vset.pattern.permute.xlu0 33
        %2590 = vperm.xlu0 %2589, %v2502
        %v2591 = vpop.permute.xlu0 %2590
        %v2595 = vrot.slane %v2581, 7
        %v2596 = vsel %vm837, %v2595, %v2561
        %v2598 = vmul.f32 %v2591, %v2596
        %v2599 = vadd.f32 %v2588, %v2598
        %v2600 = vsub.f32 1.0, %v2502
        %2601 = vrot.lane.b32.xlu0 %v2502, 1
        %v2602 = vpop.permute.xlu0 %2601
        %v2604 = vsub.f32 %v2600, %v2602
        %2606 = vset.pattern.permute.xlu0 33
        %2607 = vperm.xlu0 %2606, %v2604
        %v2608 = vpop.permute.xlu0 %2607
        %v2612 = vrot.slane %v2541, 7
        %v2613 = vsel %vm837, %v2612, %v2521
        %v2615 = vmul.f32 %v2608, %v2613
        %v2616 = vadd.f32 %v2599, %v2615
        %v2618 = vrot.slane %v2616, 1
        %2620 = vst.msk [vmem:[%s637 + $0x2] sm:$0x1] %vm1347, %v2616
        %2621 = vst.msk [vmem:[%s637 + $0x6] sm:$0x1] %vm1347, %v2618
        %v2622 = vsel %vm1103, %v2616, -inf
        %2623 = vmax.xlane.f32.xlu0 %v2622
        %v2624 = vpop.xlane.xlu0 %2623
        %vm2625 = vcmp.ge.f32.partialorder %v2616, %v2624
        %v2626 = vsel %vm2625, %v678, 32
        %v2627 = vsel %vm1103, %v2626, 2147483647
        %v2628 = vand.u32 %v2627, 65535
        %v2629 = vshra.s32 %v2627, 16
        %v2630 = vcvt.s32.f32 %v2628
        %v2631 = vcvt.s32.f32 %v2629
        %2632 = vmin.xlane.f32.xlu0 %v2631
        %v2633 = vpop.xlane.xlu0 %2632
        %vm2634 = vcmp.eq.f32.partialorder %v2631, %v2633
        %v2635 = vsel %vm2634, %v2630, inf
        %2636 = vmin.xlane.f32.xlu0 %v2635
        %v2637 = vpop.xlane.xlu0 %2636
        %v2638 = vcvt.f32.s32 %v2637
        %v2639 = vcvt.f32.s32 %v2633
        %v2640 = vshll.u32 %v2639, 16
        %v2641 = vadd.s32 %v2640, %v2638
        %vm2642 = vcmp.eq.s32.totalorder %v678, %v2641
        %v2643 = vsel %vm2642, 1, 0
        %v2644 = vcvt.s32.f32 %v2643
        %v2646 = vsel %vm679, %v2644, 0
        %2648 = vmatpush.msra.mxu0 0.0
        %2649 = vmatpush.msra.mxu0 0.0
        %2650 = vmatpush.msra.mxu0 0.0
        %2651 = vmatpush.msra.mxu0 0.0
        %2652 = vmatpush.msra.mxu0 0.0
        %2653 = vmatpush.msra.mxu0 0.0
        %2654 = vmatpush.msra.mxu0 0.0
        %2655 = vmatpush.msra.mxu0 0.0
        %2656 = vmatpush.msra.mxu0 0.0
        %2657 = vmatpush.msra.mxu0 0.0
        %2658 = vmatpush.msra.mxu0 0.0
        %2659 = vmatpush.msra.mxu0 0.0
        %2660 = vmatpush.msra.mxu0 %v653
        %2661 = vmatpush.msra.mxu0 %v652
        %2662 = vmatpush.msra.mxu0 %v651
        %2663 = vmatpush.msra.mxu0 %v650
        %2664 = vmatmul.f32.gmra.mxu0 %v2646
        %v2665 = vpop.f32.mrf.mxu0
        %v2666 = vadd.f32 0.0, %v2665
        %2667 = vdwg.mxu0
        %v2669 = vsel %vm679, %v2666, 0
        %2671 = vmatpush.msra.mxu0 0.0
        %2672 = vmatpush.msra.mxu0 0.0
        %2673 = vmatpush.msra.mxu0 0.0
        %2674 = vmatpush.msra.mxu0 0.0
        %2675 = vmatpush.msra.mxu0 0.0
        %2676 = vmatpush.msra.mxu0 0.0
        %2677 = vmatpush.msra.mxu0 0.0
        %2678 = vmatpush.msra.mxu0 0.0
        %2679 = vmatpush.msra.mxu0 0.0
        %2680 = vmatpush.msra.mxu0 0.0
        %2681 = vmatpush.msra.mxu0 0.0
        %2682 = vmatpush.msra.mxu0 0.0
        %2683 = vmatpush.msra.mxu0 %v661
        %2684 = vmatpush.msra.mxu0 %v660
        %2685 = vmatpush.msra.mxu0 %v659
        %2686 = vmatpush.msra.mxu0 %v658
        %2687 = vmatmul.f32.gmra.mxu0 %v2669
        %v2688 = vpop.f32.mrf.mxu0
        %v2689 = vadd.f32 0.0, %v2688
        %2690 = vdwg.mxu0
        %v2691 = vadd.f32 %v2689, %v704
        %2692 = vmatpush.msra.mxu0 0.0
        %2693 = vmatpush.msra.mxu0 0.0
        %2694 = vmatpush.msra.mxu0 0.0
        %2695 = vmatpush.msra.mxu0 0.0
        %2696 = vmatpush.msra.mxu0 0.0
        %2697 = vmatpush.msra.mxu0 0.0
        %2698 = vmatpush.msra.mxu0 0.0
        %2699 = vmatpush.msra.mxu0 0.0
        %2700 = vmatpush.msra.mxu0 0.0
        %2701 = vmatpush.msra.mxu0 0.0
        %2702 = vmatpush.msra.mxu0 0.0
        %2703 = vmatpush.msra.mxu0 0.0
        %2704 = vmatpush.msra.mxu0 %v665
        %2705 = vmatpush.msra.mxu0 %v664
        %2706 = vmatpush.msra.mxu0 %v663
        %2707 = vmatpush.msra.mxu0 %v662
        %2708 = vmatmul.f32.gmra.mxu0 %v2361
        %v2709 = vpop.f32.mrf.mxu0
        %v2710 = vadd.f32 %v708, %v2709
        %2711 = vdwg.mxu0
        %v2712 = vadd.f32 %v2691, %v2710
        %v2713 = vxor.u32 %v2712, 2147483648
        %v2714 = vmul.f32 %v2713, 1.442695
        %v2715 = vpow.pop %v2714
        %v2716 = vadd.f32 %v2715, 1.0
        %v2717 = vrcp.pop %v2716
        %v2718 = vmul.f32 %v2716, %v2717
        %v2719 = vsub.f32 1.0, %v2718
        %v2720 = vmul.f32 %v2717, %v2719
        %v2721 = vadd.f32 %v2717, %v2720
        %vm2722 = vweird.f32 %v2716
        %vm2723 = vweird.f32 %v2717
        %vm2724 = vmor %vm2722, %vm2723
        %v2725 = vsel %vm2724, %v2717, %v2721
        %v2726 = vand.u32 2147483647, %v2716
        %vm2727 = vcmp.eq.f32.partialorder %v2726, 8.507059e+37
        %v2728 = vand.u32 %v2716, 2147483648
        %v2729 = vor.u32 1.1754944e-38, %v2728
        %v2730 = vsel %vm2727, %v2729, %v2725
        %v2731 = vmul.f32 1.0, %v2730
        %2733 = vrot.lane.b32.xlu0 %v2710, 64
        %v2734 = vpop.permute.xlu0 %2733
        %v2736 = vmul.f32 %v2731, %v2734
        %2738 = vrot.lane.b32.xlu0 %v2736, 64
        %v2739 = vpop.permute.xlu0 %2738
        %v2741 = vadd.f32 %v2691, %v2739
        %v2742 = vtanh.pop %v2741
        %v2743 = vsub.f32 1.0, %v2731
        %2745 = vrot.lane.b32.xlu0 %v2742, 96
        %v2746 = vpop.permute.xlu0 %2745
        %v2748 = vmul.f32 %v2743, %v2746
        %v2749 = vmul.f32 %v2731, %v2114
        %v2750 = vadd.f32 %v2748, %v2749
        %v2752 = vrot.slane %v2750, 1
        %v2753 = vperm.slane %v2750, 0
        %2754 = vrot.lane.b32.xlu0 %v2753, 96
        %v2755 = vpop.permute.xlu0 %2754
        %v2756 = vsel %vm679, %v2755, 0
        %2758 = vmatpush.xpose.msra.mxu0 0.0
        %2759 = vmatpush.xpose.msra.mxu0 0.0
        %2760 = vmatpush.xpose.msra.mxu0 0.0
        %2761 = vmatpush.xpose.msra.mxu0 0.0
        %2762 = vmatpush.xpose.msra.mxu0 0.0
        %2763 = vmatpush.xpose.msra.mxu0 0.0
        %2764 = vmatpush.xpose.msra.mxu0 0.0
        %2765 = vmatpush.xpose.msra.mxu0 0.0
        %2766 = vmatpush.xpose.msra.mxu0 0.0
        %2767 = vmatpush.xpose.msra.mxu0 0.0
        %2768 = vmatpush.xpose.msra.mxu0 0.0
        %2769 = vmatpush.xpose.msra.mxu0 0.0
        %2770 = vmatpush.xpose.msra.mxu0 0.0
        %2771 = vmatpush.xpose.msra.mxu0 0.0
        %2772 = vmatpush.xpose.msra.mxu0 0.0
        %2773 = vmatpush.xpose.msra.mxu0 %v783
        %2774 = vmatmul.f32.gmra.mxu0 %v2756
        %v2775 = vpop.f32.mrf.mxu0
        %v2776 = vadd.f32 0.0, %v2775
        %2777 = vdwg.mxu0
        %v2778 = vperm.slane %v2752, 0
        %2779 = vrot.lane.b32.xlu0 %v2778, 96
        %v2780 = vpop.permute.xlu0 %2779
        %v2781 = vsel %vm679, %v2780, 0
        %2783 = vmatpush.xpose.msra.mxu0 0.0
        %2784 = vmatpush.xpose.msra.mxu0 0.0
        %2785 = vmatpush.xpose.msra.mxu0 0.0
        %2786 = vmatpush.xpose.msra.mxu0 0.0
        %2787 = vmatpush.xpose.msra.mxu0 0.0
        %2788 = vmatpush.xpose.msra.mxu0 0.0
        %2789 = vmatpush.xpose.msra.mxu0 0.0
        %2790 = vmatpush.xpose.msra.mxu0 0.0
        %2791 = vmatpush.xpose.msra.mxu0 0.0
        %2792 = vmatpush.xpose.msra.mxu0 0.0
        %2793 = vmatpush.xpose.msra.mxu0 0.0
        %2794 = vmatpush.xpose.msra.mxu0 0.0
        %2795 = vmatpush.xpose.msra.mxu0 0.0
        %2796 = vmatpush.xpose.msra.mxu0 0.0
        %2797 = vmatpush.xpose.msra.mxu0 0.0
        %2798 = vmatpush.xpose.msra.mxu0 %v811
        %2799 = vmatmul.f32.gmra.mxu0 %v2781
        %v2800 = vpop.f32.mrf.mxu0
        %v2801 = vadd.f32 0.0, %v2800
        %2802 = vdwg.mxu0
        %v2805 = vrot.slane %v2801, 7
        %v2806 = vsel %vm837, %v2805, %v2776
        %v2808 = vsel %vm833, %v2806, -1e+30
        %v2809 = vsel %vm841, %v2808, -inf
        %2810 = vmax.xlane.f32.xlu0 %v2809
        %v2811 = vpop.xlane.xlu0 %2810
        %v2812 = vsub.f32 %v2808, %v2811
        %v2813 = vmul.f32 %v2812, 1.442695
        %v2814 = vpow.pop %v2813
        %v2815 = vsel %vm841, %v2814, 0.0
        %2816 = vadd.xlane.f32.xlu0 %v2815
        %v2817 = vpop.xlane.xlu0 %2816
        %v2818 = vrcp.pop %v2817
        %v2819 = vmul.f32 %v2817, %v2818
        %v2820 = vsub.f32 1.0, %v2819
        %v2821 = vmul.f32 %v2818, %v2820
        %v2822 = vadd.f32 %v2818, %v2821
        %vm2823 = vweird.f32 %v2817
        %vm2824 = vweird.f32 %v2818
        %vm2825 = vmor %vm2823, %vm2824
        %v2826 = vsel %vm2825, %v2818, %v2822
        %v2827 = vand.u32 2147483647, %v2817
        %vm2828 = vcmp.eq.f32.partialorder %v2827, 8.507059e+37
        %v2829 = vand.u32 %v2817, 2147483648
        %v2830 = vor.u32 1.1754944e-38, %v2829
        %v2831 = vsel %vm2828, %v2830, %v2826
        %v2832 = vmul.f32 %v2814, %v2831
        %v2834 = vrot.slane %v2832, 1
        %v2835 = vsel %vm868, %v2832, 0
        %2837 = vmatpush.msra.mxu0 0.0
        %2838 = vmatpush.msra.mxu0 0.0
        %2839 = vmatpush.msra.mxu0 0.0
        %2840 = vmatpush.msra.mxu0 0.0
        %2841 = vmatpush.msra.mxu0 0.0
        %2842 = vmatpush.msra.mxu0 0.0
        %2843 = vmatpush.msra.mxu0 0.0
        %2844 = vmatpush.msra.mxu0 0.0
        %2845 = vmatpush.msra.mxu0 0.0
        %2846 = vmatpush.msra.mxu0 0.0
        %2847 = vmatpush.msra.mxu0 0.0
        %2848 = vmatpush.msra.mxu0 0.0
        %2849 = vmatpush.msra.mxu0 0.0
        %2850 = vmatpush.msra.mxu0 0.0
        %2851 = vmatpush.msra.mxu0 0.0
        %2852 = vmatpush.msra.mxu0 %v640
        %2853 = vmatmul.f32.gmra.mxu0 %v2835
        %v2854 = vpop.f32.mrf.mxu0
        %v2855 = vadd.f32 0.0, %v2854
        %2856 = vdwg.mxu0
        %v2857 = vsel %vm868, %v2834, 0
        %2859 = vmatpush.msra.mxu0 0.0
        %2860 = vmatpush.msra.mxu0 0.0
        %2861 = vmatpush.msra.mxu0 0.0
        %2862 = vmatpush.msra.mxu0 0.0
        %2863 = vmatpush.msra.mxu0 0.0
        %2864 = vmatpush.msra.mxu0 0.0
        %2865 = vmatpush.msra.mxu0 0.0
        %2866 = vmatpush.msra.mxu0 0.0
        %2867 = vmatpush.msra.mxu0 0.0
        %2868 = vmatpush.msra.mxu0 0.0
        %2869 = vmatpush.msra.mxu0 0.0
        %2870 = vmatpush.msra.mxu0 0.0
        %2871 = vmatpush.msra.mxu0 0.0
        %2872 = vmatpush.msra.mxu0 0.0
        %2873 = vmatpush.msra.mxu0 0.0
        %2874 = vmatpush.msra.mxu0 %v641
        %2875 = vmatmul.f32.gmra.mxu0 %v2857
        %v2876 = vpop.f32.mrf.mxu0
        %v2877 = vadd.f32 0.0, %v2876
        %2878 = vdwg.mxu0
        %2879 = vmatpush.xpose.msra.mxu0 0.0
        %2880 = vmatpush.xpose.msra.mxu0 0.0
        %2881 = vmatpush.xpose.msra.mxu0 0.0
        %2882 = vmatpush.xpose.msra.mxu0 0.0
        %2883 = vmatpush.xpose.msra.mxu0 0.0
        %2884 = vmatpush.xpose.msra.mxu0 0.0
        %2885 = vmatpush.xpose.msra.mxu0 0.0
        %2886 = vmatpush.xpose.msra.mxu0 0.0
        %2887 = vmatpush.xpose.msra.mxu0 0.0
        %2888 = vmatpush.xpose.msra.mxu0 0.0
        %2889 = vmatpush.xpose.msra.mxu0 0.0
        %2890 = vmatpush.xpose.msra.mxu0 0.0
        %2891 = vmatpush.xpose.msra.mxu0 0.0
        %2892 = vmatpush.xpose.msra.mxu0 0.0
        %2893 = vmatpush.xpose.msra.mxu0 0.0
        %2894 = vmatpush.xpose.msra.mxu0 %v914
        %2895 = vmatmul.f32.gmra.mxu0 %v2756
        %v2896 = vpop.f32.mrf.mxu0
        %v2897 = vadd.f32 0.0, %v2896
        %2898 = vdwg.mxu0
        %2899 = vmatpush.xpose.msra.mxu0 0.0
        %2900 = vmatpush.xpose.msra.mxu0 0.0
        %2901 = vmatpush.xpose.msra.mxu0 0.0
        %2902 = vmatpush.xpose.msra.mxu0 0.0
        %2903 = vmatpush.xpose.msra.mxu0 0.0
        %2904 = vmatpush.xpose.msra.mxu0 0.0
        %2905 = vmatpush.xpose.msra.mxu0 0.0
        %2906 = vmatpush.xpose.msra.mxu0 0.0
        %2907 = vmatpush.xpose.msra.mxu0 0.0
        %2908 = vmatpush.xpose.msra.mxu0 0.0
        %2909 = vmatpush.xpose.msra.mxu0 0.0
        %2910 = vmatpush.xpose.msra.mxu0 0.0
        %2911 = vmatpush.xpose.msra.mxu0 0.0
        %2912 = vmatpush.xpose.msra.mxu0 0.0
        %2913 = vmatpush.xpose.msra.mxu0 0.0
        %2914 = vmatpush.xpose.msra.mxu0 %v937
        %2915 = vmatmul.f32.gmra.mxu0 %v2781
        %v2916 = vpop.f32.mrf.mxu0
        %v2917 = vadd.f32 0.0, %v2916
        %2918 = vdwg.mxu0
        %v2921 = vrot.slane %v2917, 7
        %v2922 = vsel %vm837, %v2921, %v2897
        %v2924 = vsel %vm959, %v2922, -1e+30
        %v2925 = vsel %vm966, %v2924, -inf
        %2926 = vmax.xlane.f32.xlu0 %v2925
        %v2927 = vpop.xlane.xlu0 %2926
        %v2928 = vsub.f32 %v2924, %v2927
        %v2929 = vmul.f32 %v2928, 1.442695
        %v2930 = vpow.pop %v2929
        %v2931 = vsel %vm966, %v2930, 0.0
        %2932 = vadd.xlane.f32.xlu0 %v2931
        %v2933 = vpop.xlane.xlu0 %2932
        %v2934 = vrcp.pop %v2933
        %v2935 = vmul.f32 %v2933, %v2934
        %v2936 = vsub.f32 1.0, %v2935
        %v2937 = vmul.f32 %v2934, %v2936
        %v2938 = vadd.f32 %v2934, %v2937
        %vm2939 = vweird.f32 %v2933
        %vm2940 = vweird.f32 %v2934
        %vm2941 = vmor %vm2939, %vm2940
        %v2942 = vsel %vm2941, %v2934, %v2938
        %v2943 = vand.u32 2147483647, %v2933
        %vm2944 = vcmp.eq.f32.partialorder %v2943, 8.507059e+37
        %v2945 = vand.u32 %v2933, 2147483648
        %v2946 = vor.u32 1.1754944e-38, %v2945
        %v2947 = vsel %vm2944, %v2946, %v2942
        %v2948 = vmul.f32 %v2930, %v2947
        %v2950 = vrot.slane %v2948, 1
        %v2951 = vsel %vm993, %v2948, 0
        %2953 = vmatpush.msra.mxu0 0.0
        %2954 = vmatpush.msra.mxu0 0.0
        %2955 = vmatpush.msra.mxu0 0.0
        %2956 = vmatpush.msra.mxu0 0.0
        %2957 = vmatpush.msra.mxu0 0.0
        %2958 = vmatpush.msra.mxu0 0.0
        %2959 = vmatpush.msra.mxu0 0.0
        %2960 = vmatpush.msra.mxu0 0.0
        %2961 = vmatpush.msra.mxu0 0.0
        %2962 = vmatpush.msra.mxu0 0.0
        %2963 = vmatpush.msra.mxu0 0.0
        %2964 = vmatpush.msra.mxu0 0.0
        %2965 = vmatpush.msra.mxu0 0.0
        %2966 = vmatpush.msra.mxu0 0.0
        %2967 = vmatpush.msra.mxu0 0.0
        %2968 = vmatpush.msra.mxu0 %v997
        %2969 = vmatmul.f32.gmra.mxu0 %v2951
        %v2970 = vpop.f32.mrf.mxu0
        %v2971 = vadd.f32 0.0, %v2970
        %2972 = vdwg.mxu0
        %v2973 = vsel %vm993, %v2950, 0
        %2975 = vmatpush.msra.mxu0 0.0
        %2976 = vmatpush.msra.mxu0 0.0
        %2977 = vmatpush.msra.mxu0 0.0
        %2978 = vmatpush.msra.mxu0 0.0
        %2979 = vmatpush.msra.mxu0 0.0
        %2980 = vmatpush.msra.mxu0 0.0
        %2981 = vmatpush.msra.mxu0 0.0
        %2982 = vmatpush.msra.mxu0 0.0
        %2983 = vmatpush.msra.mxu0 0.0
        %2984 = vmatpush.msra.mxu0 0.0
        %2985 = vmatpush.msra.mxu0 0.0
        %2986 = vmatpush.msra.mxu0 0.0
        %2987 = vmatpush.msra.mxu0 0.0
        %2988 = vmatpush.msra.mxu0 0.0
        %2989 = vmatpush.msra.mxu0 0.0
        %2990 = vmatpush.msra.mxu0 %v1021
        %2991 = vmatmul.f32.gmra.mxu0 %v2973
        %v2992 = vpop.f32.mrf.mxu0
        %v2993 = vadd.f32 0.0, %v2992
        %2994 = vdwg.mxu0
        %2995 = vrot.lane.b32.xlu0 %v2750, 96
        %v2996 = vpop.permute.xlu0 %2995
        %v2997 = vsel %vm679, %v2996, 0
        %2999 = vmatpush.msra.mxu0 0.0
        %3000 = vmatpush.msra.mxu0 0.0
        %3001 = vmatpush.msra.mxu0 0.0
        %3002 = vmatpush.msra.mxu0 0.0
        %3003 = vmatpush.msra.mxu0 0.0
        %3004 = vmatpush.msra.mxu0 0.0
        %3005 = vmatpush.msra.mxu0 0.0
        %3006 = vmatpush.msra.mxu0 0.0
        %3007 = vmatpush.msra.mxu0 0.0
        %3008 = vmatpush.msra.mxu0 0.0
        %3009 = vmatpush.msra.mxu0 0.0
        %3010 = vmatpush.msra.mxu0 0.0
        %3011 = vmatpush.msra.mxu0 %v657
        %3012 = vmatpush.msra.mxu0 %v656
        %3013 = vmatpush.msra.mxu0 %v655
        %3014 = vmatpush.msra.mxu0 %v654
        %3015 = vmatmul.f32.gmra.mxu0 %v2997
        %v3016 = vpop.f32.mrf.mxu0
        %v3017 = vadd.f32 0.0, %v3016
        %3018 = vdwg.mxu0
        %v3019 = vsel %vm1103, %v3017, -inf
        %3020 = vmax.xlane.f32.xlu0 %v3019
        %v3021 = vpop.xlane.xlu0 %3020
        %v3022 = vsub.f32 %v3017, %v3021
        %v3023 = vmul.f32 %v3022, 1.442695
        %v3024 = vpow.pop %v3023
        %v3025 = vsel %vm1103, %v3024, 0.0
        %3026 = vadd.xlane.f32.xlu0 %v3025
        %v3027 = vpop.xlane.xlu0 %3026
        %v3028 = vrcp.pop %v3027
        %v3029 = vmul.f32 %v3027, %v3028
        %v3030 = vsub.f32 1.0, %v3029
        %v3031 = vmul.f32 %v3028, %v3030
        %v3032 = vadd.f32 %v3028, %v3031
        %vm3033 = vweird.f32 %v3027
        %vm3034 = vweird.f32 %v3028
        %vm3035 = vmor %vm3033, %vm3034
        %v3036 = vsel %vm3035, %v3028, %v3032
        %v3037 = vand.u32 2147483647, %v3027
        %vm3038 = vcmp.eq.f32.partialorder %v3037, 8.507059e+37
        %v3039 = vand.u32 %v3027, 2147483648
        %v3040 = vor.u32 1.1754944e-38, %v3039
        %v3041 = vsel %vm3038, %v3040, %v3036
        %v3042 = vmul.f32 %v3024, %v3041
        %3044 = vrot.lane.b32.xlu0 %v2689, 64
        %v3045 = vpop.permute.xlu0 %3044
        %v3047 = vadd.f32 %v3017, %v3045
        %v3048 = vadd.f32 %v3047, %v1136
        %v3051 = vrot.slane %v2877, 7
        %v3052 = vsel %vm837, %v3051, %v2855
        %v3053 = vsel %vm679, %v3052, 0
        %3055 = vmatpush.msra.mxu0 0.0
        %3056 = vmatpush.msra.mxu0 0.0
        %3057 = vmatpush.msra.mxu0 0.0
        %3058 = vmatpush.msra.mxu0 0.0
        %3059 = vmatpush.msra.mxu0 0.0
        %3060 = vmatpush.msra.mxu0 0.0
        %3061 = vmatpush.msra.mxu0 0.0
        %3062 = vmatpush.msra.mxu0 0.0
        %3063 = vmatpush.msra.mxu0 0.0
        %3064 = vmatpush.msra.mxu0 0.0
        %3065 = vmatpush.msra.mxu0 0.0
        %3066 = vmatpush.msra.mxu0 0.0
        %3067 = vmatpush.msra.mxu0 %v671
        %3068 = vmatpush.msra.mxu0 %v670
        %3069 = vmatpush.msra.mxu0 %v669
        %3070 = vmatpush.msra.mxu0 %v668
        %3071 = vmatmul.f32.gmra.mxu0 %v3053
        %v3072 = vpop.f32.mrf.mxu0
        %v3073 = vadd.f32 0.0, %v3072
        %3074 = vdwg.mxu0
        %3076 = vrot.lane.b32.xlu0 %v3073, 32
        %v3077 = vpop.permute.xlu0 %3076
        %v3079 = vadd.f32 %v3048, %v3077
        %v3082 = vrot.slane %v2993, 7
        %v3083 = vsel %vm837, %v3082, %v2971
        %v3084 = vsel %vm679, %v3083, 0
        %3086 = vmatpush.msra.mxu0 0.0
        %3087 = vmatpush.msra.mxu0 0.0
        %3088 = vmatpush.msra.mxu0 0.0
        %3089 = vmatpush.msra.mxu0 0.0
        %3090 = vmatpush.msra.mxu0 0.0
        %3091 = vmatpush.msra.mxu0 0.0
        %3092 = vmatpush.msra.mxu0 0.0
        %3093 = vmatpush.msra.mxu0 0.0
        %3094 = vmatpush.msra.mxu0 0.0
        %3095 = vmatpush.msra.mxu0 0.0
        %3096 = vmatpush.msra.mxu0 0.0
        %3097 = vmatpush.msra.mxu0 0.0
        %3098 = vmatpush.msra.mxu0 %v675
        %3099 = vmatpush.msra.mxu0 %v674
        %3100 = vmatpush.msra.mxu0 %v673
        %3101 = vmatpush.msra.mxu0 %v672
        %3102 = vmatmul.f32.gmra.mxu0 %v3084
        %v3103 = vpop.f32.mrf.mxu0
        %v3104 = vadd.f32 0.0, %v3103
        %3105 = vdwg.mxu0
        %3107 = vrot.lane.b32.xlu0 %v3104, 32
        %v3108 = vpop.permute.xlu0 %3107
        %v3110 = vadd.f32 %v3079, %v3108
        %v3111 = vsel %vm1195, %v3110, -inf
        %3112 = vmax.xlane.f32.xlu0 %v3111
        %v3113 = vpop.xlane.xlu0 %3112
        %v3114 = vsub.f32 %v3110, %v3113
        %v3115 = vmul.f32 %v3114, 1.442695
        %v3116 = vpow.pop %v3115
        %3118 = vrot.lane.b32.xlu0 %v3116, 96
        %v3119 = vpop.permute.xlu0 %3118
        %v3121 = vsel %vm1077, %v3119, 0.0
        %3122 = vadd.xlane.f32.xlu0 %v3121
        %v3123 = vpop.xlane.xlu0 %3122
        %v3124 = vrcp.pop %v3123
        %v3125 = vmul.f32 %v3123, %v3124
        %v3126 = vsub.f32 1.0, %v3125
        %v3127 = vmul.f32 %v3124, %v3126
        %v3128 = vadd.f32 %v3124, %v3127
        %vm3129 = vweird.f32 %v3123
        %vm3130 = vweird.f32 %v3124
        %vm3131 = vmor %vm3129, %vm3130
        %v3132 = vsel %vm3131, %v3124, %v3128
        %v3133 = vand.u32 2147483647, %v3123
        %vm3134 = vcmp.eq.f32.partialorder %v3133, 8.507059e+37
        %v3135 = vand.u32 %v3123, 2147483648
        %v3136 = vor.u32 1.1754944e-38, %v3135
        %v3137 = vsel %vm3134, %v3136, %v3132
        %v3138 = vmul.f32 %v3116, %v3137
        %3139 = vmatpush.msra.mxu0 0.0
        %3140 = vmatpush.msra.mxu0 0.0
        %3141 = vmatpush.msra.mxu0 0.0
        %3142 = vmatpush.msra.mxu0 0.0
        %3143 = vmatpush.msra.mxu0 0.0
        %3144 = vmatpush.msra.mxu0 0.0
        %3145 = vmatpush.msra.mxu0 0.0
        %3146 = vmatpush.msra.mxu0 0.0
        %3147 = vmatpush.msra.mxu0 0.0
        %3148 = vmatpush.msra.mxu0 0.0
        %3149 = vmatpush.msra.mxu0 0.0
        %3150 = vmatpush.msra.mxu0 0.0
        %3151 = vmatpush.msra.mxu0 0.0
        %3152 = vmatpush.msra.mxu0 0.0
        %3153 = vmatpush.msra.mxu0 0.0
        %3154 = vmatpush.msra.mxu0 %v646
        %3155 = vmatmul.f32.gmra.mxu0 %v2835
        %v3156 = vpop.f32.mrf.mxu0
        %v3157 = vadd.f32 0.0, %v3156
        %3158 = vdwg.mxu0
        %3159 = vmatpush.msra.mxu0 0.0
        %3160 = vmatpush.msra.mxu0 0.0
        %3161 = vmatpush.msra.mxu0 0.0
        %3162 = vmatpush.msra.mxu0 0.0
        %3163 = vmatpush.msra.mxu0 0.0
        %3164 = vmatpush.msra.mxu0 0.0
        %3165 = vmatpush.msra.mxu0 0.0
        %3166 = vmatpush.msra.mxu0 0.0
        %3167 = vmatpush.msra.mxu0 0.0
        %3168 = vmatpush.msra.mxu0 0.0
        %3169 = vmatpush.msra.mxu0 0.0
        %3170 = vmatpush.msra.mxu0 0.0
        %3171 = vmatpush.msra.mxu0 0.0
        %3172 = vmatpush.msra.mxu0 0.0
        %3173 = vmatpush.msra.mxu0 0.0
        %3174 = vmatpush.msra.mxu0 %v647
        %3175 = vmatmul.f32.gmra.mxu0 %v2857
        %v3176 = vpop.f32.mrf.mxu0
        %v3177 = vadd.f32 0.0, %v3176
        %3178 = vdwg.mxu0
        %3179 = vmatpush.msra.mxu0 0.0
        %3180 = vmatpush.msra.mxu0 0.0
        %3181 = vmatpush.msra.mxu0 0.0
        %3182 = vmatpush.msra.mxu0 0.0
        %3183 = vmatpush.msra.mxu0 0.0
        %3184 = vmatpush.msra.mxu0 0.0
        %3185 = vmatpush.msra.mxu0 0.0
        %3186 = vmatpush.msra.mxu0 0.0
        %3187 = vmatpush.msra.mxu0 0.0
        %3188 = vmatpush.msra.mxu0 0.0
        %3189 = vmatpush.msra.mxu0 0.0
        %3190 = vmatpush.msra.mxu0 0.0
        %3191 = vmatpush.msra.mxu0 0.0
        %3192 = vmatpush.msra.mxu0 0.0
        %3193 = vmatpush.msra.mxu0 0.0
        %3194 = vmatpush.msra.mxu0 %v1265
        %3195 = vmatmul.f32.gmra.mxu0 %v2951
        %v3196 = vpop.f32.mrf.mxu0
        %v3197 = vadd.f32 0.0, %v3196
        %3198 = vdwg.mxu0
        %3199 = vmatpush.msra.mxu0 0.0
        %3200 = vmatpush.msra.mxu0 0.0
        %3201 = vmatpush.msra.mxu0 0.0
        %3202 = vmatpush.msra.mxu0 0.0
        %3203 = vmatpush.msra.mxu0 0.0
        %3204 = vmatpush.msra.mxu0 0.0
        %3205 = vmatpush.msra.mxu0 0.0
        %3206 = vmatpush.msra.mxu0 0.0
        %3207 = vmatpush.msra.mxu0 0.0
        %3208 = vmatpush.msra.mxu0 0.0
        %3209 = vmatpush.msra.mxu0 0.0
        %3210 = vmatpush.msra.mxu0 0.0
        %3211 = vmatpush.msra.mxu0 0.0
        %3212 = vmatpush.msra.mxu0 0.0
        %3213 = vmatpush.msra.mxu0 0.0
        %3214 = vmatpush.msra.mxu0 %v1288
        %3215 = vmatmul.f32.gmra.mxu0 %v2973
        %v3216 = vpop.f32.mrf.mxu0
        %v3217 = vadd.f32 0.0, %v3216
        %3218 = vdwg.mxu0
        %3220 = vset.pattern.permute.xlu0 32
        %3221 = vperm.xlu0 %3220, %v3138
        %v3222 = vpop.permute.xlu0 %3221
        %v3224 = vmul.f32 %v3222, %v3042
        %3225 = vset.pattern.permute.xlu0 33
        %3226 = vperm.xlu0 %3225, %v3138
        %v3227 = vpop.permute.xlu0 %3226
        %v3231 = vrot.slane %v3217, 7
        %v3232 = vsel %vm837, %v3231, %v3197
        %v3234 = vmul.f32 %v3227, %v3232
        %v3235 = vadd.f32 %v3224, %v3234
        %v3236 = vsub.f32 1.0, %v3138
        %3237 = vrot.lane.b32.xlu0 %v3138, 1
        %v3238 = vpop.permute.xlu0 %3237
        %v3240 = vsub.f32 %v3236, %v3238
        %3242 = vset.pattern.permute.xlu0 33
        %3243 = vperm.xlu0 %3242, %v3240
        %v3244 = vpop.permute.xlu0 %3243
        %v3248 = vrot.slane %v3177, 7
        %v3249 = vsel %vm837, %v3248, %v3157
        %v3251 = vmul.f32 %v3244, %v3249
        %v3252 = vadd.f32 %v3235, %v3251
        %v3254 = vrot.slane %v3252, 1
        %3256 = vst.msk [vmem:[%s637 + $0x3] sm:$0x1] %vm1347, %v3252
        %3257 = vst.msk [vmem:[%s637 + $0x7] sm:$0x1] %vm1347, %v3254
        %p3258 = scmp.lt.s32.totalorder %s35, 2
        %s3259 = scalar_select %p3258, %s35, 2
        %s3260 = smul.addr %s3259, 2
        %s3261 = smul.addr %s3260, 4
        %s3262 = scalar_lea.vmem %s19, %s3261
        %s3263 = sand.u32 %s473, 1
        %s3264 = scalar_lea.sflag [#allocation3], %s3263
        %s3265 = sand.u32 %s473, 1
        %s3266 = smul.addr %s3265, 2
        %s3267 = scalar_lea.vmem [#allocation2], %s3266
        // Predicated region
        $region97: #{run.7} parent=95 // pred_check
          %p3268 = pneg %p457
        $region98: #{run.7} parent=95 // pred_check_branch
          %3270 = sbr.rel (%p3268) target = $region100
        $region99: #{run.7} parent=95 // pred_region
          _
        $region100: #{run.7} parent=95 // pred_fallthru
          _
        // Predicated region
        $region101: #{run.7} parent=95 // pred_check
          %p3271 = pneg %p483
        $region102: #{run.7} parent=95 // pred_check_branch
          %3273 = sbr.rel (%p3271) target = $region104
        $region103: #{run.7} parent=95 // pred_region
          %3275 = vsyncadd %s3264, 0
          %s3276 = smul.addr %s35, 2
          %s3277 = scalar_lea.hbm %s20, %s3276
          %s3279 = sshll.u32 %s3267, 4
          %s3280 = int_to_ptr.vmem [resolvable:$true] %s3279
          %s3281 = sshll.u32 %s3277, 4
          %s3282 = int_to_ptr.hbm [resolvable:$true] %s3281
          %3284 = dma.vmem_to_hbm [thread:$0]  %s3280, 32, %s3282, %s3264
        $region104: #{run.7} parent=95 // pred_fallthru
          _
      $region96: #{run.7} parent=5 // pred_fallthru
        _
      %p3285 = scmp.le.s32.totalorder 2, %s30
      // Predicated region
      $region105: #{run.7} parent=5 // pred_check
        %p3286 = pneg %p3285
      $region106: #{run.7} parent=5 // pred_check_branch
        %3288 = sbr.rel (%p3286) target = $region108
      $region107: #{run.7} parent=5 // pred_region
        %s3289 = ssub.s32 %s30, 2
        // Predicated region
        $region109: #{run.7} parent=107 // pred_check
          %p3290 = pneg %p463
        $region110: #{run.7} parent=107 // pred_check_branch
          %3292 = sbr.rel (%p3290) target = $region112
        $region111: #{run.7} parent=107 // pred_region
          %p3293 = scmp.lt.s32.totalorder %s36, 2
          %s3294 = scalar_select %p3293, %s36, 2
          %s3295 = smul.addr %s3294, 2
          %s3296 = smul.addr %s3295, 4
          %s3297 = scalar_lea.vmem %s19, %s3296
        $region112: #{run.7} parent=107 // pred_fallthru
          _
        // Predicated region
        $region113: #{run.7} parent=107 // pred_check
          %p3298 = pneg %p489
        $region114: #{run.7} parent=107 // pred_check_branch
          %3300 = sbr.rel (%p3298) target = $region116
        $region115: #{run.7} parent=107 // pred_region
          %s3301 = sand.u32 %s474, 1
          %s3302 = scalar_lea.sflag [#allocation3], %s3301
          %s3303 = sand.u32 %s474, 1
          %s3304 = smul.addr %s3303, 2
          %s3305 = scalar_lea.vmem [#allocation2], %s3304
          %3307 = dma.done %s3302, 32
        $region116: #{run.7} parent=107 // pred_fallthru
          _
      $region108: #{run.7} parent=5 // pred_fallthru
        _
    $region6: #{run.7} parent=1 // loop_footer
      %s34 = sadd.s32 1, %s30
    $region7: #{run.7} parent=1 // loop_footer_branch
      %29 = sbr.rel target = $region3
    $region8: #{run.7} parent=1 // loop_exit
      _
    %3308 = vsyncpa [#allocation3], 1
    %s3309 = scalar_lea.sflag [#allocation3], 1
    %3310 = vsyncpa %s3309, 1

</llo_original>
